<compile_context>
chip_gen: v5e
topology: v5e:2x2
jax: 0.10.0
libtpu: 0.0.40
codegen_flags: <defaults>
</compile_context>

<pallas_src>
import functools
import math

import numpy as np
import jax
import jax.numpy as jnp
from jax.experimental import pallas as pl
from jax.experimental.pallas import tpu as pltpu


# ------------------------------------------------------------------ config
B = 2
IN_CHANNELS = 4
INPUT_SIZE = (2, 8, 8)          # (T, H, W)   (16, 32, 32 in the original)
PATCH = (1, 2, 2)
EMB = 128                       # emb_size (768 in the original)
NUM_HEADS = 8
MLP_RATIO = 4
DEPTH = 2
LEARN_SIGMA = True
OUT_CHANNELS = IN_CHANNELS * 2 if LEARN_SIGMA else IN_CHANNELS
TEXT_SEQ = 8                    # 77 in the original
CLIP_DIM = 32                   # 512 in the original
CAPTION_CHANNELS = 2 * CLIP_DIM # 1024 in the original
FREQ_DIM = 256                  # TimestepEmbedder frequency embedding size

NUM_TEMPORAL = INPUT_SIZE[0] // PATCH[0]
NUM_SPATIAL = (INPUT_SIZE[1] // PATCH[1]) * (INPUT_SIZE[2] // PATCH[2])
NUM_PATCHES = NUM_TEMPORAL * NUM_SPATIAL
PATCH_PROD = PATCH[0] * PATCH[1] * PATCH[2]
FINAL_OUT = PATCH_PROD * OUT_CHANNELS                  # 32
FINAL_OUT_PAD = FINAL_OUT + (-FINAL_OUT % 128)         # 128 (lane-dense epilogue)


# ---------------------------------------------------------- pallas: prologue
def _prologue_kernel(xp_ref, cin_ref, yemb_ref, tfreq_ref, pe_ref,
                     w_proj, b_proj, w_c, b_c,
                     wy1, by1, wy2, by2, wt1, bt1, wt2, bt2,
                     wada, bada,
                     x_out, c_out, ada_out, *, bsz, n_patch, text_seq):
    bf = jnp.bfloat16

    def mm(a, w_ref, b_ref):
        return (jnp.dot(a.astype(bf), w_ref[...],
                        preferred_element_type=jnp.float32) + b_ref[...])

    d = pe_ref.shape[-1]
    # x projection + (spatial+temporal) positional embedding
    xp = mm(xp_ref[...], w_proj, b_proj)                       # (B*N, D)
    x_out[...] = (xp.reshape(bsz, n_patch, d)
                  + pe_ref[...][None, :, :]).astype(x_out.dtype)
    # c embedding
    ce = mm(cin_ref[...], w_c, b_c)                            # (B*2St, D)
    c_out[...] = ce.reshape(bsz, 2 * text_seq, d).astype(c_out.dtype)
    # y = Mlp(cat(text_emb_1, text_emb_2))
    h = mm(yemb_ref[...], wy1, by1)
    h = jax.nn.gelu(h, approximate=True)
    y = mm(h, wy2, by2)                                        # (B*St, D)
    # t = TimestepEmbedder MLP
    th = jax.nn.silu(mm(tfreq_ref[...], wt1, bt1))
    te = mm(th, wt2, bt2)                                      # (B, D)
    y3 = y.reshape(bsz, text_seq, d) + te[:, None, :]
    ym = jnp.mean(y3, axis=1)                                  # (B, D)  block-invariant
    # all DEPTH blocks' adaLN_modulation(mean(y)) in one matmul (stacked weights)
    ada = mm(jax.nn.silu(ym), wada, bada)                      # (B, DEPTH*12D)
    ada_out[...] = ada.astype(ada_out.dtype)


def prologue(xp, c_in_flat, y_emb_flat, t_freq, pe, params):
    bs = t_freq.shape[0]
    kernel = functools.partial(_prologue_kernel, bsz=bs,
                               n_patch=NUM_PATCHES, text_seq=TEXT_SEQ)
    return pl.pallas_call(
        kernel,
        out_shape=(jax.ShapeDtypeStruct((bs, NUM_PATCHES, EMB), jnp.float32),
                   jax.ShapeDtypeStruct((bs, 2 * TEXT_SEQ, EMB), jnp.float32),
                   jax.ShapeDtypeStruct((bs, DEPTH * 12 * EMB), jnp.float32)),
    )(xp, c_in_flat, y_emb_flat, t_freq, pe,
      params["proj_w"], params["proj_b"], params["c_w"], params["c_b"],
      params["mlp_y_w1"], params["mlp_y_b1"], params["mlp_y_w2"], params["mlp_y_b2"],
      params["t_w1"], params["t_b1"], params["t_w2"], params["t_b2"],
      params["ada_all_w"], params["ada_all_b"])


# -------------------------------------------- pallas: fused MM-DiT depth stack
BLOCK_PARAM_ORDER = [
    "g1c", "g2c", "g1x", "g2x",
    "w_qkv_c", "b_qkv_c", "w_qkv_x", "b_qkv_x",
    "w_sp_c", "b_sp_c", "w_sp_x", "b_sp_x",
    "w_m1c", "b_m1c", "w_m2c", "b_m2c",
    "w_m1x", "b_m1x", "w_m2x", "b_m2x",
]


def _mmdit_depth_kernel(ada_ref, c0_ref, x0_ref,
                        g1c, g2c, g1x, g2x,
                        w_qkv_c, b_qkv_c, w_qkv_x, b_qkv_x,
                        w_sp_c, b_sp_c, w_sp_x, b_sp_x,
                        w_m1c, b_m1c, w_m2c, b_m2c,
                        w_m1x, b_m1x, w_m2x, b_m2x,
                        c_out, x_out,
                        *, num_heads, emb, bsz, seq_c, seq_x):
    D = emb
    H = num_heads
    dh = D // H
    S = seq_c + seq_x
    bf = jnp.bfloat16

    layer = pl.program_id(0)

    @pl.when(layer == 0)
    def _():
        # initialise the resident (VMEM) residual stream from the embeddings
        c_out[...] = c0_ref[...]
        x_out[...] = x0_ref[...]

    c = c_out[...]                       # (B, Sc, D) f32
    x = x_out[...]                       # (B, Sx, D) f32
    ada = ada_ref[0]                     # (B, 12D)   precomputed adaLN vector

    mods = [ada[:, i * D:(i + 1) * D][:, None, :] for i in range(12)]   # (B,1,D)
    (a_c, be_c, ga_c, de_c, ep_c, ze_c,
     a_x, be_x, ga_x, de_x, ep_x, ze_x) = mods

    def ln_mod(v, gamma, shift, scale):
        # canonical DiT adaLN: LN(v)*gamma * (1+scale) + shift, stats in f32
        mu = jnp.mean(v, axis=-1, keepdims=True)
        var = jnp.mean(jnp.square(v - mu), axis=-1, keepdims=True)
        vn = (v - mu) * jax.lax.rsqrt(var + 1e-6) * gamma
        return vn * (1.0 + scale) + shift

    def linear(a2d, w_ref, b_ref):
        return (jnp.dot(a2d.astype(bf), w_ref[0],
                        preferred_element_type=jnp.float32) + b_ref[0])

    # ---- joint self-attention over cat(c, x) --------------------------------
    mc = ln_mod(c, g1c[0], a_c, be_c)
    mx = ln_mod(x, g1x[0], a_x, be_x)
    qkv_c = linear(mc.reshape(bsz * seq_c, D), w_qkv_c, b_qkv_c)
    qkv_x = linear(mx.reshape(bsz * seq_x, D), w_qkv_x, b_qkv_x)
    qkv = jnp.concatenate([qkv_c.reshape(bsz, seq_c, 3 * D),
                           qkv_x.reshape(bsz, seq_x, 3 * D)], axis=1)   # (B,S,3D)

    # Weights are packed head-major ([Q_h|K_h|V_h] per head, 1/sqrt(dh) folded
    # into the Q columns at init), so the head relayout is 8 slab slices + one
    # stack + three Q/K/V slices, all on lane-contiguous slabs.
    slabs = jnp.stack([qkv[:, :, h * 3 * dh:(h + 1) * 3 * dh] for h in range(H)],
                      axis=0)                                            # (H,B,S,3dh)
    slabs = slabs.reshape(H * bsz, S, 3 * dh).astype(bf)
    q3 = slabs[:, :, 0:dh]
    k3 = slabs[:, :, dh:2 * dh]
    v3 = slabs[:, :, 2 * dh:3 * dh]

    s = jnp.einsum('gqe,gke->gqk', q3, k3,
                   preferred_element_type=jnp.float32)                   # (BH,S,S)
    m = jnp.max(s, axis=-1, keepdims=True)
    p = jnp.exp(s - m)
    lsum = jnp.sum(p, axis=-1, keepdims=True)
    o = jnp.einsum('gqk,gke->gqe', p.astype(bf), v3,
                   preferred_element_type=jnp.float32)                   # (BH,S,dh)
    o = o * pl.reciprocal(lsum, approx=True)        # normalise AFTER PV (smaller)

    o = o.reshape(H, bsz, S, dh)
    att = jnp.concatenate([o[h] for h in range(H)], axis=-1)             # (B,S,D)
    att_c, att_x = att[:, :seq_c], att[:, seq_c:]

    # ---- c branch ------------------------------------------------------------
    c1 = c + ga_c * linear(att_c.reshape(bsz * seq_c, D),
                           w_sp_c, b_sp_c).reshape(bsz, seq_c, D)
    hmc = linear(ln_mod(c1, g2c[0], de_c, ep_c).reshape(bsz * seq_c, D),
                 w_m1c, b_m1c)          # reference MLP has NO activation here
    c2 = c1 + ze_c * linear(hmc, w_m2c, b_m2c).reshape(bsz, seq_c, D)

    # ---- x branch ------------------------------------------------------------
    x1 = x + ga_x * linear(att_x.reshape(bsz * seq_x, D),
                           w_sp_x, b_sp_x).reshape(bsz, seq_x, D)
    hmx = linear(ln_mod(x1, g2x[0], de_x, ep_x).reshape(bsz * seq_x, D),
                 w_m1x, b_m1x)
    x2 = x1 + ze_x * linear(hmx, w_m2x, b_m2x).reshape(bsz, seq_x, D)

    c_out[...] = c2.astype(c_out.dtype)
    x_out[...] = x2.astype(x_out.dtype)


def mmdit_blocks(ada_stack, c0, x0, stacked, num_heads):
    depth = ada_stack.shape[0]
    bsz, sc, d = c0.shape
    sx = x0.shape[1]
    weights = [stacked[k] for k in BLOCK_PARAM_ORDER]   # each (DEPTH, ...)

    def per_layer_spec(arr):
        nd = arr.ndim
        return pl.BlockSpec((1,) + arr.shape[1:],
                            lambda l, nd=nd: (l,) + (0,) * (nd - 1))

    in_specs = [
        pl.BlockSpec((1, bsz, ada_stack.shape[-1]), lambda l: (l, 0, 0)),
        pl.BlockSpec((bsz, sc, d), lambda l: (0, 0, 0)),   # constant -> fetched once
        pl.BlockSpec((bsz, sx, d), lambda l: (0, 0, 0)),
    ]
    in_specs += [per_layer_spec(w) for w in weights]
    out_specs = (
        pl.BlockSpec((bsz, sc, d), lambda l: (0, 0, 0)),   # resident accumulator
        pl.BlockSpec((bsz, sx, d), lambda l: (0, 0, 0)),
    )
    kernel = functools.partial(_mmdit_depth_kernel, num_heads=num_heads,
                               emb=d, bsz=bsz, seq_c=sc, seq_x=sx)
    # TODO(synk): at production EMB=768, tile the QKV/MLP weight N dimension
    # (extra 'arbitrary' grid axes) so two layers' buffers fit v7x's 64 MiB VMEM.
    return pl.pallas_call(
        kernel,
        out_shape=(jax.ShapeDtypeStruct((bsz, sc, d), jnp.float32),
                   jax.ShapeDtypeStruct((bsz, sx, d), jnp.float32)),
        grid=(depth,),
        in_specs=in_specs,
        out_specs=out_specs,
        compiler_params=pltpu.CompilerParams(
            dimension_semantics=("arbitrary",),        # sequential over depth
            vmem_limit_bytes=32 * 1024 * 1024),
    )(ada_stack, c0, x0, *weights)


# ------------------------------------------------------ pallas: final layer
def _final_kernel(c_ref, x_ref, w_ada, b_ada, w_out, b_out, o_ref, *, bsz):
    bf = jnp.bfloat16
    c = c_ref[...]                                   # (B, Sc, D)
    x = x_ref[...]                                   # (B, Sx, D)
    D = x.shape[-1]
    sx = x.shape[1]
    # TODO(synk): FinalLayer definition not in the snippet; condition on the
    # token-pooled c branch (canonical adaLN final layer).
    cond = jnp.mean(c, axis=1)                                           # (B, D)
    ada = (jnp.dot(jax.nn.silu(cond).astype(bf), w_ada[...],
                   preferred_element_type=jnp.float32) + b_ada[...])     # (B, 2D)
    shift = ada[:, :D][:, None, :]
    scale = ada[:, D:][:, None, :]
    mu = jnp.mean(x, axis=-1, keepdims=True)
    var = jnp.mean(jnp.square(x - mu), axis=-1, keepdims=True)
    xn = (x - mu) * jax.lax.rsqrt(var + 1e-6)                            # LN, no affine
    xm = xn * (1.0 + scale) + shift
    # w_out is zero-padded to 128 output columns -> lane-dense unmasked stores.
    out = (jnp.dot(xm.reshape(bsz * sx, D).astype(bf), w_out[...],
                   preferred_element_type=jnp.float32) + b_out[...])
    o_ref[...] = out.reshape(bsz, sx, -1).astype(o_ref.dtype)


def final_layer(x, c, fp):
    bsz, sx, _ = x.shape
    pout = fp["w_out"].shape[1]
    kernel = functools.partial(_final_kernel, bsz=bsz)
    return pl.pallas_call(
        kernel,
        out_shape=jax.ShapeDtypeStruct((bsz, sx, pout), jnp.float32),
    )(c, x, fp["w_ada"], fp["b_ada"], fp["w_out"], fp["b_out"])


# -------------------------------------------------------------- plain-JAX glue
def patchify(latent, patch):
    # 'b c (t nt) (h nh) (w nw) -> b (t h w) (c nt nh nw)'
    b, c, T, H, W = latent.shape
    pt, ph, pw = patch
    t, h, w = T // pt, H // ph, W // pw
    x = latent.reshape(b, c, t, pt, h, ph, w, pw)
    x = x.transpose(0, 2, 4, 6, 1, 3, 5, 7)
    return x.reshape(b, t * h * w, c * pt * ph * pw)


def unpatchify(x, input_size, patch, out_ch):
    b = x.shape[0]
    pt, ph, pw = patch
    t, h, w = [input_size[i] // patch[i] for i in range(3)]
    x = x.reshape(b, t, h, w, pt, ph, pw, out_ch)
    x = x.transpose(0, 7, 1, 4, 2, 5, 3, 6)       # n c t pt h ph w pw
    return x.reshape(b, out_ch, t * pt, h * ph, w * pw)


def get_1d_sincos_pos_embed_from_grid(embed_dim, pos):
    omega = np.arange(embed_dim // 2, dtype=np.float64) / (embed_dim / 2.0)
    omega = 1.0 / 10000 ** omega
    out = np.einsum("m,d->md", pos, omega)
    return np.concatenate([np.sin(out), np.cos(out)], axis=1)


def get_2d_sincos_pos_embed(embed_dim, grid_size):
    grid_h = np.arange(grid_size, dtype=np.float64)
    grid_w = np.arange(grid_size, dtype=np.float64)
    grid = np.meshgrid(grid_w, grid_h)
    grid = np.stack(grid, axis=0).reshape([2, -1])
    emb_h = get_1d_sincos_pos_embed_from_grid(embed_dim // 2, grid[0])
    emb_w = get_1d_sincos_pos_embed_from_grid(embed_dim // 2, grid[1])
    return np.concatenate([emb_h, emb_w], axis=1)


def get_1d_sincos_pos_embed(embed_dim, length):
    return get_1d_sincos_pos_embed_from_grid(
        embed_dim, np.arange(length, dtype=np.float64))


def timestep_embedding(t, dim, max_period=10000):
    half = dim // 2
    freqs = jnp.exp(-math.log(max_period)
                    * jnp.arange(half, dtype=jnp.float32) / half)
    args = t.astype(jnp.float32)[:, None] * freqs[None, :]
    return jnp.concatenate([jnp.cos(args), jnp.sin(args)], axis=-1)


# ------------------------------------------------------------- parameter init
def init_linear(key, din, dout, scale=0.02):
    kw, kb = jax.random.split(key)
    w = (scale * jax.random.normal(kw, (din, dout), jnp.float32)).astype(jnp.bfloat16)
    b = scale * jax.random.normal(kb, (1, dout), jnp.float32)
    return w, b


def pack_qkv_headmajor(w, b, num_heads):
    """[Q|K|V] columns -> head-major [Q_h|K_h|V_h]*H, with 1/sqrt(dh) folded
    into the Q columns (weight AND bias).  Numerically equivalent attention."""
    din, three_d = w.shape
    d = three_d // 3
    dh = d // num_heads
    inv = 1.0 / math.sqrt(dh)
    wq, wk, wv = w[:, :d], w[:, d:2 * d], w[:, 2 * d:]
    bq, bk, bv = b[:, :d], b[:, d:2 * d], b[:, 2 * d:]
    w_parts, b_parts = [], []
    for h in range(num_heads):
        sl = slice(h * dh, (h + 1) * dh)
        w_parts += [wq[:, sl] * inv, wk[:, sl], wv[:, sl]]
        b_parts += [bq[:, sl] * inv, bk[:, sl], bv[:, sl]]
    return jnp.concatenate(w_parts, axis=1), jnp.concatenate(b_parts, axis=1)


def init_block_params(key, d, mlp_ratio, num_heads):
    ks = jax.random.split(key, 9)
    p = {}
    p["w_ada"], p["b_ada"] = init_linear(ks[0], d, 12 * d)
    for k in ("g1c", "g2c", "g1x", "g2x"):     # LayerNorm weights (bias=False)
        p[k] = jnp.ones((1, d), jnp.float32)
    wqc, bqc = init_linear(ks[1], d, 3 * d)
    p["w_qkv_c"], p["b_qkv_c"] = pack_qkv_headmajor(wqc, bqc, num_heads)
    wqx, bqx = init_linear(ks[2], d, 3 * d)
    p["w_qkv_x"], p["b_qkv_x"] = pack_qkv_headmajor(wqx, bqx, num_heads)
    p["w_sp_c"], p["b_sp_c"] = init_linear(ks[3], d, d)
    p["w_sp_x"], p["b_sp_x"] = init_linear(ks[4], d, d)
    p["w_m1c"], p["b_m1c"] = init_linear(ks[5], d, mlp_ratio * d)
    p["w_m2c"], p["b_m2c"] = init_linear(ks[6], mlp_ratio * d, d)
    p["w_m1x"], p["b_m1x"] = init_linear(ks[7], d, mlp_ratio * d)
    p["w_m2x"], p["b_m2x"] = init_linear(ks[8], mlp_ratio * d, d)
    return p


def init_dit_params(key):
    ks = jax.random.split(key, 8 + DEPTH)
    p = {}
    p["proj_w"], p["proj_b"] = init_linear(ks[0], IN_CHANNELS * PATCH_PROD, EMB)
    p["mlp_y_w1"], p["mlp_y_b1"] = init_linear(ks[1], CAPTION_CHANNELS, EMB)
    p["mlp_y_w2"], p["mlp_y_b2"] = init_linear(ks[2], EMB, EMB)
    p["t_w1"], p["t_b1"] = init_linear(ks[3], FREQ_DIM, EMB)
    p["t_w2"], p["t_b2"] = init_linear(ks[4], EMB, EMB)
    p["c_w"], p["c_b"] = init_linear(ks[5], CAPTION_CHANNELS, EMB)
    blocks = [init_block_params(ks[8 + i], EMB, MLP_RATIO, NUM_HEADS)
              for i in range(DEPTH)]
    # depth-stacked block weights for the single fused depth pallas_call
    p["blocks_stacked"] = {k: jnp.stack([blk[k] for blk in blocks], axis=0)
                           for k in BLOCK_PARAM_ORDER}
    # stacked adaLN weights of all blocks (y is block-invariant -> one matmul)
    p["ada_all_w"] = jnp.concatenate([blk["w_ada"] for blk in blocks], axis=1)
    p["ada_all_b"] = jnp.concatenate([blk["b_ada"] for blk in blocks], axis=1)
    p["final"] = {}
    p["final"]["w_ada"], p["final"]["b_ada"] = init_linear(ks[6], EMB, 2 * EMB)
    w_out, b_out = init_linear(ks[7], EMB, FINAL_OUT)
    pad = FINAL_OUT_PAD - FINAL_OUT
    p["final"]["w_out"] = jnp.pad(w_out, ((0, 0), (0, pad)))   # zero-pad to 128 lanes
    p["final"]["b_out"] = jnp.pad(b_out, ((0, 0), (0, pad)))
    return p


# ----------------------------------------------------------------- DiT forward
def _dit_forward(noised_latent, t, text_emb_1, text_emb_2, text_emb_3, params, pe):
    bs = noised_latent.shape[0]

    # host-side layout plumbing only (patchify / concatenations / sinusoids)
    xp = patchify(noised_latent, PATCH).reshape(bs * NUM_PATCHES,
                                                IN_CHANNELS * PATCH_PROD)
    c_in = jnp.concatenate(
        [jnp.concatenate([text_emb_1, text_emb_2], axis=2), text_emb_3], axis=1)
    c_in_flat = c_in.reshape(bs * 2 * TEXT_SEQ, CAPTION_CHANNELS)
    y_emb_flat = jnp.concatenate([text_emb_1, text_emb_2],
                                 axis=-1).reshape(bs * TEXT_SEQ, CAPTION_CHANNELS)
    t_freq = timestep_embedding(t, FREQ_DIM)                      # (B, 256)

    # kernel 1: x/c embeddings + all conditioning in one launch
    x0, c0, ada_all = prologue(xp, c_in_flat, y_emb_flat, t_freq, pe, params)
    ada_stack = ada_all.reshape(bs, DEPTH, 12 * EMB).transpose(1, 0, 2)  # (L,B,12D)

    # kernel 2: all MM-DiT blocks (depth grid, resident residual stream)
    c, x = mmdit_blocks(ada_stack, c0, x0, params["blocks_stacked"], NUM_HEADS)

    # kernel 3: final adaLN layer (lane-padded epilogue), then unpatchify
    xo = final_layer(x, c, params["final"])[:, :, :FINAL_OUT]
    return unpatchify(xo, INPUT_SIZE, PATCH, OUT_CHANNELS)


dit_forward = jax.jit(_dit_forward)


# ------------------------------------------------------------------------ main
if __name__ == "__main__":
    key = jax.random.PRNGKey(0)
    k_lat, k_t1, k_t2, k_t3, k_params = jax.random.split(key, 5)

    noised_latent = jax.random.normal(
        k_lat, (B, IN_CHANNELS) + INPUT_SIZE, jnp.float32)     # (2, 4, 2, 8, 8)
    t = jnp.array([3, 7], dtype=jnp.int32)
    # synthetic deterministic stand-ins for the CLIP/CLIP/T5 encoder outputs
    text_emb_1 = 0.1 * jax.random.normal(k_t1, (B, TEXT_SEQ, CLIP_DIM), jnp.float32)
    text_emb_2 = 0.1 * jax.random.normal(k_t2, (B, TEXT_SEQ, CLIP_DIM), jnp.float32)
    text_emb_3 = 0.1 * jax.random.normal(k_t3, (B, TEXT_SEQ, CAPTION_CHANNELS),
                                         jnp.float32)

    params = init_dit_params(k_params)
    spatial = get_2d_sincos_pos_embed(EMB, INPUT_SIZE[1] // PATCH[1])   # (NS, D)
    temporal = get_1d_sincos_pos_embed(EMB, NUM_TEMPORAL)               # (NT, D)
    # combined (temporal + spatial) PE in the patchify 't-major' token order;
    # replaces the two transposes around the temporal PE add.
    pe = jnp.asarray((temporal[:, None, :] + spatial[None, :, :])
                     .reshape(NUM_PATCHES, EMB), jnp.float32)

    out = dit_forward(noised_latent, t, text_emb_1, text_emb_2, text_emb_3,
                      params, pe)
    out = jax.block_until_ready(out)
    assert out.shape == (B, OUT_CHANNELS) + INPUT_SIZE, out.shape
    assert bool(jnp.all(jnp.isfinite(out)))
    print("KERNEL_OK")
</pallas_src>

<mosaic_0001>
module attributes {stable_mosaic.version = 11 : i64} {
  func.func @_prologue_kernel(%arg0: memref<64x16xf32, #tpu.memory_space<vmem>>, %arg1: memref<32x64xf32, #tpu.memory_space<vmem>>, %arg2: memref<16x64xf32, #tpu.memory_space<vmem>>, %arg3: memref<2x256xf32, #tpu.memory_space<vmem>>, %arg4: memref<32x128xf32, #tpu.memory_space<vmem>>, %arg5: memref<16x128xbf16, #tpu.memory_space<vmem>>, %arg6: memref<1x128xf32, #tpu.memory_space<vmem>>, %arg7: memref<64x128xbf16, #tpu.memory_space<vmem>>, %arg8: memref<1x128xf32, #tpu.memory_space<vmem>>, %arg9: memref<64x128xbf16, #tpu.memory_space<vmem>>, %arg10: memref<1x128xf32, #tpu.memory_space<vmem>>, %arg11: memref<128x128xbf16, #tpu.memory_space<vmem>>, %arg12: memref<1x128xf32, #tpu.memory_space<vmem>>, %arg13: memref<256x128xbf16, #tpu.memory_space<vmem>>, %arg14: memref<1x128xf32, #tpu.memory_space<vmem>>, %arg15: memref<128x128xbf16, #tpu.memory_space<vmem>>, %arg16: memref<1x128xf32, #tpu.memory_space<vmem>>, %arg17: memref<128x3072xbf16, #tpu.memory_space<vmem>>, %arg18: memref<1x3072xf32, #tpu.memory_space<vmem>>, %arg19: memref<2x32x128xf32, #tpu.memory_space<vmem>>, %arg20: memref<2x16x128xf32, #tpu.memory_space<vmem>>, %arg21: memref<2x3072xf32, #tpu.memory_space<vmem>>) attributes {dimension_semantics = [], scalar_prefetch = 0 : i64, scratch_operands = 0 : i64, tpu.core_type = #tpu.core_type<tc>} {
    %c0 = arith.constant 0 : index
    %c0_0 = arith.constant 0 : index
    %0 = vector.load %arg0[%c0, %c0_0] : memref<64x16xf32, #tpu.memory_space<vmem>>, vector<64x16xf32>
    %1 = arith.truncf %0 : vector<64x16xf32> to vector<64x16xbf16>
    %c0_1 = arith.constant 0 : index
    %c0_2 = arith.constant 0 : index
    %2 = vector.load %arg5[%c0_1, %c0_2] : memref<16x128xbf16, #tpu.memory_space<vmem>>, vector<16x128xbf16>
    %cst = arith.constant dense<0.000000e+00> : vector<64x128xf32>
    %3 = tpu.matmul %1, %2, %cst {dimension_numbers = #tpu.dot_dimension_numbers<[1], [0], [0], [1], [0, 0, 1, 1], [], []>} : vector<64x16xbf16>, vector<16x128xbf16>, vector<64x128xf32> -> vector<64x128xf32>
    %c0_3 = arith.constant 0 : index
    %c0_4 = arith.constant 0 : index
    %4 = vector.load %arg6[%c0_3, %c0_4] : memref<1x128xf32, #tpu.memory_space<vmem>>, vector<1x128xf32>
    %5 = vector.broadcast %4 : vector<1x128xf32> to vector<64x128xf32>
    %6 = arith.addf %3, %5 : vector<64x128xf32>
    %7 = vector.shape_cast %6 : vector<64x128xf32> to vector<2x32x128xf32>
    %c0_5 = arith.constant 0 : index
    %c0_6 = arith.constant 0 : index
    %8 = vector.load %arg4[%c0_5, %c0_6] : memref<32x128xf32, #tpu.memory_space<vmem>>, vector<32x128xf32>
    %9 = vector.shape_cast %8 : vector<32x128xf32> to vector<1x32x128xf32>
    %10 = vector.broadcast %9 : vector<1x32x128xf32> to vector<2x32x128xf32>
    %11 = arith.addf %7, %10 : vector<2x32x128xf32>
    %c0_7 = arith.constant 0 : index
    %c0_8 = arith.constant 0 : index
    %c0_9 = arith.constant 0 : index
    %12 = vector.load %arg19[%c0_7, %c0_8, %c0_9] : memref<2x32x128xf32, #tpu.memory_space<vmem>>, vector<2x32x128xf32>
    tpu.vector_store %arg19[%c0_7, %c0_8, %c0_9], %11 {strides = array<i32>} : memref<2x32x128xf32, #tpu.memory_space<vmem>>, vector<2x32x128xf32>,
    %c0_10 = arith.constant 0 : index
    %c0_11 = arith.constant 0 : index
    %13 = vector.load %arg1[%c0_10, %c0_11] : memref<32x64xf32, #tpu.memory_space<vmem>>, vector<32x64xf32>
    %14 = arith.truncf %13 : vector<32x64xf32> to vector<32x64xbf16>
    %c0_12 = arith.constant 0 : index
    %c0_13 = arith.constant 0 : index
    %15 = vector.load %arg7[%c0_12, %c0_13] : memref<64x128xbf16, #tpu.memory_space<vmem>>, vector<64x128xbf16>
    %cst_14 = arith.constant dense<0.000000e+00> : vector<32x128xf32>
    %16 = tpu.matmul %14, %15, %cst_14 {dimension_numbers = #tpu.dot_dimension_numbers<[1], [0], [0], [1], [0, 0, 1, 1], [], []>} : vector<32x64xbf16>, vector<64x128xbf16>, vector<32x128xf32> -> vector<32x128xf32>
    %c0_15 = arith.constant 0 : index
    %c0_16 = arith.constant 0 : index
    %17 = vector.load %arg8[%c0_15, %c0_16] : memref<1x128xf32, #tpu.memory_space<vmem>>, vector<1x128xf32>
    %18 = vector.broadcast %17 : vector<1x128xf32> to vector<32x128xf32>
    %19 = arith.addf %16, %18 : vector<32x128xf32>
    %20 = vector.shape_cast %19 : vector<32x128xf32> to vector<2x16x128xf32>
    %c0_17 = arith.constant 0 : index
    %c0_18 = arith.constant 0 : index
    %c0_19 = arith.constant 0 : index
    %21 = vector.load %arg20[%c0_17, %c0_18, %c0_19] : memref<2x16x128xf32, #tpu.memory_space<vmem>>, vector<2x16x128xf32>
    tpu.vector_store %arg20[%c0_17, %c0_18, %c0_19], %20 {strides = array<i32>} : memref<2x16x128xf32, #tpu.memory_space<vmem>>, vector<2x16x128xf32>,
    %c0_20 = arith.constant 0 : index
    %c0_21 = arith.constant 0 : index
    %22 = vector.load %arg2[%c0_20, %c0_21] : memref<16x64xf32, #tpu.memory_space<vmem>>, vector<16x64xf32>
    %23 = arith.truncf %22 : vector<16x64xf32> to vector<16x64xbf16>
    %c0_22 = arith.constant 0 : index
    %c0_23 = arith.constant 0 : index
    %24 = vector.load %arg9[%c0_22, %c0_23] : memref<64x128xbf16, #tpu.memory_space<vmem>>, vector<64x128xbf16>
    %cst_24 = arith.constant dense<0.000000e+00> : vector<16x128xf32>
    %25 = tpu.matmul %23, %24, %cst_24 {dimension_numbers = #tpu.dot_dimension_numbers<[1], [0], [0], [1], [0, 0, 1, 1], [], []>} : vector<16x64xbf16>, vector<64x128xbf16>, vector<16x128xf32> -> vector<16x128xf32>
    %c0_25 = arith.constant 0 : index
    %c0_26 = arith.constant 0 : index
    %26 = vector.load %arg10[%c0_25, %c0_26] : memref<1x128xf32, #tpu.memory_space<vmem>>, vector<1x128xf32>
    %27 = vector.broadcast %26 : vector<1x128xf32> to vector<16x128xf32>
    %28 = arith.addf %25, %27 : vector<16x128xf32>
    %29 = arith.mulf %28, %28 : vector<16x128xf32>
    %30 = arith.mulf %28, %29 : vector<16x128xf32>
    %cst_27 = arith.constant 4.471500e-02 : f32
    %31 = vector.broadcast %cst_27 : f32 to vector<16x128xf32>
    %32 = arith.mulf %31, %30 : vector<16x128xf32>
    %33 = arith.addf %28, %32 : vector<16x128xf32>
    %cst_28 = arith.constant 0.797884583 : f32
    %34 = vector.broadcast %cst_28 : f32 to vector<16x128xf32>
    %35 = arith.mulf %34, %33 : vector<16x128xf32>
    %36 = math.tanh %35 : vector<16x128xf32>
    %cst_29 = arith.constant 1.000000e+00 : f32
    %37 = vector.broadcast %cst_29 : f32 to vector<16x128xf32>
    %38 = arith.addf %37, %36 : vector<16x128xf32>
    %cst_30 = arith.constant 5.000000e-01 : f32
    %39 = vector.broadcast %cst_30 : f32 to vector<16x128xf32>
    %40 = arith.mulf %39, %38 : vector<16x128xf32>
    %41 = arith.mulf %28, %40 : vector<16x128xf32>
    %42 = arith.truncf %41 : vector<16x128xf32> to vector<16x128xbf16>
    %c0_31 = arith.constant 0 : index
    %c0_32 = arith.constant 0 : index
    %43 = vector.load %arg11[%c0_31, %c0_32] : memref<128x128xbf16, #tpu.memory_space<vmem>>, vector<128x128xbf16>
    %cst_33 = arith.constant dense<0.000000e+00> : vector<16x128xf32>
    %44 = tpu.matmul %42, %43, %cst_33 {dimension_numbers = #tpu.dot_dimension_numbers<[1], [0], [0], [1], [0, 0, 1, 1], [], []>} : vector<16x128xbf16>, vector<128x128xbf16>, vector<16x128xf32> -> vector<16x128xf32>
    %c0_34 = arith.constant 0 : index
    %c0_35 = arith.constant 0 : index
    %45 = vector.load %arg12[%c0_34, %c0_35] : memref<1x128xf32, #tpu.memory_space<vmem>>, vector<1x128xf32>
    %46 = vector.broadcast %45 : vector<1x128xf32> to vector<16x128xf32>
    %47 = arith.addf %44, %46 : vector<16x128xf32>
    %c0_36 = arith.constant 0 : index
    %c0_37 = arith.constant 0 : index
    %48 = vector.load %arg3[%c0_36, %c0_37] : memref<2x256xf32, #tpu.memory_space<vmem>>, vector<2x256xf32>
    %49 = arith.truncf %48 : vector<2x256xf32> to vector<2x256xbf16>
    %c0_38 = arith.constant 0 : index
    %c0_39 = arith.constant 0 : index
    %50 = vector.load %arg13[%c0_38, %c0_39] : memref<256x128xbf16, #tpu.memory_space<vmem>>, vector<256x128xbf16>
    %cst_40 = arith.constant dense<0.000000e+00> : vector<2x128xf32>
    %51 = tpu.matmul %49, %50, %cst_40 {dimension_numbers = #tpu.dot_dimension_numbers<[1], [0], [0], [1], [0, 0, 1, 1], [], []>} : vector<2x256xbf16>, vector<256x128xbf16>, vector<2x128xf32> -> vector<2x128xf32>
    %c0_41 = arith.constant 0 : index
    %c0_42 = arith.constant 0 : index
    %52 = vector.load %arg14[%c0_41, %c0_42] : memref<1x128xf32, #tpu.memory_space<vmem>>, vector<1x128xf32>
    %53 = vector.broadcast %52 : vector<1x128xf32> to vector<2x128xf32>
    %54 = arith.addf %51, %53 : vector<2x128xf32>
    %55 = arith.negf %54 : vector<2x128xf32>
    %56 = math.exp %55 : vector<2x128xf32>
    %cst_43 = arith.constant 1.000000e+00 : f32
    %57 = vector.broadcast %cst_43 : f32 to vector<2x128xf32>
    %58 = arith.addf %57, %56 : vector<2x128xf32>
    %59 = arith.divf %57, %58 : vector<2x128xf32>
    %60 = arith.mulf %54, %59 : vector<2x128xf32>
    %61 = arith.truncf %60 : vector<2x128xf32> to vector<2x128xbf16>
    %c0_44 = arith.constant 0 : index
    %c0_45 = arith.constant 0 : index
    %62 = vector.load %arg15[%c0_44, %c0_45] : memref<128x128xbf16, #tpu.memory_space<vmem>>, vector<128x128xbf16>
    %cst_46 = arith.constant dense<0.000000e+00> : vector<2x128xf32>
    %63 = tpu.matmul %61, %62, %cst_46 {dimension_numbers = #tpu.dot_dimension_numbers<[1], [0], [0], [1], [0, 0, 1, 1], [], []>} : vector<2x128xbf16>, vector<128x128xbf16>, vector<2x128xf32> -> vector<2x128xf32>
    %c0_47 = arith.constant 0 : index
    %c0_48 = arith.constant 0 : index
    %64 = vector.load %arg16[%c0_47, %c0_48] : memref<1x128xf32, #tpu.memory_space<vmem>>, vector<1x128xf32>
    %65 = vector.broadcast %64 : vector<1x128xf32> to vector<2x128xf32>
    %66 = arith.addf %63, %65 : vector<2x128xf32>
    %67 = vector.shape_cast %47 : vector<16x128xf32> to vector<2x8x128xf32>
    %68 = vector.shape_cast %66 : vector<2x128xf32> to vector<2x1x128xf32>
    %69 = vector.broadcast %68 : vector<2x1x128xf32> to vector<2x8x128xf32>
    %70 = arith.addf %67, %69 : vector<2x8x128xf32>
    %cst_49 = arith.constant dense<0.000000e+00> : vector<2x128xf32>
    %71 = vector.multi_reduction <add>, %70, %cst_49 [1] : vector<2x8x128xf32> to vector<2x128xf32>
    %cst_50 = arith.constant 8.000000e+00 : f32
    %72 = vector.broadcast %cst_50 : f32 to vector<2x128xf32>
    %73 = arith.divf %71, %72 : vector<2x128xf32>
    %74 = arith.negf %73 : vector<2x128xf32>
    %75 = math.exp %74 : vector<2x128xf32>
    %cst_51 = arith.constant 1.000000e+00 : f32
    %76 = vector.broadcast %cst_51 : f32 to vector<2x128xf32>
    %77 = arith.addf %76, %75 : vector<2x128xf32>
    %78 = arith.divf %76, %77 : vector<2x128xf32>
    %79 = arith.mulf %73, %78 : vector<2x128xf32>
    %80 = arith.truncf %79 : vector<2x128xf32> to vector<2x128xbf16>
    %c0_52 = arith.constant 0 : index
    %c0_53 = arith.constant 0 : index
    %81 = vector.load %arg17[%c0_52, %c0_53] : memref<128x3072xbf16, #tpu.memory_space<vmem>>, vector<128x3072xbf16>
    %cst_54 = arith.constant dense<0.000000e+00> : vector<2x3072xf32>
    %82 = tpu.matmul %80, %81, %cst_54 {dimension_numbers = #tpu.dot_dimension_numbers<[1], [0], [0], [1], [0, 0, 1, 1], [], []>} : vector<2x128xbf16>, vector<128x3072xbf16>, vector<2x3072xf32> -> vector<2x3072xf32>
    %c0_55 = arith.constant 0 : index
    %c0_56 = arith.constant 0 : index
    %83 = vector.load %arg18[%c0_55, %c0_56] : memref<1x3072xf32, #tpu.memory_space<vmem>>, vector<1x3072xf32>
    %84 = vector.broadcast %83 : vector<1x3072xf32> to vector<2x3072xf32>
    %85 = arith.addf %82, %84 : vector<2x3072xf32>
    %c0_57 = arith.constant 0 : index
    %c0_58 = arith.constant 0 : index
    %86 = vector.load %arg21[%c0_57, %c0_58] : memref<2x3072xf32, #tpu.memory_space<vmem>>, vector<2x3072xf32>
    tpu.vector_store %arg21[%c0_57, %c0_58], %85 {strides = array<i32>} : memref<2x3072xf32, #tpu.memory_space<vmem>>, vector<2x3072xf32>,
    return
  }
}

module attributes {stable_mosaic.version = 11 : i64} {
  func.func @_final_kernel(%arg0: memref<2x16x128xf32, #tpu.memory_space<vmem>>, %arg1: memref<2x32x128xf32, #tpu.memory_space<vmem>>, %arg2: memref<128x256xbf16, #tpu.memory_space<vmem>>, %arg3: memref<1x256xf32, #tpu.memory_space<vmem>>, %arg4: memref<128x128xbf16, #tpu.memory_space<vmem>>, %arg5: memref<1x128xf32, #tpu.memory_space<vmem>>, %arg6: memref<2x32x128xf32, #tpu.memory_space<vmem>>) attributes {dimension_semantics = [], scalar_prefetch = 0 : i64, scratch_operands = 0 : i64, tpu.core_type = #tpu.core_type<tc>} {
    %c0 = arith.constant 0 : index
    %c0_0 = arith.constant 0 : index
    %c0_1 = arith.constant 0 : index
    %0 = vector.load %arg0[%c0, %c0_0, %c0_1] : memref<2x16x128xf32, #tpu.memory_space<vmem>>, vector<2x16x128xf32>
    %c0_2 = arith.constant 0 : index
    %c0_3 = arith.constant 0 : index
    %c0_4 = arith.constant 0 : index
    %1 = vector.load %arg1[%c0_2, %c0_3, %c0_4] : memref<2x32x128xf32, #tpu.memory_space<vmem>>, vector<2x32x128xf32>
    %cst = arith.constant dense<0.000000e+00> : vector<2x128xf32>
    %2 = vector.multi_reduction <add>, %0, %cst [1] : vector<2x16x128xf32> to vector<2x128xf32>
    %cst_5 = arith.constant 1.600000e+01 : f32
    %3 = vector.broadcast %cst_5 : f32 to vector<2x128xf32>
    %4 = arith.divf %2, %3 : vector<2x128xf32>
    %5 = arith.negf %4 : vector<2x128xf32>
    %6 = math.exp %5 : vector<2x128xf32>
    %cst_6 = arith.constant 1.000000e+00 : f32
    %7 = vector.broadcast %cst_6 : f32 to vector<2x128xf32>
    %8 = arith.addf %7, %6 : vector<2x128xf32>
    %9 = arith.divf %7, %8 : vector<2x128xf32>
    %10 = arith.mulf %4, %9 : vector<2x128xf32>
    %11 = arith.truncf %10 : vector<2x128xf32> to vector<2x128xbf16>
    %c0_7 = arith.constant 0 : index
    %c0_8 = arith.constant 0 : index
    %12 = vector.load %arg2[%c0_7, %c0_8] : memref<128x256xbf16, #tpu.memory_space<vmem>>, vector<128x256xbf16>
    %cst_9 = arith.constant dense<0.000000e+00> : vector<2x256xf32>
    %13 = tpu.matmul %11, %12, %cst_9 {dimension_numbers = #tpu.dot_dimension_numbers<[1], [0], [0], [1], [0, 0, 1, 1], [], []>} : vector<2x128xbf16>, vector<128x256xbf16>, vector<2x256xf32> -> vector<2x256xf32>
    %c0_10 = arith.constant 0 : index
    %c0_11 = arith.constant 0 : index
    %14 = vector.load %arg3[%c0_10, %c0_11] : memref<1x256xf32, #tpu.memory_space<vmem>>, vector<1x256xf32>
    %15 = vector.broadcast %14 : vector<1x256xf32> to vector<2x256xf32>
    %16 = arith.addf %13, %15 : vector<2x256xf32>
    %17 = vector.extract_strided_slice %16 {offsets = [0, 0], sizes = [2, 128], strides = [1, 1]} : vector<2x256xf32> to vector<2x128xf32>
    %18 = vector.shape_cast %17 : vector<2x128xf32> to vector<2x1x128xf32>
    %19 = vector.extract_strided_slice %16 {offsets = [0, 128], sizes = [2, 128], strides = [1, 1]} : vector<2x256xf32> to vector<2x128xf32>
    %20 = vector.shape_cast %19 : vector<2x128xf32> to vector<2x1x128xf32>
    %cst_12 = arith.constant dense<0.000000e+00> : vector<2x32xf32>
    %21 = vector.multi_reduction <add>, %1, %cst_12 [2] : vector<2x32x128xf32> to vector<2x32xf32>
    %22 = vector.shape_cast %21 : vector<2x32xf32> to vector<2x32x1xf32>
    %cst_13 = arith.constant 1.280000e+02 : f32
    %23 = vector.broadcast %cst_13 : f32 to vector<2x32x1xf32>
    %24 = arith.divf %22, %23 : vector<2x32x1xf32>
    %25 = vector.broadcast %24 : vector<2x32x1xf32> to vector<2x32x128xf32>
    %26 = arith.subf %1, %25 : vector<2x32x128xf32>
    %27 = arith.mulf %26, %26 : vector<2x32x128xf32>
    %cst_14 = arith.constant dense<0.000000e+00> : vector<2x32xf32>
    %28 = vector.multi_reduction <add>, %27, %cst_14 [2] : vector<2x32x128xf32> to vector<2x32xf32>
    %29 = vector.shape_cast %28 : vector<2x32xf32> to vector<2x32x1xf32>
    %cst_15 = arith.constant 1.280000e+02 : f32
    %30 = vector.broadcast %cst_15 : f32 to vector<2x32x1xf32>
    %31 = arith.divf %29, %30 : vector<2x32x1xf32>
    %32 = vector.broadcast %24 : vector<2x32x1xf32> to vector<2x32x128xf32>
    %33 = arith.subf %1, %32 : vector<2x32x128xf32>
    %cst_16 = arith.constant 9.99999997E-7 : f32
    %34 = vector.broadcast %cst_16 : f32 to vector<2x32x1xf32>
    %35 = arith.addf %31, %34 : vector<2x32x1xf32>
    %36 = math.rsqrt %35 : vector<2x32x1xf32>
    %37 = vector.broadcast %36 : vector<2x32x1xf32> to vector<2x32x128xf32>
    %38 = arith.mulf %33, %37 : vector<2x32x128xf32>
    %cst_17 = arith.constant 1.000000e+00 : f32
    %39 = vector.broadcast %cst_17 : f32 to vector<2x1x128xf32>
    %40 = arith.addf %39, %20 : vector<2x1x128xf32>
    %41 = vector.broadcast %40 : vector<2x1x128xf32> to vector<2x32x128xf32>
    %42 = arith.mulf %38, %41 : vector<2x32x128xf32>
    %43 = vector.broadcast %18 : vector<2x1x128xf32> to vector<2x32x128xf32>
    %44 = arith.addf %42, %43 : vector<2x32x128xf32>
    %45 = vector.shape_cast %44 : vector<2x32x128xf32> to vector<64x128xf32>
    %46 = arith.truncf %45 : vector<64x128xf32> to vector<64x128xbf16>
    %c0_18 = arith.constant 0 : index
    %c0_19 = arith.constant 0 : index
    %47 = vector.load %arg4[%c0_18, %c0_19] : memref<128x128xbf16, #tpu.memory_space<vmem>>, vector<128x128xbf16>
    %cst_20 = arith.constant dense<0.000000e+00> : vector<64x128xf32>
    %48 = tpu.matmul %46, %47, %cst_20 {dimension_numbers = #tpu.dot_dimension_numbers<[1], [0], [0], [1], [0, 0, 1, 1], [], []>} : vector<64x128xbf16>, vector<128x128xbf16>, vector<64x128xf32> -> vector<64x128xf32>
    %c0_21 = arith.constant 0 : index
    %c0_22 = arith.constant 0 : index
    %49 = vector.load %arg5[%c0_21, %c0_22] : memref<1x128xf32, #tpu.memory_space<vmem>>, vector<1x128xf32>
    %50 = vector.broadcast %49 : vector<1x128xf32> to vector<64x128xf32>
    %51 = arith.addf %48, %50 : vector<64x128xf32>
    %52 = vector.shape_cast %51 : vector<64x128xf32> to vector<2x32x128xf32>
    %c0_23 = arith.constant 0 : index
    %c0_24 = arith.constant 0 : index
    %c0_25 = arith.constant 0 : index
    %53 = vector.load %arg6[%c0_23, %c0_24, %c0_25] : memref<2x32x128xf32, #tpu.memory_space<vmem>>, vector<2x32x128xf32>
    tpu.vector_store %arg6[%c0_23, %c0_24, %c0_25], %52 {strides = array<i32>} : memref<2x32x128xf32, #tpu.memory_space<vmem>>, vector<2x32x128xf32>,
    return
  }
}

module attributes {stable_mosaic.version = 11 : i64} {
  func.func @_mmdit_depth_kernel(%arg0: i32, %arg1: memref<1x2x1536xf32, #tpu.memory_space<vmem>>, %arg2: memref<2x16x128xf32, #tpu.memory_space<vmem>>, %arg3: memref<2x32x128xf32, #tpu.memory_space<vmem>>, %arg4: memref<1x1x128xf32, #tpu.memory_space<vmem>>, %arg5: memref<1x1x128xf32, #tpu.memory_space<vmem>>, %arg6: memref<1x1x128xf32, #tpu.memory_space<vmem>>, %arg7: memref<1x1x128xf32, #tpu.memory_space<vmem>>, %arg8: memref<1x128x384xbf16, #tpu.memory_space<vmem>>, %arg9: memref<1x1x384xf32, #tpu.memory_space<vmem>>, %arg10: memref<1x128x384xbf16, #tpu.memory_space<vmem>>, %arg11: memref<1x1x384xf32, #tpu.memory_space<vmem>>, %arg12: memref<1x128x128xbf16, #tpu.memory_space<vmem>>, %arg13: memref<1x1x128xf32, #tpu.memory_space<vmem>>, %arg14: memref<1x128x128xbf16, #tpu.memory_space<vmem>>, %arg15: memref<1x1x128xf32, #tpu.memory_space<vmem>>, %arg16: memref<1x128x512xbf16, #tpu.memory_space<vmem>>, %arg17: memref<1x1x512xf32, #tpu.memory_space<vmem>>, %arg18: memref<1x512x128xbf16, #tpu.memory_space<vmem>>, %arg19: memref<1x1x128xf32, #tpu.memory_space<vmem>>, %arg20: memref<1x128x512xbf16, #tpu.memory_space<vmem>>, %arg21: memref<1x1x512xf32, #tpu.memory_space<vmem>>, %arg22: memref<1x512x128xbf16, #tpu.memory_space<vmem>>, %arg23: memref<1x1x128xf32, #tpu.memory_space<vmem>>, %arg24: memref<2x16x128xf32, #tpu.memory_space<vmem>>, %arg25: memref<2x32x128xf32, #tpu.memory_space<vmem>>) attributes {dimension_semantics = [#tpu.dimension_semantics<arbitrary>], iteration_bounds = array<i64: 2>, scalar_prefetch = 0 : i64, scratch_operands = 0 : i64, tpu.core_type = #tpu.core_type<tc>, window_params = [{transform_indices = @transform_0, window_bounds = array<i64: 1, 2, 1536>}, {pipeline_mode = #tpu.pipeline_mode<synchronous>, transform_indices = @transform_1, window_bounds = array<i64: 2, 16, 128>}, {pipeline_mode = #tpu.pipeline_mode<synchronous>, transform_indices = @transform_2, window_bounds = array<i64: 2, 32, 128>}, {transform_indices = @transform_3, window_bounds = array<i64: 1, 1, 128>}, {transform_indices = @transform_4, window_bounds = array<i64: 1, 1, 128>}, {transform_indices = @transform_5, window_bounds = array<i64: 1, 1, 128>}, {transform_indices = @transform_6, window_bounds = array<i64: 1, 1, 128>}, {transform_indices = @transform_7, window_bounds = array<i64: 1, 128, 384>}, {transform_indices = @transform_8, window_bounds = array<i64: 1, 1, 384>}, {transform_indices = @transform_9, window_bounds = array<i64: 1, 128, 384>}, {transform_indices = @transform_10, window_bounds = array<i64: 1, 1, 384>}, {transform_indices = @transform_11, window_bounds = array<i64: 1, 128, 128>}, {transform_indices = @transform_12, window_bounds = array<i64: 1, 1, 128>}, {transform_indices = @transform_13, window_bounds = array<i64: 1, 128, 128>}, {transform_indices = @transform_14, window_bounds = array<i64: 1, 1, 128>}, {transform_indices = @transform_15, window_bounds = array<i64: 1, 128, 512>}, {transform_indices = @transform_16, window_bounds = array<i64: 1, 1, 512>}, {transform_indices = @transform_17, window_bounds = array<i64: 1, 512, 128>}, {transform_indices = @transform_18, window_bounds = array<i64: 1, 1, 128>}, {transform_indices = @transform_19, window_bounds = array<i64: 1, 128, 512>}, {transform_indices = @transform_20, window_bounds = array<i64: 1, 1, 512>}, {transform_indices = @transform_21, window_bounds = array<i64: 1, 512, 128>}, {transform_indices = @transform_22, window_bounds = array<i64: 1, 1, 128>}, {pipeline_mode = #tpu.pipeline_mode<synchronous>, transform_indices = @transform_23, window_bounds = array<i64: 2, 16, 128>}, {pipeline_mode = #tpu.pipeline_mode<synchronous>, transform_indices = @transform_24, window_bounds = array<i64: 2, 32, 128>}]} {
    %c0_i32 = arith.constant 0 : i32
    %0 = arith.cmpi eq, %arg0, %c0_i32 : i32
    %1 = arith.extui %0 : i1 to i32
    %c0_i32_0 = arith.constant 0 : i32
    %2 = arith.cmpi ne, %1, %c0_i32_0 : i32
    scf.if %2 {
      %c0_110 = arith.constant 0 : index
      %c0_111 = arith.constant 0 : index
      %c0_112 = arith.constant 0 : index
      %293 = vector.load %arg2[%c0_110, %c0_111, %c0_112] : memref<2x16x128xf32, #tpu.memory_space<vmem>>, vector<2x16x128xf32>
      %c0_113 = arith.constant 0 : index
      %c0_114 = arith.constant 0 : index
      %c0_115 = arith.constant 0 : index
      %294 = vector.load %arg24[%c0_113, %c0_114, %c0_115] : memref<2x16x128xf32, #tpu.memory_space<vmem>>, vector<2x16x128xf32>
      tpu.vector_store %arg24[%c0_113, %c0_114, %c0_115], %293 {strides = array<i32>} : memref<2x16x128xf32, #tpu.memory_space<vmem>>, vector<2x16x128xf32>,
      %c0_116 = arith.constant 0 : index
      %c0_117 = arith.constant 0 : index
      %c0_118 = arith.constant 0 : index
      %295 = vector.load %arg3[%c0_116, %c0_117, %c0_118] : memref<2x32x128xf32, #tpu.memory_space<vmem>>, vector<2x32x128xf32>
      %c0_119 = arith.constant 0 : index
      %c0_120 = arith.constant 0 : index
      %c0_121 = arith.constant 0 : index
      %296 = vector.load %arg25[%c0_119, %c0_120, %c0_121] : memref<2x32x128xf32, #tpu.memory_space<vmem>>, vector<2x32x128xf32>
      tpu.vector_store %arg25[%c0_119, %c0_120, %c0_121], %295 {strides = array<i32>} : memref<2x32x128xf32, #tpu.memory_space<vmem>>, vector<2x32x128xf32>,
    } else {
    }
    %c0 = arith.constant 0 : index
    %c0_1 = arith.constant 0 : index
    %c0_2 = arith.constant 0 : index
    %3 = vector.load %arg24[%c0, %c0_1, %c0_2] : memref<2x16x128xf32, #tpu.memory_space<vmem>>, vector<2x16x128xf32>
    %c0_3 = arith.constant 0 : index
    %c0_4 = arith.constant 0 : index
    %c0_5 = arith.constant 0 : index
    %4 = vector.load %arg25[%c0_3, %c0_4, %c0_5] : memref<2x32x128xf32, #tpu.memory_space<vmem>>, vector<2x32x128xf32>
    %c0_6 = arith.constant 0 : index
    %c0_7 = arith.constant 0 : index
    %c0_8 = arith.constant 0 : index
    %5 = vector.load %arg1[%c0_6, %c0_7, %c0_8] : memref<1x2x1536xf32, #tpu.memory_space<vmem>>, vector<1x2x1536xf32>
    %6 = vector.shape_cast %5 : vector<1x2x1536xf32> to vector<2x1536xf32>
    %7 = vector.extract_strided_slice %6 {offsets = [0, 0], sizes = [2, 128], strides = [1, 1]} : vector<2x1536xf32> to vector<2x128xf32>
    %8 = vector.shape_cast %7 : vector<2x128xf32> to vector<2x1x128xf32>
    %9 = vector.extract_strided_slice %6 {offsets = [0, 128], sizes = [2, 128], strides = [1, 1]} : vector<2x1536xf32> to vector<2x128xf32>
    %10 = vector.shape_cast %9 : vector<2x128xf32> to vector<2x1x128xf32>
    %11 = vector.extract_strided_slice %6 {offsets = [0, 256], sizes = [2, 128], strides = [1, 1]} : vector<2x1536xf32> to vector<2x128xf32>
    %12 = vector.shape_cast %11 : vector<2x128xf32> to vector<2x1x128xf32>
    %13 = vector.extract_strided_slice %6 {offsets = [0, 384], sizes = [2, 128], strides = [1, 1]} : vector<2x1536xf32> to vector<2x128xf32>
    %14 = vector.shape_cast %13 : vector<2x128xf32> to vector<2x1x128xf32>
    %15 = vector.extract_strided_slice %6 {offsets = [0, 512], sizes = [2, 128], strides = [1, 1]} : vector<2x1536xf32> to vector<2x128xf32>
    %16 = vector.shape_cast %15 : vector<2x128xf32> to vector<2x1x128xf32>
    %17 = vector.extract_strided_slice %6 {offsets = [0, 640], sizes = [2, 128], strides = [1, 1]} : vector<2x1536xf32> to vector<2x128xf32>
    %18 = vector.shape_cast %17 : vector<2x128xf32> to vector<2x1x128xf32>
    %19 = vector.extract_strided_slice %6 {offsets = [0, 768], sizes = [2, 128], strides = [1, 1]} : vector<2x1536xf32> to vector<2x128xf32>
    %20 = vector.shape_cast %19 : vector<2x128xf32> to vector<2x1x128xf32>
    %21 = vector.extract_strided_slice %6 {offsets = [0, 896], sizes = [2, 128], strides = [1, 1]} : vector<2x1536xf32> to vector<2x128xf32>
    %22 = vector.shape_cast %21 : vector<2x128xf32> to vector<2x1x128xf32>
    %23 = vector.extract_strided_slice %6 {offsets = [0, 1024], sizes = [2, 128], strides = [1, 1]} : vector<2x1536xf32> to vector<2x128xf32>
    %24 = vector.shape_cast %23 : vector<2x128xf32> to vector<2x1x128xf32>
    %25 = vector.extract_strided_slice %6 {offsets = [0, 1152], sizes = [2, 128], strides = [1, 1]} : vector<2x1536xf32> to vector<2x128xf32>
    %26 = vector.shape_cast %25 : vector<2x128xf32> to vector<2x1x128xf32>
    %27 = vector.extract_strided_slice %6 {offsets = [0, 1280], sizes = [2, 128], strides = [1, 1]} : vector<2x1536xf32> to vector<2x128xf32>
    %28 = vector.shape_cast %27 : vector<2x128xf32> to vector<2x1x128xf32>
    %29 = vector.extract_strided_slice %6 {offsets = [0, 1408], sizes = [2, 128], strides = [1, 1]} : vector<2x1536xf32> to vector<2x128xf32>
    %30 = vector.shape_cast %29 : vector<2x128xf32> to vector<2x1x128xf32>
    %c0_9 = arith.constant 0 : index
    %c0_10 = arith.constant 0 : index
    %c0_11 = arith.constant 0 : index
    %31 = vector.load %arg4[%c0_9, %c0_10, %c0_11] : memref<1x1x128xf32, #tpu.memory_space<vmem>>, vector<1x1x128xf32>
    %32 = vector.shape_cast %31 : vector<1x1x128xf32> to vector<1x128xf32>
    %cst = arith.constant dense<0.000000e+00> : vector<2x16xf32>
    %33 = vector.multi_reduction <add>, %3, %cst [2] : vector<2x16x128xf32> to vector<2x16xf32>
    %34 = vector.shape_cast %33 : vector<2x16xf32> to vector<2x16x1xf32>
    %cst_12 = arith.constant 1.280000e+02 : f32
    %35 = vector.broadcast %cst_12 : f32 to vector<2x16x1xf32>
    %36 = arith.divf %34, %35 : vector<2x16x1xf32>
    %37 = vector.broadcast %36 : vector<2x16x1xf32> to vector<2x16x128xf32>
    %38 = arith.subf %3, %37 : vector<2x16x128xf32>
    %39 = arith.mulf %38, %38 : vector<2x16x128xf32>
    %cst_13 = arith.constant dense<0.000000e+00> : vector<2x16xf32>
    %40 = vector.multi_reduction <add>, %39, %cst_13 [2] : vector<2x16x128xf32> to vector<2x16xf32>
    %41 = vector.shape_cast %40 : vector<2x16xf32> to vector<2x16x1xf32>
    %cst_14 = arith.constant 1.280000e+02 : f32
    %42 = vector.broadcast %cst_14 : f32 to vector<2x16x1xf32>
    %43 = arith.divf %41, %42 : vector<2x16x1xf32>
    %44 = vector.broadcast %36 : vector<2x16x1xf32> to vector<2x16x128xf32>
    %45 = arith.subf %3, %44 : vector<2x16x128xf32>
    %cst_15 = arith.constant 9.99999997E-7 : f32
    %46 = vector.broadcast %cst_15 : f32 to vector<2x16x1xf32>
    %47 = arith.addf %43, %46 : vector<2x16x1xf32>
    %48 = math.rsqrt %47 : vector<2x16x1xf32>
    %49 = vector.broadcast %48 : vector<2x16x1xf32> to vector<2x16x128xf32>
    %50 = arith.mulf %45, %49 : vector<2x16x128xf32>
    %51 = vector.shape_cast %32 : vector<1x128xf32> to vector<1x1x128xf32>
    %52 = vector.broadcast %51 : vector<1x1x128xf32> to vector<2x16x128xf32>
    %53 = arith.mulf %50, %52 : vector<2x16x128xf32>
    %cst_16 = arith.constant 1.000000e+00 : f32
    %54 = vector.broadcast %cst_16 : f32 to vector<2x1x128xf32>
    %55 = arith.addf %54, %10 : vector<2x1x128xf32>
    %56 = vector.broadcast %55 : vector<2x1x128xf32> to vector<2x16x128xf32>
    %57 = arith.mulf %53, %56 : vector<2x16x128xf32>
    %58 = vector.broadcast %8 : vector<2x1x128xf32> to vector<2x16x128xf32>
    %59 = arith.addf %57, %58 : vector<2x16x128xf32>
    %c0_17 = arith.constant 0 : index
    %c0_18 = arith.constant 0 : index
    %c0_19 = arith.constant 0 : index
    %60 = vector.load %arg6[%c0_17, %c0_18, %c0_19] : memref<1x1x128xf32, #tpu.memory_space<vmem>>, vector<1x1x128xf32>
    %61 = vector.shape_cast %60 : vector<1x1x128xf32> to vector<1x128xf32>
    %cst_20 = arith.constant dense<0.000000e+00> : vector<2x32xf32>
    %62 = vector.multi_reduction <add>, %4, %cst_20 [2] : vector<2x32x128xf32> to vector<2x32xf32>
    %63 = vector.shape_cast %62 : vector<2x32xf32> to vector<2x32x1xf32>
    %cst_21 = arith.constant 1.280000e+02 : f32
    %64 = vector.broadcast %cst_21 : f32 to vector<2x32x1xf32>
    %65 = arith.divf %63, %64 : vector<2x32x1xf32>
    %66 = vector.broadcast %65 : vector<2x32x1xf32> to vector<2x32x128xf32>
    %67 = arith.subf %4, %66 : vector<2x32x128xf32>
    %68 = arith.mulf %67, %67 : vector<2x32x128xf32>
    %cst_22 = arith.constant dense<0.000000e+00> : vector<2x32xf32>
    %69 = vector.multi_reduction <add>, %68, %cst_22 [2] : vector<2x32x128xf32> to vector<2x32xf32>
    %70 = vector.shape_cast %69 : vector<2x32xf32> to vector<2x32x1xf32>
    %cst_23 = arith.constant 1.280000e+02 : f32
    %71 = vector.broadcast %cst_23 : f32 to vector<2x32x1xf32>
    %72 = arith.divf %70, %71 : vector<2x32x1xf32>
    %73 = vector.broadcast %65 : vector<2x32x1xf32> to vector<2x32x128xf32>
    %74 = arith.subf %4, %73 : vector<2x32x128xf32>
    %cst_24 = arith.constant 9.99999997E-7 : f32
    %75 = vector.broadcast %cst_24 : f32 to vector<2x32x1xf32>
    %76 = arith.addf %72, %75 : vector<2x32x1xf32>
    %77 = math.rsqrt %76 : vector<2x32x1xf32>
    %78 = vector.broadcast %77 : vector<2x32x1xf32> to vector<2x32x128xf32>
    %79 = arith.mulf %74, %78 : vector<2x32x128xf32>
    %80 = vector.shape_cast %61 : vector<1x128xf32> to vector<1x1x128xf32>
    %81 = vector.broadcast %80 : vector<1x1x128xf32> to vector<2x32x128xf32>
    %82 = arith.mulf %79, %81 : vector<2x32x128xf32>
    %cst_25 = arith.constant 1.000000e+00 : f32
    %83 = vector.broadcast %cst_25 : f32 to vector<2x1x128xf32>
    %84 = arith.addf %83, %22 : vector<2x1x128xf32>
    %85 = vector.broadcast %84 : vector<2x1x128xf32> to vector<2x32x128xf32>
    %86 = arith.mulf %82, %85 : vector<2x32x128xf32>
    %87 = vector.broadcast %20 : vector<2x1x128xf32> to vector<2x32x128xf32>
    %88 = arith.addf %86, %87 : vector<2x32x128xf32>
    %89 = vector.shape_cast %59 : vector<2x16x128xf32> to vector<32x128xf32>
    %90 = arith.truncf %89 : vector<32x128xf32> to vector<32x128xbf16>
    %c0_26 = arith.constant 0 : index
    %c0_27 = arith.constant 0 : index
    %c0_28 = arith.constant 0 : index
    %91 = vector.load %arg8[%c0_26, %c0_27, %c0_28] : memref<1x128x384xbf16, #tpu.memory_space<vmem>>, vector<1x128x384xbf16>
    %92 = vector.shape_cast %91 : vector<1x128x384xbf16> to vector<128x384xbf16>
    %cst_29 = arith.constant dense<0.000000e+00> : vector<32x384xf32>
    %93 = tpu.matmul %90, %92, %cst_29 {dimension_numbers = #tpu.dot_dimension_numbers<[1], [0], [0], [1], [0, 0, 1, 1], [], []>} : vector<32x128xbf16>, vector<128x384xbf16>, vector<32x384xf32> -> vector<32x384xf32>
    %c0_30 = arith.constant 0 : index
    %c0_31 = arith.constant 0 : index
    %c0_32 = arith.constant 0 : index
    %94 = vector.load %arg9[%c0_30, %c0_31, %c0_32] : memref<1x1x384xf32, #tpu.memory_space<vmem>>, vector<1x1x384xf32>
    %95 = vector.shape_cast %94 : vector<1x1x384xf32> to vector<1x384xf32>
    %96 = vector.broadcast %95 : vector<1x384xf32> to vector<32x384xf32>
    %97 = arith.addf %93, %96 : vector<32x384xf32>
    %98 = vector.shape_cast %88 : vector<2x32x128xf32> to vector<64x128xf32>
    %99 = arith.truncf %98 : vector<64x128xf32> to vector<64x128xbf16>
    %c0_33 = arith.constant 0 : index
    %c0_34 = arith.constant 0 : index
    %c0_35 = arith.constant 0 : index
    %100 = vector.load %arg10[%c0_33, %c0_34, %c0_35] : memref<1x128x384xbf16, #tpu.memory_space<vmem>>, vector<1x128x384xbf16>
    %101 = vector.shape_cast %100 : vector<1x128x384xbf16> to vector<128x384xbf16>
    %cst_36 = arith.constant dense<0.000000e+00> : vector<64x384xf32>
    %102 = tpu.matmul %99, %101, %cst_36 {dimension_numbers = #tpu.dot_dimension_numbers<[1], [0], [0], [1], [0, 0, 1, 1], [], []>} : vector<64x128xbf16>, vector<128x384xbf16>, vector<64x384xf32> -> vector<64x384xf32>
    %c0_37 = arith.constant 0 : index
    %c0_38 = arith.constant 0 : index
    %c0_39 = arith.constant 0 : index
    %103 = vector.load %arg11[%c0_37, %c0_38, %c0_39] : memref<1x1x384xf32, #tpu.memory_space<vmem>>, vector<1x1x384xf32>
    %104 = vector.shape_cast %103 : vector<1x1x384xf32> to vector<1x384xf32>
    %105 = vector.broadcast %104 : vector<1x384xf32> to vector<64x384xf32>
    %106 = arith.addf %102, %105 : vector<64x384xf32>
    %107 = vector.shape_cast %97 : vector<32x384xf32> to vector<2x16x384xf32>
    %108 = vector.shape_cast %106 : vector<64x384xf32> to vector<2x32x384xf32>
    %109 = tpu.concatenate %107, %108 in 1 : vector<2x16x384xf32>, vector<2x32x384xf32> -> vector<2x48x384xf32>
    %110 = vector.extract_strided_slice %109 {offsets = [0, 0, 0], sizes = [2, 48, 48], strides = [1, 1, 1]} : vector<2x48x384xf32> to vector<2x48x48xf32>
    %111 = vector.extract_strided_slice %109 {offsets = [0, 0, 48], sizes = [2, 48, 48], strides = [1, 1, 1]} : vector<2x48x384xf32> to vector<2x48x48xf32>
    %112 = vector.extract_strided_slice %109 {offsets = [0, 0, 96], sizes = [2, 48, 48], strides = [1, 1, 1]} : vector<2x48x384xf32> to vector<2x48x48xf32>
    %113 = vector.extract_strided_slice %109 {offsets = [0, 0, 144], sizes = [2, 48, 48], strides = [1, 1, 1]} : vector<2x48x384xf32> to vector<2x48x48xf32>
    %114 = vector.extract_strided_slice %109 {offsets = [0, 0, 192], sizes = [2, 48, 48], strides = [1, 1, 1]} : vector<2x48x384xf32> to vector<2x48x48xf32>
    %115 = vector.extract_strided_slice %109 {offsets = [0, 0, 240], sizes = [2, 48, 48], strides = [1, 1, 1]} : vector<2x48x384xf32> to vector<2x48x48xf32>
    %116 = vector.extract_strided_slice %109 {offsets = [0, 0, 288], sizes = [2, 48, 48], strides = [1, 1, 1]} : vector<2x48x384xf32> to vector<2x48x48xf32>
    %117 = vector.extract_strided_slice %109 {offsets = [0, 0, 336], sizes = [2, 48, 48], strides = [1, 1, 1]} : vector<2x48x384xf32> to vector<2x48x48xf32>
    %118 = vector.shape_cast %110 : vector<2x48x48xf32> to vector<1x2x48x48xf32>
    %119 = vector.shape_cast %111 : vector<2x48x48xf32> to vector<1x2x48x48xf32>
    %120 = vector.shape_cast %112 : vector<2x48x48xf32> to vector<1x2x48x48xf32>
    %121 = vector.shape_cast %113 : vector<2x48x48xf32> to vector<1x2x48x48xf32>
    %122 = vector.shape_cast %114 : vector<2x48x48xf32> to vector<1x2x48x48xf32>
    %123 = vector.shape_cast %115 : vector<2x48x48xf32> to vector<1x2x48x48xf32>
    %124 = vector.shape_cast %116 : vector<2x48x48xf32> to vector<1x2x48x48xf32>
    %125 = vector.shape_cast %117 : vector<2x48x48xf32> to vector<1x2x48x48xf32>
    %126 = tpu.concatenate %118, %119, %120, %121, %122, %123, %124, %125 in 0 : vector<1x2x48x48xf32>, vector<1x2x48x48xf32>, vector<1x2x48x48xf32>, vector<1x2x48x48xf32>, vector<1x2x48x48xf32>, vector<1x2x48x48xf32>, vector<1x2x48x48xf32>, vector<1x2x48x48xf32> -> vector<8x2x48x48xf32>
    %127 = vector.shape_cast %126 : vector<8x2x48x48xf32> to vector<16x48x48xf32>
    %128 = arith.truncf %127 : vector<16x48x48xf32> to vector<16x48x48xbf16>
    %129 = vector.extract_strided_slice %128 {offsets = [0, 0, 0], sizes = [16, 48, 16], strides = [1, 1, 1]} : vector<16x48x48xbf16> to vector<16x48x16xbf16>
    %130 = vector.extract_strided_slice %128 {offsets = [0, 0, 16], sizes = [16, 48, 16], strides = [1, 1, 1]} : vector<16x48x48xbf16> to vector<16x48x16xbf16>
    %131 = vector.extract_strided_slice %128 {offsets = [0, 0, 32], sizes = [16, 48, 16], strides = [1, 1, 1]} : vector<16x48x48xbf16> to vector<16x48x16xbf16>
    "tpu.trace_start"() <{level = 10 : i32, message = "gqe,gke->gqk"}> : () -> ()
    %cst_40 = arith.constant dense<0.000000e+00> : vector<16x48x48xf32>
    %132 = tpu.matmul %129, %130, %cst_40 {dimension_numbers = #tpu.dot_dimension_numbers<[2], [2], [1], [1], [0, 0, 0, 1, 1, 1], [0], [0]>} : vector<16x48x16xbf16>, vector<16x48x16xbf16>, vector<16x48x48xf32> -> vector<16x48x48xf32>
    "tpu.trace_stop"() : () -> ()
    %cst_41 = arith.constant dense<0xFF800000> : vector<16x48xf32>
    %133 = vector.multi_reduction <maximumf>, %132, %cst_41 [2] : vector<16x48x48xf32> to vector<16x48xf32>
    %134 = vector.shape_cast %133 : vector<16x48xf32> to vector<16x48x1xf32>
    %135 = vector.broadcast %134 : vector<16x48x1xf32> to vector<16x48x48xf32>
    %136 = arith.subf %132, %135 : vector<16x48x48xf32>
    %137 = math.exp %136 : vector<16x48x48xf32>
    %cst_42 = arith.constant dense<0.000000e+00> : vector<16x48xf32>
    %138 = vector.multi_reduction <add>, %137, %cst_42 [2] : vector<16x48x48xf32> to vector<16x48xf32>
    %139 = vector.shape_cast %138 : vector<16x48xf32> to vector<16x48x1xf32>
    %140 = arith.truncf %137 : vector<16x48x48xf32> to vector<16x48x48xbf16>
    "tpu.trace_start"() <{level = 10 : i32, message = "gqk,gke->gqe"}> : () -> ()
    %cst_43 = arith.constant dense<0.000000e+00> : vector<16x48x16xf32>
    %141 = tpu.matmul %140, %131, %cst_43 {dimension_numbers = #tpu.dot_dimension_numbers<[2], [1], [1], [2], [0, 0, 0, 1, 1, 2], [0], [0]>} : vector<16x48x48xbf16>, vector<16x48x16xbf16>, vector<16x48x16xf32> -> vector<16x48x16xf32>
    "tpu.trace_stop"() : () -> ()
    %142 = tpu.reciprocal %139 {approx = true} : vector<16x48x1xf32> -> vector<16x48x1xf32>
    %143 = vector.broadcast %142 : vector<16x48x1xf32> to vector<16x48x16xf32>
    %144 = arith.mulf %141, %143 : vector<16x48x16xf32>
    %145 = vector.shape_cast %144 : vector<16x48x16xf32> to vector<8x2x48x16xf32>
    %146 = vector.extract_strided_slice %145 {offsets = [0, 0, 0, 0], sizes = [1, 2, 48, 16], strides = [1, 1, 1, 1]} : vector<8x2x48x16xf32> to vector<1x2x48x16xf32>
    %147 = vector.shape_cast %146 : vector<1x2x48x16xf32> to vector<2x48x16xf32>
    %148 = vector.extract_strided_slice %145 {offsets = [1, 0, 0, 0], sizes = [1, 2, 48, 16], strides = [1, 1, 1, 1]} : vector<8x2x48x16xf32> to vector<1x2x48x16xf32>
    %149 = vector.shape_cast %148 : vector<1x2x48x16xf32> to vector<2x48x16xf32>
    %150 = vector.extract_strided_slice %145 {offsets = [2, 0, 0, 0], sizes = [1, 2, 48, 16], strides = [1, 1, 1, 1]} : vector<8x2x48x16xf32> to vector<1x2x48x16xf32>
    %151 = vector.shape_cast %150 : vector<1x2x48x16xf32> to vector<2x48x16xf32>
    %152 = vector.extract_strided_slice %145 {offsets = [3, 0, 0, 0], sizes = [1, 2, 48, 16], strides = [1, 1, 1, 1]} : vector<8x2x48x16xf32> to vector<1x2x48x16xf32>
    %153 = vector.shape_cast %152 : vector<1x2x48x16xf32> to vector<2x48x16xf32>
    %154 = vector.extract_strided_slice %145 {offsets = [4, 0, 0, 0], sizes = [1, 2, 48, 16], strides = [1, 1, 1, 1]} : vector<8x2x48x16xf32> to vector<1x2x48x16xf32>
    %155 = vector.shape_cast %154 : vector<1x2x48x16xf32> to vector<2x48x16xf32>
    %156 = vector.extract_strided_slice %145 {offsets = [5, 0, 0, 0], sizes = [1, 2, 48, 16], strides = [1, 1, 1, 1]} : vector<8x2x48x16xf32> to vector<1x2x48x16xf32>
    %157 = vector.shape_cast %156 : vector<1x2x48x16xf32> to vector<2x48x16xf32>
    %158 = vector.extract_strided_slice %145 {offsets = [6, 0, 0, 0], sizes = [1, 2, 48, 16], strides = [1, 1, 1, 1]} : vector<8x2x48x16xf32> to vector<1x2x48x16xf32>
    %159 = vector.shape_cast %158 : vector<1x2x48x16xf32> to vector<2x48x16xf32>
    %160 = vector.extract_strided_slice %145 {offsets = [7, 0, 0, 0], sizes = [1, 2, 48, 16], strides = [1, 1, 1, 1]} : vector<8x2x48x16xf32> to vector<1x2x48x16xf32>
    %161 = vector.shape_cast %160 : vector<1x2x48x16xf32> to vector<2x48x16xf32>
    %162 = tpu.concatenate %147, %149, %151, %153, %155, %157, %159, %161 in 2 : vector<2x48x16xf32>, vector<2x48x16xf32>, vector<2x48x16xf32>, vector<2x48x16xf32>, vector<2x48x16xf32>, vector<2x48x16xf32>, vector<2x48x16xf32>, vector<2x48x16xf32> -> vector<2x48x128xf32>
    %163 = vector.extract_strided_slice %162 {offsets = [0, 0, 0], sizes = [2, 16, 128], strides = [1, 1, 1]} : vector<2x48x128xf32> to vector<2x16x128xf32>
    %164 = vector.extract_strided_slice %162 {offsets = [0, 16, 0], sizes = [2, 32, 128], strides = [1, 1, 1]} : vector<2x48x128xf32> to vector<2x32x128xf32>
    %165 = vector.shape_cast %163 : vector<2x16x128xf32> to vector<32x128xf32>
    %166 = arith.truncf %165 : vector<32x128xf32> to vector<32x128xbf16>
    %c0_44 = arith.constant 0 : index
    %c0_45 = arith.constant 0 : index
    %c0_46 = arith.constant 0 : index
    %167 = vector.load %arg12[%c0_44, %c0_45, %c0_46] : memref<1x128x128xbf16, #tpu.memory_space<vmem>>, vector<1x128x128xbf16>
    %168 = vector.shape_cast %167 : vector<1x128x128xbf16> to vector<128x128xbf16>
    %cst_47 = arith.constant dense<0.000000e+00> : vector<32x128xf32>
    %169 = tpu.matmul %166, %168, %cst_47 {dimension_numbers = #tpu.dot_dimension_numbers<[1], [0], [0], [1], [0, 0, 1, 1], [], []>} : vector<32x128xbf16>, vector<128x128xbf16>, vector<32x128xf32> -> vector<32x128xf32>
    %c0_48 = arith.constant 0 : index
    %c0_49 = arith.constant 0 : index
    %c0_50 = arith.constant 0 : index
    %170 = vector.load %arg13[%c0_48, %c0_49, %c0_50] : memref<1x1x128xf32, #tpu.memory_space<vmem>>, vector<1x1x128xf32>
    %171 = vector.shape_cast %170 : vector<1x1x128xf32> to vector<1x128xf32>
    %172 = vector.broadcast %171 : vector<1x128xf32> to vector<32x128xf32>
    %173 = arith.addf %169, %172 : vector<32x128xf32>
    %174 = vector.shape_cast %173 : vector<32x128xf32> to vector<2x16x128xf32>
    %175 = vector.broadcast %12 : vector<2x1x128xf32> to vector<2x16x128xf32>
    %176 = arith.mulf %175, %174 : vector<2x16x128xf32>
    %177 = arith.addf %3, %176 : vector<2x16x128xf32>
    %c0_51 = arith.constant 0 : index
    %c0_52 = arith.constant 0 : index
    %c0_53 = arith.constant 0 : index
    %178 = vector.load %arg5[%c0_51, %c0_52, %c0_53] : memref<1x1x128xf32, #tpu.memory_space<vmem>>, vector<1x1x128xf32>
    %179 = vector.shape_cast %178 : vector<1x1x128xf32> to vector<1x128xf32>
    %cst_54 = arith.constant dense<0.000000e+00> : vector<2x16xf32>
    %180 = vector.multi_reduction <add>, %177, %cst_54 [2] : vector<2x16x128xf32> to vector<2x16xf32>
    %181 = vector.shape_cast %180 : vector<2x16xf32> to vector<2x16x1xf32>
    %cst_55 = arith.constant 1.280000e+02 : f32
    %182 = vector.broadcast %cst_55 : f32 to vector<2x16x1xf32>
    %183 = arith.divf %181, %182 : vector<2x16x1xf32>
    %184 = vector.broadcast %183 : vector<2x16x1xf32> to vector<2x16x128xf32>
    %185 = arith.subf %177, %184 : vector<2x16x128xf32>
    %186 = arith.mulf %185, %185 : vector<2x16x128xf32>
    %cst_56 = arith.constant dense<0.000000e+00> : vector<2x16xf32>
    %187 = vector.multi_reduction <add>, %186, %cst_56 [2] : vector<2x16x128xf32> to vector<2x16xf32>
    %188 = vector.shape_cast %187 : vector<2x16xf32> to vector<2x16x1xf32>
    %cst_57 = arith.constant 1.280000e+02 : f32
    %189 = vector.broadcast %cst_57 : f32 to vector<2x16x1xf32>
    %190 = arith.divf %188, %189 : vector<2x16x1xf32>
    %191 = vector.broadcast %183 : vector<2x16x1xf32> to vector<2x16x128xf32>
    %192 = arith.subf %177, %191 : vector<2x16x128xf32>
    %cst_58 = arith.constant 9.99999997E-7 : f32
    %193 = vector.broadcast %cst_58 : f32 to vector<2x16x1xf32>
    %194 = arith.addf %190, %193 : vector<2x16x1xf32>
    %195 = math.rsqrt %194 : vector<2x16x1xf32>
    %196 = vector.broadcast %195 : vector<2x16x1xf32> to vector<2x16x128xf32>
    %197 = arith.mulf %192, %196 : vector<2x16x128xf32>
    %198 = vector.shape_cast %179 : vector<1x128xf32> to vector<1x1x128xf32>
    %199 = vector.broadcast %198 : vector<1x1x128xf32> to vector<2x16x128xf32>
    %200 = arith.mulf %197, %199 : vector<2x16x128xf32>
    %cst_59 = arith.constant 1.000000e+00 : f32
    %201 = vector.broadcast %cst_59 : f32 to vector<2x1x128xf32>
    %202 = arith.addf %201, %16 : vector<2x1x128xf32>
    %203 = vector.broadcast %202 : vector<2x1x128xf32> to vector<2x16x128xf32>
    %204 = arith.mulf %200, %203 : vector<2x16x128xf32>
    %205 = vector.broadcast %14 : vector<2x1x128xf32> to vector<2x16x128xf32>
    %206 = arith.addf %204, %205 : vector<2x16x128xf32>
    %207 = vector.shape_cast %206 : vector<2x16x128xf32> to vector<32x128xf32>
    %208 = arith.truncf %207 : vector<32x128xf32> to vector<32x128xbf16>
    %c0_60 = arith.constant 0 : index
    %c0_61 = arith.constant 0 : index
    %c0_62 = arith.constant 0 : index
    %209 = vector.load %arg16[%c0_60, %c0_61, %c0_62] : memref<1x128x512xbf16, #tpu.memory_space<vmem>>, vector<1x128x512xbf16>
    %210 = vector.shape_cast %209 : vector<1x128x512xbf16> to vector<128x512xbf16>
    %cst_63 = arith.constant dense<0.000000e+00> : vector<32x512xf32>
    %211 = tpu.matmul %208, %210, %cst_63 {dimension_numbers = #tpu.dot_dimension_numbers<[1], [0], [0], [1], [0, 0, 1, 1], [], []>} : vector<32x128xbf16>, vector<128x512xbf16>, vector<32x512xf32> -> vector<32x512xf32>
    %c0_64 = arith.constant 0 : index
    %c0_65 = arith.constant 0 : index
    %c0_66 = arith.constant 0 : index
    %212 = vector.load %arg17[%c0_64, %c0_65, %c0_66] : memref<1x1x512xf32, #tpu.memory_space<vmem>>, vector<1x1x512xf32>
    %213 = vector.shape_cast %212 : vector<1x1x512xf32> to vector<1x512xf32>
    %214 = vector.broadcast %213 : vector<1x512xf32> to vector<32x512xf32>
    %215 = arith.addf %211, %214 : vector<32x512xf32>
    %216 = arith.truncf %215 : vector<32x512xf32> to vector<32x512xbf16>
    %c0_67 = arith.constant 0 : index
    %c0_68 = arith.constant 0 : index
    %c0_69 = arith.constant 0 : index
    %217 = vector.load %arg18[%c0_67, %c0_68, %c0_69] : memref<1x512x128xbf16, #tpu.memory_space<vmem>>, vector<1x512x128xbf16>
    %218 = vector.shape_cast %217 : vector<1x512x128xbf16> to vector<512x128xbf16>
    %cst_70 = arith.constant dense<0.000000e+00> : vector<32x128xf32>
    %219 = tpu.matmul %216, %218, %cst_70 {dimension_numbers = #tpu.dot_dimension_numbers<[1], [0], [0], [1], [0, 0, 1, 1], [], []>} : vector<32x512xbf16>, vector<512x128xbf16>, vector<32x128xf32> -> vector<32x128xf32>
    %c0_71 = arith.constant 0 : index
    %c0_72 = arith.constant 0 : index
    %c0_73 = arith.constant 0 : index
    %220 = vector.load %arg19[%c0_71, %c0_72, %c0_73] : memref<1x1x128xf32, #tpu.memory_space<vmem>>, vector<1x1x128xf32>
    %221 = vector.shape_cast %220 : vector<1x1x128xf32> to vector<1x128xf32>
    %222 = vector.broadcast %221 : vector<1x128xf32> to vector<32x128xf32>
    %223 = arith.addf %219, %222 : vector<32x128xf32>
    %224 = vector.shape_cast %223 : vector<32x128xf32> to vector<2x16x128xf32>
    %225 = vector.broadcast %18 : vector<2x1x128xf32> to vector<2x16x128xf32>
    %226 = arith.mulf %225, %224 : vector<2x16x128xf32>
    %227 = arith.addf %177, %226 : vector<2x16x128xf32>
    %228 = vector.shape_cast %164 : vector<2x32x128xf32> to vector<64x128xf32>
    %229 = arith.truncf %228 : vector<64x128xf32> to vector<64x128xbf16>
    %c0_74 = arith.constant 0 : index
    %c0_75 = arith.constant 0 : index
    %c0_76 = arith.constant 0 : index
    %230 = vector.load %arg14[%c0_74, %c0_75, %c0_76] : memref<1x128x128xbf16, #tpu.memory_space<vmem>>, vector<1x128x128xbf16>
    %231 = vector.shape_cast %230 : vector<1x128x128xbf16> to vector<128x128xbf16>
    %cst_77 = arith.constant dense<0.000000e+00> : vector<64x128xf32>
    %232 = tpu.matmul %229, %231, %cst_77 {dimension_numbers = #tpu.dot_dimension_numbers<[1], [0], [0], [1], [0, 0, 1, 1], [], []>} : vector<64x128xbf16>, vector<128x128xbf16>, vector<64x128xf32> -> vector<64x128xf32>
    %c0_78 = arith.constant 0 : index
    %c0_79 = arith.constant 0 : index
    %c0_80 = arith.constant 0 : index
    %233 = vector.load %arg15[%c0_78, %c0_79, %c0_80] : memref<1x1x128xf32, #tpu.memory_space<vmem>>, vector<1x1x128xf32>
    %234 = vector.shape_cast %233 : vector<1x1x128xf32> to vector<1x128xf32>
    %235 = vector.broadcast %234 : vector<1x128xf32> to vector<64x128xf32>
    %236 = arith.addf %232, %235 : vector<64x128xf32>
    %237 = vector.shape_cast %236 : vector<64x128xf32> to vector<2x32x128xf32>
    %238 = vector.broadcast %24 : vector<2x1x128xf32> to vector<2x32x128xf32>
    %239 = arith.mulf %238, %237 : vector<2x32x128xf32>
    %240 = arith.addf %4, %239 : vector<2x32x128xf32>
    %c0_81 = arith.constant 0 : index
    %c0_82 = arith.constant 0 : index
    %c0_83 = arith.constant 0 : index
    %241 = vector.load %arg7[%c0_81, %c0_82, %c0_83] : memref<1x1x128xf32, #tpu.memory_space<vmem>>, vector<1x1x128xf32>
    %242 = vector.shape_cast %241 : vector<1x1x128xf32> to vector<1x128xf32>
    %cst_84 = arith.constant dense<0.000000e+00> : vector<2x32xf32>
    %243 = vector.multi_reduction <add>, %240, %cst_84 [2] : vector<2x32x128xf32> to vector<2x32xf32>
    %244 = vector.shape_cast %243 : vector<2x32xf32> to vector<2x32x1xf32>
    %cst_85 = arith.constant 1.280000e+02 : f32
    %245 = vector.broadcast %cst_85 : f32 to vector<2x32x1xf32>
    %246 = arith.divf %244, %245 : vector<2x32x1xf32>
    %247 = vector.broadcast %246 : vector<2x32x1xf32> to vector<2x32x128xf32>
    %248 = arith.subf %240, %247 : vector<2x32x128xf32>
    %249 = arith.mulf %248, %248 : vector<2x32x128xf32>
    %cst_86 = arith.constant dense<0.000000e+00> : vector<2x32xf32>
    %250 = vector.multi_reduction <add>, %249, %cst_86 [2] : vector<2x32x128xf32> to vector<2x32xf32>
    %251 = vector.shape_cast %250 : vector<2x32xf32> to vector<2x32x1xf32>
    %cst_87 = arith.constant 1.280000e+02 : f32
    %252 = vector.broadcast %cst_87 : f32 to vector<2x32x1xf32>
    %253 = arith.divf %251, %252 : vector<2x32x1xf32>
    %254 = vector.broadcast %246 : vector<2x32x1xf32> to vector<2x32x128xf32>
    %255 = arith.subf %240, %254 : vector<2x32x128xf32>
    %cst_88 = arith.constant 9.99999997E-7 : f32
    %256 = vector.broadcast %cst_88 : f32 to vector<2x32x1xf32>
    %257 = arith.addf %253, %256 : vector<2x32x1xf32>
    %258 = math.rsqrt %257 : vector<2x32x1xf32>
    %259 = vector.broadcast %258 : vector<2x32x1xf32> to vector<2x32x128xf32>
    %260 = arith.mulf %255, %259 : vector<2x32x128xf32>
    %261 = vector.shape_cast %242 : vector<1x128xf32> to vector<1x1x128xf32>
    %262 = vector.broadcast %261 : vector<1x1x128xf32> to vector<2x32x128xf32>
    %263 = arith.mulf %260, %262 : vector<2x32x128xf32>
    %cst_89 = arith.constant 1.000000e+00 : f32
    %264 = vector.broadcast %cst_89 : f32 to vector<2x1x128xf32>
    %265 = arith.addf %264, %28 : vector<2x1x128xf32>
    %266 = vector.broadcast %265 : vector<2x1x128xf32> to vector<2x32x128xf32>
    %267 = arith.mulf %263, %266 : vector<2x32x128xf32>
    %268 = vector.broadcast %26 : vector<2x1x128xf32> to vector<2x32x128xf32>
    %269 = arith.addf %267, %268 : vector<2x32x128xf32>
    %270 = vector.shape_cast %269 : vector<2x32x128xf32> to vector<64x128xf32>
    %271 = arith.truncf %270 : vector<64x128xf32> to vector<64x128xbf16>
    %c0_90 = arith.constant 0 : index
    %c0_91 = arith.constant 0 : index
    %c0_92 = arith.constant 0 : index
    %272 = vector.load %arg20[%c0_90, %c0_91, %c0_92] : memref<1x128x512xbf16, #tpu.memory_space<vmem>>, vector<1x128x512xbf16>
    %273 = vector.shape_cast %272 : vector<1x128x512xbf16> to vector<128x512xbf16>
    %cst_93 = arith.constant dense<0.000000e+00> : vector<64x512xf32>
    %274 = tpu.matmul %271, %273, %cst_93 {dimension_numbers = #tpu.dot_dimension_numbers<[1], [0], [0], [1], [0, 0, 1, 1], [], []>} : vector<64x128xbf16>, vector<128x512xbf16>, vector<64x512xf32> -> vector<64x512xf32>
    %c0_94 = arith.constant 0 : index
    %c0_95 = arith.constant 0 : index
    %c0_96 = arith.constant 0 : index
    %275 = vector.load %arg21[%c0_94, %c0_95, %c0_96] : memref<1x1x512xf32, #tpu.memory_space<vmem>>, vector<1x1x512xf32>
    %276 = vector.shape_cast %275 : vector<1x1x512xf32> to vector<1x512xf32>
    %277 = vector.broadcast %276 : vector<1x512xf32> to vector<64x512xf32>
    %278 = arith.addf %274, %277 : vector<64x512xf32>
    %279 = arith.truncf %278 : vector<64x512xf32> to vector<64x512xbf16>
    %c0_97 = arith.constant 0 : index
    %c0_98 = arith.constant 0 : index
    %c0_99 = arith.constant 0 : index
    %280 = vector.load %arg22[%c0_97, %c0_98, %c0_99] : memref<1x512x128xbf16, #tpu.memory_space<vmem>>, vector<1x512x128xbf16>
    %281 = vector.shape_cast %280 : vector<1x512x128xbf16> to vector<512x128xbf16>
    %cst_100 = arith.constant dense<0.000000e+00> : vector<64x128xf32>
    %282 = tpu.matmul %279, %281, %cst_100 {dimension_numbers = #tpu.dot_dimension_numbers<[1], [0], [0], [1], [0, 0, 1, 1], [], []>} : vector<64x512xbf16>, vector<512x128xbf16>, vector<64x128xf32> -> vector<64x128xf32>
    %c0_101 = arith.constant 0 : index
    %c0_102 = arith.constant 0 : index
    %c0_103 = arith.constant 0 : index
    %283 = vector.load %arg23[%c0_101, %c0_102, %c0_103] : memref<1x1x128xf32, #tpu.memory_space<vmem>>, vector<1x1x128xf32>
    %284 = vector.shape_cast %283 : vector<1x1x128xf32> to vector<1x128xf32>
    %285 = vector.broadcast %284 : vector<1x128xf32> to vector<64x128xf32>
    %286 = arith.addf %282, %285 : vector<64x128xf32>
    %287 = vector.shape_cast %286 : vector<64x128xf32> to vector<2x32x128xf32>
    %288 = vector.broadcast %30 : vector<2x1x128xf32> to vector<2x32x128xf32>
    %289 = arith.mulf %288, %287 : vector<2x32x128xf32>
    %290 = arith.addf %240, %289 : vector<2x32x128xf32>
    %c0_104 = arith.constant 0 : index
    %c0_105 = arith.constant 0 : index
    %c0_106 = arith.constant 0 : index
    %291 = vector.load %arg24[%c0_104, %c0_105, %c0_106] : memref<2x16x128xf32, #tpu.memory_space<vmem>>, vector<2x16x128xf32>
    tpu.vector_store %arg24[%c0_104, %c0_105, %c0_106], %227 {strides = array<i32>} : memref<2x16x128xf32, #tpu.memory_space<vmem>>, vector<2x16x128xf32>,
    %c0_107 = arith.constant 0 : index
    %c0_108 = arith.constant 0 : index
    %c0_109 = arith.constant 0 : index
    %292 = vector.load %arg25[%c0_107, %c0_108, %c0_109] : memref<2x32x128xf32, #tpu.memory_space<vmem>>, vector<2x32x128xf32>
    tpu.vector_store %arg25[%c0_107, %c0_108, %c0_109], %290 {strides = array<i32>} : memref<2x32x128xf32, #tpu.memory_space<vmem>>, vector<2x32x128xf32>,
    return
  }
  func.func @transform_0(%arg0: i32) -> (i32, i32, i32) {
    %c0_i32 = arith.constant 0 : i32
    %c0_i32_0 = arith.constant 0 : i32
    %c0_i32_1 = arith.constant 0 : i32
    return %arg0, %c0_i32, %c0_i32_0 : i32, i32, i32
  }
  func.func @transform_1(%arg0: i32) -> (i32, i32, i32) {
    %c0_i32 = arith.constant 0 : i32
    %c0_i32_0 = arith.constant 0 : i32
    %c0_i32_1 = arith.constant 0 : i32
    %c0_i32_2 = arith.constant 0 : i32
    return %c0_i32, %c0_i32_0, %c0_i32_1 : i32, i32, i32
  }
  func.func @transform_2(%arg0: i32) -> (i32, i32, i32) {
    %c0_i32 = arith.constant 0 : i32
    %c0_i32_0 = arith.constant 0 : i32
    %c0_i32_1 = arith.constant 0 : i32
    %c0_i32_2 = arith.constant 0 : i32
    return %c0_i32, %c0_i32_0, %c0_i32_1 : i32, i32, i32
  }
  func.func @transform_3(%arg0: i32) -> (i32, i32, i32) {
    %c0_i32 = arith.constant 0 : i32
    %c0_i32_0 = arith.constant 0 : i32
    %c0_i32_1 = arith.constant 0 : i32
    return %arg0, %c0_i32, %c0_i32_0 : i32, i32, i32
  }
  func.func @transform_4(%arg0: i32) -> (i32, i32, i32) {
    %c0_i32 = arith.constant 0 : i32
    %c0_i32_0 = arith.constant 0 : i32
    %c0_i32_1 = arith.constant 0 : i32
    return %arg0, %c0_i32, %c0_i32_0 : i32, i32, i32
  }
  func.func @transform_5(%arg0: i32) -> (i32, i32, i32) {
    %c0_i32 = arith.constant 0 : i32
    %c0_i32_0 = arith.constant 0 : i32
    %c0_i32_1 = arith.constant 0 : i32
    return %arg0, %c0_i32, %c0_i32_0 : i32, i32, i32
  }
  func.func @transform_6(%arg0: i32) -> (i32, i32, i32) {
    %c0_i32 = arith.constant 0 : i32
    %c0_i32_0 = arith.constant 0 : i32
    %c0_i32_1 = arith.constant 0 : i32
    return %arg0, %c0_i32, %c0_i32_0 : i32, i32, i32
  }
  func.func @transform_7(%arg0: i32) -> (i32, i32, i32) {
    %c0_i32 = arith.constant 0 : i32
    %c0_i32_0 = arith.constant 0 : i32
    %c0_i32_1 = arith.constant 0 : i32
    return %arg0, %c0_i32, %c0_i32_0 : i32, i32, i32
  }
  func.func @transform_8(%arg0: i32) -> (i32, i32, i32) {
    %c0_i32 = arith.constant 0 : i32
    %c0_i32_0 = arith.constant 0 : i32
    %c0_i32_1 = arith.constant 0 : i32
    return %arg0, %c0_i32, %c0_i32_0 : i32, i32, i32
  }
  func.func @transform_9(%arg0: i32) -> (i32, i32, i32) {
    %c0_i32 = arith.constant 0 : i32
    %c0_i32_0 = arith.constant 0 : i32
    %c0_i32_1 = arith.constant 0 : i32
    return %arg0, %c0_i32, %c0_i32_0 : i32, i32, i32
  }
  func.func @transform_10(%arg0: i32) -> (i32, i32, i32) {
    %c0_i32 = arith.constant 0 : i32
    %c0_i32_0 = arith.constant 0 : i32
    %c0_i32_1 = arith.constant 0 : i32
    return %arg0, %c0_i32, %c0_i32_0 : i32, i32, i32
  }
  func.func @transform_11(%arg0: i32) -> (i32, i32, i32) {
    %c0_i32 = arith.constant 0 : i32
    %c0_i32_0 = arith.constant 0 : i32
    %c0_i32_1 = arith.constant 0 : i32
    return %arg0, %c0_i32, %c0_i32_0 : i32, i32, i32
  }
  func.func @transform_12(%arg0: i32) -> (i32, i32, i32) {
    %c0_i32 = arith.constant 0 : i32
    %c0_i32_0 = arith.constant 0 : i32
    %c0_i32_1 = arith.constant 0 : i32
    return %arg0, %c0_i32, %c0_i32_0 : i32, i32, i32
  }
  func.func @transform_13(%arg0: i32) -> (i32, i32, i32) {
    %c0_i32 = arith.constant 0 : i32
    %c0_i32_0 = arith.constant 0 : i32
    %c0_i32_1 = arith.constant 0 : i32
    return %arg0, %c0_i32, %c0_i32_0 : i32, i32, i32
  }
  func.func @transform_14(%arg0: i32) -> (i32, i32, i32) {
    %c0_i32 = arith.constant 0 : i32
    %c0_i32_0 = arith.constant 0 : i32
    %c0_i32_1 = arith.constant 0 : i32
    return %arg0, %c0_i32, %c0_i32_0 : i32, i32, i32
  }
  func.func @transform_15(%arg0: i32) -> (i32, i32, i32) {
    %c0_i32 = arith.constant 0 : i32
    %c0_i32_0 = arith.constant 0 : i32
    %c0_i32_1 = arith.constant 0 : i32
    return %arg0, %c0_i32, %c0_i32_0 : i32, i32, i32
  }
  func.func @transform_16(%arg0: i32) -> (i32, i32, i32) {
    %c0_i32 = arith.constant 0 : i32
    %c0_i32_0 = arith.constant 0 : i32
    %c0_i32_1 = arith.constant 0 : i32
    return %arg0, %c0_i32, %c0_i32_0 : i32, i32, i32
  }
  func.func @transform_17(%arg0: i32) -> (i32, i32, i32) {
    %c0_i32 = arith.constant 0 : i32
    %c0_i32_0 = arith.constant 0 : i32
    %c0_i32_1 = arith.constant 0 : i32
    return %arg0, %c0_i32, %c0_i32_0 : i32, i32, i32
  }
  func.func @transform_18(%arg0: i32) -> (i32, i32, i32) {
    %c0_i32 = arith.constant 0 : i32
    %c0_i32_0 = arith.constant 0 : i32
    %c0_i32_1 = arith.constant 0 : i32
    return %arg0, %c0_i32, %c0_i32_0 : i32, i32, i32
  }
  func.func @transform_19(%arg0: i32) -> (i32, i32, i32) {
    %c0_i32 = arith.constant 0 : i32
    %c0_i32_0 = arith.constant 0 : i32
    %c0_i32_1 = arith.constant 0 : i32
    return %arg0, %c0_i32, %c0_i32_0 : i32, i32, i32
  }
  func.func @transform_20(%arg0: i32) -> (i32, i32, i32) {
    %c0_i32 = arith.constant 0 : i32
    %c0_i32_0 = arith.constant 0 : i32
    %c0_i32_1 = arith.constant 0 : i32
    return %arg0, %c0_i32, %c0_i32_0 : i32, i32, i32
  }
  func.func @transform_21(%arg0: i32) -> (i32, i32, i32) {
    %c0_i32 = arith.constant 0 : i32
    %c0_i32_0 = arith.constant 0 : i32
    %c0_i32_1 = arith.constant 0 : i32
    return %arg0, %c0_i32, %c0_i32_0 : i32, i32, i32
  }
  func.func @transform_22(%arg0: i32) -> (i32, i32, i32) {
    %c0_i32 = arith.constant 0 : i32
    %c0_i32_0 = arith.constant 0 : i32
    %c0_i32_1 = arith.constant 0 : i32
    return %arg0, %c0_i32, %c0_i32_0 : i32, i32, i32
  }
  func.func @transform_23(%arg0: i32) -> (i32, i32, i32) {
    %c0_i32 = arith.constant 0 : i32
    %c0_i32_0 = arith.constant 0 : i32
    %c0_i32_1 = arith.constant 0 : i32
    %c0_i32_2 = arith.constant 0 : i32
    return %c0_i32, %c0_i32_0, %c0_i32_1 : i32, i32, i32
  }
  func.func @transform_24(%arg0: i32) -> (i32, i32, i32) {
    %c0_i32 = arith.constant 0 : i32
    %c0_i32_0 = arith.constant 0 : i32
    %c0_i32_1 = arith.constant 0 : i32
    %c0_i32_2 = arith.constant 0 : i32
    return %c0_i32, %c0_i32_0, %c0_i32_1 : i32, i32, i32
  }
}

</mosaic_0001>

<llo_original>
// kernel: _dit_forward.5
$region0: #{_dit_forward.5}
  #allocation0 [shape = 'u32[]', space=smem, size = 0x4, offset = 0x4, fixed_abs, tag = 'smem constant byte address 0x4 - core index']
  #allocation1 [shape = 'u32[72,128]{1,0:T(1,128)}', space=vmem, size = 0x9000, scoped, tag = 'internal scratch']
  %s0 = inlined_call_operand.vmem [shape: f32[2,16,128], index: 0, kind: input, shape index: {}]
  %s1 = inlined_call_operand.vmem [shape: f32[2,32,128], index: 1, kind: input, shape index: {}]
  %s2 = inlined_call_operand.hbm [shape: bf16[128,256], index: 2, kind: input, shape index: {}]
  %s3 = inlined_call_operand.vmem [shape: f32[1,256], index: 3, kind: input, shape index: {}]
  %s4 = inlined_call_operand.hbm [shape: bf16[128,128], index: 4, kind: input, shape index: {}]
  %s5 = inlined_call_operand.vmem [shape: f32[1,128], index: 5, kind: input, shape index: {}]
  %s6 = inlined_call_operand.vmem [shape: f32[2,32,128], index: 6, kind: output, shape index: {}]
  %s7 = sld [smem:[#allocation0]]
  $region42: #{_dit_forward.5} parent=0
    _
  %s9 = ssub.s32 1, %s7
  %s10 = scalar_select 0, %s9, %s7
  $region1: #{_dit_forward.5} parent=0
    #allocation2 [shape = 'u8[65536]{0}', space=vmem, size = 0x10000, scoped, tag = 'input window, operand 2, single buffered']
    #allocation3 [shape = 's32[1]{0}', space=sflag, size = 0x4, scoped, tag = 'scoped memory for _dit_forward.5']
    #allocation4 [shape = 'u8[32768]{0}', space=vmem, size = 0x8000, scoped, tag = 'input window, operand 4, single buffered']
    #allocation5 [shape = 's32[1]{0}', space=sflag, size = 0x4, scoped, tag = 'scoped memory for _dit_forward.5']
    %11 = vsyncpa [#allocation3], 0
    %12 = vsyncpa [#allocation5], 0
    // Predicated region
    $region2: #{_dit_forward.5} parent=1 // pred_check
      _
    $region3: #{_dit_forward.5} parent=1 // pred_check_branch
      %14 = sbr.rel (0) target = $region5
    $region4: #{_dit_forward.5} parent=1 // pred_region
      _
    $region5: #{_dit_forward.5} parent=1 // pred_fallthru
      _
    // Predicated region
    $region6: #{_dit_forward.5} parent=1 // pred_check
      _
    $region7: #{_dit_forward.5} parent=1 // pred_check_branch
      %16 = sbr.rel (0) target = $region9
    $region8: #{_dit_forward.5} parent=1 // pred_region
      _
    $region9: #{_dit_forward.5} parent=1 // pred_fallthru
      _
    // Predicated region
    $region10: #{_dit_forward.5} parent=1 // pred_check
      _
    $region11: #{_dit_forward.5} parent=1 // pred_check_branch
      %18 = sbr.rel (0) target = $region13
    $region12: #{_dit_forward.5} parent=1 // pred_region
      %20 = vsyncadd [#allocation3], 0
      %s21 = sshll.u32 %s2, 4
      %s22 = int_to_ptr.hbm [resolvable:$true] %s21
      %s23 = sshll.u32 [#allocation2], 4
      %s24 = int_to_ptr.vmem [resolvable:$true] %s23
      %29 = dma.hbm_to_vmem [thread:$0]  %s22, 2048, %s24, [#allocation3], 128, 128, 8
    $region13: #{_dit_forward.5} parent=1 // pred_fallthru
      _
    // Predicated region
    $region14: #{_dit_forward.5} parent=1 // pred_check
      _
    $region15: #{_dit_forward.5} parent=1 // pred_check_branch
      %31 = sbr.rel (0) target = $region17
    $region16: #{_dit_forward.5} parent=1 // pred_region
      _
    $region17: #{_dit_forward.5} parent=1 // pred_fallthru
      _
    // Predicated region
    $region18: #{_dit_forward.5} parent=1 // pred_check
      _
    $region19: #{_dit_forward.5} parent=1 // pred_check_branch
      %33 = sbr.rel (0) target = $region21
    $region20: #{_dit_forward.5} parent=1 // pred_region
      %35 = vsyncadd [#allocation5], 0
      %s36 = sshll.u32 %s4, 4
      %s37 = int_to_ptr.hbm [resolvable:$true] %s36
      %s38 = sshll.u32 [#allocation4], 4
      %s39 = int_to_ptr.vmem [resolvable:$true] %s38
      %44 = dma.hbm_to_vmem [thread:$0]  %s37, 1024, %s39, [#allocation5], 64, 64, 4
    $region21: #{_dit_forward.5} parent=1 // pred_fallthru
      _
    // Predicated region
    $region22: #{_dit_forward.5} parent=1 // pred_check
      _
    $region23: #{_dit_forward.5} parent=1 // pred_check_branch
      %46 = sbr.rel (0) target = $region25
    $region24: #{_dit_forward.5} parent=1 // pred_region
      _
    $region25: #{_dit_forward.5} parent=1 // pred_fallthru
      _
    // Predicated region
    $region26: #{_dit_forward.5} parent=1 // pred_check
      _
    $region27: #{_dit_forward.5} parent=1 // pred_check_branch
      %48 = sbr.rel (0) target = $region29
    $region28: #{_dit_forward.5} parent=1 // pred_region
      %50 = dma.done [#allocation3], 2048
    $region29: #{_dit_forward.5} parent=1 // pred_fallthru
      _
    // Predicated region
    $region30: #{_dit_forward.5} parent=1 // pred_check
      _
    $region31: #{_dit_forward.5} parent=1 // pred_check_branch
      %52 = sbr.rel (0) target = $region33
    $region32: #{_dit_forward.5} parent=1 // pred_region
      %54 = dma.done [#allocation5], 1024
    $region33: #{_dit_forward.5} parent=1 // pred_fallthru
      _
    %v55 = vld [vmem:[%s0] sm:$0xff]
    %v56 = vld [vmem:[%s0 + $0x8] sm:$0xff]
    %v57 = vld [vmem:[%s0 + $0x10] sm:$0xff]
    %v58 = vld [vmem:[%s0 + $0x18] sm:$0xff]
    %v59 = vld [vmem:[%s1] sm:$0xff]
    %v60 = vld [vmem:[%s1 + $0x8] sm:$0xff]
    %v61 = vld [vmem:[%s1 + $0x10] sm:$0xff]
    %v62 = vld [vmem:[%s1 + $0x18] sm:$0xff]
    %v63 = vld [vmem:[%s1 + $0x20] sm:$0xff]
    %v64 = vld [vmem:[%s1 + $0x28] sm:$0xff]
    %v65 = vld [vmem:[%s1 + $0x30] sm:$0xff]
    %v66 = vld [vmem:[%s1 + $0x38] sm:$0xff]
    %v67 = vadd.f32 %v55, %v56
    %v68 = vrot.slane %v67, 4
    %v69 = vadd.f32 %v67, %v68
    %v70 = vrot.slane %v69, 2
    %v71 = vadd.f32 %v69, %v70
    %v72 = vrot.slane %v71, 1
    %v73 = vadd.f32 %v71, %v72
    %v74 = vadd.f32 %v57, %v58
    %v75 = vrot.slane %v74, 4
    %v76 = vadd.f32 %v74, %v75
    %v77 = vrot.slane %v76, 2
    %v78 = vadd.f32 %v76, %v77
    %v79 = vrot.slane %v78, 1
    %v80 = vadd.f32 %v78, %v79
    %v81 = vrcp.pop 16.0
    %v82 = vmul.f32 16.0, %v81
    %v83 = vsub.f32 1.0, %v82
    %v84 = vmul.f32 %v81, %v83
    %v85 = vadd.f32 %v81, %v84
    %vm86 = vweird.f32 %v81
    %v87 = vsel %vm86, %v81, %v85
    %v88 = vmul.f32 %v73, %v87
    %v89 = vmul.f32 %v80, %v87
    %v90 = vxor.u32 %v88, 2147483648
    %v91 = vxor.u32 %v89, 2147483648
    %v92 = vmul.f32 %v90, 1.442695
    %v93 = vpow.pop %v92
    %v94 = vmul.f32 %v91, 1.442695
    %v95 = vpow.pop %v94
    %v96 = vadd.f32 %v93, 1.0
    %v97 = vadd.f32 %v95, 1.0
    %v98 = vrcp.pop %v96
    %v99 = vmul.f32 %v96, %v98
    %v100 = vsub.f32 1.0, %v99
    %v101 = vmul.f32 %v98, %v100
    %v102 = vadd.f32 %v98, %v101
    %vm103 = vweird.f32 %v96
    %vm104 = vweird.f32 %v98
    %vm105 = vmor %vm103, %vm104
    %v106 = vsel %vm105, %v98, %v102
    %v107 = vand.u32 2147483647, %v96
    %vm108 = vcmp.eq.f32.partialorder %v107, 8.507059e+37
    %v109 = vand.u32 %v96, 2147483648
    %v110 = vor.u32 1.1754944e-38, %v109
    %v111 = vsel %vm108, %v110, %v106
    %v112 = vmul.f32 1.0, %v111
    %v113 = vrcp.pop %v97
    %v114 = vmul.f32 %v97, %v113
    %v115 = vsub.f32 1.0, %v114
    %v116 = vmul.f32 %v113, %v115
    %v117 = vadd.f32 %v113, %v116
    %vm118 = vweird.f32 %v97
    %vm119 = vweird.f32 %v113
    %vm120 = vmor %vm118, %vm119
    %v121 = vsel %vm120, %v113, %v117
    %v122 = vand.u32 2147483647, %v97
    %vm123 = vcmp.eq.f32.partialorder %v122, 8.507059e+37
    %v124 = vand.u32 %v97, 2147483648
    %v125 = vor.u32 1.1754944e-38, %v124
    %v126 = vsel %vm123, %v125, %v121
    %v127 = vmul.f32 1.0, %v126
    %v128 = vmul.f32 %v88, %v112
    %v129 = vmul.f32 %v89, %v127
    %v130 = vpack.c.bf16 %v128, %v128
    %v131 = vpack.c.bf16 %v129, %v129
    %v132 = vld [vmem:[#allocation2] sm:$0xff]
    %v133 = vld [vmem:[#allocation2 + $0x8] sm:$0xff]
    %v134 = vld [vmem:[#allocation2 + $0x10] sm:$0xff]
    %v135 = vld [vmem:[#allocation2 + $0x18] sm:$0xff]
    %v136 = vld [vmem:[#allocation2 + $0x20] sm:$0xff]
    %v137 = vld [vmem:[#allocation2 + $0x28] sm:$0xff]
    %v138 = vld [vmem:[#allocation2 + $0x30] sm:$0xff]
    %v139 = vld [vmem:[#allocation2 + $0x38] sm:$0xff]
    %v140 = vld [vmem:[#allocation2 + $0x40] sm:$0xff]
    %v141 = vld [vmem:[#allocation2 + $0x48] sm:$0xff]
    %v142 = vld [vmem:[#allocation2 + $0x50] sm:$0xff]
    %v143 = vld [vmem:[#allocation2 + $0x58] sm:$0xff]
    %v144 = vld [vmem:[#allocation2 + $0x60] sm:$0xff]
    %v145 = vld [vmem:[#allocation2 + $0x68] sm:$0xff]
    %v146 = vld [vmem:[#allocation2 + $0x70] sm:$0xff]
    %v147 = vld [vmem:[#allocation2 + $0x78] sm:$0xff]
    %v148 = vld [vmem:[%s3] sm:$0x3]
    %v150 = vperm.slane %v148, 0
    %v151 = vperm.slane %v148, 1
    %v156 = vunpack.c.l.b16 %v130
    %v157 = vunpack.c.l.b16 %v131
    %vm158 = vcmask 1041409
    %v159 = vsel %vm158, %v157, %v156
    %v160 = vpack.c.b16 %v159, %v159
    %v178 = vunpack.c.l.b16 %v132
    %v179 = vunpack.c.h.b16 %v132
    %v180 = vunpack.c.l.b16 %v133
    %v181 = vunpack.c.h.b16 %v133
    %v182 = vunpack.c.l.b16 %v134
    %v183 = vunpack.c.h.b16 %v134
    %v184 = vunpack.c.l.b16 %v135
    %v185 = vunpack.c.h.b16 %v135
    %v186 = vunpack.c.l.b16 %v136
    %v187 = vunpack.c.h.b16 %v136
    %v188 = vunpack.c.l.b16 %v137
    %v189 = vunpack.c.h.b16 %v137
    %v190 = vunpack.c.l.b16 %v138
    %v191 = vunpack.c.h.b16 %v138
    %v192 = vunpack.c.l.b16 %v139
    %v193 = vunpack.c.h.b16 %v139
    %v194 = vunpack.c.l.b16 %v140
    %v195 = vunpack.c.h.b16 %v140
    %v196 = vunpack.c.l.b16 %v141
    %v197 = vunpack.c.h.b16 %v141
    %v198 = vunpack.c.l.b16 %v142
    %v199 = vunpack.c.h.b16 %v142
    %v200 = vunpack.c.l.b16 %v143
    %v201 = vunpack.c.h.b16 %v143
    %v202 = vunpack.c.l.b16 %v144
    %v203 = vunpack.c.h.b16 %v144
    %v204 = vunpack.c.l.b16 %v145
    %v205 = vunpack.c.h.b16 %v145
    %v206 = vunpack.c.l.b16 %v146
    %v207 = vunpack.c.h.b16 %v146
    %v208 = vunpack.c.l.b16 %v147
    %v209 = vunpack.c.h.b16 %v147
    %v210 = vpack.c.b16 %v180, %v178
    %v211 = vpack.c.b16 %v181, %v179
    %v212 = vpack.c.b16 %v184, %v182
    %v213 = vpack.c.b16 %v185, %v183
    %v214 = vpack.c.b16 %v188, %v186
    %v215 = vpack.c.b16 %v189, %v187
    %v216 = vpack.c.b16 %v192, %v190
    %v217 = vpack.c.b16 %v193, %v191
    %v218 = vpack.c.b16 %v196, %v194
    %v219 = vpack.c.b16 %v197, %v195
    %v220 = vpack.c.b16 %v200, %v198
    %v221 = vpack.c.b16 %v201, %v199
    %v222 = vpack.c.b16 %v204, %v202
    %v223 = vpack.c.b16 %v205, %v203
    %v224 = vpack.c.b16 %v208, %v206
    %v225 = vpack.c.b16 %v209, %v207
    %242 = vmatpush.bf16.msra.mxu0 %v224
    %243 = vmatpush.bf16.msra.mxu0 %v222
    %244 = vmatpush.bf16.msra.mxu0 %v220
    %245 = vmatpush.bf16.msra.mxu0 %v218
    %246 = vmatpush.bf16.msra.mxu0 %v216
    %247 = vmatpush.bf16.msra.mxu0 %v214
    %248 = vmatpush.bf16.msra.mxu0 %v212
    %249 = vmatpush.bf16.msra.mxu0 %v210
    %250 = vmatmul.bf16.gmra.mxu0 %v160
    %v251 = vpop.f32.mrf.mxu0
    %v252 = vadd.f32 %v150, %v251
    %v253 = vpop.f32.mrf.mxu0
    %254 = vdwg.mxu0
    %255 = vmatpush.bf16.msra.mxu0 %v225
    %256 = vmatpush.bf16.msra.mxu0 %v223
    %257 = vmatpush.bf16.msra.mxu0 %v221
    %258 = vmatpush.bf16.msra.mxu0 %v219
    %259 = vmatpush.bf16.msra.mxu0 %v217
    %260 = vmatpush.bf16.msra.mxu0 %v215
    %261 = vmatpush.bf16.msra.mxu0 %v213
    %262 = vmatpush.bf16.msra.mxu0 %v211
    %263 = vmatmul.bf16.gmra.mxu0 %v160
    %v264 = vpop.f32.mrf.mxu0
    %v265 = vadd.f32 %v151, %v264
    %v266 = vpop.f32.mrf.mxu0
    %267 = vdwg.mxu0
    %v269 = vrot.slane %v252, 1
    %v271 = vrot.slane %v265, 1
    %273 = vadd.xlane.f32.xlu0 %v59
    %v274 = vpop.xlane.xlu0 %273
    %275 = vadd.xlane.f32.xlu0 %v60
    %v276 = vpop.xlane.xlu0 %275
    %277 = vadd.xlane.f32.xlu0 %v61
    %v278 = vpop.xlane.xlu0 %277
    %279 = vadd.xlane.f32.xlu0 %v62
    %v280 = vpop.xlane.xlu0 %279
    %281 = vadd.xlane.f32.xlu0 %v63
    %v282 = vpop.xlane.xlu0 %281
    %283 = vadd.xlane.f32.xlu0 %v64
    %v284 = vpop.xlane.xlu0 %283
    %285 = vadd.xlane.f32.xlu0 %v65
    %v286 = vpop.xlane.xlu0 %285
    %287 = vadd.xlane.f32.xlu0 %v66
    %v288 = vpop.xlane.xlu0 %287
    %v289 = vrcp.pop 128.0
    %v290 = vmul.f32 128.0, %v289
    %v291 = vsub.f32 1.0, %v290
    %v292 = vmul.f32 %v289, %v291
    %v293 = vadd.f32 %v289, %v292
    %vm294 = vweird.f32 %v289
    %v295 = vsel %vm294, %v289, %v293
    %v296 = vmul.f32 %v274, %v295
    %v297 = vmul.f32 %v276, %v295
    %v298 = vmul.f32 %v278, %v295
    %v299 = vmul.f32 %v280, %v295
    %v300 = vmul.f32 %v282, %v295
    %v301 = vmul.f32 %v284, %v295
    %v302 = vmul.f32 %v286, %v295
    %v303 = vmul.f32 %v288, %v295
    %v304 = vsub.f32 %v59, %v296
    %v305 = vsub.f32 %v60, %v297
    %v306 = vsub.f32 %v61, %v298
    %v307 = vsub.f32 %v62, %v299
    %v308 = vsub.f32 %v63, %v300
    %v309 = vsub.f32 %v64, %v301
    %v310 = vsub.f32 %v65, %v302
    %v311 = vsub.f32 %v66, %v303
    %v312 = vmul.f32 %v304, %v304
    %v313 = vmul.f32 %v305, %v305
    %v314 = vmul.f32 %v306, %v306
    %v315 = vmul.f32 %v307, %v307
    %v316 = vmul.f32 %v308, %v308
    %v317 = vmul.f32 %v309, %v309
    %v318 = vmul.f32 %v310, %v310
    %v319 = vmul.f32 %v311, %v311
    %320 = vadd.xlane.f32.xlu0 %v312
    %v321 = vpop.xlane.xlu0 %320
    %322 = vadd.xlane.f32.xlu0 %v313
    %v323 = vpop.xlane.xlu0 %322
    %324 = vadd.xlane.f32.xlu0 %v314
    %v325 = vpop.xlane.xlu0 %324
    %326 = vadd.xlane.f32.xlu0 %v315
    %v327 = vpop.xlane.xlu0 %326
    %328 = vadd.xlane.f32.xlu0 %v316
    %v329 = vpop.xlane.xlu0 %328
    %330 = vadd.xlane.f32.xlu0 %v317
    %v331 = vpop.xlane.xlu0 %330
    %332 = vadd.xlane.f32.xlu0 %v318
    %v333 = vpop.xlane.xlu0 %332
    %334 = vadd.xlane.f32.xlu0 %v319
    %v335 = vpop.xlane.xlu0 %334
    %v336 = vmul.f32 %v321, %v295
    %v337 = vmul.f32 %v323, %v295
    %v338 = vmul.f32 %v325, %v295
    %v339 = vmul.f32 %v327, %v295
    %v340 = vmul.f32 %v329, %v295
    %v341 = vmul.f32 %v331, %v295
    %v342 = vmul.f32 %v333, %v295
    %v343 = vmul.f32 %v335, %v295
    %v344 = vadd.f32 %v336, 1e-06
    %v345 = vadd.f32 %v337, 1e-06
    %v346 = vadd.f32 %v338, 1e-06
    %v347 = vadd.f32 %v339, 1e-06
    %v348 = vadd.f32 %v340, 1e-06
    %v349 = vadd.f32 %v341, 1e-06
    %v350 = vadd.f32 %v342, 1e-06
    %v351 = vadd.f32 %v343, 1e-06
    %v352 = vrsqrt.pop %v344
    %v353 = vmul.f32 %v352, %v344
    %v354 = vmul.f32 %v353, %v352
    %v355 = vmul.f32 0.5, %v354
    %v356 = vsub.f32 1.5, %v355
    %v357 = vmul.f32 %v352, %v356
    %vm358 = vweird.f32 %v344
    %vm359 = vweird.f32 %v352
    %vm360 = vmor %vm358, %vm359
    %v361 = vsel %vm360, %v352, %v357
    %v362 = vrsqrt.pop %v345
    %v363 = vmul.f32 %v362, %v345
    %v364 = vmul.f32 %v363, %v362
    %v365 = vmul.f32 0.5, %v364
    %v366 = vsub.f32 1.5, %v365
    %v367 = vmul.f32 %v362, %v366
    %vm368 = vweird.f32 %v345
    %vm369 = vweird.f32 %v362
    %vm370 = vmor %vm368, %vm369
    %v371 = vsel %vm370, %v362, %v367
    %v372 = vrsqrt.pop %v346
    %v373 = vmul.f32 %v372, %v346
    %v374 = vmul.f32 %v373, %v372
    %v375 = vmul.f32 0.5, %v374
    %v376 = vsub.f32 1.5, %v375
    %v377 = vmul.f32 %v372, %v376
    %vm378 = vweird.f32 %v346
    %vm379 = vweird.f32 %v372
    %vm380 = vmor %vm378, %vm379
    %v381 = vsel %vm380, %v372, %v377
    %v382 = vrsqrt.pop %v347
    %v383 = vmul.f32 %v382, %v347
    %v384 = vmul.f32 %v383, %v382
    %v385 = vmul.f32 0.5, %v384
    %v386 = vsub.f32 1.5, %v385
    %v387 = vmul.f32 %v382, %v386
    %vm388 = vweird.f32 %v347
    %vm389 = vweird.f32 %v382
    %vm390 = vmor %vm388, %vm389
    %v391 = vsel %vm390, %v382, %v387
    %v392 = vrsqrt.pop %v348
    %v393 = vmul.f32 %v392, %v348
    %v394 = vmul.f32 %v393, %v392
    %v395 = vmul.f32 0.5, %v394
    %v396 = vsub.f32 1.5, %v395
    %v397 = vmul.f32 %v392, %v396
    %vm398 = vweird.f32 %v348
    %vm399 = vweird.f32 %v392
    %vm400 = vmor %vm398, %vm399
    %v401 = vsel %vm400, %v392, %v397
    %v402 = vrsqrt.pop %v349
    %v403 = vmul.f32 %v402, %v349
    %v404 = vmul.f32 %v403, %v402
    %v405 = vmul.f32 0.5, %v404
    %v406 = vsub.f32 1.5, %v405
    %v407 = vmul.f32 %v402, %v406
    %vm408 = vweird.f32 %v349
    %vm409 = vweird.f32 %v402
    %vm410 = vmor %vm408, %vm409
    %v411 = vsel %vm410, %v402, %v407
    %v412 = vrsqrt.pop %v350
    %v413 = vmul.f32 %v412, %v350
    %v414 = vmul.f32 %v413, %v412
    %v415 = vmul.f32 0.5, %v414
    %v416 = vsub.f32 1.5, %v415
    %v417 = vmul.f32 %v412, %v416
    %vm418 = vweird.f32 %v350
    %vm419 = vweird.f32 %v412
    %vm420 = vmor %vm418, %vm419
    %v421 = vsel %vm420, %v412, %v417
    %v422 = vrsqrt.pop %v351
    %v423 = vmul.f32 %v422, %v351
    %v424 = vmul.f32 %v423, %v422
    %v425 = vmul.f32 0.5, %v424
    %v426 = vsub.f32 1.5, %v425
    %v427 = vmul.f32 %v422, %v426
    %vm428 = vweird.f32 %v351
    %vm429 = vweird.f32 %v422
    %vm430 = vmor %vm428, %vm429
    %v431 = vsel %vm430, %v422, %v427
    %v432 = vmul.f32 %v304, %v361
    %v433 = vmul.f32 %v305, %v371
    %v434 = vmul.f32 %v306, %v381
    %v435 = vmul.f32 %v307, %v391
    %v436 = vmul.f32 %v308, %v401
    %v437 = vmul.f32 %v309, %v411
    %v438 = vmul.f32 %v310, %v421
    %v439 = vmul.f32 %v311, %v431
    %v440 = vadd.f32 %v265, 1.0
    %v441 = vadd.f32 %v271, 1.0
    %v444 = vperm.slane %v440, 0
    %v445 = vperm.slane %v441, 0
    %v448 = vmul.f32 %v432, %v444
    %v449 = vmul.f32 %v433, %v444
    %v450 = vmul.f32 %v434, %v444
    %v451 = vmul.f32 %v435, %v444
    %v452 = vmul.f32 %v436, %v445
    %v453 = vmul.f32 %v437, %v445
    %v454 = vmul.f32 %v438, %v445
    %v455 = vmul.f32 %v439, %v445
    %v456 = vperm.slane %v252, 0
    %v457 = vperm.slane %v269, 0
    %v460 = vadd.f32 %v448, %v456
    %v461 = vadd.f32 %v449, %v456
    %v462 = vadd.f32 %v450, %v456
    %v463 = vadd.f32 %v451, %v456
    %v464 = vadd.f32 %v452, %v457
    %v465 = vadd.f32 %v453, %v457
    %v466 = vadd.f32 %v454, %v457
    %v467 = vadd.f32 %v455, %v457
    %v468 = vpack.c.bf16 %v461, %v460
    %v469 = vpack.c.bf16 %v463, %v462
    %v470 = vpack.c.bf16 %v465, %v464
    %v471 = vpack.c.bf16 %v467, %v466
    %v472 = vld [vmem:[#allocation4] sm:$0xf]
    %v473 = vld [vmem:[#allocation4 + $0x4] sm:$0xf]
    %v474 = vld [vmem:[#allocation4 + $0x8] sm:$0xf]
    %v475 = vld [vmem:[#allocation4 + $0xc] sm:$0xf]
    %v476 = vld [vmem:[#allocation4 + $0x10] sm:$0xf]
    %v477 = vld [vmem:[#allocation4 + $0x14] sm:$0xf]
    %v478 = vld [vmem:[#allocation4 + $0x18] sm:$0xf]
    %v479 = vld [vmem:[#allocation4 + $0x1c] sm:$0xf]
    %v480 = vld [vmem:[#allocation4 + $0x20] sm:$0xf]
    %v481 = vld [vmem:[#allocation4 + $0x24] sm:$0xf]
    %v482 = vld [vmem:[#allocation4 + $0x28] sm:$0xf]
    %v483 = vld [vmem:[#allocation4 + $0x2c] sm:$0xf]
    %v484 = vld [vmem:[#allocation4 + $0x30] sm:$0xf]
    %v485 = vld [vmem:[#allocation4 + $0x34] sm:$0xf]
    %v486 = vld [vmem:[#allocation4 + $0x38] sm:$0xf]
    %v487 = vld [vmem:[#allocation4 + $0x3c] sm:$0xf]
    %v488 = vld [vmem:[%s5] sm:$0x1]
    %v490 = vperm.slane %v488, 0
    %v508 = vunpack.c.l.b16 %v472
    %v509 = vunpack.c.l.b16 %v473
    %v510 = vunpack.c.l.b16 %v474
    %v511 = vunpack.c.l.b16 %v475
    %v512 = vunpack.c.l.b16 %v476
    %v513 = vunpack.c.l.b16 %v477
    %v514 = vunpack.c.l.b16 %v478
    %v515 = vunpack.c.l.b16 %v479
    %v516 = vunpack.c.l.b16 %v480
    %v517 = vunpack.c.l.b16 %v481
    %v518 = vunpack.c.l.b16 %v482
    %v519 = vunpack.c.l.b16 %v483
    %v520 = vunpack.c.l.b16 %v484
    %v521 = vunpack.c.l.b16 %v485
    %v522 = vunpack.c.l.b16 %v486
    %v523 = vunpack.c.l.b16 %v487
    %v524 = vpack.c.b16 %v509, %v508
    %v525 = vpack.c.b16 %v511, %v510
    %v526 = vpack.c.b16 %v513, %v512
    %v527 = vpack.c.b16 %v515, %v514
    %v528 = vpack.c.b16 %v517, %v516
    %v529 = vpack.c.b16 %v519, %v518
    %v530 = vpack.c.b16 %v521, %v520
    %v531 = vpack.c.b16 %v523, %v522
    %540 = vmatpush.bf16.msra.mxu0 %v531
    %541 = vmatpush.bf16.msra.mxu0 %v530
    %542 = vmatpush.bf16.msra.mxu0 %v529
    %543 = vmatpush.bf16.msra.mxu0 %v528
    %544 = vmatpush.bf16.msra.mxu0 %v527
    %545 = vmatpush.bf16.msra.mxu0 %v526
    %546 = vmatpush.bf16.msra.mxu0 %v525
    %547 = vmatpush.bf16.msra.mxu0 %v524
    %548 = vmatmul.bf16.gmra.mxu0 %v468
    %v549 = vpop.f32.mrf.mxu0
    %v550 = vadd.f32 %v490, %v549
    %v551 = vpop.f32.mrf.mxu0
    %v552 = vadd.f32 %v490, %v551
    %553 = vmatmul.bf16.gmra.mxu0 %v469
    %v554 = vpop.f32.mrf.mxu0
    %v555 = vadd.f32 %v490, %v554
    %v556 = vpop.f32.mrf.mxu0
    %v557 = vadd.f32 %v490, %v556
    %558 = vmatmul.bf16.gmra.mxu0 %v470
    %v559 = vpop.f32.mrf.mxu0
    %v560 = vadd.f32 %v490, %v559
    %v561 = vpop.f32.mrf.mxu0
    %v562 = vadd.f32 %v490, %v561
    %563 = vmatmul.bf16.gmra.mxu0 %v471
    %v564 = vpop.f32.mrf.mxu0
    %v565 = vadd.f32 %v490, %v564
    %v566 = vpop.f32.mrf.mxu0
    %v567 = vadd.f32 %v490, %v566
    %568 = vdwg.mxu0
    %569 = vst [vmem:[%s6] sm:$0xff] %v550
    %570 = vst [vmem:[%s6 + $0x8] sm:$0xff] %v552
    %571 = vst [vmem:[%s6 + $0x10] sm:$0xff] %v555
    %572 = vst [vmem:[%s6 + $0x18] sm:$0xff] %v557
    %573 = vst [vmem:[%s6 + $0x20] sm:$0xff] %v560
    %574 = vst [vmem:[%s6 + $0x28] sm:$0xff] %v562
    %575 = vst [vmem:[%s6 + $0x30] sm:$0xff] %v565
    %576 = vst [vmem:[%s6 + $0x38] sm:$0xff] %v567
    // Predicated region
    $region34: #{_dit_forward.5} parent=1 // pred_check
      _
    $region35: #{_dit_forward.5} parent=1 // pred_check_branch
      %578 = sbr.rel (0) target = $region37
    $region36: #{_dit_forward.5} parent=1 // pred_region
      _
    $region37: #{_dit_forward.5} parent=1 // pred_fallthru
      _
    // Predicated region
    $region38: #{_dit_forward.5} parent=1 // pred_check
      _
    $region39: #{_dit_forward.5} parent=1 // pred_check_branch
      %580 = sbr.rel (0) target = $region41
    $region40: #{_dit_forward.5} parent=1 // pred_region
      _
    $region41: #{_dit_forward.5} parent=1 // pred_fallthru
      _
    %581 = vsyncpa [#allocation3], 1
    %582 = vsyncpa [#allocation5], 1

// kernel: _dit_forward.3
$region0: #{_dit_forward.3}
  #allocation0 [shape = 'u32[]', space=smem, size = 0x4, offset = 0x4, fixed_abs, tag = 'smem constant byte address 0x4 - core index']
  #allocation1 [shape = 'u32[72,128]{1,0:T(1,128)}', space=vmem, size = 0x9000, scoped, tag = 'internal scratch']
  %s0 = inlined_call_operand.vmem [shape: f32[64,16], index: 0, kind: input, shape index: {}]
  %s1 = inlined_call_operand.vmem [shape: f32[32,64], index: 1, kind: input, shape index: {}]
  %s2 = inlined_call_operand.vmem [shape: f32[16,64], index: 2, kind: input, shape index: {}]
  %s3 = inlined_call_operand.vmem [shape: f32[2,256], index: 3, kind: input, shape index: {}]
  %s4 = inlined_call_operand.vmem [shape: f32[32,128], index: 4, kind: input, shape index: {}]
  %s5 = inlined_call_operand.hbm [shape: bf16[16,128], index: 5, kind: input, shape index: {}]
  %s6 = inlined_call_operand.hbm [shape: f32[1,128], index: 6, kind: input, shape index: {}]
  %s7 = inlined_call_operand.hbm [shape: bf16[64,128], index: 7, kind: input, shape index: {}]
  %s8 = inlined_call_operand.hbm [shape: f32[1,128], index: 8, kind: input, shape index: {}]
  %s9 = inlined_call_operand.hbm [shape: bf16[64,128], index: 9, kind: input, shape index: {}]
  %s10 = inlined_call_operand.hbm [shape: f32[1,128], index: 10, kind: input, shape index: {}]
  %s11 = inlined_call_operand.vmem [shape: bf16[128,128], index: 11, kind: input, shape index: {}]
  %s12 = inlined_call_operand.hbm [shape: f32[1,128], index: 12, kind: input, shape index: {}]
  %s13 = inlined_call_operand.vmem [shape: bf16[256,128], index: 13, kind: input, shape index: {}]
  %s14 = inlined_call_operand.hbm [shape: f32[1,128], index: 14, kind: input, shape index: {}]
  %s15 = inlined_call_operand.hbm [shape: bf16[128,128], index: 15, kind: input, shape index: {}]
  %s16 = inlined_call_operand.hbm [shape: f32[1,128], index: 16, kind: input, shape index: {}]
  %s17 = inlined_call_operand.hbm [shape: bf16[128,3072], index: 17, kind: input, shape index: {}]
  %s18 = inlined_call_operand.hbm [shape: f32[1,3072], index: 18, kind: input, shape index: {}]
  %s19 = inlined_call_operand.vmem [shape: f32[2,32,128], index: 19, kind: output, shape index: {0}]
  %s20 = inlined_call_operand.vmem [shape: f32[2,16,128], index: 20, kind: output, shape index: {1}]
  %s21 = inlined_call_operand.vmem [shape: f32[2,3072], index: 21, kind: output, shape index: {2}]
  %22 = xla_tuple %s19, %s20, %s21
  %s23 = sld [smem:[#allocation0]]
  $region150: #{_dit_forward.3} parent=0
    _
  %s25 = ssub.s32 1, %s23
  %s26 = scalar_select 0, %s25, %s23
  $region1: #{_dit_forward.3} parent=0
    #allocation2 [shape = 'u8[4096]{0}', space=vmem, size = 0x1000, scoped, tag = 'input window, operand 5, single buffered']
    #allocation3 [shape = 's32[1]{0}', space=sflag, size = 0x4, scoped, tag = 'scoped memory for _dit_forward.3']
    #allocation4 [shape = 'u8[512]{0}', space=vmem, size = 0x400, scoped, tag = 'input window, operand 6, single buffered']
    #allocation5 [shape = 's32[1]{0}', space=sflag, size = 0x4, scoped, tag = 'scoped memory for _dit_forward.3']
    #allocation6 [shape = 'u8[16384]{0}', space=vmem, size = 0x4000, scoped, tag = 'input window, operand 7, single buffered']
    #allocation7 [shape = 'u8[512]{0}', space=vmem, size = 0x400, scoped, tag = 'input window, operand 8, single buffered']
    #allocation8 [shape = 's32[1]{0}', space=sflag, size = 0x4, scoped, tag = 'scoped memory for _dit_forward.3']
    #allocation9 [shape = 'u8[16384]{0}', space=vmem, size = 0x4000, scoped, tag = 'input window, operand 9, single buffered']
    #allocation10 [shape = 'u8[512]{0}', space=vmem, size = 0x400, scoped, tag = 'input window, operand 10, single buffered']
    #allocation11 [shape = 's32[1]{0}', space=sflag, size = 0x4, scoped, tag = 'scoped memory for _dit_forward.3']
    #allocation12 [shape = 'u8[512]{0}', space=vmem, size = 0x400, scoped, tag = 'input window, operand 12, single buffered']
    #allocation13 [shape = 'u8[512]{0}', space=vmem, size = 0x400, scoped, tag = 'input window, operand 14, single buffered']
    #allocation14 [shape = 's32[1]{0}', space=sflag, size = 0x4, scoped, tag = 'scoped memory for _dit_forward.3']
    #allocation15 [shape = 'u8[32768]{0}', space=vmem, size = 0x8000, scoped, tag = 'input window, operand 15, single buffered']
    #allocation16 [shape = 'u8[512]{0}', space=vmem, size = 0x400, scoped, tag = 'input window, operand 16, single buffered']
    #allocation17 [shape = 's32[1]{0}', space=sflag, size = 0x4, scoped, tag = 'scoped memory for _dit_forward.3']
    #allocation18 [shape = 'u8[786432]{0}', space=vmem, size = 0xc0000, scoped, tag = 'input window, operand 17, single buffered']
    #allocation19 [shape = 'u8[12288]{0}', space=vmem, size = 0x3000, scoped, tag = 'input window, operand 18, single buffered']
    #allocation20 [shape = 's32[1]{0}', space=sflag, size = 0x4, scoped, tag = 'scoped memory for _dit_forward.3']
    %27 = vsyncpa [#allocation3], 0
    %28 = vsyncpa [#allocation5], 0
    %29 = vsyncpa [#allocation8], 0
    %30 = vsyncpa [#allocation11], 0
    %31 = vsyncpa [#allocation14], 0
    %32 = vsyncpa [#allocation17], 0
    %33 = vsyncpa [#allocation20], 0
    // Predicated region
    $region2: #{_dit_forward.3} parent=1 // pred_check
      _
    $region3: #{_dit_forward.3} parent=1 // pred_check_branch
      %35 = sbr.rel (0) target = $region5
    $region4: #{_dit_forward.3} parent=1 // pred_region
      _
    $region5: #{_dit_forward.3} parent=1 // pred_fallthru
      _
    // Predicated region
    $region6: #{_dit_forward.3} parent=1 // pred_check
      _
    $region7: #{_dit_forward.3} parent=1 // pred_check_branch
      %37 = sbr.rel (0) target = $region9
    $region8: #{_dit_forward.3} parent=1 // pred_region
      _
    $region9: #{_dit_forward.3} parent=1 // pred_fallthru
      _
    // Predicated region
    $region10: #{_dit_forward.3} parent=1 // pred_check
      _
    $region11: #{_dit_forward.3} parent=1 // pred_check_branch
      %39 = sbr.rel (0) target = $region13
    $region12: #{_dit_forward.3} parent=1 // pred_region
      _
    $region13: #{_dit_forward.3} parent=1 // pred_fallthru
      _
    // Predicated region
    $region14: #{_dit_forward.3} parent=1 // pred_check
      _
    $region15: #{_dit_forward.3} parent=1 // pred_check_branch
      %41 = sbr.rel (0) target = $region17
    $region16: #{_dit_forward.3} parent=1 // pred_region
      _
    $region17: #{_dit_forward.3} parent=1 // pred_fallthru
      _
    // Predicated region
    $region18: #{_dit_forward.3} parent=1 // pred_check
      _
    $region19: #{_dit_forward.3} parent=1 // pred_check_branch
      %43 = sbr.rel (0) target = $region21
    $region20: #{_dit_forward.3} parent=1 // pred_region
      _
    $region21: #{_dit_forward.3} parent=1 // pred_fallthru
      _
    // Predicated region
    $region22: #{_dit_forward.3} parent=1 // pred_check
      _
    $region23: #{_dit_forward.3} parent=1 // pred_check_branch
      %45 = sbr.rel (0) target = $region25
    $region24: #{_dit_forward.3} parent=1 // pred_region
      %47 = vsyncadd [#allocation3], 0
      %s48 = sshll.u32 %s5, 4
      %s49 = int_to_ptr.hbm [resolvable:$true] %s48
      %s50 = sshll.u32 [#allocation2], 4
      %s51 = int_to_ptr.vmem [resolvable:$true] %s50
      %56 = dma.hbm_to_vmem [thread:$0]  %s49, 128, %s51, [#allocation3], 64, 64, 4
    $region25: #{_dit_forward.3} parent=1 // pred_fallthru
      _
    // Predicated region
    $region26: #{_dit_forward.3} parent=1 // pred_check
      _
    $region27: #{_dit_forward.3} parent=1 // pred_check_branch
      %58 = sbr.rel (0) target = $region29
    $region28: #{_dit_forward.3} parent=1 // pred_region
      %60 = vsyncadd [#allocation5], 0
      %s62 = sshll.u32 %s6, 4
      %s63 = int_to_ptr.hbm [resolvable:$true] %s62
      %s64 = sshll.u32 [#allocation4], 4
      %s65 = int_to_ptr.vmem [resolvable:$true] %s64
      %67 = dma.hbm_to_vmem [thread:$0]  %s63, 16, %s65, [#allocation5]
    $region29: #{_dit_forward.3} parent=1 // pred_fallthru
      _
    // Predicated region
    $region30: #{_dit_forward.3} parent=1 // pred_check
      _
    $region31: #{_dit_forward.3} parent=1 // pred_check_branch
      %69 = sbr.rel (0) target = $region33
    $region32: #{_dit_forward.3} parent=1 // pred_region
      %71 = vsyncadd [#allocation5], 0
      %s72 = sshll.u32 %s7, 4
      %s73 = int_to_ptr.hbm [resolvable:$true] %s72
      %s74 = sshll.u32 [#allocation6], 4
      %s75 = int_to_ptr.vmem [resolvable:$true] %s74
      %80 = dma.hbm_to_vmem [thread:$0]  %s73, 512, %s75, [#allocation5], 64, 64, 4
    $region33: #{_dit_forward.3} parent=1 // pred_fallthru
      _
    // Predicated region
    $region34: #{_dit_forward.3} parent=1 // pred_check
      _
    $region35: #{_dit_forward.3} parent=1 // pred_check_branch
      %82 = sbr.rel (0) target = $region37
    $region36: #{_dit_forward.3} parent=1 // pred_region
      %84 = vsyncadd [#allocation8], 0
      %s86 = sshll.u32 %s8, 4
      %s87 = int_to_ptr.hbm [resolvable:$true] %s86
      %s88 = sshll.u32 [#allocation7], 4
      %s89 = int_to_ptr.vmem [resolvable:$true] %s88
      %91 = dma.hbm_to_vmem [thread:$0]  %s87, 16, %s89, [#allocation8]
    $region37: #{_dit_forward.3} parent=1 // pred_fallthru
      _
    // Predicated region
    $region38: #{_dit_forward.3} parent=1 // pred_check
      _
    $region39: #{_dit_forward.3} parent=1 // pred_check_branch
      %93 = sbr.rel (0) target = $region41
    $region40: #{_dit_forward.3} parent=1 // pred_region
      %95 = vsyncadd [#allocation8], 0
      %s96 = sshll.u32 %s9, 4
      %s97 = int_to_ptr.hbm [resolvable:$true] %s96
      %s98 = sshll.u32 [#allocation9], 4
      %s99 = int_to_ptr.vmem [resolvable:$true] %s98
      %104 = dma.hbm_to_vmem [thread:$0]  %s97, 512, %s99, [#allocation8], 64, 64, 4
    $region41: #{_dit_forward.3} parent=1 // pred_fallthru
      _
    // Predicated region
    $region42: #{_dit_forward.3} parent=1 // pred_check
      _
    $region43: #{_dit_forward.3} parent=1 // pred_check_branch
      %106 = sbr.rel (0) target = $region45
    $region44: #{_dit_forward.3} parent=1 // pred_region
      %108 = vsyncadd [#allocation11], 0
      %s110 = sshll.u32 %s10, 4
      %s111 = int_to_ptr.hbm [resolvable:$true] %s110
      %s112 = sshll.u32 [#allocation10], 4
      %s113 = int_to_ptr.vmem [resolvable:$true] %s112
      %115 = dma.hbm_to_vmem [thread:$0]  %s111, 16, %s113, [#allocation11]
    $region45: #{_dit_forward.3} parent=1 // pred_fallthru
      _
    // Predicated region
    $region46: #{_dit_forward.3} parent=1 // pred_check
      _
    $region47: #{_dit_forward.3} parent=1 // pred_check_branch
      %117 = sbr.rel (0) target = $region49
    $region48: #{_dit_forward.3} parent=1 // pred_region
      _
    $region49: #{_dit_forward.3} parent=1 // pred_fallthru
      _
    // Predicated region
    $region50: #{_dit_forward.3} parent=1 // pred_check
      _
    $region51: #{_dit_forward.3} parent=1 // pred_check_branch
      %119 = sbr.rel (0) target = $region53
    $region52: #{_dit_forward.3} parent=1 // pred_region
      %121 = vsyncadd [#allocation11], 0
      %s123 = sshll.u32 %s12, 4
      %s124 = int_to_ptr.hbm [resolvable:$true] %s123
      %s125 = sshll.u32 [#allocation12], 4
      %s126 = int_to_ptr.vmem [resolvable:$true] %s125
      %128 = dma.hbm_to_vmem [thread:$0]  %s124, 16, %s126, [#allocation11]
    $region53: #{_dit_forward.3} parent=1 // pred_fallthru
      _
    // Predicated region
    $region54: #{_dit_forward.3} parent=1 // pred_check
      _
    $region55: #{_dit_forward.3} parent=1 // pred_check_branch
      %130 = sbr.rel (0) target = $region57
    $region56: #{_dit_forward.3} parent=1 // pred_region
      _
    $region57: #{_dit_forward.3} parent=1 // pred_fallthru
      _
    // Predicated region
    $region58: #{_dit_forward.3} parent=1 // pred_check
      _
    $region59: #{_dit_forward.3} parent=1 // pred_check_branch
      %132 = sbr.rel (0) target = $region61
    $region60: #{_dit_forward.3} parent=1 // pred_region
      %134 = vsyncadd [#allocation14], 0
      %s136 = sshll.u32 %s14, 4
      %s137 = int_to_ptr.hbm [resolvable:$true] %s136
      %s138 = sshll.u32 [#allocation13], 4
      %s139 = int_to_ptr.vmem [resolvable:$true] %s138
      %141 = dma.hbm_to_vmem [thread:$0]  %s137, 16, %s139, [#allocation14]
    $region61: #{_dit_forward.3} parent=1 // pred_fallthru
      _
    // Predicated region
    $region62: #{_dit_forward.3} parent=1 // pred_check
      _
    $region63: #{_dit_forward.3} parent=1 // pred_check_branch
      %143 = sbr.rel (0) target = $region65
    $region64: #{_dit_forward.3} parent=1 // pred_region
      %145 = vsyncadd [#allocation14], 0
      %s146 = sshll.u32 %s15, 4
      %s147 = int_to_ptr.hbm [resolvable:$true] %s146
      %s148 = sshll.u32 [#allocation15], 4
      %s149 = int_to_ptr.vmem [resolvable:$true] %s148
      %154 = dma.hbm_to_vmem [thread:$0]  %s147, 1024, %s149, [#allocation14], 64, 64, 4
    $region65: #{_dit_forward.3} parent=1 // pred_fallthru
      _
    // Predicated region
    $region66: #{_dit_forward.3} parent=1 // pred_check
      _
    $region67: #{_dit_forward.3} parent=1 // pred_check_branch
      %156 = sbr.rel (0) target = $region69
    $region68: #{_dit_forward.3} parent=1 // pred_region
      %158 = vsyncadd [#allocation17], 0
      %s160 = sshll.u32 %s16, 4
      %s161 = int_to_ptr.hbm [resolvable:$true] %s160
      %s162 = sshll.u32 [#allocation16], 4
      %s163 = int_to_ptr.vmem [resolvable:$true] %s162
      %165 = dma.hbm_to_vmem [thread:$0]  %s161, 16, %s163, [#allocation17]
    $region69: #{_dit_forward.3} parent=1 // pred_fallthru
      _
    // Predicated region
    $region70: #{_dit_forward.3} parent=1 // pred_check
      _
    $region71: #{_dit_forward.3} parent=1 // pred_check_branch
      %167 = sbr.rel (0) target = $region73
    $region72: #{_dit_forward.3} parent=1 // pred_region
      %169 = vsyncadd [#allocation17], 0
      %s170 = sshll.u32 %s17, 4
      %s171 = int_to_ptr.hbm [resolvable:$true] %s170
      %s172 = sshll.u32 [#allocation18], 4
      %s173 = int_to_ptr.vmem [resolvable:$true] %s172
      %178 = dma.hbm_to_vmem [thread:$0]  %s171, 24576, %s173, [#allocation17], 1536, 1536, 96
    $region73: #{_dit_forward.3} parent=1 // pred_fallthru
      _
    // Predicated region
    $region74: #{_dit_forward.3} parent=1 // pred_check
      _
    $region75: #{_dit_forward.3} parent=1 // pred_check_branch
      %180 = sbr.rel (0) target = $region77
    $region76: #{_dit_forward.3} parent=1 // pred_region
      %182 = vsyncadd [#allocation20], 0
      %s184 = sshll.u32 %s18, 4
      %s185 = int_to_ptr.hbm [resolvable:$true] %s184
      %s186 = sshll.u32 [#allocation19], 4
      %s187 = int_to_ptr.vmem [resolvable:$true] %s186
      %189 = dma.hbm_to_vmem [thread:$0]  %s185, 384, %s187, [#allocation20]
    $region77: #{_dit_forward.3} parent=1 // pred_fallthru
      _
    // Predicated region
    $region78: #{_dit_forward.3} parent=1 // pred_check
      _
    $region79: #{_dit_forward.3} parent=1 // pred_check_branch
      %191 = sbr.rel (0) target = $region81
    $region80: #{_dit_forward.3} parent=1 // pred_region
      %193 = dma.done [#allocation3], 128
    $region81: #{_dit_forward.3} parent=1 // pred_fallthru
      _
    // Predicated region
    $region82: #{_dit_forward.3} parent=1 // pred_check
      _
    $region83: #{_dit_forward.3} parent=1 // pred_check_branch
      %195 = sbr.rel (0) target = $region85
    $region84: #{_dit_forward.3} parent=1 // pred_region
      %197 = dma.done [#allocation5], 16
    $region85: #{_dit_forward.3} parent=1 // pred_fallthru
      _
    // Predicated region
    $region86: #{_dit_forward.3} parent=1 // pred_check
      _
    $region87: #{_dit_forward.3} parent=1 // pred_check_branch
      %199 = sbr.rel (0) target = $region89
    $region88: #{_dit_forward.3} parent=1 // pred_region
      %201 = dma.done [#allocation5], 512
    $region89: #{_dit_forward.3} parent=1 // pred_fallthru
      _
    // Predicated region
    $region90: #{_dit_forward.3} parent=1 // pred_check
      _
    $region91: #{_dit_forward.3} parent=1 // pred_check_branch
      %203 = sbr.rel (0) target = $region93
    $region92: #{_dit_forward.3} parent=1 // pred_region
      %205 = dma.done [#allocation8], 16
    $region93: #{_dit_forward.3} parent=1 // pred_fallthru
      _
    // Predicated region
    $region94: #{_dit_forward.3} parent=1 // pred_check
      _
    $region95: #{_dit_forward.3} parent=1 // pred_check_branch
      %207 = sbr.rel (0) target = $region97
    $region96: #{_dit_forward.3} parent=1 // pred_region
      %209 = dma.done [#allocation8], 512
    $region97: #{_dit_forward.3} parent=1 // pred_fallthru
      _
    // Predicated region
    $region98: #{_dit_forward.3} parent=1 // pred_check
      _
    $region99: #{_dit_forward.3} parent=1 // pred_check_branch
      %211 = sbr.rel (0) target = $region101
    $region100: #{_dit_forward.3} parent=1 // pred_region
      %213 = dma.done [#allocation11], 16
    $region101: #{_dit_forward.3} parent=1 // pred_fallthru
      _
    // Predicated region
    $region102: #{_dit_forward.3} parent=1 // pred_check
      _
    $region103: #{_dit_forward.3} parent=1 // pred_check_branch
      %215 = sbr.rel (0) target = $region105
    $region104: #{_dit_forward.3} parent=1 // pred_region
      %217 = dma.done [#allocation11], 16
    $region105: #{_dit_forward.3} parent=1 // pred_fallthru
      _
    // Predicated region
    $region106: #{_dit_forward.3} parent=1 // pred_check
      _
    $region107: #{_dit_forward.3} parent=1 // pred_check_branch
      %219 = sbr.rel (0) target = $region109
    $region108: #{_dit_forward.3} parent=1 // pred_region
      %221 = dma.done [#allocation14], 16
    $region109: #{_dit_forward.3} parent=1 // pred_fallthru
      _
    // Predicated region
    $region110: #{_dit_forward.3} parent=1 // pred_check
      _
    $region111: #{_dit_forward.3} parent=1 // pred_check_branch
      %223 = sbr.rel (0) target = $region113
    $region112: #{_dit_forward.3} parent=1 // pred_region
      %225 = dma.done [#allocation14], 1024
    $region113: #{_dit_forward.3} parent=1 // pred_fallthru
      _
    // Predicated region
    $region114: #{_dit_forward.3} parent=1 // pred_check
      _
    $region115: #{_dit_forward.3} parent=1 // pred_check_branch
      %227 = sbr.rel (0) target = $region117
    $region116: #{_dit_forward.3} parent=1 // pred_region
      %229 = dma.done [#allocation17], 16
    $region117: #{_dit_forward.3} parent=1 // pred_fallthru
      _
    // Predicated region
    $region118: #{_dit_forward.3} parent=1 // pred_check
      _
    $region119: #{_dit_forward.3} parent=1 // pred_check_branch
      %231 = sbr.rel (0) target = $region121
    $region120: #{_dit_forward.3} parent=1 // pred_region
      %233 = dma.done [#allocation17], 24576
    $region121: #{_dit_forward.3} parent=1 // pred_fallthru
      _
    // Predicated region
    $region122: #{_dit_forward.3} parent=1 // pred_check
      _
    $region123: #{_dit_forward.3} parent=1 // pred_check_branch
      %235 = sbr.rel (0) target = $region125
    $region124: #{_dit_forward.3} parent=1 // pred_region
      %237 = dma.done [#allocation20], 384
    $region125: #{_dit_forward.3} parent=1 // pred_fallthru
      _
    %v239 = vld [vmem:[%s0] sm:$0xff]
    %v240 = vld [vmem:[%s0 + $0x8] sm:$0xff]
    %v241 = vld [vmem:[%s0 + $0x10] sm:$0xff]
    %v242 = vld [vmem:[%s0 + $0x18] sm:$0xff]
    %v243 = vld [vmem:[%s0 + $0x20] sm:$0xff]
    %v244 = vld [vmem:[%s0 + $0x28] sm:$0xff]
    %v245 = vld [vmem:[%s0 + $0x30] sm:$0xff]
    %v246 = vld [vmem:[%s0 + $0x38] sm:$0xff]
    %v247 = vpack.c.bf16 %v240, %v239
    %v248 = vpack.c.bf16 %v242, %v241
    %v249 = vpack.c.bf16 %v244, %v243
    %v250 = vpack.c.bf16 %v246, %v245
    %v251 = vld [vmem:[#allocation2] sm:$0xf]
    %v252 = vld [vmem:[#allocation2 + $0x4] sm:$0xf]
    %v253 = vld [vmem:[#allocation4] sm:$0x1]
    %v255 = vperm.slane %v253, 0
    %v259 = vunpack.c.l.b16 %v251
    %v260 = vunpack.c.l.b16 %v252
    %v261 = vpack.c.b16 %v260, %v259
    %vm263 = vcmask 130048
    %v265 = vsel %vm263, %v247, 0
    %v268 = vsel %vm263, %v248, 0
    %v271 = vsel %vm263, %v249, 0
    %v274 = vsel %vm263, %v250, 0
    %276 = vmatpush.bf16.msra.mxu0 0
    %277 = vmatpush.bf16.msra.mxu0 0
    %278 = vmatpush.bf16.msra.mxu0 0
    %279 = vmatpush.bf16.msra.mxu0 0
    %280 = vmatpush.bf16.msra.mxu0 0
    %281 = vmatpush.bf16.msra.mxu0 0
    %282 = vmatpush.bf16.msra.mxu0 0
    %283 = vmatpush.bf16.msra.mxu0 %v261
    %284 = vmatmul.bf16.gmra.mxu0 %v265
    %v285 = vpop.f32.mrf.mxu0
    %v286 = vadd.f32 %v255, %v285
    %v287 = vpop.f32.mrf.mxu0
    %v288 = vadd.f32 %v255, %v287
    %289 = vmatmul.bf16.gmra.mxu0 %v268
    %v290 = vpop.f32.mrf.mxu0
    %v291 = vadd.f32 %v255, %v290
    %v292 = vpop.f32.mrf.mxu0
    %v293 = vadd.f32 %v255, %v292
    %294 = vmatmul.bf16.gmra.mxu0 %v271
    %v295 = vpop.f32.mrf.mxu0
    %v296 = vadd.f32 %v255, %v295
    %v297 = vpop.f32.mrf.mxu0
    %v298 = vadd.f32 %v255, %v297
    %299 = vmatmul.bf16.gmra.mxu0 %v274
    %v300 = vpop.f32.mrf.mxu0
    %v301 = vadd.f32 %v255, %v300
    %v302 = vpop.f32.mrf.mxu0
    %v303 = vadd.f32 %v255, %v302
    %304 = vdwg.mxu0
    %v305 = vld [vmem:[%s4] sm:$0xff]
    %v306 = vld [vmem:[%s4 + $0x8] sm:$0xff]
    %v307 = vld [vmem:[%s4 + $0x10] sm:$0xff]
    %v308 = vld [vmem:[%s4 + $0x18] sm:$0xff]
    %v309 = vadd.f32 %v286, %v305
    %v310 = vadd.f32 %v288, %v306
    %v311 = vadd.f32 %v291, %v307
    %v312 = vadd.f32 %v293, %v308
    %v313 = vadd.f32 %v296, %v305
    %v314 = vadd.f32 %v298, %v306
    %v315 = vadd.f32 %v301, %v307
    %v316 = vadd.f32 %v303, %v308
    %317 = vst [vmem:[%s19] sm:$0xff] %v309
    %318 = vst [vmem:[%s19 + $0x8] sm:$0xff] %v310
    %319 = vst [vmem:[%s19 + $0x10] sm:$0xff] %v311
    %320 = vst [vmem:[%s19 + $0x18] sm:$0xff] %v312
    %321 = vst [vmem:[%s19 + $0x20] sm:$0xff] %v313
    %322 = vst [vmem:[%s19 + $0x28] sm:$0xff] %v314
    %323 = vst [vmem:[%s19 + $0x30] sm:$0xff] %v315
    %324 = vst [vmem:[%s19 + $0x38] sm:$0xff] %v316
    %v325 = vld [vmem:[%s1] sm:$0xff]
    %v326 = vld [vmem:[%s1 + $0x8] sm:$0xff]
    %v327 = vld [vmem:[%s1 + $0x10] sm:$0xff]
    %v328 = vld [vmem:[%s1 + $0x18] sm:$0xff]
    %v329 = vpack.c.bf16 %v326, %v325
    %v330 = vpack.c.bf16 %v328, %v327
    %v331 = vld [vmem:[#allocation6] sm:$0xf]
    %v332 = vld [vmem:[#allocation6 + $0x4] sm:$0xf]
    %v333 = vld [vmem:[#allocation6 + $0x8] sm:$0xf]
    %v334 = vld [vmem:[#allocation6 + $0xc] sm:$0xf]
    %v335 = vld [vmem:[#allocation6 + $0x10] sm:$0xf]
    %v336 = vld [vmem:[#allocation6 + $0x14] sm:$0xf]
    %v337 = vld [vmem:[#allocation6 + $0x18] sm:$0xf]
    %v338 = vld [vmem:[#allocation6 + $0x1c] sm:$0xf]
    %v339 = vld [vmem:[#allocation7] sm:$0x1]
    %v341 = vperm.slane %v339, 0
    %v351 = vunpack.c.l.b16 %v331
    %v352 = vunpack.c.l.b16 %v332
    %v353 = vunpack.c.l.b16 %v333
    %v354 = vunpack.c.l.b16 %v334
    %v355 = vunpack.c.l.b16 %v335
    %v356 = vunpack.c.l.b16 %v336
    %v357 = vunpack.c.l.b16 %v337
    %v358 = vunpack.c.l.b16 %v338
    %v359 = vpack.c.b16 %v352, %v351
    %v360 = vpack.c.b16 %v354, %v353
    %v361 = vpack.c.b16 %v356, %v355
    %v362 = vpack.c.b16 %v358, %v357
    %vm367 = vcmask 523264
    %v369 = vsel %vm367, %v329, 0
    %v372 = vsel %vm367, %v330, 0
    %374 = vmatpush.bf16.msra.mxu0 0
    %375 = vmatpush.bf16.msra.mxu0 0
    %376 = vmatpush.bf16.msra.mxu0 0
    %377 = vmatpush.bf16.msra.mxu0 0
    %378 = vmatpush.bf16.msra.mxu0 %v362
    %379 = vmatpush.bf16.msra.mxu0 %v361
    %380 = vmatpush.bf16.msra.mxu0 %v360
    %381 = vmatpush.bf16.msra.mxu0 %v359
    %382 = vmatmul.bf16.gmra.mxu0 %v369
    %v383 = vpop.f32.mrf.mxu0
    %v384 = vadd.f32 %v341, %v383
    %v385 = vpop.f32.mrf.mxu0
    %v386 = vadd.f32 %v341, %v385
    %387 = vmatmul.bf16.gmra.mxu0 %v372
    %v388 = vpop.f32.mrf.mxu0
    %v389 = vadd.f32 %v341, %v388
    %v390 = vpop.f32.mrf.mxu0
    %v391 = vadd.f32 %v341, %v390
    %392 = vdwg.mxu0
    %393 = vst [vmem:[%s20] sm:$0xff] %v384
    %394 = vst [vmem:[%s20 + $0x8] sm:$0xff] %v386
    %395 = vst [vmem:[%s20 + $0x10] sm:$0xff] %v389
    %396 = vst [vmem:[%s20 + $0x18] sm:$0xff] %v391
    %v397 = vld [vmem:[%s2] sm:$0xff]
    %v398 = vld [vmem:[%s2 + $0x8] sm:$0xff]
    %v399 = vpack.c.bf16 %v398, %v397
    %v400 = vld [vmem:[#allocation9] sm:$0xf]
    %v401 = vld [vmem:[#allocation9 + $0x4] sm:$0xf]
    %v402 = vld [vmem:[#allocation9 + $0x8] sm:$0xf]
    %v403 = vld [vmem:[#allocation9 + $0xc] sm:$0xf]
    %v404 = vld [vmem:[#allocation9 + $0x10] sm:$0xf]
    %v405 = vld [vmem:[#allocation9 + $0x14] sm:$0xf]
    %v406 = vld [vmem:[#allocation9 + $0x18] sm:$0xf]
    %v407 = vld [vmem:[#allocation9 + $0x1c] sm:$0xf]
    %v408 = vld [vmem:[#allocation10] sm:$0x1]
    %v410 = vperm.slane %v408, 0
    %v420 = vunpack.c.l.b16 %v400
    %v421 = vunpack.c.l.b16 %v401
    %v422 = vunpack.c.l.b16 %v402
    %v423 = vunpack.c.l.b16 %v403
    %v424 = vunpack.c.l.b16 %v404
    %v425 = vunpack.c.l.b16 %v405
    %v426 = vunpack.c.l.b16 %v406
    %v427 = vunpack.c.l.b16 %v407
    %v428 = vpack.c.b16 %v421, %v420
    %v429 = vpack.c.b16 %v423, %v422
    %v430 = vpack.c.b16 %v425, %v424
    %v431 = vpack.c.b16 %v427, %v426
    %v437 = vsel %vm367, %v399, 0
    %439 = vmatpush.bf16.msra.mxu0 0
    %440 = vmatpush.bf16.msra.mxu0 0
    %441 = vmatpush.bf16.msra.mxu0 0
    %442 = vmatpush.bf16.msra.mxu0 0
    %443 = vmatpush.bf16.msra.mxu0 %v431
    %444 = vmatpush.bf16.msra.mxu0 %v430
    %445 = vmatpush.bf16.msra.mxu0 %v429
    %446 = vmatpush.bf16.msra.mxu0 %v428
    %447 = vmatmul.bf16.gmra.mxu0 %v437
    %v448 = vpop.f32.mrf.mxu0
    %v449 = vadd.f32 %v410, %v448
    %v450 = vpop.f32.mrf.mxu0
    %v451 = vadd.f32 %v410, %v450
    %452 = vdwg.mxu0
    %v453 = vmul.f32 %v449, %v449
    %v454 = vmul.f32 %v451, %v451
    %v455 = vmul.f32 %v449, %v453
    %v456 = vmul.f32 %v451, %v454
    %v457 = vmul.f32 %v455, 0.044715
    %v458 = vmul.f32 %v456, 0.044715
    %v459 = vadd.f32 %v449, %v457
    %v460 = vadd.f32 %v451, %v458
    %v461 = vmul.f32 %v459, 0.7978846
    %v462 = vmul.f32 %v460, 0.7978846
    %v463 = vtanh.pop %v461
    %v464 = vtanh.pop %v462
    %v465 = vadd.f32 %v463, 1.0
    %v466 = vadd.f32 %v464, 1.0
    %v467 = vmul.f32 %v465, 0.5
    %v468 = vmul.f32 %v466, 0.5
    %v469 = vmul.f32 %v449, %v467
    %v470 = vmul.f32 %v451, %v468
    %v471 = vpack.c.bf16 %v470, %v469
    %v472 = vld [vmem:[%s11] sm:$0xf]
    %v473 = vld [vmem:[%s11 + $0x4] sm:$0xf]
    %v474 = vld [vmem:[%s11 + $0x8] sm:$0xf]
    %v475 = vld [vmem:[%s11 + $0xc] sm:$0xf]
    %v476 = vld [vmem:[%s11 + $0x10] sm:$0xf]
    %v477 = vld [vmem:[%s11 + $0x14] sm:$0xf]
    %v478 = vld [vmem:[%s11 + $0x18] sm:$0xf]
    %v479 = vld [vmem:[%s11 + $0x1c] sm:$0xf]
    %v480 = vld [vmem:[%s11 + $0x20] sm:$0xf]
    %v481 = vld [vmem:[%s11 + $0x24] sm:$0xf]
    %v482 = vld [vmem:[%s11 + $0x28] sm:$0xf]
    %v483 = vld [vmem:[%s11 + $0x2c] sm:$0xf]
    %v484 = vld [vmem:[%s11 + $0x30] sm:$0xf]
    %v485 = vld [vmem:[%s11 + $0x34] sm:$0xf]
    %v486 = vld [vmem:[%s11 + $0x38] sm:$0xf]
    %v487 = vld [vmem:[%s11 + $0x3c] sm:$0xf]
    %v488 = vld [vmem:[#allocation12] sm:$0x1]
    %v490 = vperm.slane %v488, 0
    %v508 = vunpack.c.l.b16 %v472
    %v509 = vunpack.c.l.b16 %v473
    %v510 = vunpack.c.l.b16 %v474
    %v511 = vunpack.c.l.b16 %v475
    %v512 = vunpack.c.l.b16 %v476
    %v513 = vunpack.c.l.b16 %v477
    %v514 = vunpack.c.l.b16 %v478
    %v515 = vunpack.c.l.b16 %v479
    %v516 = vunpack.c.l.b16 %v480
    %v517 = vunpack.c.l.b16 %v481
    %v518 = vunpack.c.l.b16 %v482
    %v519 = vunpack.c.l.b16 %v483
    %v520 = vunpack.c.l.b16 %v484
    %v521 = vunpack.c.l.b16 %v485
    %v522 = vunpack.c.l.b16 %v486
    %v523 = vunpack.c.l.b16 %v487
    %v524 = vpack.c.b16 %v509, %v508
    %v525 = vpack.c.b16 %v511, %v510
    %v526 = vpack.c.b16 %v513, %v512
    %v527 = vpack.c.b16 %v515, %v514
    %v528 = vpack.c.b16 %v517, %v516
    %v529 = vpack.c.b16 %v519, %v518
    %v530 = vpack.c.b16 %v521, %v520
    %v531 = vpack.c.b16 %v523, %v522
    %540 = vmatpush.bf16.msra.mxu0 %v531
    %541 = vmatpush.bf16.msra.mxu0 %v530
    %542 = vmatpush.bf16.msra.mxu0 %v529
    %543 = vmatpush.bf16.msra.mxu0 %v528
    %544 = vmatpush.bf16.msra.mxu0 %v527
    %545 = vmatpush.bf16.msra.mxu0 %v526
    %546 = vmatpush.bf16.msra.mxu0 %v525
    %547 = vmatpush.bf16.msra.mxu0 %v524
    %548 = vmatmul.bf16.gmra.mxu0 %v471
    %v549 = vpop.f32.mrf.mxu0
    %v550 = vadd.f32 %v490, %v549
    %v551 = vpop.f32.mrf.mxu0
    %v552 = vadd.f32 %v490, %v551
    %553 = vdwg.mxu0
    %v554 = vld [vmem:[%s3] sm:$0xf]
    %556 = vst [vmem:[#allocation1] ss:$4 sm:$0xff] %v554
    %v557 = vld.sshfl [vmem:[#allocation1] sm:$0xff pattern:$0x73625140]
    %v558 = vld.sshfl [vmem:[#allocation1 + $0x8] sm:$0xff pattern:$0x73625140]
    %v561 = vpack.c.bf16 %v557, %v557
    %v562 = vpack.c.bf16 %v558, %v558
    %v563 = vld [vmem:[%s13] sm:$0xf]
    %v564 = vld [vmem:[%s13 + $0x4] sm:$0xf]
    %v565 = vld [vmem:[%s13 + $0x8] sm:$0xf]
    %v566 = vld [vmem:[%s13 + $0xc] sm:$0xf]
    %v567 = vld [vmem:[%s13 + $0x10] sm:$0xf]
    %v568 = vld [vmem:[%s13 + $0x14] sm:$0xf]
    %v569 = vld [vmem:[%s13 + $0x18] sm:$0xf]
    %v570 = vld [vmem:[%s13 + $0x1c] sm:$0xf]
    %v571 = vld [vmem:[%s13 + $0x20] sm:$0xf]
    %v572 = vld [vmem:[%s13 + $0x24] sm:$0xf]
    %v573 = vld [vmem:[%s13 + $0x28] sm:$0xf]
    %v574 = vld [vmem:[%s13 + $0x2c] sm:$0xf]
    %v575 = vld [vmem:[%s13 + $0x30] sm:$0xf]
    %v576 = vld [vmem:[%s13 + $0x34] sm:$0xf]
    %v577 = vld [vmem:[%s13 + $0x38] sm:$0xf]
    %v578 = vld [vmem:[%s13 + $0x3c] sm:$0xf]
    %v579 = vld [vmem:[%s13 + $0x40] sm:$0xf]
    %v580 = vld [vmem:[%s13 + $0x44] sm:$0xf]
    %v581 = vld [vmem:[%s13 + $0x48] sm:$0xf]
    %v582 = vld [vmem:[%s13 + $0x4c] sm:$0xf]
    %v583 = vld [vmem:[%s13 + $0x50] sm:$0xf]
    %v584 = vld [vmem:[%s13 + $0x54] sm:$0xf]
    %v585 = vld [vmem:[%s13 + $0x58] sm:$0xf]
    %v586 = vld [vmem:[%s13 + $0x5c] sm:$0xf]
    %v587 = vld [vmem:[%s13 + $0x60] sm:$0xf]
    %v588 = vld [vmem:[%s13 + $0x64] sm:$0xf]
    %v589 = vld [vmem:[%s13 + $0x68] sm:$0xf]
    %v590 = vld [vmem:[%s13 + $0x6c] sm:$0xf]
    %v591 = vld [vmem:[%s13 + $0x70] sm:$0xf]
    %v592 = vld [vmem:[%s13 + $0x74] sm:$0xf]
    %v593 = vld [vmem:[%s13 + $0x78] sm:$0xf]
    %v594 = vld [vmem:[%s13 + $0x7c] sm:$0xf]
    %v595 = vld [vmem:[#allocation13] sm:$0x1]
    %v597 = vperm.slane %v595, 0
    %v631 = vunpack.c.l.b16 %v563
    %v632 = vunpack.c.l.b16 %v564
    %v633 = vunpack.c.l.b16 %v565
    %v634 = vunpack.c.l.b16 %v566
    %v635 = vunpack.c.l.b16 %v567
    %v636 = vunpack.c.l.b16 %v568
    %v637 = vunpack.c.l.b16 %v569
    %v638 = vunpack.c.l.b16 %v570
    %v639 = vunpack.c.l.b16 %v571
    %v640 = vunpack.c.l.b16 %v572
    %v641 = vunpack.c.l.b16 %v573
    %v642 = vunpack.c.l.b16 %v574
    %v643 = vunpack.c.l.b16 %v575
    %v644 = vunpack.c.l.b16 %v576
    %v645 = vunpack.c.l.b16 %v577
    %v646 = vunpack.c.l.b16 %v578
    %v647 = vunpack.c.l.b16 %v579
    %v648 = vunpack.c.l.b16 %v580
    %v649 = vunpack.c.l.b16 %v581
    %v650 = vunpack.c.l.b16 %v582
    %v651 = vunpack.c.l.b16 %v583
    %v652 = vunpack.c.l.b16 %v584
    %v653 = vunpack.c.l.b16 %v585
    %v654 = vunpack.c.l.b16 %v586
    %v655 = vunpack.c.l.b16 %v587
    %v656 = vunpack.c.l.b16 %v588
    %v657 = vunpack.c.l.b16 %v589
    %v658 = vunpack.c.l.b16 %v590
    %v659 = vunpack.c.l.b16 %v591
    %v660 = vunpack.c.l.b16 %v592
    %v661 = vunpack.c.l.b16 %v593
    %v662 = vunpack.c.l.b16 %v594
    %v663 = vpack.c.b16 %v632, %v631
    %v664 = vpack.c.b16 %v634, %v633
    %v665 = vpack.c.b16 %v636, %v635
    %v666 = vpack.c.b16 %v638, %v637
    %v667 = vpack.c.b16 %v640, %v639
    %v668 = vpack.c.b16 %v642, %v641
    %v669 = vpack.c.b16 %v644, %v643
    %v670 = vpack.c.b16 %v646, %v645
    %v671 = vpack.c.b16 %v648, %v647
    %v672 = vpack.c.b16 %v650, %v649
    %v673 = vpack.c.b16 %v652, %v651
    %v674 = vpack.c.b16 %v654, %v653
    %v675 = vpack.c.b16 %v656, %v655
    %v676 = vpack.c.b16 %v658, %v657
    %v677 = vpack.c.b16 %v660, %v659
    %v678 = vpack.c.b16 %v662, %v661
    %695 = vmatpush.bf16.msra.mxu0 %v670
    %696 = vmatpush.bf16.msra.mxu0 %v669
    %697 = vmatpush.bf16.msra.mxu0 %v668
    %698 = vmatpush.bf16.msra.mxu0 %v667
    %699 = vmatpush.bf16.msra.mxu0 %v666
    %700 = vmatpush.bf16.msra.mxu0 %v665
    %701 = vmatpush.bf16.msra.mxu0 %v664
    %702 = vmatpush.bf16.msra.mxu0 %v663
    %703 = vmatmul.bf16.gmra.mxu0 %v561
    %v704 = vpop.f32.mrf.mxu0
    %v705 = vadd.f32 %v597, %v704
    %v706 = vpop.f32.mrf.mxu0
    %707 = vdwg.mxu0
    %708 = vmatpush.bf16.msra.mxu0 %v678
    %709 = vmatpush.bf16.msra.mxu0 %v677
    %710 = vmatpush.bf16.msra.mxu0 %v676
    %711 = vmatpush.bf16.msra.mxu0 %v675
    %712 = vmatpush.bf16.msra.mxu0 %v674
    %713 = vmatpush.bf16.msra.mxu0 %v673
    %714 = vmatpush.bf16.msra.mxu0 %v672
    %715 = vmatpush.bf16.msra.mxu0 %v671
    %716 = vmatmul.bf16.gmra.mxu0 %v562
    %v717 = vpop.f32.mrf.mxu0
    %v718 = vadd.f32 %v705, %v717
    %v719 = vpop.f32.mrf.mxu0
    %720 = vdwg.mxu0
    %v721 = vxor.u32 %v718, 2147483648
    %v722 = vmul.f32 %v721, 1.442695
    %v723 = vpow.pop %v722
    %v724 = vadd.f32 %v723, 1.0
    %v725 = vrcp.pop %v724
    %v726 = vmul.f32 %v724, %v725
    %v727 = vsub.f32 1.0, %v726
    %v728 = vmul.f32 %v725, %v727
    %v729 = vadd.f32 %v725, %v728
    %vm730 = vweird.f32 %v724
    %vm731 = vweird.f32 %v725
    %vm732 = vmor %vm730, %vm731
    %v733 = vsel %vm732, %v725, %v729
    %v734 = vand.u32 2147483647, %v724
    %vm735 = vcmp.eq.f32.partialorder %v734, 8.507059e+37
    %v736 = vand.u32 %v724, 2147483648
    %v737 = vor.u32 1.1754944e-38, %v736
    %v738 = vsel %vm735, %v737, %v733
    %v739 = vmul.f32 1.0, %v738
    %v740 = vmul.f32 %v718, %v739
    %v741 = vpack.c.bf16 %v740, %v740
    %v742 = vld [vmem:[#allocation15] sm:$0xf]
    %v743 = vld [vmem:[#allocation15 + $0x4] sm:$0xf]
    %v744 = vld [vmem:[#allocation15 + $0x8] sm:$0xf]
    %v745 = vld [vmem:[#allocation15 + $0xc] sm:$0xf]
    %v746 = vld [vmem:[#allocation15 + $0x10] sm:$0xf]
    %v747 = vld [vmem:[#allocation15 + $0x14] sm:$0xf]
    %v748 = vld [vmem:[#allocation15 + $0x18] sm:$0xf]
    %v749 = vld [vmem:[#allocation15 + $0x1c] sm:$0xf]
    %v750 = vld [vmem:[#allocation15 + $0x20] sm:$0xf]
    %v751 = vld [vmem:[#allocation15 + $0x24] sm:$0xf]
    %v752 = vld [vmem:[#allocation15 + $0x28] sm:$0xf]
    %v753 = vld [vmem:[#allocation15 + $0x2c] sm:$0xf]
    %v754 = vld [vmem:[#allocation15 + $0x30] sm:$0xf]
    %v755 = vld [vmem:[#allocation15 + $0x34] sm:$0xf]
    %v756 = vld [vmem:[#allocation15 + $0x38] sm:$0xf]
    %v757 = vld [vmem:[#allocation15 + $0x3c] sm:$0xf]
    %v758 = vld [vmem:[#allocation16] sm:$0x1]
    %v760 = vperm.slane %v758, 0
    %v778 = vunpack.c.l.b16 %v742
    %v779 = vunpack.c.l.b16 %v743
    %v780 = vunpack.c.l.b16 %v744
    %v781 = vunpack.c.l.b16 %v745
    %v782 = vunpack.c.l.b16 %v746
    %v783 = vunpack.c.l.b16 %v747
    %v784 = vunpack.c.l.b16 %v748
    %v785 = vunpack.c.l.b16 %v749
    %v786 = vunpack.c.l.b16 %v750
    %v787 = vunpack.c.l.b16 %v751
    %v788 = vunpack.c.l.b16 %v752
    %v789 = vunpack.c.l.b16 %v753
    %v790 = vunpack.c.l.b16 %v754
    %v791 = vunpack.c.l.b16 %v755
    %v792 = vunpack.c.l.b16 %v756
    %v793 = vunpack.c.l.b16 %v757
    %v794 = vpack.c.b16 %v779, %v778
    %v795 = vpack.c.b16 %v781, %v780
    %v796 = vpack.c.b16 %v783, %v782
    %v797 = vpack.c.b16 %v785, %v784
    %v798 = vpack.c.b16 %v787, %v786
    %v799 = vpack.c.b16 %v789, %v788
    %v800 = vpack.c.b16 %v791, %v790
    %v801 = vpack.c.b16 %v793, %v792
    %810 = vmatpush.bf16.msra.mxu0 %v801
    %811 = vmatpush.bf16.msra.mxu0 %v800
    %812 = vmatpush.bf16.msra.mxu0 %v799
    %813 = vmatpush.bf16.msra.mxu0 %v798
    %814 = vmatpush.bf16.msra.mxu0 %v797
    %815 = vmatpush.bf16.msra.mxu0 %v796
    %816 = vmatpush.bf16.msra.mxu0 %v795
    %817 = vmatpush.bf16.msra.mxu0 %v794
    %818 = vmatmul.bf16.gmra.mxu0 %v741
    %v819 = vpop.f32.mrf.mxu0
    %v820 = vadd.f32 %v760, %v819
    %v821 = vpop.f32.mrf.mxu0
    %822 = vdwg.mxu0
    %v824 = vrot.slane %v820, 1
    %v825 = vperm.slane %v820, 0
    %v826 = vperm.slane %v824, 0
    %v829 = vadd.f32 %v550, %v825
    %v830 = vadd.f32 %v552, %v826
    %v831 = vrot.slane %v829, 4
    %v832 = vadd.f32 %v829, %v831
    %v833 = vrot.slane %v832, 2
    %v834 = vadd.f32 %v832, %v833
    %v835 = vrot.slane %v834, 1
    %v836 = vadd.f32 %v834, %v835
    %v837 = vrot.slane %v830, 4
    %v838 = vadd.f32 %v830, %v837
    %v839 = vrot.slane %v838, 2
    %v840 = vadd.f32 %v838, %v839
    %v841 = vrot.slane %v840, 1
    %v842 = vadd.f32 %v840, %v841
    %v843 = vrcp.pop 8.0
    %v844 = vmul.f32 8.0, %v843
    %v845 = vsub.f32 1.0, %v844
    %v846 = vmul.f32 %v843, %v845
    %v847 = vadd.f32 %v843, %v846
    %vm848 = vweird.f32 %v843
    %v849 = vsel %vm848, %v843, %v847
    %v850 = vmul.f32 %v836, %v849
    %v851 = vmul.f32 %v842, %v849
    %v852 = vxor.u32 %v850, 2147483648
    %v853 = vxor.u32 %v851, 2147483648
    %v854 = vmul.f32 %v852, 1.442695
    %v855 = vpow.pop %v854
    %v856 = vmul.f32 %v853, 1.442695
    %v857 = vpow.pop %v856
    %v858 = vadd.f32 %v855, 1.0
    %v859 = vadd.f32 %v857, 1.0
    %v860 = vrcp.pop %v858
    %v861 = vmul.f32 %v858, %v860
    %v862 = vsub.f32 1.0, %v861
    %v863 = vmul.f32 %v860, %v862
    %v864 = vadd.f32 %v860, %v863
    %vm865 = vweird.f32 %v858
    %vm866 = vweird.f32 %v860
    %vm867 = vmor %vm865, %vm866
    %v868 = vsel %vm867, %v860, %v864
    %v869 = vand.u32 2147483647, %v858
    %vm870 = vcmp.eq.f32.partialorder %v869, 8.507059e+37
    %v871 = vand.u32 %v858, 2147483648
    %v872 = vor.u32 1.1754944e-38, %v871
    %v873 = vsel %vm870, %v872, %v868
    %v874 = vmul.f32 1.0, %v873
    %v875 = vrcp.pop %v859
    %v876 = vmul.f32 %v859, %v875
    %v877 = vsub.f32 1.0, %v876
    %v878 = vmul.f32 %v875, %v877
    %v879 = vadd.f32 %v875, %v878
    %vm880 = vweird.f32 %v859
    %vm881 = vweird.f32 %v875
    %vm882 = vmor %vm880, %vm881
    %v883 = vsel %vm882, %v875, %v879
    %v884 = vand.u32 2147483647, %v859
    %vm885 = vcmp.eq.f32.partialorder %v884, 8.507059e+37
    %v886 = vand.u32 %v859, 2147483648
    %v887 = vor.u32 1.1754944e-38, %v886
    %v888 = vsel %vm885, %v887, %v883
    %v889 = vmul.f32 1.0, %v888
    %v890 = vmul.f32 %v850, %v874
    %v891 = vmul.f32 %v851, %v889
    %v892 = vpack.c.bf16 %v890, %v890
    %v893 = vpack.c.bf16 %v891, %v891
    %v894 = vld [vmem:[#allocation18] sm:$0xff]
    %v895 = vld [vmem:[#allocation18 + $0x8] sm:$0xff]
    %v896 = vld [vmem:[#allocation18 + $0x10] sm:$0xff]
    %v897 = vld [vmem:[#allocation18 + $0x18] sm:$0xff]
    %v898 = vld [vmem:[#allocation18 + $0x20] sm:$0xff]
    %v899 = vld [vmem:[#allocation18 + $0x28] sm:$0xff]
    %v900 = vld [vmem:[#allocation18 + $0x30] sm:$0xff]
    %v901 = vld [vmem:[#allocation18 + $0x38] sm:$0xff]
    %v902 = vld [vmem:[#allocation18 + $0x40] sm:$0xff]
    %v903 = vld [vmem:[#allocation18 + $0x48] sm:$0xff]
    %v904 = vld [vmem:[#allocation18 + $0x50] sm:$0xff]
    %v905 = vld [vmem:[#allocation18 + $0x58] sm:$0xff]
    %v906 = vld [vmem:[#allocation18 + $0x60] sm:$0xff]
    %v907 = vld [vmem:[#allocation18 + $0x68] sm:$0xff]
    %v908 = vld [vmem:[#allocation18 + $0x70] sm:$0xff]
    %v909 = vld [vmem:[#allocation18 + $0x78] sm:$0xff]
    %v910 = vld [vmem:[#allocation18 + $0x80] sm:$0xff]
    %v911 = vld [vmem:[#allocation18 + $0x88] sm:$0xff]
    %v912 = vld [vmem:[#allocation18 + $0x90] sm:$0xff]
    %v913 = vld [vmem:[#allocation18 + $0x98] sm:$0xff]
    %v914 = vld [vmem:[#allocation18 + $0xa0] sm:$0xff]
    %v915 = vld [vmem:[#allocation18 + $0xa8] sm:$0xff]
    %v916 = vld [vmem:[#allocation18 + $0xb0] sm:$0xff]
    %v917 = vld [vmem:[#allocation18 + $0xb8] sm:$0xff]
    %v918 = vld [vmem:[#allocation18 + $0xc0] sm:$0xff]
    %v919 = vld [vmem:[#allocation18 + $0xc8] sm:$0xff]
    %v920 = vld [vmem:[#allocation18 + $0xd0] sm:$0xff]
    %v921 = vld [vmem:[#allocation18 + $0xd8] sm:$0xff]
    %v922 = vld [vmem:[#allocation18 + $0xe0] sm:$0xff]
    %v923 = vld [vmem:[#allocation18 + $0xe8] sm:$0xff]
    %v924 = vld [vmem:[#allocation18 + $0xf0] sm:$0xff]
    %v925 = vld [vmem:[#allocation18 + $0xf8] sm:$0xff]
    %v926 = vld [vmem:[#allocation18 + $0x100] sm:$0xff]
    %v927 = vld [vmem:[#allocation18 + $0x108] sm:$0xff]
    %v928 = vld [vmem:[#allocation18 + $0x110] sm:$0xff]
    %v929 = vld [vmem:[#allocation18 + $0x118] sm:$0xff]
    %v930 = vld [vmem:[#allocation18 + $0x120] sm:$0xff]
    %v931 = vld [vmem:[#allocation18 + $0x128] sm:$0xff]
    %v932 = vld [vmem:[#allocation18 + $0x130] sm:$0xff]
    %v933 = vld [vmem:[#allocation18 + $0x138] sm:$0xff]
    %v934 = vld [vmem:[#allocation18 + $0x140] sm:$0xff]
    %v935 = vld [vmem:[#allocation18 + $0x148] sm:$0xff]
    %v936 = vld [vmem:[#allocation18 + $0x150] sm:$0xff]
    %v937 = vld [vmem:[#allocation18 + $0x158] sm:$0xff]
    %v938 = vld [vmem:[#allocation18 + $0x160] sm:$0xff]
    %v939 = vld [vmem:[#allocation18 + $0x168] sm:$0xff]
    %v940 = vld [vmem:[#allocation18 + $0x170] sm:$0xff]
    %v941 = vld [vmem:[#allocation18 + $0x178] sm:$0xff]
    %v942 = vld [vmem:[#allocation18 + $0x180] sm:$0xff]
    %v943 = vld [vmem:[#allocation18 + $0x188] sm:$0xff]
    %v944 = vld [vmem:[#allocation18 + $0x190] sm:$0xff]
    %v945 = vld [vmem:[#allocation18 + $0x198] sm:$0xff]
    %v946 = vld [vmem:[#allocation18 + $0x1a0] sm:$0xff]
    %v947 = vld [vmem:[#allocation18 + $0x1a8] sm:$0xff]
    %v948 = vld [vmem:[#allocation18 + $0x1b0] sm:$0xff]
    %v949 = vld [vmem:[#allocation18 + $0x1b8] sm:$0xff]
    %v950 = vld [vmem:[#allocation18 + $0x1c0] sm:$0xff]
    %v951 = vld [vmem:[#allocation18 + $0x1c8] sm:$0xff]
    %v952 = vld [vmem:[#allocation18 + $0x1d0] sm:$0xff]
    %v953 = vld [vmem:[#allocation18 + $0x1d8] sm:$0xff]
    %v954 = vld [vmem:[#allocation18 + $0x1e0] sm:$0xff]
    %v955 = vld [vmem:[#allocation18 + $0x1e8] sm:$0xff]
    %v956 = vld [vmem:[#allocation18 + $0x1f0] sm:$0xff]
    %v957 = vld [vmem:[#allocation18 + $0x1f8] sm:$0xff]
    %v958 = vld [vmem:[#allocation18 + $0x200] sm:$0xff]
    %v959 = vld [vmem:[#allocation18 + $0x208] sm:$0xff]
    %v960 = vld [vmem:[#allocation18 + $0x210] sm:$0xff]
    %v961 = vld [vmem:[#allocation18 + $0x218] sm:$0xff]
    %v962 = vld [vmem:[#allocation18 + $0x220] sm:$0xff]
    %v963 = vld [vmem:[#allocation18 + $0x228] sm:$0xff]
    %v964 = vld [vmem:[#allocation18 + $0x230] sm:$0xff]
    %v965 = vld [vmem:[#allocation18 + $0x238] sm:$0xff]
    %v966 = vld [vmem:[#allocation18 + $0x240] sm:$0xff]
    %v967 = vld [vmem:[#allocation18 + $0x248] sm:$0xff]
    %v968 = vld [vmem:[#allocation18 + $0x250] sm:$0xff]
    %v969 = vld [vmem:[#allocation18 + $0x258] sm:$0xff]
    %v970 = vld [vmem:[#allocation18 + $0x260] sm:$0xff]
    %v971 = vld [vmem:[#allocation18 + $0x268] sm:$0xff]
    %v972 = vld [vmem:[#allocation18 + $0x270] sm:$0xff]
    %v973 = vld [vmem:[#allocation18 + $0x278] sm:$0xff]
    %v974 = vld [vmem:[#allocation18 + $0x280] sm:$0xff]
    %v975 = vld [vmem:[#allocation18 + $0x288] sm:$0xff]
    %v976 = vld [vmem:[#allocation18 + $0x290] sm:$0xff]
    %v977 = vld [vmem:[#allocation18 + $0x298] sm:$0xff]
    %v978 = vld [vmem:[#allocation18 + $0x2a0] sm:$0xff]
    %v979 = vld [vmem:[#allocation18 + $0x2a8] sm:$0xff]
    %v980 = vld [vmem:[#allocation18 + $0x2b0] sm:$0xff]
    %v981 = vld [vmem:[#allocation18 + $0x2b8] sm:$0xff]
    %v982 = vld [vmem:[#allocation18 + $0x2c0] sm:$0xff]
    %v983 = vld [vmem:[#allocation18 + $0x2c8] sm:$0xff]
    %v984 = vld [vmem:[#allocation18 + $0x2d0] sm:$0xff]
    %v985 = vld [vmem:[#allocation18 + $0x2d8] sm:$0xff]
    %v986 = vld [vmem:[#allocation18 + $0x2e0] sm:$0xff]
    %v987 = vld [vmem:[#allocation18 + $0x2e8] sm:$0xff]
    %v988 = vld [vmem:[#allocation18 + $0x2f0] sm:$0xff]
    %v989 = vld [vmem:[#allocation18 + $0x2f8] sm:$0xff]
    %v990 = vld [vmem:[#allocation18 + $0x300] sm:$0xff]
    %v991 = vld [vmem:[#allocation18 + $0x308] sm:$0xff]
    %v992 = vld [vmem:[#allocation18 + $0x310] sm:$0xff]
    %v993 = vld [vmem:[#allocation18 + $0x318] sm:$0xff]
    %v994 = vld [vmem:[#allocation18 + $0x320] sm:$0xff]
    %v995 = vld [vmem:[#allocation18 + $0x328] sm:$0xff]
    %v996 = vld [vmem:[#allocation18 + $0x330] sm:$0xff]
    %v997 = vld [vmem:[#allocation18 + $0x338] sm:$0xff]
    %v998 = vld [vmem:[#allocation18 + $0x340] sm:$0xff]
    %v999 = vld [vmem:[#allocation18 + $0x348] sm:$0xff]
    %v1000 = vld [vmem:[#allocation18 + $0x350] sm:$0xff]
    %v1001 = vld [vmem:[#allocation18 + $0x358] sm:$0xff]
    %v1002 = vld [vmem:[#allocation18 + $0x360] sm:$0xff]
    %v1003 = vld [vmem:[#allocation18 + $0x368] sm:$0xff]
    %v1004 = vld [vmem:[#allocation18 + $0x370] sm:$0xff]
    %v1005 = vld [vmem:[#allocation18 + $0x378] sm:$0xff]
    %v1006 = vld [vmem:[#allocation18 + $0x380] sm:$0xff]
    %v1007 = vld [vmem:[#allocation18 + $0x388] sm:$0xff]
    %v1008 = vld [vmem:[#allocation18 + $0x390] sm:$0xff]
    %v1009 = vld [vmem:[#allocation18 + $0x398] sm:$0xff]
    %v1010 = vld [vmem:[#allocation18 + $0x3a0] sm:$0xff]
    %v1011 = vld [vmem:[#allocation18 + $0x3a8] sm:$0xff]
    %v1012 = vld [vmem:[#allocation18 + $0x3b0] sm:$0xff]
    %v1013 = vld [vmem:[#allocation18 + $0x3b8] sm:$0xff]
    %v1014 = vld [vmem:[#allocation18 + $0x3c0] sm:$0xff]
    %v1015 = vld [vmem:[#allocation18 + $0x3c8] sm:$0xff]
    %v1016 = vld [vmem:[#allocation18 + $0x3d0] sm:$0xff]
    %v1017 = vld [vmem:[#allocation18 + $0x3d8] sm:$0xff]
    %v1018 = vld [vmem:[#allocation18 + $0x3e0] sm:$0xff]
    %v1019 = vld [vmem:[#allocation18 + $0x3e8] sm:$0xff]
    %v1020 = vld [vmem:[#allocation18 + $0x3f0] sm:$0xff]
    %v1021 = vld [vmem:[#allocation18 + $0x3f8] sm:$0xff]
    %v1022 = vld [vmem:[#allocation18 + $0x400] sm:$0xff]
    %v1023 = vld [vmem:[#allocation18 + $0x408] sm:$0xff]
    %v1024 = vld [vmem:[#allocation18 + $0x410] sm:$0xff]
    %v1025 = vld [vmem:[#allocation18 + $0x418] sm:$0xff]
    %v1026 = vld [vmem:[#allocation18 + $0x420] sm:$0xff]
    %v1027 = vld [vmem:[#allocation18 + $0x428] sm:$0xff]
    %v1028 = vld [vmem:[#allocation18 + $0x430] sm:$0xff]
    %v1029 = vld [vmem:[#allocation18 + $0x438] sm:$0xff]
    %v1030 = vld [vmem:[#allocation18 + $0x440] sm:$0xff]
    %v1031 = vld [vmem:[#allocation18 + $0x448] sm:$0xff]
    %v1032 = vld [vmem:[#allocation18 + $0x450] sm:$0xff]
    %v1033 = vld [vmem:[#allocation18 + $0x458] sm:$0xff]
    %v1034 = vld [vmem:[#allocation18 + $0x460] sm:$0xff]
    %v1035 = vld [vmem:[#allocation18 + $0x468] sm:$0xff]
    %v1036 = vld [vmem:[#allocation18 + $0x470] sm:$0xff]
    %v1037 = vld [vmem:[#allocation18 + $0x478] sm:$0xff]
    %v1038 = vld [vmem:[#allocation18 + $0x480] sm:$0xff]
    %v1039 = vld [vmem:[#allocation18 + $0x488] sm:$0xff]
    %v1040 = vld [vmem:[#allocation18 + $0x490] sm:$0xff]
    %v1041 = vld [vmem:[#allocation18 + $0x498] sm:$0xff]
    %v1042 = vld [vmem:[#allocation18 + $0x4a0] sm:$0xff]
    %v1043 = vld [vmem:[#allocation18 + $0x4a8] sm:$0xff]
    %v1044 = vld [vmem:[#allocation18 + $0x4b0] sm:$0xff]
    %v1045 = vld [vmem:[#allocation18 + $0x4b8] sm:$0xff]
    %v1046 = vld [vmem:[#allocation18 + $0x4c0] sm:$0xff]
    %v1047 = vld [vmem:[#allocation18 + $0x4c8] sm:$0xff]
    %v1048 = vld [vmem:[#allocation18 + $0x4d0] sm:$0xff]
    %v1049 = vld [vmem:[#allocation18 + $0x4d8] sm:$0xff]
    %v1050 = vld [vmem:[#allocation18 + $0x4e0] sm:$0xff]
    %v1051 = vld [vmem:[#allocation18 + $0x4e8] sm:$0xff]
    %v1052 = vld [vmem:[#allocation18 + $0x4f0] sm:$0xff]
    %v1053 = vld [vmem:[#allocation18 + $0x4f8] sm:$0xff]
    %v1054 = vld [vmem:[#allocation18 + $0x500] sm:$0xff]
    %v1055 = vld [vmem:[#allocation18 + $0x508] sm:$0xff]
    %v1056 = vld [vmem:[#allocation18 + $0x510] sm:$0xff]
    %v1057 = vld [vmem:[#allocation18 + $0x518] sm:$0xff]
    %v1058 = vld [vmem:[#allocation18 + $0x520] sm:$0xff]
    %v1059 = vld [vmem:[#allocation18 + $0x528] sm:$0xff]
    %v1060 = vld [vmem:[#allocation18 + $0x530] sm:$0xff]
    %v1061 = vld [vmem:[#allocation18 + $0x538] sm:$0xff]
    %v1062 = vld [vmem:[#allocation18 + $0x540] sm:$0xff]
    %v1063 = vld [vmem:[#allocation18 + $0x548] sm:$0xff]
    %v1064 = vld [vmem:[#allocation18 + $0x550] sm:$0xff]
    %v1065 = vld [vmem:[#allocation18 + $0x558] sm:$0xff]
    %v1066 = vld [vmem:[#allocation18 + $0x560] sm:$0xff]
    %v1067 = vld [vmem:[#allocation18 + $0x568] sm:$0xff]
    %v1068 = vld [vmem:[#allocation18 + $0x570] sm:$0xff]
    %v1069 = vld [vmem:[#allocation18 + $0x578] sm:$0xff]
    %v1070 = vld [vmem:[#allocation18 + $0x580] sm:$0xff]
    %v1071 = vld [vmem:[#allocation18 + $0x588] sm:$0xff]
    %v1072 = vld [vmem:[#allocation18 + $0x590] sm:$0xff]
    %v1073 = vld [vmem:[#allocation18 + $0x598] sm:$0xff]
    %v1074 = vld [vmem:[#allocation18 + $0x5a0] sm:$0xff]
    %v1075 = vld [vmem:[#allocation18 + $0x5a8] sm:$0xff]
    %v1076 = vld [vmem:[#allocation18 + $0x5b0] sm:$0xff]
    %v1077 = vld [vmem:[#allocation18 + $0x5b8] sm:$0xff]
    %v1078 = vld [vmem:[#allocation18 + $0x5c0] sm:$0xff]
    %v1079 = vld [vmem:[#allocation18 + $0x5c8] sm:$0xff]
    %v1080 = vld [vmem:[#allocation18 + $0x5d0] sm:$0xff]
    %v1081 = vld [vmem:[#allocation18 + $0x5d8] sm:$0xff]
    %v1082 = vld [vmem:[#allocation18 + $0x5e0] sm:$0xff]
    %v1083 = vld [vmem:[#allocation18 + $0x5e8] sm:$0xff]
    %v1084 = vld [vmem:[#allocation18 + $0x5f0] sm:$0xff]
    %v1085 = vld [vmem:[#allocation18 + $0x5f8] sm:$0xff]
    %v1086 = vld [vmem:[#allocation19] sm:$0xff]
    %v1087 = vld [vmem:[#allocation19 + $0x8] sm:$0xff]
    %v1088 = vld [vmem:[#allocation19 + $0x10] sm:$0xff]
    %v1092 = vperm.slane %v1086, 0
    %v1093 = vperm.slane %v1086, 1
    %v1094 = vperm.slane %v1086, 2
    %v1095 = vperm.slane %v1086, 3
    %v1096 = vperm.slane %v1086, 4
    %v1097 = vperm.slane %v1086, 5
    %v1098 = vperm.slane %v1086, 6
    %v1099 = vperm.slane %v1086, 7
    %v1100 = vperm.slane %v1087, 0
    %v1101 = vperm.slane %v1087, 1
    %v1102 = vperm.slane %v1087, 2
    %v1103 = vperm.slane %v1087, 3
    %v1104 = vperm.slane %v1087, 4
    %v1105 = vperm.slane %v1087, 5
    %v1106 = vperm.slane %v1087, 6
    %v1107 = vperm.slane %v1087, 7
    %v1108 = vperm.slane %v1088, 0
    %v1109 = vperm.slane %v1088, 1
    %v1110 = vperm.slane %v1088, 2
    %v1111 = vperm.slane %v1088, 3
    %v1112 = vperm.slane %v1088, 4
    %v1113 = vperm.slane %v1088, 5
    %v1114 = vperm.slane %v1088, 6
    %v1115 = vperm.slane %v1088, 7
    %v1142 = vunpack.c.l.b16 %v892
    %v1143 = vunpack.c.l.b16 %v893
    %vm1144 = vcmask 1041409
    %v1145 = vsel %vm1144, %v1143, %v1142
    %v1146 = vpack.c.b16 %v1145, %v1145
    %v1340 = vunpack.c.l.b16 %v894
    %v1341 = vunpack.c.h.b16 %v894
    %v1342 = vunpack.c.l.b16 %v895
    %v1343 = vunpack.c.h.b16 %v895
    %v1344 = vunpack.c.l.b16 %v896
    %v1345 = vunpack.c.h.b16 %v896
    %v1346 = vunpack.c.l.b16 %v897
    %v1347 = vunpack.c.h.b16 %v897
    %v1348 = vunpack.c.l.b16 %v898
    %v1349 = vunpack.c.h.b16 %v898
    %v1350 = vunpack.c.l.b16 %v899
    %v1351 = vunpack.c.h.b16 %v899
    %v1352 = vunpack.c.l.b16 %v900
    %v1353 = vunpack.c.h.b16 %v900
    %v1354 = vunpack.c.l.b16 %v901
    %v1355 = vunpack.c.h.b16 %v901
    %v1356 = vunpack.c.l.b16 %v902
    %v1357 = vunpack.c.h.b16 %v902
    %v1358 = vunpack.c.l.b16 %v903
    %v1359 = vunpack.c.h.b16 %v903
    %v1360 = vunpack.c.l.b16 %v904
    %v1361 = vunpack.c.h.b16 %v904
    %v1362 = vunpack.c.l.b16 %v905
    %v1363 = vunpack.c.h.b16 %v905
    %v1364 = vunpack.c.l.b16 %v906
    %v1365 = vunpack.c.h.b16 %v906
    %v1366 = vunpack.c.l.b16 %v907
    %v1367 = vunpack.c.h.b16 %v907
    %v1368 = vunpack.c.l.b16 %v908
    %v1369 = vunpack.c.h.b16 %v908
    %v1370 = vunpack.c.l.b16 %v909
    %v1371 = vunpack.c.h.b16 %v909
    %v1372 = vunpack.c.l.b16 %v910
    %v1373 = vunpack.c.h.b16 %v910
    %v1374 = vunpack.c.l.b16 %v911
    %v1375 = vunpack.c.h.b16 %v911
    %v1376 = vunpack.c.l.b16 %v912
    %v1377 = vunpack.c.h.b16 %v912
    %v1378 = vunpack.c.l.b16 %v913
    %v1379 = vunpack.c.h.b16 %v913
    %v1380 = vunpack.c.l.b16 %v914
    %v1381 = vunpack.c.h.b16 %v914
    %v1382 = vunpack.c.l.b16 %v915
    %v1383 = vunpack.c.h.b16 %v915
    %v1384 = vunpack.c.l.b16 %v916
    %v1385 = vunpack.c.h.b16 %v916
    %v1386 = vunpack.c.l.b16 %v917
    %v1387 = vunpack.c.h.b16 %v917
    %v1388 = vunpack.c.l.b16 %v918
    %v1389 = vunpack.c.h.b16 %v918
    %v1390 = vunpack.c.l.b16 %v919
    %v1391 = vunpack.c.h.b16 %v919
    %v1392 = vunpack.c.l.b16 %v920
    %v1393 = vunpack.c.h.b16 %v920
    %v1394 = vunpack.c.l.b16 %v921
    %v1395 = vunpack.c.h.b16 %v921
    %v1396 = vunpack.c.l.b16 %v922
    %v1397 = vunpack.c.h.b16 %v922
    %v1398 = vunpack.c.l.b16 %v923
    %v1399 = vunpack.c.h.b16 %v923
    %v1400 = vunpack.c.l.b16 %v924
    %v1401 = vunpack.c.h.b16 %v924
    %v1402 = vunpack.c.l.b16 %v925
    %v1403 = vunpack.c.h.b16 %v925
    %v1404 = vunpack.c.l.b16 %v926
    %v1405 = vunpack.c.h.b16 %v926
    %v1406 = vunpack.c.l.b16 %v927
    %v1407 = vunpack.c.h.b16 %v927
    %v1408 = vunpack.c.l.b16 %v928
    %v1409 = vunpack.c.h.b16 %v928
    %v1410 = vunpack.c.l.b16 %v929
    %v1411 = vunpack.c.h.b16 %v929
    %v1412 = vunpack.c.l.b16 %v930
    %v1413 = vunpack.c.h.b16 %v930
    %v1414 = vunpack.c.l.b16 %v931
    %v1415 = vunpack.c.h.b16 %v931
    %v1416 = vunpack.c.l.b16 %v932
    %v1417 = vunpack.c.h.b16 %v932
    %v1418 = vunpack.c.l.b16 %v933
    %v1419 = vunpack.c.h.b16 %v933
    %v1420 = vunpack.c.l.b16 %v934
    %v1421 = vunpack.c.h.b16 %v934
    %v1422 = vunpack.c.l.b16 %v935
    %v1423 = vunpack.c.h.b16 %v935
    %v1424 = vunpack.c.l.b16 %v936
    %v1425 = vunpack.c.h.b16 %v936
    %v1426 = vunpack.c.l.b16 %v937
    %v1427 = vunpack.c.h.b16 %v937
    %v1428 = vunpack.c.l.b16 %v938
    %v1429 = vunpack.c.h.b16 %v938
    %v1430 = vunpack.c.l.b16 %v939
    %v1431 = vunpack.c.h.b16 %v939
    %v1432 = vunpack.c.l.b16 %v940
    %v1433 = vunpack.c.h.b16 %v940
    %v1434 = vunpack.c.l.b16 %v941
    %v1435 = vunpack.c.h.b16 %v941
    %v1436 = vunpack.c.l.b16 %v942
    %v1437 = vunpack.c.h.b16 %v942
    %v1438 = vunpack.c.l.b16 %v943
    %v1439 = vunpack.c.h.b16 %v943
    %v1440 = vunpack.c.l.b16 %v944
    %v1441 = vunpack.c.h.b16 %v944
    %v1442 = vunpack.c.l.b16 %v945
    %v1443 = vunpack.c.h.b16 %v945
    %v1444 = vunpack.c.l.b16 %v946
    %v1445 = vunpack.c.h.b16 %v946
    %v1446 = vunpack.c.l.b16 %v947
    %v1447 = vunpack.c.h.b16 %v947
    %v1448 = vunpack.c.l.b16 %v948
    %v1449 = vunpack.c.h.b16 %v948
    %v1450 = vunpack.c.l.b16 %v949
    %v1451 = vunpack.c.h.b16 %v949
    %v1452 = vunpack.c.l.b16 %v950
    %v1453 = vunpack.c.h.b16 %v950
    %v1454 = vunpack.c.l.b16 %v951
    %v1455 = vunpack.c.h.b16 %v951
    %v1456 = vunpack.c.l.b16 %v952
    %v1457 = vunpack.c.h.b16 %v952
    %v1458 = vunpack.c.l.b16 %v953
    %v1459 = vunpack.c.h.b16 %v953
    %v1460 = vunpack.c.l.b16 %v954
    %v1461 = vunpack.c.h.b16 %v954
    %v1462 = vunpack.c.l.b16 %v955
    %v1463 = vunpack.c.h.b16 %v955
    %v1464 = vunpack.c.l.b16 %v956
    %v1465 = vunpack.c.h.b16 %v956
    %v1466 = vunpack.c.l.b16 %v957
    %v1467 = vunpack.c.h.b16 %v957
    %v1468 = vunpack.c.l.b16 %v958
    %v1469 = vunpack.c.h.b16 %v958
    %v1470 = vunpack.c.l.b16 %v959
    %v1471 = vunpack.c.h.b16 %v959
    %v1472 = vunpack.c.l.b16 %v960
    %v1473 = vunpack.c.h.b16 %v960
    %v1474 = vunpack.c.l.b16 %v961
    %v1475 = vunpack.c.h.b16 %v961
    %v1476 = vunpack.c.l.b16 %v962
    %v1477 = vunpack.c.h.b16 %v962
    %v1478 = vunpack.c.l.b16 %v963
    %v1479 = vunpack.c.h.b16 %v963
    %v1480 = vunpack.c.l.b16 %v964
    %v1481 = vunpack.c.h.b16 %v964
    %v1482 = vunpack.c.l.b16 %v965
    %v1483 = vunpack.c.h.b16 %v965
    %v1484 = vunpack.c.l.b16 %v966
    %v1485 = vunpack.c.h.b16 %v966
    %v1486 = vunpack.c.l.b16 %v967
    %v1487 = vunpack.c.h.b16 %v967
    %v1488 = vunpack.c.l.b16 %v968
    %v1489 = vunpack.c.h.b16 %v968
    %v1490 = vunpack.c.l.b16 %v969
    %v1491 = vunpack.c.h.b16 %v969
    %v1492 = vunpack.c.l.b16 %v970
    %v1493 = vunpack.c.h.b16 %v970
    %v1494 = vunpack.c.l.b16 %v971
    %v1495 = vunpack.c.h.b16 %v971
    %v1496 = vunpack.c.l.b16 %v972
    %v1497 = vunpack.c.h.b16 %v972
    %v1498 = vunpack.c.l.b16 %v973
    %v1499 = vunpack.c.h.b16 %v973
    %v1500 = vunpack.c.l.b16 %v974
    %v1501 = vunpack.c.h.b16 %v974
    %v1502 = vunpack.c.l.b16 %v975
    %v1503 = vunpack.c.h.b16 %v975
    %v1504 = vunpack.c.l.b16 %v976
    %v1505 = vunpack.c.h.b16 %v976
    %v1506 = vunpack.c.l.b16 %v977
    %v1507 = vunpack.c.h.b16 %v977
    %v1508 = vunpack.c.l.b16 %v978
    %v1509 = vunpack.c.h.b16 %v978
    %v1510 = vunpack.c.l.b16 %v979
    %v1511 = vunpack.c.h.b16 %v979
    %v1512 = vunpack.c.l.b16 %v980
    %v1513 = vunpack.c.h.b16 %v980
    %v1514 = vunpack.c.l.b16 %v981
    %v1515 = vunpack.c.h.b16 %v981
    %v1516 = vunpack.c.l.b16 %v982
    %v1517 = vunpack.c.h.b16 %v982
    %v1518 = vunpack.c.l.b16 %v983
    %v1519 = vunpack.c.h.b16 %v983
    %v1520 = vunpack.c.l.b16 %v984
    %v1521 = vunpack.c.h.b16 %v984
    %v1522 = vunpack.c.l.b16 %v985
    %v1523 = vunpack.c.h.b16 %v985
    %v1524 = vunpack.c.l.b16 %v986
    %v1525 = vunpack.c.h.b16 %v986
    %v1526 = vunpack.c.l.b16 %v987
    %v1527 = vunpack.c.h.b16 %v987
    %v1528 = vunpack.c.l.b16 %v988
    %v1529 = vunpack.c.h.b16 %v988
    %v1530 = vunpack.c.l.b16 %v989
    %v1531 = vunpack.c.h.b16 %v989
    %v1532 = vunpack.c.l.b16 %v990
    %v1533 = vunpack.c.h.b16 %v990
    %v1534 = vunpack.c.l.b16 %v991
    %v1535 = vunpack.c.h.b16 %v991
    %v1536 = vunpack.c.l.b16 %v992
    %v1537 = vunpack.c.h.b16 %v992
    %v1538 = vunpack.c.l.b16 %v993
    %v1539 = vunpack.c.h.b16 %v993
    %v1540 = vunpack.c.l.b16 %v994
    %v1541 = vunpack.c.h.b16 %v994
    %v1542 = vunpack.c.l.b16 %v995
    %v1543 = vunpack.c.h.b16 %v995
    %v1544 = vunpack.c.l.b16 %v996
    %v1545 = vunpack.c.h.b16 %v996
    %v1546 = vunpack.c.l.b16 %v997
    %v1547 = vunpack.c.h.b16 %v997
    %v1548 = vunpack.c.l.b16 %v998
    %v1549 = vunpack.c.h.b16 %v998
    %v1550 = vunpack.c.l.b16 %v999
    %v1551 = vunpack.c.h.b16 %v999
    %v1552 = vunpack.c.l.b16 %v1000
    %v1553 = vunpack.c.h.b16 %v1000
    %v1554 = vunpack.c.l.b16 %v1001
    %v1555 = vunpack.c.h.b16 %v1001
    %v1556 = vunpack.c.l.b16 %v1002
    %v1557 = vunpack.c.h.b16 %v1002
    %v1558 = vunpack.c.l.b16 %v1003
    %v1559 = vunpack.c.h.b16 %v1003
    %v1560 = vunpack.c.l.b16 %v1004
    %v1561 = vunpack.c.h.b16 %v1004
    %v1562 = vunpack.c.l.b16 %v1005
    %v1563 = vunpack.c.h.b16 %v1005
    %v1564 = vunpack.c.l.b16 %v1006
    %v1565 = vunpack.c.h.b16 %v1006
    %v1566 = vunpack.c.l.b16 %v1007
    %v1567 = vunpack.c.h.b16 %v1007
    %v1568 = vunpack.c.l.b16 %v1008
    %v1569 = vunpack.c.h.b16 %v1008
    %v1570 = vunpack.c.l.b16 %v1009
    %v1571 = vunpack.c.h.b16 %v1009
    %v1572 = vunpack.c.l.b16 %v1010
    %v1573 = vunpack.c.h.b16 %v1010
    %v1574 = vunpack.c.l.b16 %v1011
    %v1575 = vunpack.c.h.b16 %v1011
    %v1576 = vunpack.c.l.b16 %v1012
    %v1577 = vunpack.c.h.b16 %v1012
    %v1578 = vunpack.c.l.b16 %v1013
    %v1579 = vunpack.c.h.b16 %v1013
    %v1580 = vunpack.c.l.b16 %v1014
    %v1581 = vunpack.c.h.b16 %v1014
    %v1582 = vunpack.c.l.b16 %v1015
    %v1583 = vunpack.c.h.b16 %v1015
    %v1584 = vunpack.c.l.b16 %v1016
    %v1585 = vunpack.c.h.b16 %v1016
    %v1586 = vunpack.c.l.b16 %v1017
    %v1587 = vunpack.c.h.b16 %v1017
    %v1588 = vunpack.c.l.b16 %v1018
    %v1589 = vunpack.c.h.b16 %v1018
    %v1590 = vunpack.c.l.b16 %v1019
    %v1591 = vunpack.c.h.b16 %v1019
    %v1592 = vunpack.c.l.b16 %v1020
    %v1593 = vunpack.c.h.b16 %v1020
    %v1594 = vunpack.c.l.b16 %v1021
    %v1595 = vunpack.c.h.b16 %v1021
    %v1596 = vunpack.c.l.b16 %v1022
    %v1597 = vunpack.c.h.b16 %v1022
    %v1598 = vunpack.c.l.b16 %v1023
    %v1599 = vunpack.c.h.b16 %v1023
    %v1600 = vunpack.c.l.b16 %v1024
    %v1601 = vunpack.c.h.b16 %v1024
    %v1602 = vunpack.c.l.b16 %v1025
    %v1603 = vunpack.c.h.b16 %v1025
    %v1604 = vunpack.c.l.b16 %v1026
    %v1605 = vunpack.c.h.b16 %v1026
    %v1606 = vunpack.c.l.b16 %v1027
    %v1607 = vunpack.c.h.b16 %v1027
    %v1608 = vunpack.c.l.b16 %v1028
    %v1609 = vunpack.c.h.b16 %v1028
    %v1610 = vunpack.c.l.b16 %v1029
    %v1611 = vunpack.c.h.b16 %v1029
    %v1612 = vunpack.c.l.b16 %v1030
    %v1613 = vunpack.c.h.b16 %v1030
    %v1614 = vunpack.c.l.b16 %v1031
    %v1615 = vunpack.c.h.b16 %v1031
    %v1616 = vunpack.c.l.b16 %v1032
    %v1617 = vunpack.c.h.b16 %v1032
    %v1618 = vunpack.c.l.b16 %v1033
    %v1619 = vunpack.c.h.b16 %v1033
    %v1620 = vunpack.c.l.b16 %v1034
    %v1621 = vunpack.c.h.b16 %v1034
    %v1622 = vunpack.c.l.b16 %v1035
    %v1623 = vunpack.c.h.b16 %v1035
    %v1624 = vunpack.c.l.b16 %v1036
    %v1625 = vunpack.c.h.b16 %v1036
    %v1626 = vunpack.c.l.b16 %v1037
    %v1627 = vunpack.c.h.b16 %v1037
    %v1628 = vunpack.c.l.b16 %v1038
    %v1629 = vunpack.c.h.b16 %v1038
    %v1630 = vunpack.c.l.b16 %v1039
    %v1631 = vunpack.c.h.b16 %v1039
    %v1632 = vunpack.c.l.b16 %v1040
    %v1633 = vunpack.c.h.b16 %v1040
    %v1634 = vunpack.c.l.b16 %v1041
    %v1635 = vunpack.c.h.b16 %v1041
    %v1636 = vunpack.c.l.b16 %v1042
    %v1637 = vunpack.c.h.b16 %v1042
    %v1638 = vunpack.c.l.b16 %v1043
    %v1639 = vunpack.c.h.b16 %v1043
    %v1640 = vunpack.c.l.b16 %v1044
    %v1641 = vunpack.c.h.b16 %v1044
    %v1642 = vunpack.c.l.b16 %v1045
    %v1643 = vunpack.c.h.b16 %v1045
    %v1644 = vunpack.c.l.b16 %v1046
    %v1645 = vunpack.c.h.b16 %v1046
    %v1646 = vunpack.c.l.b16 %v1047
    %v1647 = vunpack.c.h.b16 %v1047
    %v1648 = vunpack.c.l.b16 %v1048
    %v1649 = vunpack.c.h.b16 %v1048
    %v1650 = vunpack.c.l.b16 %v1049
    %v1651 = vunpack.c.h.b16 %v1049
    %v1652 = vunpack.c.l.b16 %v1050
    %v1653 = vunpack.c.h.b16 %v1050
    %v1654 = vunpack.c.l.b16 %v1051
    %v1655 = vunpack.c.h.b16 %v1051
    %v1656 = vunpack.c.l.b16 %v1052
    %v1657 = vunpack.c.h.b16 %v1052
    %v1658 = vunpack.c.l.b16 %v1053
    %v1659 = vunpack.c.h.b16 %v1053
    %v1660 = vunpack.c.l.b16 %v1054
    %v1661 = vunpack.c.h.b16 %v1054
    %v1662 = vunpack.c.l.b16 %v1055
    %v1663 = vunpack.c.h.b16 %v1055
    %v1664 = vunpack.c.l.b16 %v1056
    %v1665 = vunpack.c.h.b16 %v1056
    %v1666 = vunpack.c.l.b16 %v1057
    %v1667 = vunpack.c.h.b16 %v1057
    %v1668 = vunpack.c.l.b16 %v1058
    %v1669 = vunpack.c.h.b16 %v1058
    %v1670 = vunpack.c.l.b16 %v1059
    %v1671 = vunpack.c.h.b16 %v1059
    %v1672 = vunpack.c.l.b16 %v1060
    %v1673 = vunpack.c.h.b16 %v1060
    %v1674 = vunpack.c.l.b16 %v1061
    %v1675 = vunpack.c.h.b16 %v1061
    %v1676 = vunpack.c.l.b16 %v1062
    %v1677 = vunpack.c.h.b16 %v1062
    %v1678 = vunpack.c.l.b16 %v1063
    %v1679 = vunpack.c.h.b16 %v1063
    %v1680 = vunpack.c.l.b16 %v1064
    %v1681 = vunpack.c.h.b16 %v1064
    %v1682 = vunpack.c.l.b16 %v1065
    %v1683 = vunpack.c.h.b16 %v1065
    %v1684 = vunpack.c.l.b16 %v1066
    %v1685 = vunpack.c.h.b16 %v1066
    %v1686 = vunpack.c.l.b16 %v1067
    %v1687 = vunpack.c.h.b16 %v1067
    %v1688 = vunpack.c.l.b16 %v1068
    %v1689 = vunpack.c.h.b16 %v1068
    %v1690 = vunpack.c.l.b16 %v1069
    %v1691 = vunpack.c.h.b16 %v1069
    %v1692 = vunpack.c.l.b16 %v1070
    %v1693 = vunpack.c.h.b16 %v1070
    %v1694 = vunpack.c.l.b16 %v1071
    %v1695 = vunpack.c.h.b16 %v1071
    %v1696 = vunpack.c.l.b16 %v1072
    %v1697 = vunpack.c.h.b16 %v1072
    %v1698 = vunpack.c.l.b16 %v1073
    %v1699 = vunpack.c.h.b16 %v1073
    %v1700 = vunpack.c.l.b16 %v1074
    %v1701 = vunpack.c.h.b16 %v1074
    %v1702 = vunpack.c.l.b16 %v1075
    %v1703 = vunpack.c.h.b16 %v1075
    %v1704 = vunpack.c.l.b16 %v1076
    %v1705 = vunpack.c.h.b16 %v1076
    %v1706 = vunpack.c.l.b16 %v1077
    %v1707 = vunpack.c.h.b16 %v1077
    %v1708 = vunpack.c.l.b16 %v1078
    %v1709 = vunpack.c.h.b16 %v1078
    %v1710 = vunpack.c.l.b16 %v1079
    %v1711 = vunpack.c.h.b16 %v1079
    %v1712 = vunpack.c.l.b16 %v1080
    %v1713 = vunpack.c.h.b16 %v1080
    %v1714 = vunpack.c.l.b16 %v1081
    %v1715 = vunpack.c.h.b16 %v1081
    %v1716 = vunpack.c.l.b16 %v1082
    %v1717 = vunpack.c.h.b16 %v1082
    %v1718 = vunpack.c.l.b16 %v1083
    %v1719 = vunpack.c.h.b16 %v1083
    %v1720 = vunpack.c.l.b16 %v1084
    %v1721 = vunpack.c.h.b16 %v1084
    %v1722 = vunpack.c.l.b16 %v1085
    %v1723 = vunpack.c.h.b16 %v1085
    %v1724 = vpack.c.b16 %v1364, %v1340
    %v1725 = vpack.c.b16 %v1365, %v1341
    %v1726 = vpack.c.b16 %v1366, %v1342
    %v1727 = vpack.c.b16 %v1367, %v1343
    %v1728 = vpack.c.b16 %v1368, %v1344
    %v1729 = vpack.c.b16 %v1369, %v1345
    %v1730 = vpack.c.b16 %v1370, %v1346
    %v1731 = vpack.c.b16 %v1371, %v1347
    %v1732 = vpack.c.b16 %v1372, %v1348
    %v1733 = vpack.c.b16 %v1373, %v1349
    %v1734 = vpack.c.b16 %v1374, %v1350
    %v1735 = vpack.c.b16 %v1375, %v1351
    %v1736 = vpack.c.b16 %v1376, %v1352
    %v1737 = vpack.c.b16 %v1377, %v1353
    %v1738 = vpack.c.b16 %v1378, %v1354
    %v1739 = vpack.c.b16 %v1379, %v1355
    %v1740 = vpack.c.b16 %v1380, %v1356
    %v1741 = vpack.c.b16 %v1381, %v1357
    %v1742 = vpack.c.b16 %v1382, %v1358
    %v1743 = vpack.c.b16 %v1383, %v1359
    %v1744 = vpack.c.b16 %v1384, %v1360
    %v1745 = vpack.c.b16 %v1385, %v1361
    %v1746 = vpack.c.b16 %v1386, %v1362
    %v1747 = vpack.c.b16 %v1387, %v1363
    %v1748 = vpack.c.b16 %v1412, %v1388
    %v1749 = vpack.c.b16 %v1413, %v1389
    %v1750 = vpack.c.b16 %v1414, %v1390
    %v1751 = vpack.c.b16 %v1415, %v1391
    %v1752 = vpack.c.b16 %v1416, %v1392
    %v1753 = vpack.c.b16 %v1417, %v1393
    %v1754 = vpack.c.b16 %v1418, %v1394
    %v1755 = vpack.c.b16 %v1419, %v1395
    %v1756 = vpack.c.b16 %v1420, %v1396
    %v1757 = vpack.c.b16 %v1421, %v1397
    %v1758 = vpack.c.b16 %v1422, %v1398
    %v1759 = vpack.c.b16 %v1423, %v1399
    %v1760 = vpack.c.b16 %v1424, %v1400
    %v1761 = vpack.c.b16 %v1425, %v1401
    %v1762 = vpack.c.b16 %v1426, %v1402
    %v1763 = vpack.c.b16 %v1427, %v1403
    %v1764 = vpack.c.b16 %v1428, %v1404
    %v1765 = vpack.c.b16 %v1429, %v1405
    %v1766 = vpack.c.b16 %v1430, %v1406
    %v1767 = vpack.c.b16 %v1431, %v1407
    %v1768 = vpack.c.b16 %v1432, %v1408
    %v1769 = vpack.c.b16 %v1433, %v1409
    %v1770 = vpack.c.b16 %v1434, %v1410
    %v1771 = vpack.c.b16 %v1435, %v1411
    %v1772 = vpack.c.b16 %v1460, %v1436
    %v1773 = vpack.c.b16 %v1461, %v1437
    %v1774 = vpack.c.b16 %v1462, %v1438
    %v1775 = vpack.c.b16 %v1463, %v1439
    %v1776 = vpack.c.b16 %v1464, %v1440
    %v1777 = vpack.c.b16 %v1465, %v1441
    %v1778 = vpack.c.b16 %v1466, %v1442
    %v1779 = vpack.c.b16 %v1467, %v1443
    %v1780 = vpack.c.b16 %v1468, %v1444
    %v1781 = vpack.c.b16 %v1469, %v1445
    %v1782 = vpack.c.b16 %v1470, %v1446
    %v1783 = vpack.c.b16 %v1471, %v1447
    %v1784 = vpack.c.b16 %v1472, %v1448
    %v1785 = vpack.c.b16 %v1473, %v1449
    %v1786 = vpack.c.b16 %v1474, %v1450
    %v1787 = vpack.c.b16 %v1475, %v1451
    %v1788 = vpack.c.b16 %v1476, %v1452
    %v1789 = vpack.c.b16 %v1477, %v1453
    %v1790 = vpack.c.b16 %v1478, %v1454
    %v1791 = vpack.c.b16 %v1479, %v1455
    %v1792 = vpack.c.b16 %v1480, %v1456
    %v1793 = vpack.c.b16 %v1481, %v1457
    %v1794 = vpack.c.b16 %v1482, %v1458
    %v1795 = vpack.c.b16 %v1483, %v1459
    %v1796 = vpack.c.b16 %v1508, %v1484
    %v1797 = vpack.c.b16 %v1509, %v1485
    %v1798 = vpack.c.b16 %v1510, %v1486
    %v1799 = vpack.c.b16 %v1511, %v1487
    %v1800 = vpack.c.b16 %v1512, %v1488
    %v1801 = vpack.c.b16 %v1513, %v1489
    %v1802 = vpack.c.b16 %v1514, %v1490
    %v1803 = vpack.c.b16 %v1515, %v1491
    %v1804 = vpack.c.b16 %v1516, %v1492
    %v1805 = vpack.c.b16 %v1517, %v1493
    %v1806 = vpack.c.b16 %v1518, %v1494
    %v1807 = vpack.c.b16 %v1519, %v1495
    %v1808 = vpack.c.b16 %v1520, %v1496
    %v1809 = vpack.c.b16 %v1521, %v1497
    %v1810 = vpack.c.b16 %v1522, %v1498
    %v1811 = vpack.c.b16 %v1523, %v1499
    %v1812 = vpack.c.b16 %v1524, %v1500
    %v1813 = vpack.c.b16 %v1525, %v1501
    %v1814 = vpack.c.b16 %v1526, %v1502
    %v1815 = vpack.c.b16 %v1527, %v1503
    %v1816 = vpack.c.b16 %v1528, %v1504
    %v1817 = vpack.c.b16 %v1529, %v1505
    %v1818 = vpack.c.b16 %v1530, %v1506
    %v1819 = vpack.c.b16 %v1531, %v1507
    %v1820 = vpack.c.b16 %v1556, %v1532
    %v1821 = vpack.c.b16 %v1557, %v1533
    %v1822 = vpack.c.b16 %v1558, %v1534
    %v1823 = vpack.c.b16 %v1559, %v1535
    %v1824 = vpack.c.b16 %v1560, %v1536
    %v1825 = vpack.c.b16 %v1561, %v1537
    %v1826 = vpack.c.b16 %v1562, %v1538
    %v1827 = vpack.c.b16 %v1563, %v1539
    %v1828 = vpack.c.b16 %v1564, %v1540
    %v1829 = vpack.c.b16 %v1565, %v1541
    %v1830 = vpack.c.b16 %v1566, %v1542
    %v1831 = vpack.c.b16 %v1567, %v1543
    %v1832 = vpack.c.b16 %v1568, %v1544
    %v1833 = vpack.c.b16 %v1569, %v1545
    %v1834 = vpack.c.b16 %v1570, %v1546
    %v1835 = vpack.c.b16 %v1571, %v1547
    %v1836 = vpack.c.b16 %v1572, %v1548
    %v1837 = vpack.c.b16 %v1573, %v1549
    %v1838 = vpack.c.b16 %v1574, %v1550
    %v1839 = vpack.c.b16 %v1575, %v1551
    %v1840 = vpack.c.b16 %v1576, %v1552
    %v1841 = vpack.c.b16 %v1577, %v1553
    %v1842 = vpack.c.b16 %v1578, %v1554
    %v1843 = vpack.c.b16 %v1579, %v1555
    %v1844 = vpack.c.b16 %v1604, %v1580
    %v1845 = vpack.c.b16 %v1605, %v1581
    %v1846 = vpack.c.b16 %v1606, %v1582
    %v1847 = vpack.c.b16 %v1607, %v1583
    %v1848 = vpack.c.b16 %v1608, %v1584
    %v1849 = vpack.c.b16 %v1609, %v1585
    %v1850 = vpack.c.b16 %v1610, %v1586
    %v1851 = vpack.c.b16 %v1611, %v1587
    %v1852 = vpack.c.b16 %v1612, %v1588
    %v1853 = vpack.c.b16 %v1613, %v1589
    %v1854 = vpack.c.b16 %v1614, %v1590
    %v1855 = vpack.c.b16 %v1615, %v1591
    %v1856 = vpack.c.b16 %v1616, %v1592
    %v1857 = vpack.c.b16 %v1617, %v1593
    %v1858 = vpack.c.b16 %v1618, %v1594
    %v1859 = vpack.c.b16 %v1619, %v1595
    %v1860 = vpack.c.b16 %v1620, %v1596
    %v1861 = vpack.c.b16 %v1621, %v1597
    %v1862 = vpack.c.b16 %v1622, %v1598
    %v1863 = vpack.c.b16 %v1623, %v1599
    %v1864 = vpack.c.b16 %v1624, %v1600
    %v1865 = vpack.c.b16 %v1625, %v1601
    %v1866 = vpack.c.b16 %v1626, %v1602
    %v1867 = vpack.c.b16 %v1627, %v1603
    %v1868 = vpack.c.b16 %v1652, %v1628
    %v1869 = vpack.c.b16 %v1653, %v1629
    %v1870 = vpack.c.b16 %v1654, %v1630
    %v1871 = vpack.c.b16 %v1655, %v1631
    %v1872 = vpack.c.b16 %v1656, %v1632
    %v1873 = vpack.c.b16 %v1657, %v1633
    %v1874 = vpack.c.b16 %v1658, %v1634
    %v1875 = vpack.c.b16 %v1659, %v1635
    %v1876 = vpack.c.b16 %v1660, %v1636
    %v1877 = vpack.c.b16 %v1661, %v1637
    %v1878 = vpack.c.b16 %v1662, %v1638
    %v1879 = vpack.c.b16 %v1663, %v1639
    %v1880 = vpack.c.b16 %v1664, %v1640
    %v1881 = vpack.c.b16 %v1665, %v1641
    %v1882 = vpack.c.b16 %v1666, %v1642
    %v1883 = vpack.c.b16 %v1667, %v1643
    %v1884 = vpack.c.b16 %v1668, %v1644
    %v1885 = vpack.c.b16 %v1669, %v1645
    %v1886 = vpack.c.b16 %v1670, %v1646
    %v1887 = vpack.c.b16 %v1671, %v1647
    %v1888 = vpack.c.b16 %v1672, %v1648
    %v1889 = vpack.c.b16 %v1673, %v1649
    %v1890 = vpack.c.b16 %v1674, %v1650
    %v1891 = vpack.c.b16 %v1675, %v1651
    %v1892 = vpack.c.b16 %v1700, %v1676
    %v1893 = vpack.c.b16 %v1701, %v1677
    %v1894 = vpack.c.b16 %v1702, %v1678
    %v1895 = vpack.c.b16 %v1703, %v1679
    %v1896 = vpack.c.b16 %v1704, %v1680
    %v1897 = vpack.c.b16 %v1705, %v1681
    %v1898 = vpack.c.b16 %v1706, %v1682
    %v1899 = vpack.c.b16 %v1707, %v1683
    %v1900 = vpack.c.b16 %v1708, %v1684
    %v1901 = vpack.c.b16 %v1709, %v1685
    %v1902 = vpack.c.b16 %v1710, %v1686
    %v1903 = vpack.c.b16 %v1711, %v1687
    %v1904 = vpack.c.b16 %v1712, %v1688
    %v1905 = vpack.c.b16 %v1713, %v1689
    %v1906 = vpack.c.b16 %v1714, %v1690
    %v1907 = vpack.c.b16 %v1715, %v1691
    %v1908 = vpack.c.b16 %v1716, %v1692
    %v1909 = vpack.c.b16 %v1717, %v1693
    %v1910 = vpack.c.b16 %v1718, %v1694
    %v1911 = vpack.c.b16 %v1719, %v1695
    %v1912 = vpack.c.b16 %v1720, %v1696
    %v1913 = vpack.c.b16 %v1721, %v1697
    %v1914 = vpack.c.b16 %v1722, %v1698
    %v1915 = vpack.c.b16 %v1723, %v1699
    %2108 = vmatpush.bf16.msra.mxu0 %v1892
    %2109 = vmatpush.bf16.msra.mxu0 %v1868
    %2110 = vmatpush.bf16.msra.mxu0 %v1844
    %2111 = vmatpush.bf16.msra.mxu0 %v1820
    %2112 = vmatpush.bf16.msra.mxu0 %v1796
    %2113 = vmatpush.bf16.msra.mxu0 %v1772
    %2114 = vmatpush.bf16.msra.mxu0 %v1748
    %2115 = vmatpush.bf16.msra.mxu0 %v1724
    %2116 = vmatmul.bf16.gmra.mxu0 %v1146
    %v2117 = vpop.f32.mrf.mxu0
    %v2118 = vadd.f32 %v1092, %v2117
    %v2119 = vpop.f32.mrf.mxu0
    %2120 = vdwg.mxu0
    %2121 = vmatpush.bf16.msra.mxu0 %v1893
    %2122 = vmatpush.bf16.msra.mxu0 %v1869
    %2123 = vmatpush.bf16.msra.mxu0 %v1845
    %2124 = vmatpush.bf16.msra.mxu0 %v1821
    %2125 = vmatpush.bf16.msra.mxu0 %v1797
    %2126 = vmatpush.bf16.msra.mxu0 %v1773
    %2127 = vmatpush.bf16.msra.mxu0 %v1749
    %2128 = vmatpush.bf16.msra.mxu0 %v1725
    %2129 = vmatmul.bf16.gmra.mxu0 %v1146
    %v2130 = vpop.f32.mrf.mxu0
    %v2131 = vadd.f32 %v1093, %v2130
    %v2132 = vpop.f32.mrf.mxu0
    %2133 = vdwg.mxu0
    %2134 = vmatpush.bf16.msra.mxu0 %v1894
    %2135 = vmatpush.bf16.msra.mxu0 %v1870
    %2136 = vmatpush.bf16.msra.mxu0 %v1846
    %2137 = vmatpush.bf16.msra.mxu0 %v1822
    %2138 = vmatpush.bf16.msra.mxu0 %v1798
    %2139 = vmatpush.bf16.msra.mxu0 %v1774
    %2140 = vmatpush.bf16.msra.mxu0 %v1750
    %2141 = vmatpush.bf16.msra.mxu0 %v1726
    %2142 = vmatmul.bf16.gmra.mxu0 %v1146
    %v2143 = vpop.f32.mrf.mxu0
    %v2144 = vadd.f32 %v1094, %v2143
    %v2145 = vpop.f32.mrf.mxu0
    %2146 = vdwg.mxu0
    %2147 = vmatpush.bf16.msra.mxu0 %v1895
    %2148 = vmatpush.bf16.msra.mxu0 %v1871
    %2149 = vmatpush.bf16.msra.mxu0 %v1847
    %2150 = vmatpush.bf16.msra.mxu0 %v1823
    %2151 = vmatpush.bf16.msra.mxu0 %v1799
    %2152 = vmatpush.bf16.msra.mxu0 %v1775
    %2153 = vmatpush.bf16.msra.mxu0 %v1751
    %2154 = vmatpush.bf16.msra.mxu0 %v1727
    %2155 = vmatmul.bf16.gmra.mxu0 %v1146
    %v2156 = vpop.f32.mrf.mxu0
    %v2157 = vadd.f32 %v1095, %v2156
    %v2158 = vpop.f32.mrf.mxu0
    %2159 = vdwg.mxu0
    %2160 = vmatpush.bf16.msra.mxu0 %v1896
    %2161 = vmatpush.bf16.msra.mxu0 %v1872
    %2162 = vmatpush.bf16.msra.mxu0 %v1848
    %2163 = vmatpush.bf16.msra.mxu0 %v1824
    %2164 = vmatpush.bf16.msra.mxu0 %v1800
    %2165 = vmatpush.bf16.msra.mxu0 %v1776
    %2166 = vmatpush.bf16.msra.mxu0 %v1752
    %2167 = vmatpush.bf16.msra.mxu0 %v1728
    %2168 = vmatmul.bf16.gmra.mxu0 %v1146
    %v2169 = vpop.f32.mrf.mxu0
    %v2170 = vadd.f32 %v1096, %v2169
    %v2171 = vpop.f32.mrf.mxu0
    %2172 = vdwg.mxu0
    %2173 = vmatpush.bf16.msra.mxu0 %v1897
    %2174 = vmatpush.bf16.msra.mxu0 %v1873
    %2175 = vmatpush.bf16.msra.mxu0 %v1849
    %2176 = vmatpush.bf16.msra.mxu0 %v1825
    %2177 = vmatpush.bf16.msra.mxu0 %v1801
    %2178 = vmatpush.bf16.msra.mxu0 %v1777
    %2179 = vmatpush.bf16.msra.mxu0 %v1753
    %2180 = vmatpush.bf16.msra.mxu0 %v1729
    %2181 = vmatmul.bf16.gmra.mxu0 %v1146
    %v2182 = vpop.f32.mrf.mxu0
    %v2183 = vadd.f32 %v1097, %v2182
    %v2184 = vpop.f32.mrf.mxu0
    %2185 = vdwg.mxu0
    %2186 = vmatpush.bf16.msra.mxu0 %v1898
    %2187 = vmatpush.bf16.msra.mxu0 %v1874
    %2188 = vmatpush.bf16.msra.mxu0 %v1850
    %2189 = vmatpush.bf16.msra.mxu0 %v1826
    %2190 = vmatpush.bf16.msra.mxu0 %v1802
    %2191 = vmatpush.bf16.msra.mxu0 %v1778
    %2192 = vmatpush.bf16.msra.mxu0 %v1754
    %2193 = vmatpush.bf16.msra.mxu0 %v1730
    %2194 = vmatmul.bf16.gmra.mxu0 %v1146
    %v2195 = vpop.f32.mrf.mxu0
    %v2196 = vadd.f32 %v1098, %v2195
    %v2197 = vpop.f32.mrf.mxu0
    %2198 = vdwg.mxu0
    %2199 = vmatpush.bf16.msra.mxu0 %v1899
    %2200 = vmatpush.bf16.msra.mxu0 %v1875
    %2201 = vmatpush.bf16.msra.mxu0 %v1851
    %2202 = vmatpush.bf16.msra.mxu0 %v1827
    %2203 = vmatpush.bf16.msra.mxu0 %v1803
    %2204 = vmatpush.bf16.msra.mxu0 %v1779
    %2205 = vmatpush.bf16.msra.mxu0 %v1755
    %2206 = vmatpush.bf16.msra.mxu0 %v1731
    %2207 = vmatmul.bf16.gmra.mxu0 %v1146
    %v2208 = vpop.f32.mrf.mxu0
    %v2209 = vadd.f32 %v1099, %v2208
    %v2210 = vpop.f32.mrf.mxu0
    %2211 = vdwg.mxu0
    %2212 = vmatpush.bf16.msra.mxu0 %v1900
    %2213 = vmatpush.bf16.msra.mxu0 %v1876
    %2214 = vmatpush.bf16.msra.mxu0 %v1852
    %2215 = vmatpush.bf16.msra.mxu0 %v1828
    %2216 = vmatpush.bf16.msra.mxu0 %v1804
    %2217 = vmatpush.bf16.msra.mxu0 %v1780
    %2218 = vmatpush.bf16.msra.mxu0 %v1756
    %2219 = vmatpush.bf16.msra.mxu0 %v1732
    %2220 = vmatmul.bf16.gmra.mxu0 %v1146
    %v2221 = vpop.f32.mrf.mxu0
    %v2222 = vadd.f32 %v1100, %v2221
    %v2223 = vpop.f32.mrf.mxu0
    %2224 = vdwg.mxu0
    %2225 = vmatpush.bf16.msra.mxu0 %v1901
    %2226 = vmatpush.bf16.msra.mxu0 %v1877
    %2227 = vmatpush.bf16.msra.mxu0 %v1853
    %2228 = vmatpush.bf16.msra.mxu0 %v1829
    %2229 = vmatpush.bf16.msra.mxu0 %v1805
    %2230 = vmatpush.bf16.msra.mxu0 %v1781
    %2231 = vmatpush.bf16.msra.mxu0 %v1757
    %2232 = vmatpush.bf16.msra.mxu0 %v1733
    %2233 = vmatmul.bf16.gmra.mxu0 %v1146
    %v2234 = vpop.f32.mrf.mxu0
    %v2235 = vadd.f32 %v1101, %v2234
    %v2236 = vpop.f32.mrf.mxu0
    %2237 = vdwg.mxu0
    %2238 = vmatpush.bf16.msra.mxu0 %v1902
    %2239 = vmatpush.bf16.msra.mxu0 %v1878
    %2240 = vmatpush.bf16.msra.mxu0 %v1854
    %2241 = vmatpush.bf16.msra.mxu0 %v1830
    %2242 = vmatpush.bf16.msra.mxu0 %v1806
    %2243 = vmatpush.bf16.msra.mxu0 %v1782
    %2244 = vmatpush.bf16.msra.mxu0 %v1758
    %2245 = vmatpush.bf16.msra.mxu0 %v1734
    %2246 = vmatmul.bf16.gmra.mxu0 %v1146
    %v2247 = vpop.f32.mrf.mxu0
    %v2248 = vadd.f32 %v1102, %v2247
    %v2249 = vpop.f32.mrf.mxu0
    %2250 = vdwg.mxu0
    %2251 = vmatpush.bf16.msra.mxu0 %v1903
    %2252 = vmatpush.bf16.msra.mxu0 %v1879
    %2253 = vmatpush.bf16.msra.mxu0 %v1855
    %2254 = vmatpush.bf16.msra.mxu0 %v1831
    %2255 = vmatpush.bf16.msra.mxu0 %v1807
    %2256 = vmatpush.bf16.msra.mxu0 %v1783
    %2257 = vmatpush.bf16.msra.mxu0 %v1759
    %2258 = vmatpush.bf16.msra.mxu0 %v1735
    %2259 = vmatmul.bf16.gmra.mxu0 %v1146
    %v2260 = vpop.f32.mrf.mxu0
    %v2261 = vadd.f32 %v1103, %v2260
    %v2262 = vpop.f32.mrf.mxu0
    %2263 = vdwg.mxu0
    %2264 = vmatpush.bf16.msra.mxu0 %v1904
    %2265 = vmatpush.bf16.msra.mxu0 %v1880
    %2266 = vmatpush.bf16.msra.mxu0 %v1856
    %2267 = vmatpush.bf16.msra.mxu0 %v1832
    %2268 = vmatpush.bf16.msra.mxu0 %v1808
    %2269 = vmatpush.bf16.msra.mxu0 %v1784
    %2270 = vmatpush.bf16.msra.mxu0 %v1760
    %2271 = vmatpush.bf16.msra.mxu0 %v1736
    %2272 = vmatmul.bf16.gmra.mxu0 %v1146
    %v2273 = vpop.f32.mrf.mxu0
    %v2274 = vadd.f32 %v1104, %v2273
    %v2275 = vpop.f32.mrf.mxu0
    %2276 = vdwg.mxu0
    %2277 = vmatpush.bf16.msra.mxu0 %v1905
    %2278 = vmatpush.bf16.msra.mxu0 %v1881
    %2279 = vmatpush.bf16.msra.mxu0 %v1857
    %2280 = vmatpush.bf16.msra.mxu0 %v1833
    %2281 = vmatpush.bf16.msra.mxu0 %v1809
    %2282 = vmatpush.bf16.msra.mxu0 %v1785
    %2283 = vmatpush.bf16.msra.mxu0 %v1761
    %2284 = vmatpush.bf16.msra.mxu0 %v1737
    %2285 = vmatmul.bf16.gmra.mxu0 %v1146
    %v2286 = vpop.f32.mrf.mxu0
    %v2287 = vadd.f32 %v1105, %v2286
    %v2288 = vpop.f32.mrf.mxu0
    %2289 = vdwg.mxu0
    %2290 = vmatpush.bf16.msra.mxu0 %v1906
    %2291 = vmatpush.bf16.msra.mxu0 %v1882
    %2292 = vmatpush.bf16.msra.mxu0 %v1858
    %2293 = vmatpush.bf16.msra.mxu0 %v1834
    %2294 = vmatpush.bf16.msra.mxu0 %v1810
    %2295 = vmatpush.bf16.msra.mxu0 %v1786
    %2296 = vmatpush.bf16.msra.mxu0 %v1762
    %2297 = vmatpush.bf16.msra.mxu0 %v1738
    %2298 = vmatmul.bf16.gmra.mxu0 %v1146
    %v2299 = vpop.f32.mrf.mxu0
    %v2300 = vadd.f32 %v1106, %v2299
    %v2301 = vpop.f32.mrf.mxu0
    %2302 = vdwg.mxu0
    %2303 = vmatpush.bf16.msra.mxu0 %v1907
    %2304 = vmatpush.bf16.msra.mxu0 %v1883
    %2305 = vmatpush.bf16.msra.mxu0 %v1859
    %2306 = vmatpush.bf16.msra.mxu0 %v1835
    %2307 = vmatpush.bf16.msra.mxu0 %v1811
    %2308 = vmatpush.bf16.msra.mxu0 %v1787
    %2309 = vmatpush.bf16.msra.mxu0 %v1763
    %2310 = vmatpush.bf16.msra.mxu0 %v1739
    %2311 = vmatmul.bf16.gmra.mxu0 %v1146
    %v2312 = vpop.f32.mrf.mxu0
    %v2313 = vadd.f32 %v1107, %v2312
    %v2314 = vpop.f32.mrf.mxu0
    %2315 = vdwg.mxu0
    %2316 = vmatpush.bf16.msra.mxu0 %v1908
    %2317 = vmatpush.bf16.msra.mxu0 %v1884
    %2318 = vmatpush.bf16.msra.mxu0 %v1860
    %2319 = vmatpush.bf16.msra.mxu0 %v1836
    %2320 = vmatpush.bf16.msra.mxu0 %v1812
    %2321 = vmatpush.bf16.msra.mxu0 %v1788
    %2322 = vmatpush.bf16.msra.mxu0 %v1764
    %2323 = vmatpush.bf16.msra.mxu0 %v1740
    %2324 = vmatmul.bf16.gmra.mxu0 %v1146
    %v2325 = vpop.f32.mrf.mxu0
    %v2326 = vadd.f32 %v1108, %v2325
    %v2327 = vpop.f32.mrf.mxu0
    %2328 = vdwg.mxu0
    %2329 = vmatpush.bf16.msra.mxu0 %v1909
    %2330 = vmatpush.bf16.msra.mxu0 %v1885
    %2331 = vmatpush.bf16.msra.mxu0 %v1861
    %2332 = vmatpush.bf16.msra.mxu0 %v1837
    %2333 = vmatpush.bf16.msra.mxu0 %v1813
    %2334 = vmatpush.bf16.msra.mxu0 %v1789
    %2335 = vmatpush.bf16.msra.mxu0 %v1765
    %2336 = vmatpush.bf16.msra.mxu0 %v1741
    %2337 = vmatmul.bf16.gmra.mxu0 %v1146
    %v2338 = vpop.f32.mrf.mxu0
    %v2339 = vadd.f32 %v1109, %v2338
    %v2340 = vpop.f32.mrf.mxu0
    %2341 = vdwg.mxu0
    %2342 = vmatpush.bf16.msra.mxu0 %v1910
    %2343 = vmatpush.bf16.msra.mxu0 %v1886
    %2344 = vmatpush.bf16.msra.mxu0 %v1862
    %2345 = vmatpush.bf16.msra.mxu0 %v1838
    %2346 = vmatpush.bf16.msra.mxu0 %v1814
    %2347 = vmatpush.bf16.msra.mxu0 %v1790
    %2348 = vmatpush.bf16.msra.mxu0 %v1766
    %2349 = vmatpush.bf16.msra.mxu0 %v1742
    %2350 = vmatmul.bf16.gmra.mxu0 %v1146
    %v2351 = vpop.f32.mrf.mxu0
    %v2352 = vadd.f32 %v1110, %v2351
    %v2353 = vpop.f32.mrf.mxu0
    %2354 = vdwg.mxu0
    %2355 = vmatpush.bf16.msra.mxu0 %v1911
    %2356 = vmatpush.bf16.msra.mxu0 %v1887
    %2357 = vmatpush.bf16.msra.mxu0 %v1863
    %2358 = vmatpush.bf16.msra.mxu0 %v1839
    %2359 = vmatpush.bf16.msra.mxu0 %v1815
    %2360 = vmatpush.bf16.msra.mxu0 %v1791
    %2361 = vmatpush.bf16.msra.mxu0 %v1767
    %2362 = vmatpush.bf16.msra.mxu0 %v1743
    %2363 = vmatmul.bf16.gmra.mxu0 %v1146
    %v2364 = vpop.f32.mrf.mxu0
    %v2365 = vadd.f32 %v1111, %v2364
    %v2366 = vpop.f32.mrf.mxu0
    %2367 = vdwg.mxu0
    %2368 = vmatpush.bf16.msra.mxu0 %v1912
    %2369 = vmatpush.bf16.msra.mxu0 %v1888
    %2370 = vmatpush.bf16.msra.mxu0 %v1864
    %2371 = vmatpush.bf16.msra.mxu0 %v1840
    %2372 = vmatpush.bf16.msra.mxu0 %v1816
    %2373 = vmatpush.bf16.msra.mxu0 %v1792
    %2374 = vmatpush.bf16.msra.mxu0 %v1768
    %2375 = vmatpush.bf16.msra.mxu0 %v1744
    %2376 = vmatmul.bf16.gmra.mxu0 %v1146
    %v2377 = vpop.f32.mrf.mxu0
    %v2378 = vadd.f32 %v1112, %v2377
    %v2379 = vpop.f32.mrf.mxu0
    %2380 = vdwg.mxu0
    %2381 = vmatpush.bf16.msra.mxu0 %v1913
    %2382 = vmatpush.bf16.msra.mxu0 %v1889
    %2383 = vmatpush.bf16.msra.mxu0 %v1865
    %2384 = vmatpush.bf16.msra.mxu0 %v1841
    %2385 = vmatpush.bf16.msra.mxu0 %v1817
    %2386 = vmatpush.bf16.msra.mxu0 %v1793
    %2387 = vmatpush.bf16.msra.mxu0 %v1769
    %2388 = vmatpush.bf16.msra.mxu0 %v1745
    %2389 = vmatmul.bf16.gmra.mxu0 %v1146
    %v2390 = vpop.f32.mrf.mxu0
    %v2391 = vadd.f32 %v1113, %v2390
    %v2392 = vpop.f32.mrf.mxu0
    %2393 = vdwg.mxu0
    %2394 = vmatpush.bf16.msra.mxu0 %v1914
    %2395 = vmatpush.bf16.msra.mxu0 %v1890
    %2396 = vmatpush.bf16.msra.mxu0 %v1866
    %2397 = vmatpush.bf16.msra.mxu0 %v1842
    %2398 = vmatpush.bf16.msra.mxu0 %v1818
    %2399 = vmatpush.bf16.msra.mxu0 %v1794
    %2400 = vmatpush.bf16.msra.mxu0 %v1770
    %2401 = vmatpush.bf16.msra.mxu0 %v1746
    %2402 = vmatmul.bf16.gmra.mxu0 %v1146
    %v2403 = vpop.f32.mrf.mxu0
    %v2404 = vadd.f32 %v1114, %v2403
    %v2405 = vpop.f32.mrf.mxu0
    %2406 = vdwg.mxu0
    %2407 = vmatpush.bf16.msra.mxu0 %v1915
    %2408 = vmatpush.bf16.msra.mxu0 %v1891
    %2409 = vmatpush.bf16.msra.mxu0 %v1867
    %2410 = vmatpush.bf16.msra.mxu0 %v1843
    %2411 = vmatpush.bf16.msra.mxu0 %v1819
    %2412 = vmatpush.bf16.msra.mxu0 %v1795
    %2413 = vmatpush.bf16.msra.mxu0 %v1771
    %2414 = vmatpush.bf16.msra.mxu0 %v1747
    %2415 = vmatmul.bf16.gmra.mxu0 %v1146
    %v2416 = vpop.f32.mrf.mxu0
    %v2417 = vadd.f32 %v1115, %v2416
    %v2418 = vpop.f32.mrf.mxu0
    %2419 = vdwg.mxu0
    %v2444 = vrot.slane %v2131, 6
    %v2445 = vrot.slane %v2144, 4
    %v2446 = vrot.slane %v2157, 2
    %v2447 = vrot.slane %v2183, 6
    %v2448 = vrot.slane %v2196, 4
    %v2449 = vrot.slane %v2209, 2
    %v2450 = vrot.slane %v2235, 6
    %v2451 = vrot.slane %v2248, 4
    %v2452 = vrot.slane %v2261, 2
    %v2453 = vrot.slane %v2287, 6
    %v2454 = vrot.slane %v2300, 4
    %v2455 = vrot.slane %v2313, 2
    %v2456 = vrot.slane %v2339, 6
    %v2457 = vrot.slane %v2352, 4
    %v2458 = vrot.slane %v2365, 2
    %v2459 = vrot.slane %v2391, 6
    %v2460 = vrot.slane %v2404, 4
    %v2461 = vrot.slane %v2417, 2
    %vm2462 = vcmask 1041408
    %v2463 = vsel %vm2462, %v2118, %v2444
    %vm2464 = vcmask 1045508
    %v2465 = vsel %vm2464, %v2445, %v2446
    %vm2466 = vcmask 1043456
    %v2467 = vsel %vm2466, %v2463, %v2465
    %v2468 = vsel %vm2462, %v2170, %v2447
    %v2469 = vsel %vm2464, %v2448, %v2449
    %v2470 = vsel %vm2466, %v2468, %v2469
    %v2471 = vsel %vm2462, %v2222, %v2450
    %v2472 = vsel %vm2464, %v2451, %v2452
    %v2473 = vsel %vm2466, %v2471, %v2472
    %v2474 = vsel %vm2462, %v2274, %v2453
    %v2475 = vsel %vm2464, %v2454, %v2455
    %v2476 = vsel %vm2466, %v2474, %v2475
    %v2477 = vsel %vm2462, %v2326, %v2456
    %v2478 = vsel %vm2464, %v2457, %v2458
    %v2479 = vsel %vm2466, %v2477, %v2478
    %v2480 = vsel %vm2462, %v2378, %v2459
    %v2481 = vsel %vm2464, %v2460, %v2461
    %v2482 = vsel %vm2466, %v2480, %v2481
    %2489 = vst [vmem:[%s21] sm:$0xff] %v2467
    %2490 = vst [vmem:[%s21 + $0x8] sm:$0xff] %v2470
    %2491 = vst [vmem:[%s21 + $0x10] sm:$0xff] %v2473
    %2492 = vst [vmem:[%s21 + $0x18] sm:$0xff] %v2476
    %2493 = vst [vmem:[%s21 + $0x20] sm:$0xff] %v2479
    %2494 = vst [vmem:[%s21 + $0x28] sm:$0xff] %v2482
    // Predicated region
    $region126: #{_dit_forward.3} parent=1 // pred_check
      _
    $region127: #{_dit_forward.3} parent=1 // pred_check_branch
      %2496 = sbr.rel (0) target = $region129
    $region128: #{_dit_forward.3} parent=1 // pred_region
      _
    $region129: #{_dit_forward.3} parent=1 // pred_fallthru
      _
    // Predicated region
    $region130: #{_dit_forward.3} parent=1 // pred_check
      _
    $region131: #{_dit_forward.3} parent=1 // pred_check_branch
      %2498 = sbr.rel (0) target = $region133
    $region132: #{_dit_forward.3} parent=1 // pred_region
      _
    $region133: #{_dit_forward.3} parent=1 // pred_fallthru
      _
    // Predicated region
    $region134: #{_dit_forward.3} parent=1 // pred_check
      _
    $region135: #{_dit_forward.3} parent=1 // pred_check_branch
      %2500 = sbr.rel (0) target = $region137
    $region136: #{_dit_forward.3} parent=1 // pred_region
      _
    $region137: #{_dit_forward.3} parent=1 // pred_fallthru
      _
    // Predicated region
    $region138: #{_dit_forward.3} parent=1 // pred_check
      _
    $region139: #{_dit_forward.3} parent=1 // pred_check_branch
      %2502 = sbr.rel (0) target = $region141
    $region140: #{_dit_forward.3} parent=1 // pred_region
      _
    $region141: #{_dit_forward.3} parent=1 // pred_fallthru
      _
    // Predicated region
    $region142: #{_dit_forward.3} parent=1 // pred_check
      _
    $region143: #{_dit_forward.3} parent=1 // pred_check_branch
      %2504 = sbr.rel (0) target = $region145
    $region144: #{_dit_forward.3} parent=1 // pred_region
      _
    $region145: #{_dit_forward.3} parent=1 // pred_fallthru
      _
    // Predicated region
    $region146: #{_dit_forward.3} parent=1 // pred_check
      _
    $region147: #{_dit_forward.3} parent=1 // pred_check_branch
      %2506 = sbr.rel (0) target = $region149
    $region148: #{_dit_forward.3} parent=1 // pred_region
      _
    $region149: #{_dit_forward.3} parent=1 // pred_fallthru
      _
    %2507 = vsyncpa [#allocation3], 1
    %2508 = vsyncpa [#allocation5], 1
    %2509 = vsyncpa [#allocation8], 1
    %2510 = vsyncpa [#allocation11], 1
    %2511 = vsyncpa [#allocation14], 1
    %2512 = vsyncpa [#allocation17], 1
    %2513 = vsyncpa [#allocation20], 1

// kernel: _dit_forward.4
$region0: #{_dit_forward.4}
  #allocation0 [shape = 'u32[]', space=smem, size = 0x4, offset = 0x4, fixed_abs, tag = 'smem constant byte address 0x4 - core index']
  #allocation1 [shape = 'u32[72,128]{1,0:T(1,128)}', space=vmem, size = 0x9000, scoped, tag = 'internal scratch']
  %s0 = inlined_call_operand.vmem [shape: f32[2,2,1536], index: 0, kind: input, shape index: {}]
  %s1 = inlined_call_operand.vmem [shape: f32[2,16,128], index: 1, kind: input, shape index: {}]
  %s2 = inlined_call_operand.vmem [shape: f32[2,32,128], index: 2, kind: input, shape index: {}]
  %s3 = inlined_call_operand.vmem [shape: f32[2,1,128], index: 3, kind: input, shape index: {}]
  %s4 = inlined_call_operand.vmem [shape: f32[2,1,128], index: 4, kind: input, shape index: {}]
  %s5 = inlined_call_operand.hbm [shape: f32[2,1,128], index: 5, kind: input, shape index: {}]
  %s6 = inlined_call_operand.hbm [shape: f32[2,1,128], index: 6, kind: input, shape index: {}]
  %s7 = inlined_call_operand.hbm [shape: bf16[2,128,384], index: 7, kind: input, shape index: {}]
  %s8 = inlined_call_operand.hbm [shape: f32[2,1,384], index: 8, kind: input, shape index: {}]
  %s9 = inlined_call_operand.hbm [shape: bf16[2,128,384], index: 9, kind: input, shape index: {}]
  %s10 = inlined_call_operand.hbm [shape: f32[2,1,384], index: 10, kind: input, shape index: {}]
  %s11 = inlined_call_operand.vmem [shape: bf16[2,128,128], index: 11, kind: input, shape index: {}]
  %s12 = inlined_call_operand.hbm [shape: f32[2,1,128], index: 12, kind: input, shape index: {}]
  %s13 = inlined_call_operand.hbm [shape: bf16[2,128,128], index: 13, kind: input, shape index: {}]
  %s14 = inlined_call_operand.hbm [shape: f32[2,1,128], index: 14, kind: input, shape index: {}]
  %s15 = inlined_call_operand.vmem [shape: bf16[2,128,512], index: 15, kind: input, shape index: {}]
  %s16 = inlined_call_operand.hbm [shape: f32[2,1,512], index: 16, kind: input, shape index: {}]
  %s17 = inlined_call_operand.vmem [shape: bf16[2,512,128], index: 17, kind: input, shape index: {}]
  %s18 = inlined_call_operand.hbm [shape: f32[2,1,128], index: 18, kind: input, shape index: {}]
  %s19 = inlined_call_operand.hbm [shape: bf16[2,128,512], index: 19, kind: input, shape index: {}]
  %s20 = inlined_call_operand.hbm [shape: f32[2,1,512], index: 20, kind: input, shape index: {}]
  %s21 = inlined_call_operand.hbm [shape: bf16[2,512,128], index: 21, kind: input, shape index: {}]
  %s22 = inlined_call_operand.hbm [shape: f32[2,1,128], index: 22, kind: input, shape index: {}]
  %s23 = inlined_call_operand.vmem [shape: f32[2,16,128], index: 23, kind: output, shape index: {0}]
  %s24 = inlined_call_operand.vmem [shape: f32[2,32,128], index: 24, kind: output, shape index: {1}]
  %25 = xla_tuple %s23, %s24
  %s26 = sld [smem:[#allocation0]]
  $region197: #{_dit_forward.4} parent=0
    _
  %s28 = ssub.s32 1, %s26
  %s29 = scalar_select 0, %s28, %s26
  $region1: #{_dit_forward.4} parent=0
    #allocation2 [shape = 'u8[1024]{0}', space=vmem, size = 0x400, scoped, tag = 'input window, operand 5']
    #allocation3 [shape = 's32[2]{0}', space=sflag, size = 0x8, scoped, tag = 'scoped memory for _dit_forward.4']
    #allocation4 [shape = 'u8[1024]{0}', space=vmem, size = 0x400, scoped, tag = 'input window, operand 6']
    #allocation5 [shape = 's32[2]{0}', space=sflag, size = 0x8, scoped, tag = 'scoped memory for _dit_forward.4']
    #allocation6 [shape = 'u8[196608]{0}', space=vmem, size = 0x30000, scoped, tag = 'input window, operand 7']
    #allocation7 [shape = 'u8[3072]{0}', space=vmem, size = 0xc00, scoped, tag = 'input window, operand 8']
    #allocation8 [shape = 's32[2]{0}', space=sflag, size = 0x8, scoped, tag = 'scoped memory for _dit_forward.4']
    #allocation9 [shape = 'u8[196608]{0}', space=vmem, size = 0x30000, scoped, tag = 'input window, operand 9']
    #allocation10 [shape = 'u8[3072]{0}', space=vmem, size = 0xc00, scoped, tag = 'input window, operand 10']
    #allocation11 [shape = 's32[2]{0}', space=sflag, size = 0x8, scoped, tag = 'scoped memory for _dit_forward.4']
    #allocation12 [shape = 'u8[1024]{0}', space=vmem, size = 0x400, scoped, tag = 'input window, operand 12']
    #allocation13 [shape = 'u8[65536]{0}', space=vmem, size = 0x10000, scoped, tag = 'input window, operand 13']
    #allocation14 [shape = 's32[2]{0}', space=sflag, size = 0x8, scoped, tag = 'scoped memory for _dit_forward.4']
    #allocation15 [shape = 'u8[1024]{0}', space=vmem, size = 0x400, scoped, tag = 'input window, operand 14']
    #allocation16 [shape = 'u8[4096]{0}', space=vmem, size = 0x1000, scoped, tag = 'input window, operand 16']
    #allocation17 [shape = 's32[2]{0}', space=sflag, size = 0x8, scoped, tag = 'scoped memory for _dit_forward.4']
    #allocation18 [shape = 'u8[1024]{0}', space=vmem, size = 0x400, scoped, tag = 'input window, operand 18']
    #allocation19 [shape = 'u8[262144]{0}', space=vmem, size = 0x40000, scoped, tag = 'input window, operand 19']
    #allocation20 [shape = 's32[2]{0}', space=sflag, size = 0x8, scoped, tag = 'scoped memory for _dit_forward.4']
    #allocation21 [shape = 'u8[4096]{0}', space=vmem, size = 0x1000, scoped, tag = 'input window, operand 20']
    #allocation22 [shape = 'u8[262144]{0}', space=vmem, size = 0x40000, scoped, tag = 'input window, operand 21']
    #allocation23 [shape = 's32[2]{0}', space=sflag, size = 0x8, scoped, tag = 'scoped memory for _dit_forward.4']
    #allocation24 [shape = 'u8[1024]{0}', space=vmem, size = 0x400, scoped, tag = 'input window, operand 22']
    %30 = vsyncpa [#allocation3], 0
    %s31 = scalar_lea.sflag [#allocation3], 1
    %32 = vsyncpa %s31, 0
    %33 = vsyncpa [#allocation5], 0
    %s34 = scalar_lea.sflag [#allocation5], 1
    %35 = vsyncpa %s34, 0
    %36 = vsyncpa [#allocation8], 0
    %s37 = scalar_lea.sflag [#allocation8], 1
    %38 = vsyncpa %s37, 0
    %39 = vsyncpa [#allocation11], 0
    %s40 = scalar_lea.sflag [#allocation11], 1
    %41 = vsyncpa %s40, 0
    %42 = vsyncpa [#allocation14], 0
    %s43 = scalar_lea.sflag [#allocation14], 1
    %44 = vsyncpa %s43, 0
    %45 = vsyncpa [#allocation17], 0
    %s46 = scalar_lea.sflag [#allocation17], 1
    %47 = vsyncpa %s46, 0
    %48 = vsyncpa [#allocation20], 0
    %s49 = scalar_lea.sflag [#allocation20], 1
    %50 = vsyncpa %s49, 0
    %51 = vsyncpa [#allocation23], 0
    %s52 = scalar_lea.sflag [#allocation23], 1
    %53 = vsyncpa %s52, 0
    loop: start=0, step=1, limit=4
    $region2: #{_dit_forward.4} parent=1 // loop_pre_header
      _
    $region3: #{_dit_forward.4} parent=1 // loop_header
      %s55 = sphi 0, %s59
      %p56 = scmp.ge.s32.totalorder %s55, 4
      %s65 = sphi 0, %s67
      %s68 = sphi 0, %s65
      %s69 = sphi 0, %s68
      %s85 = sphi 0, %s69
      %s89 = sphi 0, %s89
      %s91 = sphi 0, %s89
      %s92 = sphi 0, %s91
      %s106 = sphi 0, %s92
      %s110 = sphi 0, %s110
      %s112 = sphi 0, %s110
      %s113 = sphi 0, %s112
      %s127 = sphi 0, %s113
      %s133 = sphi 0, %s135
      %s136 = sphi 0, %s133
      %s137 = sphi 0, %s136
      %s153 = sphi 0, %s137
      %s159 = sphi 0, %s161
      %s162 = sphi 0, %s159
      %s163 = sphi 0, %s162
      %s179 = sphi 0, %s163
      %s185 = sphi 0, %s187
      %s188 = sphi 0, %s185
      %s189 = sphi 0, %s188
      %s205 = sphi 0, %s189
      %s211 = sphi 0, %s213
      %s214 = sphi 0, %s211
      %s215 = sphi 0, %s214
      %s231 = sphi 0, %s215
      %s237 = sphi 0, %s239
      %s240 = sphi 0, %s237
      %s241 = sphi 0, %s240
      %s257 = sphi 0, %s241
      %s263 = sphi 0, %s265
      %s266 = sphi 0, %s263
      %s267 = sphi 0, %s266
      %s283 = sphi 0, %s267
      %s289 = sphi 0, %s291
      %s292 = sphi 0, %s289
      %s293 = sphi 0, %s292
      %s309 = sphi 0, %s293
      %s315 = sphi 0, %s317
      %s318 = sphi 0, %s315
      %s319 = sphi 0, %s318
      %s335 = sphi 0, %s319
      %s341 = sphi 0, %s343
      %s344 = sphi 0, %s341
      %s345 = sphi 0, %s344
      %s361 = sphi 0, %s345
      %s367 = sphi 0, %s369
      %s370 = sphi 0, %s367
      %s371 = sphi 0, %s370
      %s387 = sphi 0, %s371
      %s393 = sphi 0, %s395
      %s396 = sphi 0, %s393
      %s397 = sphi 0, %s396
      %s413 = sphi 0, %s397
      %s419 = sphi 0, %s421
      %s422 = sphi 0, %s419
      %s423 = sphi 0, %s422
      %s439 = sphi 0, %s423
      %s445 = sphi 0, %s447
      %s448 = sphi 0, %s445
      %s449 = sphi 0, %s448
      %s465 = sphi 0, %s449
      %s471 = sphi 0, %s473
      %s474 = sphi 0, %s471
      %s475 = sphi 0, %s474
      %s491 = sphi 0, %s475
      %s497 = sphi 0, %s499
      %s500 = sphi 0, %s497
      %s501 = sphi 0, %s500
      %s517 = sphi 0, %s501
      %s523 = sphi 0, %s525
      %s526 = sphi 0, %s523
      %s527 = sphi 0, %s526
      %s543 = sphi 0, %s527
      %s549 = sphi 0, %s551
      %s552 = sphi 0, %s549
      %s553 = sphi 0, %s552
      %s569 = sphi 0, %s553
      %s575 = sphi 0, %s577
      %s578 = sphi 0, %s575
      %s579 = sphi 0, %s578
      %s595 = sphi 0, %s579
      %s601 = sphi 0, %s603
      %s604 = sphi 0, %s601
      %s605 = sphi 0, %s604
      %s621 = sphi 0, %s605
      %s627 = sphi 0, %s629
      %s630 = sphi 0, %s627
      %s631 = sphi 0, %s630
      %s647 = sphi 0, %s631
      %s651 = sphi 0, %s651
      %s653 = sphi 0, %s651
      %s654 = sphi 0, %s653
      %s668 = sphi 0, %s654
      %s672 = sphi 0, %s672
      %s674 = sphi 0, %s672
      %s675 = sphi 0, %s674
      %s689 = sphi 0, %s675
    $region4: #{_dit_forward.4} parent=1 // loop_header_branch
      %58 = sbr.rel (%p56) target = $region8
    $region5: #{_dit_forward.4} parent=1 // loop_body
      %s60 = ssub.s32 %s55, 1
      %s61 = ssub.s32 %s55, 2
      %s62 = sadd.s32 %s55, 1
      %s63 = ssub.s32 %s55, %s62
      %p64 = scmp.eq.s32.totalorder %s63, 0
      %s66 = sadd.s32 %s65, 1
      %s67 = scalar_select %p64, %s65, %s66
      %p70 = pneg %p64
      %p71 = scmp.eq.s32.totalorder %s55, 1
      %p72 = por %p70, %p71
      %p73 = scmp.ne.s32.totalorder %s65, %s68
      %p74 = scmp.eq.s32.totalorder %s55, 0
      %p75 = por %p73, %p74
      %p76 = scmp.ne.s32.totalorder %s65, %s68
      %p77 = scmp.eq.s32.totalorder %s60, 1
      %p78 = por %p76, %p77
      %p79 = scmp.ne.s32.totalorder %s68, %s69
      %p80 = scmp.eq.s32.totalorder %s60, 0
      %p81 = por %p79, %p80
      %p82 = scmp.ne.s32.totalorder %s68, %s69
      %p83 = scmp.eq.s32.totalorder %s61, 1
      %p84 = por %p82, %p83
      %p86 = scmp.ne.s32.totalorder %s69, %s85
      %p87 = scmp.eq.s32.totalorder %s61, 0
      %p88 = por %p86, %p87
      %s90 = sadd.s32 %s89, 1
      %p93 = scmp.eq.s32.totalorder %s55, 1
      %p94 = scmp.ne.s32.totalorder %s89, %s91
      %p95 = scmp.eq.s32.totalorder %s55, 0
      %p96 = por %p94, %p95
      %p97 = scmp.ne.s32.totalorder %s89, %s91
      %p98 = scmp.eq.s32.totalorder %s60, 1
      %p99 = por %p97, %p98
      %p100 = scmp.ne.s32.totalorder %s91, %s92
      %p101 = scmp.eq.s32.totalorder %s60, 0
      %p102 = por %p100, %p101
      %p103 = scmp.ne.s32.totalorder %s91, %s92
      %p104 = scmp.eq.s32.totalorder %s61, 1
      %p105 = por %p103, %p104
      %p107 = scmp.ne.s32.totalorder %s92, %s106
      %p108 = scmp.eq.s32.totalorder %s61, 0
      %p109 = por %p107, %p108
      %s111 = sadd.s32 %s110, 1
      %p114 = scmp.eq.s32.totalorder %s55, 1
      %p115 = scmp.ne.s32.totalorder %s110, %s112
      %p116 = scmp.eq.s32.totalorder %s55, 0
      %p117 = por %p115, %p116
      %p118 = scmp.ne.s32.totalorder %s110, %s112
      %p119 = scmp.eq.s32.totalorder %s60, 1
      %p120 = por %p118, %p119
      %p121 = scmp.ne.s32.totalorder %s112, %s113
      %p122 = scmp.eq.s32.totalorder %s60, 0
      %p123 = por %p121, %p122
      %p124 = scmp.ne.s32.totalorder %s112, %s113
      %p125 = scmp.eq.s32.totalorder %s61, 1
      %p126 = por %p124, %p125
      %p128 = scmp.ne.s32.totalorder %s113, %s127
      %p129 = scmp.eq.s32.totalorder %s61, 0
      %p130 = por %p128, %p129
      %s131 = ssub.s32 %s55, %s62
      %p132 = scmp.eq.s32.totalorder %s131, 0
      %s134 = sadd.s32 %s133, 1
      %s135 = scalar_select %p132, %s133, %s134
      %p138 = pneg %p132
      %p139 = scmp.eq.s32.totalorder %s55, 1
      %p140 = por %p138, %p139
      %p141 = scmp.ne.s32.totalorder %s133, %s136
      %p142 = scmp.eq.s32.totalorder %s55, 0
      %p143 = por %p141, %p142
      %p144 = scmp.ne.s32.totalorder %s133, %s136
      %p145 = scmp.eq.s32.totalorder %s60, 1
      %p146 = por %p144, %p145
      %p147 = scmp.ne.s32.totalorder %s136, %s137
      %p148 = scmp.eq.s32.totalorder %s60, 0
      %p149 = por %p147, %p148
      %p150 = scmp.ne.s32.totalorder %s136, %s137
      %p151 = scmp.eq.s32.totalorder %s61, 1
      %p152 = por %p150, %p151
      %p154 = scmp.ne.s32.totalorder %s137, %s153
      %p155 = scmp.eq.s32.totalorder %s61, 0
      %p156 = por %p154, %p155
      %s157 = ssub.s32 %s55, %s62
      %p158 = scmp.eq.s32.totalorder %s157, 0
      %s160 = sadd.s32 %s159, 1
      %s161 = scalar_select %p158, %s159, %s160
      %p164 = pneg %p158
      %p165 = scmp.eq.s32.totalorder %s55, 1
      %p166 = por %p164, %p165
      %p167 = scmp.ne.s32.totalorder %s159, %s162
      %p168 = scmp.eq.s32.totalorder %s55, 0
      %p169 = por %p167, %p168
      %p170 = scmp.ne.s32.totalorder %s159, %s162
      %p171 = scmp.eq.s32.totalorder %s60, 1
      %p172 = por %p170, %p171
      %p173 = scmp.ne.s32.totalorder %s162, %s163
      %p174 = scmp.eq.s32.totalorder %s60, 0
      %p175 = por %p173, %p174
      %p176 = scmp.ne.s32.totalorder %s162, %s163
      %p177 = scmp.eq.s32.totalorder %s61, 1
      %p178 = por %p176, %p177
      %p180 = scmp.ne.s32.totalorder %s163, %s179
      %p181 = scmp.eq.s32.totalorder %s61, 0
      %p182 = por %p180, %p181
      %s183 = ssub.s32 %s55, %s62
      %p184 = scmp.eq.s32.totalorder %s183, 0
      %s186 = sadd.s32 %s185, 1
      %s187 = scalar_select %p184, %s185, %s186
      %p190 = pneg %p184
      %p191 = scmp.eq.s32.totalorder %s55, 1
      %p192 = por %p190, %p191
      %p193 = scmp.ne.s32.totalorder %s185, %s188
      %p194 = scmp.eq.s32.totalorder %s55, 0
      %p195 = por %p193, %p194
      %p196 = scmp.ne.s32.totalorder %s185, %s188
      %p197 = scmp.eq.s32.totalorder %s60, 1
      %p198 = por %p196, %p197
      %p199 = scmp.ne.s32.totalorder %s188, %s189
      %p200 = scmp.eq.s32.totalorder %s60, 0
      %p201 = por %p199, %p200
      %p202 = scmp.ne.s32.totalorder %s188, %s189
      %p203 = scmp.eq.s32.totalorder %s61, 1
      %p204 = por %p202, %p203
      %p206 = scmp.ne.s32.totalorder %s189, %s205
      %p207 = scmp.eq.s32.totalorder %s61, 0
      %p208 = por %p206, %p207
      %s209 = ssub.s32 %s55, %s62
      %p210 = scmp.eq.s32.totalorder %s209, 0
      %s212 = sadd.s32 %s211, 1
      %s213 = scalar_select %p210, %s211, %s212
      %p216 = pneg %p210
      %p217 = scmp.eq.s32.totalorder %s55, 1
      %p218 = por %p216, %p217
      %p219 = scmp.ne.s32.totalorder %s211, %s214
      %p220 = scmp.eq.s32.totalorder %s55, 0
      %p221 = por %p219, %p220
      %p222 = scmp.ne.s32.totalorder %s211, %s214
      %p223 = scmp.eq.s32.totalorder %s60, 1
      %p224 = por %p222, %p223
      %p225 = scmp.ne.s32.totalorder %s214, %s215
      %p226 = scmp.eq.s32.totalorder %s60, 0
      %p227 = por %p225, %p226
      %p228 = scmp.ne.s32.totalorder %s214, %s215
      %p229 = scmp.eq.s32.totalorder %s61, 1
      %p230 = por %p228, %p229
      %p232 = scmp.ne.s32.totalorder %s215, %s231
      %p233 = scmp.eq.s32.totalorder %s61, 0
      %p234 = por %p232, %p233
      %s235 = ssub.s32 %s55, %s62
      %p236 = scmp.eq.s32.totalorder %s235, 0
      %s238 = sadd.s32 %s237, 1
      %s239 = scalar_select %p236, %s237, %s238
      %p242 = pneg %p236
      %p243 = scmp.eq.s32.totalorder %s55, 1
      %p244 = por %p242, %p243
      %p245 = scmp.ne.s32.totalorder %s237, %s240
      %p246 = scmp.eq.s32.totalorder %s55, 0
      %p247 = por %p245, %p246
      %p248 = scmp.ne.s32.totalorder %s237, %s240
      %p249 = scmp.eq.s32.totalorder %s60, 1
      %p250 = por %p248, %p249
      %p251 = scmp.ne.s32.totalorder %s240, %s241
      %p252 = scmp.eq.s32.totalorder %s60, 0
      %p253 = por %p251, %p252
      %p254 = scmp.ne.s32.totalorder %s240, %s241
      %p255 = scmp.eq.s32.totalorder %s61, 1
      %p256 = por %p254, %p255
      %p258 = scmp.ne.s32.totalorder %s241, %s257
      %p259 = scmp.eq.s32.totalorder %s61, 0
      %p260 = por %p258, %p259
      %s261 = ssub.s32 %s55, %s62
      %p262 = scmp.eq.s32.totalorder %s261, 0
      %s264 = sadd.s32 %s263, 1
      %s265 = scalar_select %p262, %s263, %s264
      %p268 = pneg %p262
      %p269 = scmp.eq.s32.totalorder %s55, 1
      %p270 = por %p268, %p269
      %p271 = scmp.ne.s32.totalorder %s263, %s266
      %p272 = scmp.eq.s32.totalorder %s55, 0
      %p273 = por %p271, %p272
      %p274 = scmp.ne.s32.totalorder %s263, %s266
      %p275 = scmp.eq.s32.totalorder %s60, 1
      %p276 = por %p274, %p275
      %p277 = scmp.ne.s32.totalorder %s266, %s267
      %p278 = scmp.eq.s32.totalorder %s60, 0
      %p279 = por %p277, %p278
      %p280 = scmp.ne.s32.totalorder %s266, %s267
      %p281 = scmp.eq.s32.totalorder %s61, 1
      %p282 = por %p280, %p281
      %p284 = scmp.ne.s32.totalorder %s267, %s283
      %p285 = scmp.eq.s32.totalorder %s61, 0
      %p286 = por %p284, %p285
      %s287 = ssub.s32 %s55, %s62
      %p288 = scmp.eq.s32.totalorder %s287, 0
      %s290 = sadd.s32 %s289, 1
      %s291 = scalar_select %p288, %s289, %s290
      %p294 = pneg %p288
      %p295 = scmp.eq.s32.totalorder %s55, 1
      %p296 = por %p294, %p295
      %p297 = scmp.ne.s32.totalorder %s289, %s292
      %p298 = scmp.eq.s32.totalorder %s55, 0
      %p299 = por %p297, %p298
      %p300 = scmp.ne.s32.totalorder %s289, %s292
      %p301 = scmp.eq.s32.totalorder %s60, 1
      %p302 = por %p300, %p301
      %p303 = scmp.ne.s32.totalorder %s292, %s293
      %p304 = scmp.eq.s32.totalorder %s60, 0
      %p305 = por %p303, %p304
      %p306 = scmp.ne.s32.totalorder %s292, %s293
      %p307 = scmp.eq.s32.totalorder %s61, 1
      %p308 = por %p306, %p307
      %p310 = scmp.ne.s32.totalorder %s293, %s309
      %p311 = scmp.eq.s32.totalorder %s61, 0
      %p312 = por %p310, %p311
      %s313 = ssub.s32 %s55, %s62
      %p314 = scmp.eq.s32.totalorder %s313, 0
      %s316 = sadd.s32 %s315, 1
      %s317 = scalar_select %p314, %s315, %s316
      %p320 = pneg %p314
      %p321 = scmp.eq.s32.totalorder %s55, 1
      %p322 = por %p320, %p321
      %p323 = scmp.ne.s32.totalorder %s315, %s318
      %p324 = scmp.eq.s32.totalorder %s55, 0
      %p325 = por %p323, %p324
      %p326 = scmp.ne.s32.totalorder %s315, %s318
      %p327 = scmp.eq.s32.totalorder %s60, 1
      %p328 = por %p326, %p327
      %p329 = scmp.ne.s32.totalorder %s318, %s319
      %p330 = scmp.eq.s32.totalorder %s60, 0
      %p331 = por %p329, %p330
      %p332 = scmp.ne.s32.totalorder %s318, %s319
      %p333 = scmp.eq.s32.totalorder %s61, 1
      %p334 = por %p332, %p333
      %p336 = scmp.ne.s32.totalorder %s319, %s335
      %p337 = scmp.eq.s32.totalorder %s61, 0
      %p338 = por %p336, %p337
      %s339 = ssub.s32 %s55, %s62
      %p340 = scmp.eq.s32.totalorder %s339, 0
      %s342 = sadd.s32 %s341, 1
      %s343 = scalar_select %p340, %s341, %s342
      %p346 = pneg %p340
      %p347 = scmp.eq.s32.totalorder %s55, 1
      %p348 = por %p346, %p347
      %p349 = scmp.ne.s32.totalorder %s341, %s344
      %p350 = scmp.eq.s32.totalorder %s55, 0
      %p351 = por %p349, %p350
      %p352 = scmp.ne.s32.totalorder %s341, %s344
      %p353 = scmp.eq.s32.totalorder %s60, 1
      %p354 = por %p352, %p353
      %p355 = scmp.ne.s32.totalorder %s344, %s345
      %p356 = scmp.eq.s32.totalorder %s60, 0
      %p357 = por %p355, %p356
      %p358 = scmp.ne.s32.totalorder %s344, %s345
      %p359 = scmp.eq.s32.totalorder %s61, 1
      %p360 = por %p358, %p359
      %p362 = scmp.ne.s32.totalorder %s345, %s361
      %p363 = scmp.eq.s32.totalorder %s61, 0
      %p364 = por %p362, %p363
      %s365 = ssub.s32 %s55, %s62
      %p366 = scmp.eq.s32.totalorder %s365, 0
      %s368 = sadd.s32 %s367, 1
      %s369 = scalar_select %p366, %s367, %s368
      %p372 = pneg %p366
      %p373 = scmp.eq.s32.totalorder %s55, 1
      %p374 = por %p372, %p373
      %p375 = scmp.ne.s32.totalorder %s367, %s370
      %p376 = scmp.eq.s32.totalorder %s55, 0
      %p377 = por %p375, %p376
      %p378 = scmp.ne.s32.totalorder %s367, %s370
      %p379 = scmp.eq.s32.totalorder %s60, 1
      %p380 = por %p378, %p379
      %p381 = scmp.ne.s32.totalorder %s370, %s371
      %p382 = scmp.eq.s32.totalorder %s60, 0
      %p383 = por %p381, %p382
      %p384 = scmp.ne.s32.totalorder %s370, %s371
      %p385 = scmp.eq.s32.totalorder %s61, 1
      %p386 = por %p384, %p385
      %p388 = scmp.ne.s32.totalorder %s371, %s387
      %p389 = scmp.eq.s32.totalorder %s61, 0
      %p390 = por %p388, %p389
      %s391 = ssub.s32 %s55, %s62
      %p392 = scmp.eq.s32.totalorder %s391, 0
      %s394 = sadd.s32 %s393, 1
      %s395 = scalar_select %p392, %s393, %s394
      %p398 = pneg %p392
      %p399 = scmp.eq.s32.totalorder %s55, 1
      %p400 = por %p398, %p399
      %p401 = scmp.ne.s32.totalorder %s393, %s396
      %p402 = scmp.eq.s32.totalorder %s55, 0
      %p403 = por %p401, %p402
      %p404 = scmp.ne.s32.totalorder %s393, %s396
      %p405 = scmp.eq.s32.totalorder %s60, 1
      %p406 = por %p404, %p405
      %p407 = scmp.ne.s32.totalorder %s396, %s397
      %p408 = scmp.eq.s32.totalorder %s60, 0
      %p409 = por %p407, %p408
      %p410 = scmp.ne.s32.totalorder %s396, %s397
      %p411 = scmp.eq.s32.totalorder %s61, 1
      %p412 = por %p410, %p411
      %p414 = scmp.ne.s32.totalorder %s397, %s413
      %p415 = scmp.eq.s32.totalorder %s61, 0
      %p416 = por %p414, %p415
      %s417 = ssub.s32 %s55, %s62
      %p418 = scmp.eq.s32.totalorder %s417, 0
      %s420 = sadd.s32 %s419, 1
      %s421 = scalar_select %p418, %s419, %s420
      %p424 = pneg %p418
      %p425 = scmp.eq.s32.totalorder %s55, 1
      %p426 = por %p424, %p425
      %p427 = scmp.ne.s32.totalorder %s419, %s422
      %p428 = scmp.eq.s32.totalorder %s55, 0
      %p429 = por %p427, %p428
      %p430 = scmp.ne.s32.totalorder %s419, %s422
      %p431 = scmp.eq.s32.totalorder %s60, 1
      %p432 = por %p430, %p431
      %p433 = scmp.ne.s32.totalorder %s422, %s423
      %p434 = scmp.eq.s32.totalorder %s60, 0
      %p435 = por %p433, %p434
      %p436 = scmp.ne.s32.totalorder %s422, %s423
      %p437 = scmp.eq.s32.totalorder %s61, 1
      %p438 = por %p436, %p437
      %p440 = scmp.ne.s32.totalorder %s423, %s439
      %p441 = scmp.eq.s32.totalorder %s61, 0
      %p442 = por %p440, %p441
      %s443 = ssub.s32 %s55, %s62
      %p444 = scmp.eq.s32.totalorder %s443, 0
      %s446 = sadd.s32 %s445, 1
      %s447 = scalar_select %p444, %s445, %s446
      %p450 = pneg %p444
      %p451 = scmp.eq.s32.totalorder %s55, 1
      %p452 = por %p450, %p451
      %p453 = scmp.ne.s32.totalorder %s445, %s448
      %p454 = scmp.eq.s32.totalorder %s55, 0
      %p455 = por %p453, %p454
      %p456 = scmp.ne.s32.totalorder %s445, %s448
      %p457 = scmp.eq.s32.totalorder %s60, 1
      %p458 = por %p456, %p457
      %p459 = scmp.ne.s32.totalorder %s448, %s449
      %p460 = scmp.eq.s32.totalorder %s60, 0
      %p461 = por %p459, %p460
      %p462 = scmp.ne.s32.totalorder %s448, %s449
      %p463 = scmp.eq.s32.totalorder %s61, 1
      %p464 = por %p462, %p463
      %p466 = scmp.ne.s32.totalorder %s449, %s465
      %p467 = scmp.eq.s32.totalorder %s61, 0
      %p468 = por %p466, %p467
      %s469 = ssub.s32 %s55, %s62
      %p470 = scmp.eq.s32.totalorder %s469, 0
      %s472 = sadd.s32 %s471, 1
      %s473 = scalar_select %p470, %s471, %s472
      %p476 = pneg %p470
      %p477 = scmp.eq.s32.totalorder %s55, 1
      %p478 = por %p476, %p477
      %p479 = scmp.ne.s32.totalorder %s471, %s474
      %p480 = scmp.eq.s32.totalorder %s55, 0
      %p481 = por %p479, %p480
      %p482 = scmp.ne.s32.totalorder %s471, %s474
      %p483 = scmp.eq.s32.totalorder %s60, 1
      %p484 = por %p482, %p483
      %p485 = scmp.ne.s32.totalorder %s474, %s475
      %p486 = scmp.eq.s32.totalorder %s60, 0
      %p487 = por %p485, %p486
      %p488 = scmp.ne.s32.totalorder %s474, %s475
      %p489 = scmp.eq.s32.totalorder %s61, 1
      %p490 = por %p488, %p489
      %p492 = scmp.ne.s32.totalorder %s475, %s491
      %p493 = scmp.eq.s32.totalorder %s61, 0
      %p494 = por %p492, %p493
      %s495 = ssub.s32 %s55, %s62
      %p496 = scmp.eq.s32.totalorder %s495, 0
      %s498 = sadd.s32 %s497, 1
      %s499 = scalar_select %p496, %s497, %s498
      %p502 = pneg %p496
      %p503 = scmp.eq.s32.totalorder %s55, 1
      %p504 = por %p502, %p503
      %p505 = scmp.ne.s32.totalorder %s497, %s500
      %p506 = scmp.eq.s32.totalorder %s55, 0
      %p507 = por %p505, %p506
      %p508 = scmp.ne.s32.totalorder %s497, %s500
      %p509 = scmp.eq.s32.totalorder %s60, 1
      %p510 = por %p508, %p509
      %p511 = scmp.ne.s32.totalorder %s500, %s501
      %p512 = scmp.eq.s32.totalorder %s60, 0
      %p513 = por %p511, %p512
      %p514 = scmp.ne.s32.totalorder %s500, %s501
      %p515 = scmp.eq.s32.totalorder %s61, 1
      %p516 = por %p514, %p515
      %p518 = scmp.ne.s32.totalorder %s501, %s517
      %p519 = scmp.eq.s32.totalorder %s61, 0
      %p520 = por %p518, %p519
      %s521 = ssub.s32 %s55, %s62
      %p522 = scmp.eq.s32.totalorder %s521, 0
      %s524 = sadd.s32 %s523, 1
      %s525 = scalar_select %p522, %s523, %s524
      %p528 = pneg %p522
      %p529 = scmp.eq.s32.totalorder %s55, 1
      %p530 = por %p528, %p529
      %p531 = scmp.ne.s32.totalorder %s523, %s526
      %p532 = scmp.eq.s32.totalorder %s55, 0
      %p533 = por %p531, %p532
      %p534 = scmp.ne.s32.totalorder %s523, %s526
      %p535 = scmp.eq.s32.totalorder %s60, 1
      %p536 = por %p534, %p535
      %p537 = scmp.ne.s32.totalorder %s526, %s527
      %p538 = scmp.eq.s32.totalorder %s60, 0
      %p539 = por %p537, %p538
      %p540 = scmp.ne.s32.totalorder %s526, %s527
      %p541 = scmp.eq.s32.totalorder %s61, 1
      %p542 = por %p540, %p541
      %p544 = scmp.ne.s32.totalorder %s527, %s543
      %p545 = scmp.eq.s32.totalorder %s61, 0
      %p546 = por %p544, %p545
      %s547 = ssub.s32 %s55, %s62
      %p548 = scmp.eq.s32.totalorder %s547, 0
      %s550 = sadd.s32 %s549, 1
      %s551 = scalar_select %p548, %s549, %s550
      %p554 = pneg %p548
      %p555 = scmp.eq.s32.totalorder %s55, 1
      %p556 = por %p554, %p555
      %p557 = scmp.ne.s32.totalorder %s549, %s552
      %p558 = scmp.eq.s32.totalorder %s55, 0
      %p559 = por %p557, %p558
      %p560 = scmp.ne.s32.totalorder %s549, %s552
      %p561 = scmp.eq.s32.totalorder %s60, 1
      %p562 = por %p560, %p561
      %p563 = scmp.ne.s32.totalorder %s552, %s553
      %p564 = scmp.eq.s32.totalorder %s60, 0
      %p565 = por %p563, %p564
      %p566 = scmp.ne.s32.totalorder %s552, %s553
      %p567 = scmp.eq.s32.totalorder %s61, 1
      %p568 = por %p566, %p567
      %p570 = scmp.ne.s32.totalorder %s553, %s569
      %p571 = scmp.eq.s32.totalorder %s61, 0
      %p572 = por %p570, %p571
      %s573 = ssub.s32 %s55, %s62
      %p574 = scmp.eq.s32.totalorder %s573, 0
      %s576 = sadd.s32 %s575, 1
      %s577 = scalar_select %p574, %s575, %s576
      %p580 = pneg %p574
      %p581 = scmp.eq.s32.totalorder %s55, 1
      %p582 = por %p580, %p581
      %p583 = scmp.ne.s32.totalorder %s575, %s578
      %p584 = scmp.eq.s32.totalorder %s55, 0
      %p585 = por %p583, %p584
      %p586 = scmp.ne.s32.totalorder %s575, %s578
      %p587 = scmp.eq.s32.totalorder %s60, 1
      %p588 = por %p586, %p587
      %p589 = scmp.ne.s32.totalorder %s578, %s579
      %p590 = scmp.eq.s32.totalorder %s60, 0
      %p591 = por %p589, %p590
      %p592 = scmp.ne.s32.totalorder %s578, %s579
      %p593 = scmp.eq.s32.totalorder %s61, 1
      %p594 = por %p592, %p593
      %p596 = scmp.ne.s32.totalorder %s579, %s595
      %p597 = scmp.eq.s32.totalorder %s61, 0
      %p598 = por %p596, %p597
      %s599 = ssub.s32 %s55, %s62
      %p600 = scmp.eq.s32.totalorder %s599, 0
      %s602 = sadd.s32 %s601, 1
      %s603 = scalar_select %p600, %s601, %s602
      %p606 = pneg %p600
      %p607 = scmp.eq.s32.totalorder %s55, 1
      %p608 = por %p606, %p607
      %p609 = scmp.ne.s32.totalorder %s601, %s604
      %p610 = scmp.eq.s32.totalorder %s55, 0
      %p611 = por %p609, %p610
      %p612 = scmp.ne.s32.totalorder %s601, %s604
      %p613 = scmp.eq.s32.totalorder %s60, 1
      %p614 = por %p612, %p613
      %p615 = scmp.ne.s32.totalorder %s604, %s605
      %p616 = scmp.eq.s32.totalorder %s60, 0
      %p617 = por %p615, %p616
      %p618 = scmp.ne.s32.totalorder %s604, %s605
      %p619 = scmp.eq.s32.totalorder %s61, 1
      %p620 = por %p618, %p619
      %p622 = scmp.ne.s32.totalorder %s605, %s621
      %p623 = scmp.eq.s32.totalorder %s61, 0
      %p624 = por %p622, %p623
      %s625 = ssub.s32 %s55, %s62
      %p626 = scmp.eq.s32.totalorder %s625, 0
      %s628 = sadd.s32 %s627, 1
      %s629 = scalar_select %p626, %s627, %s628
      %p632 = pneg %p626
      %p633 = scmp.eq.s32.totalorder %s55, 1
      %p634 = por %p632, %p633
      %p635 = scmp.ne.s32.totalorder %s627, %s630
      %p636 = scmp.eq.s32.totalorder %s55, 0
      %p637 = por %p635, %p636
      %p638 = scmp.ne.s32.totalorder %s627, %s630
      %p639 = scmp.eq.s32.totalorder %s60, 1
      %p640 = por %p638, %p639
      %p641 = scmp.ne.s32.totalorder %s630, %s631
      %p642 = scmp.eq.s32.totalorder %s60, 0
      %p643 = por %p641, %p642
      %p644 = scmp.ne.s32.totalorder %s630, %s631
      %p645 = scmp.eq.s32.totalorder %s61, 1
      %p646 = por %p644, %p645
      %p648 = scmp.ne.s32.totalorder %s631, %s647
      %p649 = scmp.eq.s32.totalorder %s61, 0
      %p650 = por %p648, %p649
      %s652 = sadd.s32 %s651, 1
      %p655 = scmp.eq.s32.totalorder %s55, 1
      %p656 = scmp.ne.s32.totalorder %s651, %s653
      %p657 = scmp.eq.s32.totalorder %s55, 0
      %p658 = por %p656, %p657
      %p659 = scmp.ne.s32.totalorder %s651, %s653
      %p660 = scmp.eq.s32.totalorder %s60, 1
      %p661 = por %p659, %p660
      %p662 = scmp.ne.s32.totalorder %s653, %s654
      %p663 = scmp.eq.s32.totalorder %s60, 0
      %p664 = por %p662, %p663
      %p665 = scmp.ne.s32.totalorder %s653, %s654
      %p666 = scmp.eq.s32.totalorder %s61, 1
      %p667 = por %p665, %p666
      %p669 = scmp.ne.s32.totalorder %s654, %s668
      %p670 = scmp.eq.s32.totalorder %s61, 0
      %p671 = por %p669, %p670
      %s673 = sadd.s32 %s672, 1
      %p676 = scmp.eq.s32.totalorder %s55, 1
      %p677 = scmp.ne.s32.totalorder %s672, %s674
      %p678 = scmp.eq.s32.totalorder %s55, 0
      %p679 = por %p677, %p678
      %p680 = scmp.ne.s32.totalorder %s672, %s674
      %p681 = scmp.eq.s32.totalorder %s60, 1
      %p682 = por %p680, %p681
      %p683 = scmp.ne.s32.totalorder %s674, %s675
      %p684 = scmp.eq.s32.totalorder %s60, 0
      %p685 = por %p683, %p684
      %p686 = scmp.ne.s32.totalorder %s674, %s675
      %p687 = scmp.eq.s32.totalorder %s61, 1
      %p688 = por %p686, %p687
      %p690 = scmp.ne.s32.totalorder %s675, %s689
      %p691 = scmp.eq.s32.totalorder %s61, 0
      %p692 = por %p690, %p691
      %p693 = scmp.le.s32.totalorder 1, %s55
      %p694 = scmp.lt.s32.totalorder %s55, 3
      %p695 = pnand %p693, %p694
      %p696 = pneg %p695
      // Predicated region
      $region9: #{_dit_forward.4} parent=5 // pred_check
        _
      $region10: #{_dit_forward.4} parent=5 // pred_check_branch
        %698 = sbr.rel (%p695) target = $region12
      $region11: #{_dit_forward.4} parent=5 // pred_region
        %s699 = ssub.s32 %s55, 1
        // Predicated region
        $region13: #{_dit_forward.4} parent=11 // pred_check
          %p700 = pneg %p102
        $region14: #{_dit_forward.4} parent=11 // pred_check_branch
          %702 = sbr.rel (%p700) target = $region16
        $region15: #{_dit_forward.4} parent=11 // pred_region
          _
        $region16: #{_dit_forward.4} parent=11 // pred_fallthru
          _
        // Predicated region
        $region17: #{_dit_forward.4} parent=11 // pred_check
          %p703 = pneg %p123
        $region18: #{_dit_forward.4} parent=11 // pred_check_branch
          %705 = sbr.rel (%p703) target = $region20
        $region19: #{_dit_forward.4} parent=11 // pred_region
          _
        $region20: #{_dit_forward.4} parent=11 // pred_fallthru
          _
      $region12: #{_dit_forward.4} parent=5 // pred_fallthru
        _
      %p706 = scmp.lt.s32.totalorder %s55, 2
      // Predicated region
      $region21: #{_dit_forward.4} parent=5 // pred_check
        %p707 = pneg %p706
      $region22: #{_dit_forward.4} parent=5 // pred_check_branch
        %709 = sbr.rel (%p707) target = $region24
      $region23: #{_dit_forward.4} parent=5 // pred_region
        // Predicated region
        $region25: #{_dit_forward.4} parent=23 // pred_check
          %p710 = pneg %p75
        $region26: #{_dit_forward.4} parent=23 // pred_check_branch
          %712 = sbr.rel (%p710) target = $region28
        $region27: #{_dit_forward.4} parent=23 // pred_region
          %p713 = scmp.lt.s32.totalorder %s55, 1
          %s714 = scalar_select %p713, %s55, 1
          %s715 = smul.addr %s714, 12
          %s716 = smul.addr %s715, 2
          %s717 = scalar_lea.vmem %s0, %s716
        $region28: #{_dit_forward.4} parent=23 // pred_fallthru
          _
        // Predicated region
        $region29: #{_dit_forward.4} parent=23 // pred_check
          %p718 = pneg %p143
        $region30: #{_dit_forward.4} parent=23 // pred_check_branch
          %720 = sbr.rel (%p718) target = $region32
        $region31: #{_dit_forward.4} parent=23 // pred_region
          %p721 = scmp.lt.s32.totalorder %s55, 1
          %s722 = scalar_select %p721, %s55, 1
          %s723 = scalar_lea.vmem %s3, %s722
        $region32: #{_dit_forward.4} parent=23 // pred_fallthru
          _
        // Predicated region
        $region33: #{_dit_forward.4} parent=23 // pred_check
          %p724 = pneg %p169
        $region34: #{_dit_forward.4} parent=23 // pred_check_branch
          %726 = sbr.rel (%p724) target = $region36
        $region35: #{_dit_forward.4} parent=23 // pred_region
          %p727 = scmp.lt.s32.totalorder %s55, 1
          %s728 = scalar_select %p727, %s55, 1
          %s729 = scalar_lea.vmem %s4, %s728
        $region36: #{_dit_forward.4} parent=23 // pred_fallthru
          _
        // Predicated region
        $region37: #{_dit_forward.4} parent=23 // pred_check
          %p730 = pneg %p195
        $region38: #{_dit_forward.4} parent=23 // pred_check_branch
          %732 = sbr.rel (%p730) target = $region40
        $region39: #{_dit_forward.4} parent=23 // pred_region
          %s733 = sand.u32 %s185, 1
          %s734 = scalar_lea.sflag [#allocation3], %s733
          %s735 = sand.u32 %s185, 1
          %s736 = scalar_lea.vmem [#allocation2], %s735
          %738 = vsyncadd %s734, 0
          %s739 = scalar_lea.hbm %s5, %s55
          %s741 = sshll.u32 %s739, 4
          %s742 = int_to_ptr.hbm [resolvable:$true] %s741
          %s743 = sshll.u32 %s736, 4
          %s744 = int_to_ptr.vmem [resolvable:$true] %s743
          %746 = dma.hbm_to_vmem [thread:$0]  %s742, 16, %s744, %s734
        $region40: #{_dit_forward.4} parent=23 // pred_fallthru
          _
        // Predicated region
        $region41: #{_dit_forward.4} parent=23 // pred_check
          %p747 = pneg %p221
        $region42: #{_dit_forward.4} parent=23 // pred_check_branch
          %749 = sbr.rel (%p747) target = $region44
        $region43: #{_dit_forward.4} parent=23 // pred_region
          %s750 = sand.u32 %s55, 1
          %s751 = scalar_lea.sflag [#allocation5], %s750
          %s752 = sand.u32 %s211, 1
          %s753 = scalar_lea.vmem [#allocation4], %s752
          %755 = vsyncadd %s751, 0
          %s756 = scalar_lea.hbm %s6, %s55
          %s758 = sshll.u32 %s756, 4
          %s759 = int_to_ptr.hbm [resolvable:$true] %s758
          %s760 = sshll.u32 %s753, 4
          %s761 = int_to_ptr.vmem [resolvable:$true] %s760
          %763 = dma.hbm_to_vmem [thread:$0]  %s759, 16, %s761, %s751
        $region44: #{_dit_forward.4} parent=23 // pred_fallthru
          _
        // Predicated region
        $region45: #{_dit_forward.4} parent=23 // pred_check
          %p764 = pneg %p247
        $region46: #{_dit_forward.4} parent=23 // pred_check_branch
          %766 = sbr.rel (%p764) target = $region48
        $region47: #{_dit_forward.4} parent=23 // pred_region
          %s767 = sand.u32 %s55, 1
          %s768 = scalar_lea.sflag [#allocation5], %s767
          %s769 = sand.u32 %s237, 1
          %s770 = smul.addr %s769, 192
          %s771 = scalar_lea.vmem [#allocation6], %s770
          %773 = vsyncadd %s768, 0
          %s774 = smul.addr %s55, 48
          %s775 = smul.addr %s774, 4
          %s776 = scalar_lea.hbm %s7, %s775
          %s777 = sshll.u32 %s776, 4
          %s778 = int_to_ptr.hbm [resolvable:$true] %s777
          %s779 = sshll.u32 %s771, 4
          %s780 = int_to_ptr.vmem [resolvable:$true] %s779
          %785 = dma.hbm_to_vmem [thread:$0]  %s778, 3072, %s780, %s768, 192, 192, 12
        $region48: #{_dit_forward.4} parent=23 // pred_fallthru
          _
        // Predicated region
        $region49: #{_dit_forward.4} parent=23 // pred_check
          %p786 = pneg %p273
        $region50: #{_dit_forward.4} parent=23 // pred_check_branch
          %788 = sbr.rel (%p786) target = $region52
        $region51: #{_dit_forward.4} parent=23 // pred_region
          %s789 = sand.u32 %s55, 1
          %s790 = scalar_lea.sflag [#allocation8], %s789
          %s791 = sand.u32 %s263, 1
          %s792 = smul.addr %s791, 3
          %s793 = scalar_lea.vmem [#allocation7], %s792
          %795 = vsyncadd %s790, 0
          %s796 = smul.addr %s55, 3
          %s797 = scalar_lea.hbm %s8, %s796
          %s799 = sshll.u32 %s797, 4
          %s800 = int_to_ptr.hbm [resolvable:$true] %s799
          %s801 = sshll.u32 %s793, 4
          %s802 = int_to_ptr.vmem [resolvable:$true] %s801
          %804 = dma.hbm_to_vmem [thread:$0]  %s800, 48, %s802, %s790
        $region52: #{_dit_forward.4} parent=23 // pred_fallthru
          _
        // Predicated region
        $region53: #{_dit_forward.4} parent=23 // pred_check
          %p805 = pneg %p299
        $region54: #{_dit_forward.4} parent=23 // pred_check_branch
          %807 = sbr.rel (%p805) target = $region56
        $region55: #{_dit_forward.4} parent=23 // pred_region
          %s808 = sand.u32 %s55, 1
          %s809 = scalar_lea.sflag [#allocation8], %s808
          %s810 = sand.u32 %s289, 1
          %s811 = smul.addr %s810, 192
          %s812 = scalar_lea.vmem [#allocation9], %s811
          %814 = vsyncadd %s809, 0
          %s815 = smul.addr %s55, 48
          %s816 = smul.addr %s815, 4
          %s817 = scalar_lea.hbm %s9, %s816
          %s818 = sshll.u32 %s817, 4
          %s819 = int_to_ptr.hbm [resolvable:$true] %s818
          %s820 = sshll.u32 %s812, 4
          %s821 = int_to_ptr.vmem [resolvable:$true] %s820
          %826 = dma.hbm_to_vmem [thread:$0]  %s819, 3072, %s821, %s809, 192, 192, 12
        $region56: #{_dit_forward.4} parent=23 // pred_fallthru
          _
        // Predicated region
        $region57: #{_dit_forward.4} parent=23 // pred_check
          %p827 = pneg %p325
        $region58: #{_dit_forward.4} parent=23 // pred_check_branch
          %829 = sbr.rel (%p827) target = $region60
        $region59: #{_dit_forward.4} parent=23 // pred_region
          %s830 = sand.u32 %s55, 1
          %s831 = scalar_lea.sflag [#allocation11], %s830
          %s832 = sand.u32 %s315, 1
          %s833 = smul.addr %s832, 3
          %s834 = scalar_lea.vmem [#allocation10], %s833
          %836 = vsyncadd %s831, 0
          %s837 = smul.addr %s55, 3
          %s838 = scalar_lea.hbm %s10, %s837
          %s840 = sshll.u32 %s838, 4
          %s841 = int_to_ptr.hbm [resolvable:$true] %s840
          %s842 = sshll.u32 %s834, 4
          %s843 = int_to_ptr.vmem [resolvable:$true] %s842
          %845 = dma.hbm_to_vmem [thread:$0]  %s841, 48, %s843, %s831
        $region60: #{_dit_forward.4} parent=23 // pred_fallthru
          _
        // Predicated region
        $region61: #{_dit_forward.4} parent=23 // pred_check
          %p846 = pneg %p351
        $region62: #{_dit_forward.4} parent=23 // pred_check_branch
          %848 = sbr.rel (%p846) target = $region64
        $region63: #{_dit_forward.4} parent=23 // pred_region
          %p849 = scmp.lt.s32.totalorder %s55, 1
          %s850 = scalar_select %p849, %s55, 1
          %s851 = smul.addr %s850, 16
          %s852 = smul.addr %s851, 4
          %s853 = scalar_lea.vmem %s11, %s852
        $region64: #{_dit_forward.4} parent=23 // pred_fallthru
          _
        // Predicated region
        $region65: #{_dit_forward.4} parent=23 // pred_check
          %p854 = pneg %p377
        $region66: #{_dit_forward.4} parent=23 // pred_check_branch
          %856 = sbr.rel (%p854) target = $region68
        $region67: #{_dit_forward.4} parent=23 // pred_region
          %s857 = sand.u32 %s55, 1
          %s858 = scalar_lea.sflag [#allocation11], %s857
          %s859 = sand.u32 %s367, 1
          %s860 = scalar_lea.vmem [#allocation12], %s859
          %862 = vsyncadd %s858, 0
          %s863 = scalar_lea.hbm %s12, %s55
          %s865 = sshll.u32 %s863, 4
          %s866 = int_to_ptr.hbm [resolvable:$true] %s865
          %s867 = sshll.u32 %s860, 4
          %s868 = int_to_ptr.vmem [resolvable:$true] %s867
          %870 = dma.hbm_to_vmem [thread:$0]  %s866, 16, %s868, %s858
        $region68: #{_dit_forward.4} parent=23 // pred_fallthru
          _
        // Predicated region
        $region69: #{_dit_forward.4} parent=23 // pred_check
          %p871 = pneg %p403
        $region70: #{_dit_forward.4} parent=23 // pred_check_branch
          %873 = sbr.rel (%p871) target = $region72
        $region71: #{_dit_forward.4} parent=23 // pred_region
          %s874 = sand.u32 %s55, 1
          %s875 = scalar_lea.sflag [#allocation14], %s874
          %s876 = sand.u32 %s393, 1
          %s877 = smul.addr %s876, 64
          %s878 = scalar_lea.vmem [#allocation13], %s877
          %880 = vsyncadd %s875, 0
          %s881 = smul.addr %s55, 16
          %s882 = smul.addr %s881, 4
          %s883 = scalar_lea.hbm %s13, %s882
          %s884 = sshll.u32 %s883, 4
          %s885 = int_to_ptr.hbm [resolvable:$true] %s884
          %s886 = sshll.u32 %s878, 4
          %s887 = int_to_ptr.vmem [resolvable:$true] %s886
          %892 = dma.hbm_to_vmem [thread:$0]  %s885, 1024, %s887, %s875, 64, 64, 4
        $region72: #{_dit_forward.4} parent=23 // pred_fallthru
          _
        // Predicated region
        $region73: #{_dit_forward.4} parent=23 // pred_check
          %p893 = pneg %p429
        $region74: #{_dit_forward.4} parent=23 // pred_check_branch
          %895 = sbr.rel (%p893) target = $region76
        $region75: #{_dit_forward.4} parent=23 // pred_region
          %s896 = sand.u32 %s55, 1
          %s897 = scalar_lea.sflag [#allocation14], %s896
          %s898 = sand.u32 %s419, 1
          %s899 = scalar_lea.vmem [#allocation15], %s898
          %901 = vsyncadd %s897, 0
          %s902 = scalar_lea.hbm %s14, %s55
          %s904 = sshll.u32 %s902, 4
          %s905 = int_to_ptr.hbm [resolvable:$true] %s904
          %s906 = sshll.u32 %s899, 4
          %s907 = int_to_ptr.vmem [resolvable:$true] %s906
          %909 = dma.hbm_to_vmem [thread:$0]  %s905, 16, %s907, %s897
        $region76: #{_dit_forward.4} parent=23 // pred_fallthru
          _
        // Predicated region
        $region77: #{_dit_forward.4} parent=23 // pred_check
          %p910 = pneg %p455
        $region78: #{_dit_forward.4} parent=23 // pred_check_branch
          %912 = sbr.rel (%p910) target = $region80
        $region79: #{_dit_forward.4} parent=23 // pred_region
          %p913 = scmp.lt.s32.totalorder %s55, 1
          %s914 = scalar_select %p913, %s55, 1
          %s915 = smul.addr %s914, 64
          %s916 = smul.addr %s915, 4
          %s917 = scalar_lea.vmem %s15, %s916
        $region80: #{_dit_forward.4} parent=23 // pred_fallthru
          _
        // Predicated region
        $region81: #{_dit_forward.4} parent=23 // pred_check
          %p918 = pneg %p481
        $region82: #{_dit_forward.4} parent=23 // pred_check_branch
          %920 = sbr.rel (%p918) target = $region84
        $region83: #{_dit_forward.4} parent=23 // pred_region
          %s921 = sand.u32 %s55, 1
          %s922 = scalar_lea.sflag [#allocation17], %s921
          %s923 = sand.u32 %s471, 1
          %s924 = smul.addr %s923, 4
          %s925 = scalar_lea.vmem [#allocation16], %s924
          %927 = vsyncadd %s922, 0
          %s928 = smul.addr %s55, 4
          %s929 = scalar_lea.hbm %s16, %s928
          %s931 = sshll.u32 %s929, 4
          %s932 = int_to_ptr.hbm [resolvable:$true] %s931
          %s933 = sshll.u32 %s925, 4
          %s934 = int_to_ptr.vmem [resolvable:$true] %s933
          %936 = dma.hbm_to_vmem [thread:$0]  %s932, 64, %s934, %s922
        $region84: #{_dit_forward.4} parent=23 // pred_fallthru
          _
        // Predicated region
        $region85: #{_dit_forward.4} parent=23 // pred_check
          %p937 = pneg %p507
        $region86: #{_dit_forward.4} parent=23 // pred_check_branch
          %939 = sbr.rel (%p937) target = $region88
        $region87: #{_dit_forward.4} parent=23 // pred_region
          %p940 = scmp.lt.s32.totalorder %s55, 1
          %s941 = scalar_select %p940, %s55, 1
          %s942 = smul.addr %s941, 64
          %s943 = smul.addr %s942, 4
          %s944 = scalar_lea.vmem %s17, %s943
        $region88: #{_dit_forward.4} parent=23 // pred_fallthru
          _
        // Predicated region
        $region89: #{_dit_forward.4} parent=23 // pred_check
          %p945 = pneg %p533
        $region90: #{_dit_forward.4} parent=23 // pred_check_branch
          %947 = sbr.rel (%p945) target = $region92
        $region91: #{_dit_forward.4} parent=23 // pred_region
          %s948 = sand.u32 %s55, 1
          %s949 = scalar_lea.sflag [#allocation17], %s948
          %s950 = sand.u32 %s523, 1
          %s951 = scalar_lea.vmem [#allocation18], %s950
          %953 = vsyncadd %s949, 0
          %s954 = scalar_lea.hbm %s18, %s55
          %s956 = sshll.u32 %s954, 4
          %s957 = int_to_ptr.hbm [resolvable:$true] %s956
          %s958 = sshll.u32 %s951, 4
          %s959 = int_to_ptr.vmem [resolvable:$true] %s958
          %961 = dma.hbm_to_vmem [thread:$0]  %s957, 16, %s959, %s949
        $region92: #{_dit_forward.4} parent=23 // pred_fallthru
          _
        // Predicated region
        $region93: #{_dit_forward.4} parent=23 // pred_check
          %p962 = pneg %p559
        $region94: #{_dit_forward.4} parent=23 // pred_check_branch
          %964 = sbr.rel (%p962) target = $region96
        $region95: #{_dit_forward.4} parent=23 // pred_region
          %s965 = sand.u32 %s55, 1
          %s966 = scalar_lea.sflag [#allocation20], %s965
          %s967 = sand.u32 %s549, 1
          %s968 = smul.addr %s967, 256
          %s969 = scalar_lea.vmem [#allocation19], %s968
          %971 = vsyncadd %s966, 0
          %s972 = smul.addr %s55, 64
          %s973 = smul.addr %s972, 4
          %s974 = scalar_lea.hbm %s19, %s973
          %s975 = sshll.u32 %s974, 4
          %s976 = int_to_ptr.hbm [resolvable:$true] %s975
          %s977 = sshll.u32 %s969, 4
          %s978 = int_to_ptr.vmem [resolvable:$true] %s977
          %983 = dma.hbm_to_vmem [thread:$0]  %s976, 4096, %s978, %s966, 256, 256, 16
        $region96: #{_dit_forward.4} parent=23 // pred_fallthru
          _
        // Predicated region
        $region97: #{_dit_forward.4} parent=23 // pred_check
          %p984 = pneg %p585
        $region98: #{_dit_forward.4} parent=23 // pred_check_branch
          %986 = sbr.rel (%p984) target = $region100
        $region99: #{_dit_forward.4} parent=23 // pred_region
          %s987 = sand.u32 %s55, 1
          %s988 = scalar_lea.sflag [#allocation20], %s987
          %s989 = sand.u32 %s575, 1
          %s990 = smul.addr %s989, 4
          %s991 = scalar_lea.vmem [#allocation21], %s990
          %993 = vsyncadd %s988, 0
          %s994 = smul.addr %s55, 4
          %s995 = scalar_lea.hbm %s20, %s994
          %s997 = sshll.u32 %s995, 4
          %s998 = int_to_ptr.hbm [resolvable:$true] %s997
          %s999 = sshll.u32 %s991, 4
          %s1000 = int_to_ptr.vmem [resolvable:$true] %s999
          %1002 = dma.hbm_to_vmem [thread:$0]  %s998, 64, %s1000, %s988
        $region100: #{_dit_forward.4} parent=23 // pred_fallthru
          _
        // Predicated region
        $region101: #{_dit_forward.4} parent=23 // pred_check
          %p1003 = pneg %p611
        $region102: #{_dit_forward.4} parent=23 // pred_check_branch
          %1005 = sbr.rel (%p1003) target = $region104
        $region103: #{_dit_forward.4} parent=23 // pred_region
          %s1006 = sand.u32 %s55, 1
          %s1007 = scalar_lea.sflag [#allocation23], %s1006
          %s1008 = sand.u32 %s601, 1
          %s1009 = smul.addr %s1008, 256
          %s1010 = scalar_lea.vmem [#allocation22], %s1009
          %1012 = vsyncadd %s1007, 0
          %s1013 = smul.addr %s55, 64
          %s1014 = smul.addr %s1013, 4
          %s1015 = scalar_lea.hbm %s21, %s1014
          %s1016 = sshll.u32 %s1015, 4
          %s1017 = int_to_ptr.hbm [resolvable:$true] %s1016
          %s1018 = sshll.u32 %s1010, 4
          %s1019 = int_to_ptr.vmem [resolvable:$true] %s1018
          %1024 = dma.hbm_to_vmem [thread:$0]  %s1017, 4096, %s1019, %s1007, 64, 64, 4
        $region104: #{_dit_forward.4} parent=23 // pred_fallthru
          _
        // Predicated region
        $region105: #{_dit_forward.4} parent=23 // pred_check
          %p1025 = pneg %p637
        $region106: #{_dit_forward.4} parent=23 // pred_check_branch
          %1027 = sbr.rel (%p1025) target = $region108
        $region107: #{_dit_forward.4} parent=23 // pred_region
          %s1028 = sand.u32 %s55, 1
          %s1029 = scalar_lea.sflag [#allocation23], %s1028
          %s1030 = sand.u32 %s627, 1
          %s1031 = scalar_lea.vmem [#allocation24], %s1030
          %1033 = vsyncadd %s1029, 0
          %s1034 = scalar_lea.hbm %s22, %s55
          %s1036 = sshll.u32 %s1034, 4
          %s1037 = int_to_ptr.hbm [resolvable:$true] %s1036
          %s1038 = sshll.u32 %s1031, 4
          %s1039 = int_to_ptr.vmem [resolvable:$true] %s1038
          %1041 = dma.hbm_to_vmem [thread:$0]  %s1037, 16, %s1039, %s1029
        $region108: #{_dit_forward.4} parent=23 // pred_fallthru
          _
      $region24: #{_dit_forward.4} parent=5 // pred_fallthru
        _
      %p1042 = scmp.le.s32.totalorder 1, %s55
      %p1043 = scmp.lt.s32.totalorder %s55, 3
      %p1044 = pnand %p1042, %p1043
      %p1045 = pneg %p1044
      // Predicated region
      $region109: #{_dit_forward.4} parent=5 // pred_check
        _
      $region110: #{_dit_forward.4} parent=5 // pred_check_branch
        %1047 = sbr.rel (%p1044) target = $region112
      $region111: #{_dit_forward.4} parent=5 // pred_region
        %s1048 = ssub.s32 %s55, 1
        %s1049 = sand.u32 %s188, 1
        %s1050 = scalar_lea.sflag [#allocation3], %s1049
        %s1051 = sand.u32 %s188, 1
        %s1052 = scalar_lea.vmem [#allocation2], %s1051
        // Predicated region
        $region113: #{_dit_forward.4} parent=111 // pred_check
          %p1053 = pneg %p201
        $region114: #{_dit_forward.4} parent=111 // pred_check_branch
          %1055 = sbr.rel (%p1053) target = $region116
        $region115: #{_dit_forward.4} parent=111 // pred_region
          %1057 = dma.done %s1050, 16
        $region116: #{_dit_forward.4} parent=111 // pred_fallthru
          _
        %s1058 = sand.u32 %s60, 1
        %s1059 = scalar_lea.sflag [#allocation5], %s1058
        %s1060 = sand.u32 %s214, 1
        %s1061 = scalar_lea.vmem [#allocation4], %s1060
        // Predicated region
        $region117: #{_dit_forward.4} parent=111 // pred_check
          %p1062 = pneg %p227
        $region118: #{_dit_forward.4} parent=111 // pred_check_branch
          %1064 = sbr.rel (%p1062) target = $region120
        $region119: #{_dit_forward.4} parent=111 // pred_region
          %1066 = dma.done %s1059, 16
        $region120: #{_dit_forward.4} parent=111 // pred_fallthru
          _
        %s1067 = sand.u32 %s60, 1
        %s1068 = scalar_lea.sflag [#allocation5], %s1067
        %s1069 = sand.u32 %s240, 1
        %s1070 = smul.addr %s1069, 192
        %s1071 = scalar_lea.vmem [#allocation6], %s1070
        // Predicated region
        $region121: #{_dit_forward.4} parent=111 // pred_check
          %p1072 = pneg %p253
        $region122: #{_dit_forward.4} parent=111 // pred_check_branch
          %1074 = sbr.rel (%p1072) target = $region124
        $region123: #{_dit_forward.4} parent=111 // pred_region
          %1076 = dma.done %s1068, 3072
        $region124: #{_dit_forward.4} parent=111 // pred_fallthru
          _
        %s1077 = sand.u32 %s60, 1
        %s1078 = scalar_lea.sflag [#allocation8], %s1077
        %s1079 = sand.u32 %s266, 1
        %s1080 = smul.addr %s1079, 3
        %s1081 = scalar_lea.vmem [#allocation7], %s1080
        // Predicated region
        $region125: #{_dit_forward.4} parent=111 // pred_check
          %p1082 = pneg %p279
        $region126: #{_dit_forward.4} parent=111 // pred_check_branch
          %1084 = sbr.rel (%p1082) target = $region128
        $region127: #{_dit_forward.4} parent=111 // pred_region
          %1086 = dma.done %s1078, 48
        $region128: #{_dit_forward.4} parent=111 // pred_fallthru
          _
        %s1087 = sand.u32 %s60, 1
        %s1088 = scalar_lea.sflag [#allocation8], %s1087
        %s1089 = sand.u32 %s292, 1
        %s1090 = smul.addr %s1089, 192
        %s1091 = scalar_lea.vmem [#allocation9], %s1090
        // Predicated region
        $region129: #{_dit_forward.4} parent=111 // pred_check
          %p1092 = pneg %p305
        $region130: #{_dit_forward.4} parent=111 // pred_check_branch
          %1094 = sbr.rel (%p1092) target = $region132
        $region131: #{_dit_forward.4} parent=111 // pred_region
          %1096 = dma.done %s1088, 3072
        $region132: #{_dit_forward.4} parent=111 // pred_fallthru
          _
        %s1097 = sand.u32 %s60, 1
        %s1098 = scalar_lea.sflag [#allocation11], %s1097
        %s1099 = sand.u32 %s318, 1
        %s1100 = smul.addr %s1099, 3
        %s1101 = scalar_lea.vmem [#allocation10], %s1100
        // Predicated region
        $region133: #{_dit_forward.4} parent=111 // pred_check
          %p1102 = pneg %p331
        $region134: #{_dit_forward.4} parent=111 // pred_check_branch
          %1104 = sbr.rel (%p1102) target = $region136
        $region135: #{_dit_forward.4} parent=111 // pred_region
          %1106 = dma.done %s1098, 48
        $region136: #{_dit_forward.4} parent=111 // pred_fallthru
          _
        %s1107 = sand.u32 %s60, 1
        %s1108 = scalar_lea.sflag [#allocation11], %s1107
        %s1109 = sand.u32 %s370, 1
        %s1110 = scalar_lea.vmem [#allocation12], %s1109
        // Predicated region
        $region137: #{_dit_forward.4} parent=111 // pred_check
          %p1111 = pneg %p383
        $region138: #{_dit_forward.4} parent=111 // pred_check_branch
          %1113 = sbr.rel (%p1111) target = $region140
        $region139: #{_dit_forward.4} parent=111 // pred_region
          %1115 = dma.done %s1108, 16
        $region140: #{_dit_forward.4} parent=111 // pred_fallthru
          _
        %s1116 = sand.u32 %s60, 1
        %s1117 = scalar_lea.sflag [#allocation14], %s1116
        %s1118 = sand.u32 %s396, 1
        %s1119 = smul.addr %s1118, 64
        %s1120 = scalar_lea.vmem [#allocation13], %s1119
        // Predicated region
        $region141: #{_dit_forward.4} parent=111 // pred_check
          %p1121 = pneg %p409
        $region142: #{_dit_forward.4} parent=111 // pred_check_branch
          %1123 = sbr.rel (%p1121) target = $region144
        $region143: #{_dit_forward.4} parent=111 // pred_region
          %1125 = dma.done %s1117, 1024
        $region144: #{_dit_forward.4} parent=111 // pred_fallthru
          _
        %s1126 = sand.u32 %s60, 1
        %s1127 = scalar_lea.sflag [#allocation14], %s1126
        %s1128 = sand.u32 %s422, 1
        %s1129 = scalar_lea.vmem [#allocation15], %s1128
        // Predicated region
        $region145: #{_dit_forward.4} parent=111 // pred_check
          %p1130 = pneg %p435
        $region146: #{_dit_forward.4} parent=111 // pred_check_branch
          %1132 = sbr.rel (%p1130) target = $region148
        $region147: #{_dit_forward.4} parent=111 // pred_region
          %1134 = dma.done %s1127, 16
        $region148: #{_dit_forward.4} parent=111 // pred_fallthru
          _
        %s1135 = sand.u32 %s60, 1
        %s1136 = scalar_lea.sflag [#allocation17], %s1135
        %s1137 = sand.u32 %s474, 1
        %s1138 = smul.addr %s1137, 4
        %s1139 = scalar_lea.vmem [#allocation16], %s1138
        // Predicated region
        $region149: #{_dit_forward.4} parent=111 // pred_check
          %p1140 = pneg %p487
        $region150: #{_dit_forward.4} parent=111 // pred_check_branch
          %1142 = sbr.rel (%p1140) target = $region152
        $region151: #{_dit_forward.4} parent=111 // pred_region
          %1144 = dma.done %s1136, 64
        $region152: #{_dit_forward.4} parent=111 // pred_fallthru
          _
        %s1145 = sand.u32 %s60, 1
        %s1146 = scalar_lea.sflag [#allocation17], %s1145
        %s1147 = sand.u32 %s526, 1
        %s1148 = scalar_lea.vmem [#allocation18], %s1147
        // Predicated region
        $region153: #{_dit_forward.4} parent=111 // pred_check
          %p1149 = pneg %p539
        $region154: #{_dit_forward.4} parent=111 // pred_check_branch
          %1151 = sbr.rel (%p1149) target = $region156
        $region155: #{_dit_forward.4} parent=111 // pred_region
          %1153 = dma.done %s1146, 16
        $region156: #{_dit_forward.4} parent=111 // pred_fallthru
          _
        %s1154 = sand.u32 %s60, 1
        %s1155 = scalar_lea.sflag [#allocation20], %s1154
        %s1156 = sand.u32 %s552, 1
        %s1157 = smul.addr %s1156, 256
        %s1158 = scalar_lea.vmem [#allocation19], %s1157
        // Predicated region
        $region157: #{_dit_forward.4} parent=111 // pred_check
          %p1159 = pneg %p565
        $region158: #{_dit_forward.4} parent=111 // pred_check_branch
          %1161 = sbr.rel (%p1159) target = $region160
        $region159: #{_dit_forward.4} parent=111 // pred_region
          %1163 = dma.done %s1155, 4096
        $region160: #{_dit_forward.4} parent=111 // pred_fallthru
          _
        %s1164 = sand.u32 %s60, 1
        %s1165 = scalar_lea.sflag [#allocation20], %s1164
        %s1166 = sand.u32 %s578, 1
        %s1167 = smul.addr %s1166, 4
        %s1168 = scalar_lea.vmem [#allocation21], %s1167
        // Predicated region
        $region161: #{_dit_forward.4} parent=111 // pred_check
          %p1169 = pneg %p591
        $region162: #{_dit_forward.4} parent=111 // pred_check_branch
          %1171 = sbr.rel (%p1169) target = $region164
        $region163: #{_dit_forward.4} parent=111 // pred_region
          %1173 = dma.done %s1165, 64
        $region164: #{_dit_forward.4} parent=111 // pred_fallthru
          _
        %s1174 = sand.u32 %s60, 1
        %s1175 = scalar_lea.sflag [#allocation23], %s1174
        %s1176 = sand.u32 %s604, 1
        %s1177 = smul.addr %s1176, 256
        %s1178 = scalar_lea.vmem [#allocation22], %s1177
        // Predicated region
        $region165: #{_dit_forward.4} parent=111 // pred_check
          %p1179 = pneg %p617
        $region166: #{_dit_forward.4} parent=111 // pred_check_branch
          %1181 = sbr.rel (%p1179) target = $region168
        $region167: #{_dit_forward.4} parent=111 // pred_region
          %1183 = dma.done %s1175, 4096
        $region168: #{_dit_forward.4} parent=111 // pred_fallthru
          _
        %s1184 = sand.u32 %s60, 1
        %s1185 = scalar_lea.sflag [#allocation23], %s1184
        %s1186 = sand.u32 %s630, 1
        %s1187 = scalar_lea.vmem [#allocation24], %s1186
        // Predicated region
        $region169: #{_dit_forward.4} parent=111 // pred_check
          %p1188 = pneg %p643
        $region170: #{_dit_forward.4} parent=111 // pred_check_branch
          %1190 = sbr.rel (%p1188) target = $region172
        $region171: #{_dit_forward.4} parent=111 // pred_region
          %1192 = dma.done %s1185, 16
        $region172: #{_dit_forward.4} parent=111 // pred_fallthru
          _
        %p1193 = scmp.lt.s32.totalorder %s60, 1
        %s1194 = scalar_select %p1193, %s60, 1
        %s1195 = smul.addr %s1194, 12
        %s1196 = smul.addr %s1195, 2
        %s1197 = scalar_lea.vmem %s0, %s1196
        %p1198 = pneg %p81
        %p1199 = pneg %p78
        %p1200 = pneg %p102
        %p1201 = pneg %p99
        %p1202 = pneg %p123
        %p1203 = pneg %p120
        %p1204 = scmp.lt.s32.totalorder %s60, 1
        %s1205 = scalar_select %p1204, %s60, 1
        %s1206 = scalar_lea.vmem %s3, %s1205
        %p1207 = pneg %p149
        %p1208 = pneg %p146
        %p1209 = scmp.lt.s32.totalorder %s60, 1
        %s1210 = scalar_select %p1209, %s60, 1
        %s1211 = scalar_lea.vmem %s4, %s1210
        %p1212 = pneg %p175
        %p1213 = pneg %p172
        %s1214 = sand.u32 %s188, 1
        %s1215 = scalar_lea.sflag [#allocation3], %s1214
        %s1216 = sand.u32 %s188, 1
        %s1217 = scalar_lea.vmem [#allocation2], %s1216
        %p1218 = pneg %p201
        %p1219 = pneg %p198
        %s1220 = sand.u32 %s60, 1
        %s1221 = scalar_lea.sflag [#allocation5], %s1220
        %s1222 = sand.u32 %s214, 1
        %s1223 = scalar_lea.vmem [#allocation4], %s1222
        %p1224 = pneg %p227
        %p1225 = pneg %p224
        %s1226 = sand.u32 %s60, 1
        %s1227 = scalar_lea.sflag [#allocation5], %s1226
        %s1228 = sand.u32 %s240, 1
        %s1229 = smul.addr %s1228, 192
        %s1230 = scalar_lea.vmem [#allocation6], %s1229
        %p1231 = pneg %p253
        %p1232 = pneg %p250
        %s1233 = sand.u32 %s60, 1
        %s1234 = scalar_lea.sflag [#allocation8], %s1233
        %s1235 = sand.u32 %s266, 1
        %s1236 = smul.addr %s1235, 3
        %s1237 = scalar_lea.vmem [#allocation7], %s1236
        %p1238 = pneg %p279
        %p1239 = pneg %p276
        %s1240 = sand.u32 %s60, 1
        %s1241 = scalar_lea.sflag [#allocation8], %s1240
        %s1242 = sand.u32 %s292, 1
        %s1243 = smul.addr %s1242, 192
        %s1244 = scalar_lea.vmem [#allocation9], %s1243
        %p1245 = pneg %p305
        %p1246 = pneg %p302
        %s1247 = sand.u32 %s60, 1
        %s1248 = scalar_lea.sflag [#allocation11], %s1247
        %s1249 = sand.u32 %s318, 1
        %s1250 = smul.addr %s1249, 3
        %s1251 = scalar_lea.vmem [#allocation10], %s1250
        %p1252 = pneg %p331
        %p1253 = pneg %p328
        %p1254 = scmp.lt.s32.totalorder %s60, 1
        %s1255 = scalar_select %p1254, %s60, 1
        %s1256 = smul.addr %s1255, 16
        %s1257 = smul.addr %s1256, 4
        %s1258 = scalar_lea.vmem %s11, %s1257
        %p1259 = pneg %p357
        %p1260 = pneg %p354
        %s1261 = sand.u32 %s60, 1
        %s1262 = scalar_lea.sflag [#allocation11], %s1261
        %s1263 = sand.u32 %s370, 1
        %s1264 = scalar_lea.vmem [#allocation12], %s1263
        %p1265 = pneg %p383
        %p1266 = pneg %p380
        %s1267 = sand.u32 %s60, 1
        %s1268 = scalar_lea.sflag [#allocation14], %s1267
        %s1269 = sand.u32 %s396, 1
        %s1270 = smul.addr %s1269, 64
        %s1271 = scalar_lea.vmem [#allocation13], %s1270
        %p1272 = pneg %p409
        %p1273 = pneg %p406
        %s1274 = sand.u32 %s60, 1
        %s1275 = scalar_lea.sflag [#allocation14], %s1274
        %s1276 = sand.u32 %s422, 1
        %s1277 = scalar_lea.vmem [#allocation15], %s1276
        %p1278 = pneg %p435
        %p1279 = pneg %p432
        %p1280 = scmp.lt.s32.totalorder %s60, 1
        %s1281 = scalar_select %p1280, %s60, 1
        %s1282 = smul.addr %s1281, 64
        %s1283 = smul.addr %s1282, 4
        %s1284 = scalar_lea.vmem %s15, %s1283
        %p1285 = pneg %p461
        %p1286 = pneg %p458
        %s1287 = sand.u32 %s60, 1
        %s1288 = scalar_lea.sflag [#allocation17], %s1287
        %s1289 = sand.u32 %s474, 1
        %s1290 = smul.addr %s1289, 4
        %s1291 = scalar_lea.vmem [#allocation16], %s1290
        %p1292 = pneg %p487
        %p1293 = pneg %p484
        %p1294 = scmp.lt.s32.totalorder %s60, 1
        %s1295 = scalar_select %p1294, %s60, 1
        %s1296 = smul.addr %s1295, 64
        %s1297 = smul.addr %s1296, 4
        %s1298 = scalar_lea.vmem %s17, %s1297
        %p1299 = pneg %p513
        %p1300 = pneg %p510
        %s1301 = sand.u32 %s60, 1
        %s1302 = scalar_lea.sflag [#allocation17], %s1301
        %s1303 = sand.u32 %s526, 1
        %s1304 = scalar_lea.vmem [#allocation18], %s1303
        %p1305 = pneg %p539
        %p1306 = pneg %p536
        %s1307 = sand.u32 %s60, 1
        %s1308 = scalar_lea.sflag [#allocation20], %s1307
        %s1309 = sand.u32 %s552, 1
        %s1310 = smul.addr %s1309, 256
        %s1311 = scalar_lea.vmem [#allocation19], %s1310
        %p1312 = pneg %p565
        %p1313 = pneg %p562
        %s1314 = sand.u32 %s60, 1
        %s1315 = scalar_lea.sflag [#allocation20], %s1314
        %s1316 = sand.u32 %s578, 1
        %s1317 = smul.addr %s1316, 4
        %s1318 = scalar_lea.vmem [#allocation21], %s1317
        %p1319 = pneg %p591
        %p1320 = pneg %p588
        %s1321 = sand.u32 %s60, 1
        %s1322 = scalar_lea.sflag [#allocation23], %s1321
        %s1323 = sand.u32 %s604, 1
        %s1324 = smul.addr %s1323, 256
        %s1325 = scalar_lea.vmem [#allocation22], %s1324
        %p1326 = pneg %p617
        %p1327 = pneg %p614
        %s1328 = sand.u32 %s60, 1
        %s1329 = scalar_lea.sflag [#allocation23], %s1328
        %s1330 = sand.u32 %s630, 1
        %s1331 = scalar_lea.vmem [#allocation24], %s1330
        %p1332 = pneg %p643
        %p1333 = pneg %p640
        %p1334 = pneg %p664
        %p1335 = pneg %p661
        %p1336 = pneg %p685
        %p1337 = pneg %p682
        %p1338 = scmp.lt.s32.totalorder %s60, 1
        %s1339 = scalar_select %p1338, %s60, 1
        %s1340 = smul.addr %s1339, 12
        %s1341 = smul.addr %s1340, 2
        %s1342 = scalar_lea.vmem %s0, %s1341
        %p1343 = scmp.lt.s32.totalorder %s60, 1
        %s1344 = scalar_select %p1343, %s60, 1
        %s1345 = scalar_lea.vmem %s3, %s1344
        %p1346 = scmp.lt.s32.totalorder %s60, 1
        %s1347 = scalar_select %p1346, %s60, 1
        %s1348 = scalar_lea.vmem %s4, %s1347
        %p1349 = scmp.lt.s32.totalorder %s60, 1
        %s1350 = scalar_select %p1349, %s60, 1
        %s1351 = smul.addr %s1350, 16
        %s1352 = smul.addr %s1351, 4
        %s1353 = scalar_lea.vmem %s11, %s1352
        %p1354 = scmp.lt.s32.totalorder %s60, 1
        %s1355 = scalar_select %p1354, %s60, 1
        %s1356 = smul.addr %s1355, 64
        %s1357 = smul.addr %s1356, 4
        %s1358 = scalar_lea.vmem %s15, %s1357
        %p1359 = scmp.lt.s32.totalorder %s60, 1
        %s1360 = scalar_select %p1359, %s60, 1
        %s1361 = smul.addr %s1360, 64
        %s1362 = smul.addr %s1361, 4
        %s1363 = scalar_lea.vmem %s17, %s1362
        %p1365 = scmp.eq.s32.totalorder %s60, 0
        // Predicated region
        $region173: #{_dit_forward.4} parent=111 // pred_check
          %p1366 = pneg %p1365
        $region174: #{_dit_forward.4} parent=111 // pred_check_branch
          %1368 = sbr.rel (%p1366) target = $region176
        $region175: #{_dit_forward.4} parent=111 // pred_region
          %v1369 = vld [vmem:[%s1] sm:$0xff]
          %v1370 = vld [vmem:[%s1 + $0x8] sm:$0xff]
          %v1371 = vld [vmem:[%s1 + $0x10] sm:$0xff]
          %v1372 = vld [vmem:[%s1 + $0x18] sm:$0xff]
          %1373 = vst [vmem:[%s23] sm:$0xff] %v1369
          %1374 = vst [vmem:[%s23 + $0x8] sm:$0xff] %v1370
          %1375 = vst [vmem:[%s23 + $0x10] sm:$0xff] %v1371
          %1376 = vst [vmem:[%s23 + $0x18] sm:$0xff] %v1372
          %v1377 = vld [vmem:[%s2] sm:$0xff]
          %v1378 = vld [vmem:[%s2 + $0x8] sm:$0xff]
          %v1379 = vld [vmem:[%s2 + $0x10] sm:$0xff]
          %v1380 = vld [vmem:[%s2 + $0x18] sm:$0xff]
          %v1381 = vld [vmem:[%s2 + $0x20] sm:$0xff]
          %v1382 = vld [vmem:[%s2 + $0x28] sm:$0xff]
          %v1383 = vld [vmem:[%s2 + $0x30] sm:$0xff]
          %v1384 = vld [vmem:[%s2 + $0x38] sm:$0xff]
          %1385 = vst [vmem:[%s24] sm:$0xff] %v1377
          %1386 = vst [vmem:[%s24 + $0x8] sm:$0xff] %v1378
          %1387 = vst [vmem:[%s24 + $0x10] sm:$0xff] %v1379
          %1388 = vst [vmem:[%s24 + $0x18] sm:$0xff] %v1380
          %1389 = vst [vmem:[%s24 + $0x20] sm:$0xff] %v1381
          %1390 = vst [vmem:[%s24 + $0x28] sm:$0xff] %v1382
          %1391 = vst [vmem:[%s24 + $0x30] sm:$0xff] %v1383
          %1392 = vst [vmem:[%s24 + $0x38] sm:$0xff] %v1384
        $region176: #{_dit_forward.4} parent=111 // pred_fallthru
          _
        %v1393 = vld [vmem:[%s23] sm:$0xff]
        %v1394 = vld [vmem:[%s23 + $0x8] sm:$0xff]
        %v1395 = vld [vmem:[%s23 + $0x10] sm:$0xff]
        %v1396 = vld [vmem:[%s23 + $0x18] sm:$0xff]
        %v1397 = vld [vmem:[%s24] sm:$0xff]
        %v1398 = vld [vmem:[%s24 + $0x8] sm:$0xff]
        %v1399 = vld [vmem:[%s24 + $0x10] sm:$0xff]
        %v1400 = vld [vmem:[%s24 + $0x18] sm:$0xff]
        %v1401 = vld [vmem:[%s24 + $0x20] sm:$0xff]
        %v1402 = vld [vmem:[%s24 + $0x28] sm:$0xff]
        %v1403 = vld [vmem:[%s24 + $0x30] sm:$0xff]
        %v1404 = vld [vmem:[%s24 + $0x38] sm:$0xff]
        %v1405 = vld [vmem:[%s1342] sm:$0xff]
        %v1406 = vld [vmem:[%s1342 + $0x8] sm:$0xff]
        %v1407 = vld [vmem:[%s1342 + $0x10] sm:$0xff]
        %v1409 = vrot.slane %v1405, 1
        %v1410 = vrot.slane %v1405, 2
        %v1411 = vrot.slane %v1405, 3
        %vm1412 = vcmask 1040384
        %v1413 = vsel %vm1412, %v1405, %v1409
        %vm1414 = vcmask 1042434
        %v1415 = vsel %vm1414, %v1410, %v1411
        %vm1416 = vcmask 1041408
        %v1417 = vsel %vm1416, %v1413, %v1415
        %vm1418 = vcmask 1041409
        %v1419 = vsel %vm1418, %v1405, %v1409
        %vm1420 = vcmask 1043459
        %v1421 = vsel %vm1420, %v1410, %v1411
        %vm1422 = vcmask 1042433
        %v1423 = vsel %vm1422, %v1419, %v1421
        %v1424 = vrot.slane %v1423, 1
        %v1425 = vrot.slane %v1417, 1
        %v1426 = vrot.slane %v1424, 1
        %v1429 = vrot.slane %v1417, 2
        %v1430 = vrot.slane %v1424, 2
        %v1431 = vrot.slane %v1417, 3
        %v1432 = vrot.slane %v1424, 3
        %v1434 = vrot.slane %v1406, 1
        %v1435 = vrot.slane %v1406, 2
        %v1436 = vrot.slane %v1406, 3
        %v1437 = vsel %vm1412, %v1406, %v1434
        %v1438 = vsel %vm1414, %v1435, %v1436
        %v1439 = vsel %vm1416, %v1437, %v1438
        %v1440 = vsel %vm1418, %v1406, %v1434
        %v1441 = vsel %vm1420, %v1435, %v1436
        %v1442 = vsel %vm1422, %v1440, %v1441
        %v1443 = vrot.slane %v1442, 1
        %v1446 = vrot.slane %v1439, 1
        %v1447 = vrot.slane %v1443, 1
        %v1448 = vrot.slane %v1439, 2
        %v1449 = vrot.slane %v1443, 2
        %v1450 = vrot.slane %v1439, 3
        %v1451 = vrot.slane %v1443, 3
        %v1455 = vrot.slane %v1407, 1
        %v1456 = vrot.slane %v1407, 2
        %v1457 = vrot.slane %v1407, 3
        %v1458 = vsel %vm1412, %v1407, %v1455
        %v1459 = vsel %vm1414, %v1456, %v1457
        %v1460 = vsel %vm1416, %v1458, %v1459
        %v1461 = vsel %vm1418, %v1407, %v1455
        %v1462 = vsel %vm1420, %v1456, %v1457
        %v1463 = vsel %vm1422, %v1461, %v1462
        %v1464 = vrot.slane %v1463, 1
        %v1465 = vrot.slane %v1460, 1
        %v1466 = vrot.slane %v1464, 1
        %v1467 = vrot.slane %v1460, 2
        %v1468 = vrot.slane %v1464, 2
        %v1471 = vrot.slane %v1460, 3
        %v1472 = vrot.slane %v1464, 3
        %v1473 = vld [vmem:[%s1345] sm:$0x1]
        %1474 = vadd.xlane.f32.xlu0 %v1393
        %v1475 = vpop.xlane.xlu0 %1474
        %1476 = vadd.xlane.f32.xlu0 %v1394
        %v1477 = vpop.xlane.xlu0 %1476
        %1478 = vadd.xlane.f32.xlu0 %v1395
        %v1479 = vpop.xlane.xlu0 %1478
        %1480 = vadd.xlane.f32.xlu0 %v1396
        %v1481 = vpop.xlane.xlu0 %1480
        %v1482 = vrcp.pop 128.0
        %v1483 = vmul.f32 128.0, %v1482
        %v1484 = vsub.f32 1.0, %v1483
        %v1485 = vmul.f32 %v1482, %v1484
        %v1486 = vadd.f32 %v1482, %v1485
        %vm1487 = vweird.f32 %v1482
        %v1488 = vsel %vm1487, %v1482, %v1486
        %v1489 = vmul.f32 %v1475, %v1488
        %v1490 = vmul.f32 %v1477, %v1488
        %v1491 = vmul.f32 %v1479, %v1488
        %v1492 = vmul.f32 %v1481, %v1488
        %v1493 = vsub.f32 %v1393, %v1489
        %v1494 = vsub.f32 %v1394, %v1490
        %v1495 = vsub.f32 %v1395, %v1491
        %v1496 = vsub.f32 %v1396, %v1492
        %v1497 = vmul.f32 %v1493, %v1493
        %v1498 = vmul.f32 %v1494, %v1494
        %v1499 = vmul.f32 %v1495, %v1495
        %v1500 = vmul.f32 %v1496, %v1496
        %1501 = vadd.xlane.f32.xlu0 %v1497
        %v1502 = vpop.xlane.xlu0 %1501
        %1503 = vadd.xlane.f32.xlu0 %v1498
        %v1504 = vpop.xlane.xlu0 %1503
        %1505 = vadd.xlane.f32.xlu0 %v1499
        %v1506 = vpop.xlane.xlu0 %1505
        %1507 = vadd.xlane.f32.xlu0 %v1500
        %v1508 = vpop.xlane.xlu0 %1507
        %v1509 = vmul.f32 %v1502, %v1488
        %v1510 = vmul.f32 %v1504, %v1488
        %v1511 = vmul.f32 %v1506, %v1488
        %v1512 = vmul.f32 %v1508, %v1488
        %v1513 = vadd.f32 %v1509, 1e-06
        %v1514 = vadd.f32 %v1510, 1e-06
        %v1515 = vadd.f32 %v1511, 1e-06
        %v1516 = vadd.f32 %v1512, 1e-06
        %v1517 = vrsqrt.pop %v1513
        %v1518 = vmul.f32 %v1517, %v1513
        %v1519 = vmul.f32 %v1518, %v1517
        %v1520 = vmul.f32 0.5, %v1519
        %v1521 = vsub.f32 1.5, %v1520
        %v1522 = vmul.f32 %v1517, %v1521
        %vm1523 = vweird.f32 %v1513
        %vm1524 = vweird.f32 %v1517
        %vm1525 = vmor %vm1523, %vm1524
        %v1526 = vsel %vm1525, %v1517, %v1522
        %v1527 = vrsqrt.pop %v1514
        %v1528 = vmul.f32 %v1527, %v1514
        %v1529 = vmul.f32 %v1528, %v1527
        %v1530 = vmul.f32 0.5, %v1529
        %v1531 = vsub.f32 1.5, %v1530
        %v1532 = vmul.f32 %v1527, %v1531
        %vm1533 = vweird.f32 %v1514
        %vm1534 = vweird.f32 %v1527
        %vm1535 = vmor %vm1533, %vm1534
        %v1536 = vsel %vm1535, %v1527, %v1532
        %v1537 = vrsqrt.pop %v1515
        %v1538 = vmul.f32 %v1537, %v1515
        %v1539 = vmul.f32 %v1538, %v1537
        %v1540 = vmul.f32 0.5, %v1539
        %v1541 = vsub.f32 1.5, %v1540
        %v1542 = vmul.f32 %v1537, %v1541
        %vm1543 = vweird.f32 %v1515
        %vm1544 = vweird.f32 %v1537
        %vm1545 = vmor %vm1543, %vm1544
        %v1546 = vsel %vm1545, %v1537, %v1542
        %v1547 = vrsqrt.pop %v1516
        %v1548 = vmul.f32 %v1547, %v1516
        %v1549 = vmul.f32 %v1548, %v1547
        %v1550 = vmul.f32 0.5, %v1549
        %v1551 = vsub.f32 1.5, %v1550
        %v1552 = vmul.f32 %v1547, %v1551
        %vm1553 = vweird.f32 %v1516
        %vm1554 = vweird.f32 %v1547
        %vm1555 = vmor %vm1553, %vm1554
        %v1556 = vsel %vm1555, %v1547, %v1552
        %v1557 = vmul.f32 %v1493, %v1526
        %v1558 = vmul.f32 %v1494, %v1536
        %v1559 = vmul.f32 %v1495, %v1546
        %v1560 = vmul.f32 %v1496, %v1556
        %v1562 = vperm.slane %v1473, 0
        %v1564 = vmul.f32 %v1557, %v1562
        %v1565 = vmul.f32 %v1558, %v1562
        %v1566 = vmul.f32 %v1559, %v1562
        %v1567 = vmul.f32 %v1560, %v1562
        %v1568 = vadd.f32 %v1425, 1.0
        %v1569 = vadd.f32 %v1426, 1.0
        %v1572 = vperm.slane %v1568, 0
        %v1573 = vperm.slane %v1569, 0
        %v1576 = vmul.f32 %v1564, %v1572
        %v1577 = vmul.f32 %v1565, %v1572
        %v1578 = vmul.f32 %v1566, %v1573
        %v1579 = vmul.f32 %v1567, %v1573
        %v1580 = vperm.slane %v1417, 0
        %v1581 = vperm.slane %v1424, 0
        %v1584 = vadd.f32 %v1576, %v1580
        %v1585 = vadd.f32 %v1577, %v1580
        %v1586 = vadd.f32 %v1578, %v1581
        %v1587 = vadd.f32 %v1579, %v1581
        %v1588 = vld [vmem:[%s1052] sm:$0x1]
        %1589 = vadd.xlane.f32.xlu0 %v1397
        %v1590 = vpop.xlane.xlu0 %1589
        %1591 = vadd.xlane.f32.xlu0 %v1398
        %v1592 = vpop.xlane.xlu0 %1591
        %1593 = vadd.xlane.f32.xlu0 %v1399
        %v1594 = vpop.xlane.xlu0 %1593
        %1595 = vadd.xlane.f32.xlu0 %v1400
        %v1596 = vpop.xlane.xlu0 %1595
        %1597 = vadd.xlane.f32.xlu0 %v1401
        %v1598 = vpop.xlane.xlu0 %1597
        %1599 = vadd.xlane.f32.xlu0 %v1402
        %v1600 = vpop.xlane.xlu0 %1599
        %1601 = vadd.xlane.f32.xlu0 %v1403
        %v1602 = vpop.xlane.xlu0 %1601
        %1603 = vadd.xlane.f32.xlu0 %v1404
        %v1604 = vpop.xlane.xlu0 %1603
        %v1605 = vmul.f32 %v1590, %v1488
        %v1606 = vmul.f32 %v1592, %v1488
        %v1607 = vmul.f32 %v1594, %v1488
        %v1608 = vmul.f32 %v1596, %v1488
        %v1609 = vmul.f32 %v1598, %v1488
        %v1610 = vmul.f32 %v1600, %v1488
        %v1611 = vmul.f32 %v1602, %v1488
        %v1612 = vmul.f32 %v1604, %v1488
        %v1613 = vsub.f32 %v1397, %v1605
        %v1614 = vsub.f32 %v1398, %v1606
        %v1615 = vsub.f32 %v1399, %v1607
        %v1616 = vsub.f32 %v1400, %v1608
        %v1617 = vsub.f32 %v1401, %v1609
        %v1618 = vsub.f32 %v1402, %v1610
        %v1619 = vsub.f32 %v1403, %v1611
        %v1620 = vsub.f32 %v1404, %v1612
        %v1621 = vmul.f32 %v1613, %v1613
        %v1622 = vmul.f32 %v1614, %v1614
        %v1623 = vmul.f32 %v1615, %v1615
        %v1624 = vmul.f32 %v1616, %v1616
        %v1625 = vmul.f32 %v1617, %v1617
        %v1626 = vmul.f32 %v1618, %v1618
        %v1627 = vmul.f32 %v1619, %v1619
        %v1628 = vmul.f32 %v1620, %v1620
        %1629 = vadd.xlane.f32.xlu0 %v1621
        %v1630 = vpop.xlane.xlu0 %1629
        %1631 = vadd.xlane.f32.xlu0 %v1622
        %v1632 = vpop.xlane.xlu0 %1631
        %1633 = vadd.xlane.f32.xlu0 %v1623
        %v1634 = vpop.xlane.xlu0 %1633
        %1635 = vadd.xlane.f32.xlu0 %v1624
        %v1636 = vpop.xlane.xlu0 %1635
        %1637 = vadd.xlane.f32.xlu0 %v1625
        %v1638 = vpop.xlane.xlu0 %1637
        %1639 = vadd.xlane.f32.xlu0 %v1626
        %v1640 = vpop.xlane.xlu0 %1639
        %1641 = vadd.xlane.f32.xlu0 %v1627
        %v1642 = vpop.xlane.xlu0 %1641
        %1643 = vadd.xlane.f32.xlu0 %v1628
        %v1644 = vpop.xlane.xlu0 %1643
        %v1645 = vmul.f32 %v1630, %v1488
        %v1646 = vmul.f32 %v1632, %v1488
        %v1647 = vmul.f32 %v1634, %v1488
        %v1648 = vmul.f32 %v1636, %v1488
        %v1649 = vmul.f32 %v1638, %v1488
        %v1650 = vmul.f32 %v1640, %v1488
        %v1651 = vmul.f32 %v1642, %v1488
        %v1652 = vmul.f32 %v1644, %v1488
        %v1653 = vadd.f32 %v1645, 1e-06
        %v1654 = vadd.f32 %v1646, 1e-06
        %v1655 = vadd.f32 %v1647, 1e-06
        %v1656 = vadd.f32 %v1648, 1e-06
        %v1657 = vadd.f32 %v1649, 1e-06
        %v1658 = vadd.f32 %v1650, 1e-06
        %v1659 = vadd.f32 %v1651, 1e-06
        %v1660 = vadd.f32 %v1652, 1e-06
        %v1661 = vrsqrt.pop %v1653
        %v1662 = vmul.f32 %v1661, %v1653
        %v1663 = vmul.f32 %v1662, %v1661
        %v1664 = vmul.f32 0.5, %v1663
        %v1665 = vsub.f32 1.5, %v1664
        %v1666 = vmul.f32 %v1661, %v1665
        %vm1667 = vweird.f32 %v1653
        %vm1668 = vweird.f32 %v1661
        %vm1669 = vmor %vm1667, %vm1668
        %v1670 = vsel %vm1669, %v1661, %v1666
        %v1671 = vrsqrt.pop %v1654
        %v1672 = vmul.f32 %v1671, %v1654
        %v1673 = vmul.f32 %v1672, %v1671
        %v1674 = vmul.f32 0.5, %v1673
        %v1675 = vsub.f32 1.5, %v1674
        %v1676 = vmul.f32 %v1671, %v1675
        %vm1677 = vweird.f32 %v1654
        %vm1678 = vweird.f32 %v1671
        %vm1679 = vmor %vm1677, %vm1678
        %v1680 = vsel %vm1679, %v1671, %v1676
        %v1681 = vrsqrt.pop %v1655
        %v1682 = vmul.f32 %v1681, %v1655
        %v1683 = vmul.f32 %v1682, %v1681
        %v1684 = vmul.f32 0.5, %v1683
        %v1685 = vsub.f32 1.5, %v1684
        %v1686 = vmul.f32 %v1681, %v1685
        %vm1687 = vweird.f32 %v1655
        %vm1688 = vweird.f32 %v1681
        %vm1689 = vmor %vm1687, %vm1688
        %v1690 = vsel %vm1689, %v1681, %v1686
        %v1691 = vrsqrt.pop %v1656
        %v1692 = vmul.f32 %v1691, %v1656
        %v1693 = vmul.f32 %v1692, %v1691
        %v1694 = vmul.f32 0.5, %v1693
        %v1695 = vsub.f32 1.5, %v1694
        %v1696 = vmul.f32 %v1691, %v1695
        %vm1697 = vweird.f32 %v1656
        %vm1698 = vweird.f32 %v1691
        %vm1699 = vmor %vm1697, %vm1698
        %v1700 = vsel %vm1699, %v1691, %v1696
        %v1701 = vrsqrt.pop %v1657
        %v1702 = vmul.f32 %v1701, %v1657
        %v1703 = vmul.f32 %v1702, %v1701
        %v1704 = vmul.f32 0.5, %v1703
        %v1705 = vsub.f32 1.5, %v1704
        %v1706 = vmul.f32 %v1701, %v1705
        %vm1707 = vweird.f32 %v1657
        %vm1708 = vweird.f32 %v1701
        %vm1709 = vmor %vm1707, %vm1708
        %v1710 = vsel %vm1709, %v1701, %v1706
        %v1711 = vrsqrt.pop %v1658
        %v1712 = vmul.f32 %v1711, %v1658
        %v1713 = vmul.f32 %v1712, %v1711
        %v1714 = vmul.f32 0.5, %v1713
        %v1715 = vsub.f32 1.5, %v1714
        %v1716 = vmul.f32 %v1711, %v1715
        %vm1717 = vweird.f32 %v1658
        %vm1718 = vweird.f32 %v1711
        %vm1719 = vmor %vm1717, %vm1718
        %v1720 = vsel %vm1719, %v1711, %v1716
        %v1721 = vrsqrt.pop %v1659
        %v1722 = vmul.f32 %v1721, %v1659
        %v1723 = vmul.f32 %v1722, %v1721
        %v1724 = vmul.f32 0.5, %v1723
        %v1725 = vsub.f32 1.5, %v1724
        %v1726 = vmul.f32 %v1721, %v1725
        %vm1727 = vweird.f32 %v1659
        %vm1728 = vweird.f32 %v1721
        %vm1729 = vmor %vm1727, %vm1728
        %v1730 = vsel %vm1729, %v1721, %v1726
        %v1731 = vrsqrt.pop %v1660
        %v1732 = vmul.f32 %v1731, %v1660
        %v1733 = vmul.f32 %v1732, %v1731
        %v1734 = vmul.f32 0.5, %v1733
        %v1735 = vsub.f32 1.5, %v1734
        %v1736 = vmul.f32 %v1731, %v1735
        %vm1737 = vweird.f32 %v1660
        %vm1738 = vweird.f32 %v1731
        %vm1739 = vmor %vm1737, %vm1738
        %v1740 = vsel %vm1739, %v1731, %v1736
        %v1741 = vmul.f32 %v1613, %v1670
        %v1742 = vmul.f32 %v1614, %v1680
        %v1743 = vmul.f32 %v1615, %v1690
        %v1744 = vmul.f32 %v1616, %v1700
        %v1745 = vmul.f32 %v1617, %v1710
        %v1746 = vmul.f32 %v1618, %v1720
        %v1747 = vmul.f32 %v1619, %v1730
        %v1748 = vmul.f32 %v1620, %v1740
        %v1750 = vperm.slane %v1588, 0
        %v1752 = vmul.f32 %v1741, %v1750
        %v1753 = vmul.f32 %v1742, %v1750
        %v1754 = vmul.f32 %v1743, %v1750
        %v1755 = vmul.f32 %v1744, %v1750
        %v1756 = vmul.f32 %v1745, %v1750
        %v1757 = vmul.f32 %v1746, %v1750
        %v1758 = vmul.f32 %v1747, %v1750
        %v1759 = vmul.f32 %v1748, %v1750
        %v1760 = vadd.f32 %v1450, 1.0
        %v1761 = vadd.f32 %v1451, 1.0
        %v1764 = vperm.slane %v1760, 0
        %v1765 = vperm.slane %v1761, 0
        %v1768 = vmul.f32 %v1752, %v1764
        %v1769 = vmul.f32 %v1753, %v1764
        %v1770 = vmul.f32 %v1754, %v1764
        %v1771 = vmul.f32 %v1755, %v1764
        %v1772 = vmul.f32 %v1756, %v1765
        %v1773 = vmul.f32 %v1757, %v1765
        %v1774 = vmul.f32 %v1758, %v1765
        %v1775 = vmul.f32 %v1759, %v1765
        %v1776 = vperm.slane %v1448, 0
        %v1777 = vperm.slane %v1449, 0
        %v1780 = vadd.f32 %v1768, %v1776
        %v1781 = vadd.f32 %v1769, %v1776
        %v1782 = vadd.f32 %v1770, %v1776
        %v1783 = vadd.f32 %v1771, %v1776
        %v1784 = vadd.f32 %v1772, %v1777
        %v1785 = vadd.f32 %v1773, %v1777
        %v1786 = vadd.f32 %v1774, %v1777
        %v1787 = vadd.f32 %v1775, %v1777
        %v1788 = vpack.c.bf16 %v1585, %v1584
        %v1789 = vpack.c.bf16 %v1587, %v1586
        %v1790 = vld [vmem:[%s1071] sm:$0xff]
        %v1791 = vld [vmem:[%s1071 + $0x8] sm:$0xf]
        %v1792 = vld [vmem:[%s1071 + $0xc] sm:$0xff]
        %v1793 = vld [vmem:[%s1071 + $0x14] sm:$0xf]
        %v1794 = vld [vmem:[%s1071 + $0x18] sm:$0xff]
        %v1795 = vld [vmem:[%s1071 + $0x20] sm:$0xf]
        %v1796 = vld [vmem:[%s1071 + $0x24] sm:$0xff]
        %v1797 = vld [vmem:[%s1071 + $0x2c] sm:$0xf]
        %v1798 = vld [vmem:[%s1071 + $0x30] sm:$0xff]
        %v1799 = vld [vmem:[%s1071 + $0x38] sm:$0xf]
        %v1800 = vld [vmem:[%s1071 + $0x3c] sm:$0xff]
        %v1801 = vld [vmem:[%s1071 + $0x44] sm:$0xf]
        %v1802 = vld [vmem:[%s1071 + $0x48] sm:$0xff]
        %v1803 = vld [vmem:[%s1071 + $0x50] sm:$0xf]
        %v1804 = vld [vmem:[%s1071 + $0x54] sm:$0xff]
        %v1805 = vld [vmem:[%s1071 + $0x5c] sm:$0xf]
        %v1806 = vld [vmem:[%s1071 + $0x60] sm:$0xff]
        %v1807 = vld [vmem:[%s1071 + $0x68] sm:$0xf]
        %v1808 = vld [vmem:[%s1071 + $0x6c] sm:$0xff]
        %v1809 = vld [vmem:[%s1071 + $0x74] sm:$0xf]
        %v1810 = vld [vmem:[%s1071 + $0x78] sm:$0xff]
        %v1811 = vld [vmem:[%s1071 + $0x80] sm:$0xf]
        %v1812 = vld [vmem:[%s1071 + $0x84] sm:$0xff]
        %v1813 = vld [vmem:[%s1071 + $0x8c] sm:$0xf]
        %v1814 = vld [vmem:[%s1071 + $0x90] sm:$0xff]
        %v1815 = vld [vmem:[%s1071 + $0x98] sm:$0xf]
        %v1816 = vld [vmem:[%s1071 + $0x9c] sm:$0xff]
        %v1817 = vld [vmem:[%s1071 + $0xa4] sm:$0xf]
        %v1818 = vld [vmem:[%s1071 + $0xa8] sm:$0xff]
        %v1819 = vld [vmem:[%s1071 + $0xb0] sm:$0xf]
        %v1820 = vld [vmem:[%s1071 + $0xb4] sm:$0xff]
        %v1821 = vld [vmem:[%s1071 + $0xbc] sm:$0xf]
        %v1822 = vld [vmem:[%s1081] sm:$0x7]
        %v1824 = vperm.slane %v1822, 0
        %v1825 = vperm.slane %v1822, 1
        %v1826 = vperm.slane %v1822, 2
        %v1862 = vunpack.c.l.b16 %v1790
        %v1863 = vunpack.c.h.b16 %v1790
        %v1864 = vunpack.c.l.b16 %v1791
        %v1865 = vunpack.c.l.b16 %v1792
        %v1866 = vunpack.c.h.b16 %v1792
        %v1867 = vunpack.c.l.b16 %v1793
        %v1868 = vunpack.c.l.b16 %v1794
        %v1869 = vunpack.c.h.b16 %v1794
        %v1870 = vunpack.c.l.b16 %v1795
        %v1871 = vunpack.c.l.b16 %v1796
        %v1872 = vunpack.c.h.b16 %v1796
        %v1873 = vunpack.c.l.b16 %v1797
        %v1874 = vunpack.c.l.b16 %v1798
        %v1875 = vunpack.c.h.b16 %v1798
        %v1876 = vunpack.c.l.b16 %v1799
        %v1877 = vunpack.c.l.b16 %v1800
        %v1878 = vunpack.c.h.b16 %v1800
        %v1879 = vunpack.c.l.b16 %v1801
        %v1880 = vunpack.c.l.b16 %v1802
        %v1881 = vunpack.c.h.b16 %v1802
        %v1882 = vunpack.c.l.b16 %v1803
        %v1883 = vunpack.c.l.b16 %v1804
        %v1884 = vunpack.c.h.b16 %v1804
        %v1885 = vunpack.c.l.b16 %v1805
        %v1886 = vunpack.c.l.b16 %v1806
        %v1887 = vunpack.c.h.b16 %v1806
        %v1888 = vunpack.c.l.b16 %v1807
        %v1889 = vunpack.c.l.b16 %v1808
        %v1890 = vunpack.c.h.b16 %v1808
        %v1891 = vunpack.c.l.b16 %v1809
        %v1892 = vunpack.c.l.b16 %v1810
        %v1893 = vunpack.c.h.b16 %v1810
        %v1894 = vunpack.c.l.b16 %v1811
        %v1895 = vunpack.c.l.b16 %v1812
        %v1896 = vunpack.c.h.b16 %v1812
        %v1897 = vunpack.c.l.b16 %v1813
        %v1898 = vunpack.c.l.b16 %v1814
        %v1899 = vunpack.c.h.b16 %v1814
        %v1900 = vunpack.c.l.b16 %v1815
        %v1901 = vunpack.c.l.b16 %v1816
        %v1902 = vunpack.c.h.b16 %v1816
        %v1903 = vunpack.c.l.b16 %v1817
        %v1904 = vunpack.c.l.b16 %v1818
        %v1905 = vunpack.c.h.b16 %v1818
        %v1906 = vunpack.c.l.b16 %v1819
        %v1907 = vunpack.c.l.b16 %v1820
        %v1908 = vunpack.c.h.b16 %v1820
        %v1909 = vunpack.c.l.b16 %v1821
        %v1910 = vpack.c.b16 %v1865, %v1862
        %v1911 = vpack.c.b16 %v1866, %v1863
        %v1912 = vpack.c.b16 %v1867, %v1864
        %v1913 = vpack.c.b16 %v1871, %v1868
        %v1914 = vpack.c.b16 %v1872, %v1869
        %v1915 = vpack.c.b16 %v1873, %v1870
        %v1916 = vpack.c.b16 %v1877, %v1874
        %v1917 = vpack.c.b16 %v1878, %v1875
        %v1918 = vpack.c.b16 %v1879, %v1876
        %v1919 = vpack.c.b16 %v1883, %v1880
        %v1920 = vpack.c.b16 %v1884, %v1881
        %v1921 = vpack.c.b16 %v1885, %v1882
        %v1922 = vpack.c.b16 %v1889, %v1886
        %v1923 = vpack.c.b16 %v1890, %v1887
        %v1924 = vpack.c.b16 %v1891, %v1888
        %v1925 = vpack.c.b16 %v1895, %v1892
        %v1926 = vpack.c.b16 %v1896, %v1893
        %v1927 = vpack.c.b16 %v1897, %v1894
        %v1928 = vpack.c.b16 %v1901, %v1898
        %v1929 = vpack.c.b16 %v1902, %v1899
        %v1930 = vpack.c.b16 %v1903, %v1900
        %v1931 = vpack.c.b16 %v1907, %v1904
        %v1932 = vpack.c.b16 %v1908, %v1905
        %v1933 = vpack.c.b16 %v1909, %v1906
        %1958 = vmatpush.bf16.msra.mxu0 %v1931
        %1959 = vmatpush.bf16.msra.mxu0 %v1928
        %1960 = vmatpush.bf16.msra.mxu0 %v1925
        %1961 = vmatpush.bf16.msra.mxu0 %v1922
        %1962 = vmatpush.bf16.msra.mxu0 %v1919
        %1963 = vmatpush.bf16.msra.mxu0 %v1916
        %1964 = vmatpush.bf16.msra.mxu0 %v1913
        %1965 = vmatpush.bf16.msra.mxu0 %v1910
        %1966 = vmatmul.bf16.gmra.mxu0 %v1788
        %v1967 = vpop.f32.mrf.mxu0
        %v1968 = vadd.f32 %v1824, %v1967
        %v1969 = vpop.f32.mrf.mxu0
        %v1970 = vadd.f32 %v1824, %v1969
        %1971 = vmatmul.bf16.gmra.mxu0 %v1789
        %v1972 = vpop.f32.mrf.mxu0
        %v1973 = vadd.f32 %v1824, %v1972
        %v1974 = vpop.f32.mrf.mxu0
        %v1975 = vadd.f32 %v1824, %v1974
        %1976 = vdwg.mxu0
        %1977 = vmatpush.bf16.msra.mxu0 %v1932
        %1978 = vmatpush.bf16.msra.mxu0 %v1929
        %1979 = vmatpush.bf16.msra.mxu0 %v1926
        %1980 = vmatpush.bf16.msra.mxu0 %v1923
        %1981 = vmatpush.bf16.msra.mxu0 %v1920
        %1982 = vmatpush.bf16.msra.mxu0 %v1917
        %1983 = vmatpush.bf16.msra.mxu0 %v1914
        %1984 = vmatpush.bf16.msra.mxu0 %v1911
        %1985 = vmatmul.bf16.gmra.mxu0 %v1788
        %v1986 = vpop.f32.mrf.mxu0
        %v1987 = vadd.f32 %v1825, %v1986
        %v1988 = vpop.f32.mrf.mxu0
        %v1989 = vadd.f32 %v1825, %v1988
        %1990 = vmatmul.bf16.gmra.mxu0 %v1789
        %v1991 = vpop.f32.mrf.mxu0
        %v1992 = vadd.f32 %v1825, %v1991
        %v1993 = vpop.f32.mrf.mxu0
        %v1994 = vadd.f32 %v1825, %v1993
        %1995 = vdwg.mxu0
        %1996 = vmatpush.bf16.msra.mxu0 %v1933
        %1997 = vmatpush.bf16.msra.mxu0 %v1930
        %1998 = vmatpush.bf16.msra.mxu0 %v1927
        %1999 = vmatpush.bf16.msra.mxu0 %v1924
        %2000 = vmatpush.bf16.msra.mxu0 %v1921
        %2001 = vmatpush.bf16.msra.mxu0 %v1918
        %2002 = vmatpush.bf16.msra.mxu0 %v1915
        %2003 = vmatpush.bf16.msra.mxu0 %v1912
        %2004 = vmatmul.bf16.gmra.mxu0 %v1788
        %v2005 = vpop.f32.mrf.mxu0
        %v2006 = vadd.f32 %v1826, %v2005
        %v2007 = vpop.f32.mrf.mxu0
        %v2008 = vadd.f32 %v1826, %v2007
        %2009 = vmatmul.bf16.gmra.mxu0 %v1789
        %v2010 = vpop.f32.mrf.mxu0
        %v2011 = vadd.f32 %v1826, %v2010
        %v2012 = vpop.f32.mrf.mxu0
        %v2013 = vadd.f32 %v1826, %v2012
        %2014 = vdwg.mxu0
        %v2015 = vpack.c.bf16 %v1781, %v1780
        %v2016 = vpack.c.bf16 %v1783, %v1782
        %v2017 = vpack.c.bf16 %v1785, %v1784
        %v2018 = vpack.c.bf16 %v1787, %v1786
        %v2019 = vld [vmem:[%s1091] sm:$0xff]
        %v2020 = vld [vmem:[%s1091 + $0x8] sm:$0xf]
        %v2021 = vld [vmem:[%s1091 + $0xc] sm:$0xff]
        %v2022 = vld [vmem:[%s1091 + $0x14] sm:$0xf]
        %v2023 = vld [vmem:[%s1091 + $0x18] sm:$0xff]
        %v2024 = vld [vmem:[%s1091 + $0x20] sm:$0xf]
        %v2025 = vld [vmem:[%s1091 + $0x24] sm:$0xff]
        %v2026 = vld [vmem:[%s1091 + $0x2c] sm:$0xf]
        %v2027 = vld [vmem:[%s1091 + $0x30] sm:$0xff]
        %v2028 = vld [vmem:[%s1091 + $0x38] sm:$0xf]
        %v2029 = vld [vmem:[%s1091 + $0x3c] sm:$0xff]
        %v2030 = vld [vmem:[%s1091 + $0x44] sm:$0xf]
        %v2031 = vld [vmem:[%s1091 + $0x48] sm:$0xff]
        %v2032 = vld [vmem:[%s1091 + $0x50] sm:$0xf]
        %v2033 = vld [vmem:[%s1091 + $0x54] sm:$0xff]
        %v2034 = vld [vmem:[%s1091 + $0x5c] sm:$0xf]
        %v2035 = vld [vmem:[%s1091 + $0x60] sm:$0xff]
        %v2036 = vld [vmem:[%s1091 + $0x68] sm:$0xf]
        %v2037 = vld [vmem:[%s1091 + $0x6c] sm:$0xff]
        %v2038 = vld [vmem:[%s1091 + $0x74] sm:$0xf]
        %v2039 = vld [vmem:[%s1091 + $0x78] sm:$0xff]
        %v2040 = vld [vmem:[%s1091 + $0x80] sm:$0xf]
        %v2041 = vld [vmem:[%s1091 + $0x84] sm:$0xff]
        %v2042 = vld [vmem:[%s1091 + $0x8c] sm:$0xf]
        %v2043 = vld [vmem:[%s1091 + $0x90] sm:$0xff]
        %v2044 = vld [vmem:[%s1091 + $0x98] sm:$0xf]
        %v2045 = vld [vmem:[%s1091 + $0x9c] sm:$0xff]
        %v2046 = vld [vmem:[%s1091 + $0xa4] sm:$0xf]
        %v2047 = vld [vmem:[%s1091 + $0xa8] sm:$0xff]
        %v2048 = vld [vmem:[%s1091 + $0xb0] sm:$0xf]
        %v2049 = vld [vmem:[%s1091 + $0xb4] sm:$0xff]
        %v2050 = vld [vmem:[%s1091 + $0xbc] sm:$0xf]
        %v2051 = vld [vmem:[%s1101] sm:$0x7]
        %v2053 = vperm.slane %v2051, 0
        %v2054 = vperm.slane %v2051, 1
        %v2055 = vperm.slane %v2051, 2
        %v2091 = vunpack.c.l.b16 %v2019
        %v2092 = vunpack.c.h.b16 %v2019
        %v2093 = vunpack.c.l.b16 %v2020
        %v2094 = vunpack.c.l.b16 %v2021
        %v2095 = vunpack.c.h.b16 %v2021
        %v2096 = vunpack.c.l.b16 %v2022
        %v2097 = vunpack.c.l.b16 %v2023
        %v2098 = vunpack.c.h.b16 %v2023
        %v2099 = vunpack.c.l.b16 %v2024
        %v2100 = vunpack.c.l.b16 %v2025
        %v2101 = vunpack.c.h.b16 %v2025
        %v2102 = vunpack.c.l.b16 %v2026
        %v2103 = vunpack.c.l.b16 %v2027
        %v2104 = vunpack.c.h.b16 %v2027
        %v2105 = vunpack.c.l.b16 %v2028
        %v2106 = vunpack.c.l.b16 %v2029
        %v2107 = vunpack.c.h.b16 %v2029
        %v2108 = vunpack.c.l.b16 %v2030
        %v2109 = vunpack.c.l.b16 %v2031
        %v2110 = vunpack.c.h.b16 %v2031
        %v2111 = vunpack.c.l.b16 %v2032
        %v2112 = vunpack.c.l.b16 %v2033
        %v2113 = vunpack.c.h.b16 %v2033
        %v2114 = vunpack.c.l.b16 %v2034
        %v2115 = vunpack.c.l.b16 %v2035
        %v2116 = vunpack.c.h.b16 %v2035
        %v2117 = vunpack.c.l.b16 %v2036
        %v2118 = vunpack.c.l.b16 %v2037
        %v2119 = vunpack.c.h.b16 %v2037
        %v2120 = vunpack.c.l.b16 %v2038
        %v2121 = vunpack.c.l.b16 %v2039
        %v2122 = vunpack.c.h.b16 %v2039
        %v2123 = vunpack.c.l.b16 %v2040
        %v2124 = vunpack.c.l.b16 %v2041
        %v2125 = vunpack.c.h.b16 %v2041
        %v2126 = vunpack.c.l.b16 %v2042
        %v2127 = vunpack.c.l.b16 %v2043
        %v2128 = vunpack.c.h.b16 %v2043
        %v2129 = vunpack.c.l.b16 %v2044
        %v2130 = vunpack.c.l.b16 %v2045
        %v2131 = vunpack.c.h.b16 %v2045
        %v2132 = vunpack.c.l.b16 %v2046
        %v2133 = vunpack.c.l.b16 %v2047
        %v2134 = vunpack.c.h.b16 %v2047
        %v2135 = vunpack.c.l.b16 %v2048
        %v2136 = vunpack.c.l.b16 %v2049
        %v2137 = vunpack.c.h.b16 %v2049
        %v2138 = vunpack.c.l.b16 %v2050
        %v2139 = vpack.c.b16 %v2094, %v2091
        %v2140 = vpack.c.b16 %v2095, %v2092
        %v2141 = vpack.c.b16 %v2096, %v2093
        %v2142 = vpack.c.b16 %v2100, %v2097
        %v2143 = vpack.c.b16 %v2101, %v2098
        %v2144 = vpack.c.b16 %v2102, %v2099
        %v2145 = vpack.c.b16 %v2106, %v2103
        %v2146 = vpack.c.b16 %v2107, %v2104
        %v2147 = vpack.c.b16 %v2108, %v2105
        %v2148 = vpack.c.b16 %v2112, %v2109
        %v2149 = vpack.c.b16 %v2113, %v2110
        %v2150 = vpack.c.b16 %v2114, %v2111
        %v2151 = vpack.c.b16 %v2118, %v2115
        %v2152 = vpack.c.b16 %v2119, %v2116
        %v2153 = vpack.c.b16 %v2120, %v2117
        %v2154 = vpack.c.b16 %v2124, %v2121
        %v2155 = vpack.c.b16 %v2125, %v2122
        %v2156 = vpack.c.b16 %v2126, %v2123
        %v2157 = vpack.c.b16 %v2130, %v2127
        %v2158 = vpack.c.b16 %v2131, %v2128
        %v2159 = vpack.c.b16 %v2132, %v2129
        %v2160 = vpack.c.b16 %v2136, %v2133
        %v2161 = vpack.c.b16 %v2137, %v2134
        %v2162 = vpack.c.b16 %v2138, %v2135
        %2187 = vmatpush.bf16.msra.mxu0 %v2160
        %2188 = vmatpush.bf16.msra.mxu0 %v2157
        %2189 = vmatpush.bf16.msra.mxu0 %v2154
        %2190 = vmatpush.bf16.msra.mxu0 %v2151
        %2191 = vmatpush.bf16.msra.mxu0 %v2148
        %2192 = vmatpush.bf16.msra.mxu0 %v2145
        %2193 = vmatpush.bf16.msra.mxu0 %v2142
        %2194 = vmatpush.bf16.msra.mxu0 %v2139
        %2195 = vmatmul.bf16.gmra.mxu0 %v2015
        %v2196 = vpop.f32.mrf.mxu0
        %v2197 = vadd.f32 %v2053, %v2196
        %v2198 = vpop.f32.mrf.mxu0
        %v2199 = vadd.f32 %v2053, %v2198
        %2200 = vmatmul.bf16.gmra.mxu0 %v2016
        %v2201 = vpop.f32.mrf.mxu0
        %v2202 = vadd.f32 %v2053, %v2201
        %v2203 = vpop.f32.mrf.mxu0
        %v2204 = vadd.f32 %v2053, %v2203
        %2205 = vmatmul.bf16.gmra.mxu0 %v2017
        %v2206 = vpop.f32.mrf.mxu0
        %v2207 = vadd.f32 %v2053, %v2206
        %v2208 = vpop.f32.mrf.mxu0
        %v2209 = vadd.f32 %v2053, %v2208
        %2210 = vmatmul.bf16.gmra.mxu0 %v2018
        %v2211 = vpop.f32.mrf.mxu0
        %v2212 = vadd.f32 %v2053, %v2211
        %v2213 = vpop.f32.mrf.mxu0
        %v2214 = vadd.f32 %v2053, %v2213
        %2215 = vdwg.mxu0
        %2216 = vmatpush.bf16.msra.mxu0 %v2161
        %2217 = vmatpush.bf16.msra.mxu0 %v2158
        %2218 = vmatpush.bf16.msra.mxu0 %v2155
        %2219 = vmatpush.bf16.msra.mxu0 %v2152
        %2220 = vmatpush.bf16.msra.mxu0 %v2149
        %2221 = vmatpush.bf16.msra.mxu0 %v2146
        %2222 = vmatpush.bf16.msra.mxu0 %v2143
        %2223 = vmatpush.bf16.msra.mxu0 %v2140
        %2224 = vmatmul.bf16.gmra.mxu0 %v2015
        %v2225 = vpop.f32.mrf.mxu0
        %v2226 = vadd.f32 %v2054, %v2225
        %v2227 = vpop.f32.mrf.mxu0
        %v2228 = vadd.f32 %v2054, %v2227
        %2229 = vmatmul.bf16.gmra.mxu0 %v2016
        %v2230 = vpop.f32.mrf.mxu0
        %v2231 = vadd.f32 %v2054, %v2230
        %v2232 = vpop.f32.mrf.mxu0
        %v2233 = vadd.f32 %v2054, %v2232
        %2234 = vmatmul.bf16.gmra.mxu0 %v2017
        %v2235 = vpop.f32.mrf.mxu0
        %v2236 = vadd.f32 %v2054, %v2235
        %v2237 = vpop.f32.mrf.mxu0
        %v2238 = vadd.f32 %v2054, %v2237
        %2239 = vmatmul.bf16.gmra.mxu0 %v2018
        %v2240 = vpop.f32.mrf.mxu0
        %v2241 = vadd.f32 %v2054, %v2240
        %v2242 = vpop.f32.mrf.mxu0
        %v2243 = vadd.f32 %v2054, %v2242
        %2244 = vdwg.mxu0
        %2245 = vmatpush.bf16.msra.mxu0 %v2162
        %2246 = vmatpush.bf16.msra.mxu0 %v2159
        %2247 = vmatpush.bf16.msra.mxu0 %v2156
        %2248 = vmatpush.bf16.msra.mxu0 %v2153
        %2249 = vmatpush.bf16.msra.mxu0 %v2150
        %2250 = vmatpush.bf16.msra.mxu0 %v2147
        %2251 = vmatpush.bf16.msra.mxu0 %v2144
        %2252 = vmatpush.bf16.msra.mxu0 %v2141
        %2253 = vmatmul.bf16.gmra.mxu0 %v2015
        %v2254 = vpop.f32.mrf.mxu0
        %v2255 = vadd.f32 %v2055, %v2254
        %v2256 = vpop.f32.mrf.mxu0
        %v2257 = vadd.f32 %v2055, %v2256
        %2258 = vmatmul.bf16.gmra.mxu0 %v2016
        %v2259 = vpop.f32.mrf.mxu0
        %v2260 = vadd.f32 %v2055, %v2259
        %v2261 = vpop.f32.mrf.mxu0
        %v2262 = vadd.f32 %v2055, %v2261
        %2263 = vmatmul.bf16.gmra.mxu0 %v2017
        %v2264 = vpop.f32.mrf.mxu0
        %v2265 = vadd.f32 %v2055, %v2264
        %v2266 = vpop.f32.mrf.mxu0
        %v2267 = vadd.f32 %v2055, %v2266
        %2268 = vmatmul.bf16.gmra.mxu0 %v2018
        %v2269 = vpop.f32.mrf.mxu0
        %v2270 = vadd.f32 %v2055, %v2269
        %v2271 = vpop.f32.mrf.mxu0
        %v2272 = vadd.f32 %v2055, %v2271
        %2273 = vdwg.mxu0
        %2286 = vrot.lane.b32.xlu0 %v1968, 80
        %v2287 = vpop.permute.xlu0 %2286
        %2288 = vrot.lane.b32.xlu0 %v1970, 80
        %v2289 = vpop.permute.xlu0 %2288
        %2290 = vrot.lane.b32.xlu0 %v2197, 80
        %v2291 = vpop.permute.xlu0 %2290
        %2292 = vrot.lane.b32.xlu0 %v2199, 80
        %v2293 = vpop.permute.xlu0 %2292
        %2294 = vrot.lane.b32.xlu0 %v2202, 80
        %v2295 = vpop.permute.xlu0 %2294
        %2296 = vrot.lane.b32.xlu0 %v2204, 80
        %v2297 = vpop.permute.xlu0 %2296
        %2298 = vrot.lane.b32.xlu0 %v1973, 80
        %v2299 = vpop.permute.xlu0 %2298
        %2300 = vrot.lane.b32.xlu0 %v1975, 80
        %v2301 = vpop.permute.xlu0 %2300
        %2302 = vrot.lane.b32.xlu0 %v2207, 80
        %v2303 = vpop.permute.xlu0 %2302
        %2304 = vrot.lane.b32.xlu0 %v2209, 80
        %v2305 = vpop.permute.xlu0 %2304
        %2306 = vrot.lane.b32.xlu0 %v2212, 80
        %v2307 = vpop.permute.xlu0 %2306
        %2308 = vrot.lane.b32.xlu0 %v2214, 80
        %v2309 = vpop.permute.xlu0 %2308
        %2334 = vrot.lane.b32.xlu0 %v1968, 32
        %v2335 = vpop.permute.xlu0 %2334
        %2336 = vrot.lane.b32.xlu0 %v1987, 32
        %v2337 = vpop.permute.xlu0 %2336
        %2338 = vrot.lane.b32.xlu0 %v1970, 32
        %v2339 = vpop.permute.xlu0 %2338
        %2340 = vrot.lane.b32.xlu0 %v1989, 32
        %v2341 = vpop.permute.xlu0 %2340
        %2342 = vrot.lane.b32.xlu0 %v2197, 32
        %v2343 = vpop.permute.xlu0 %2342
        %2344 = vrot.lane.b32.xlu0 %v2226, 32
        %v2345 = vpop.permute.xlu0 %2344
        %2346 = vrot.lane.b32.xlu0 %v2199, 32
        %v2347 = vpop.permute.xlu0 %2346
        %2348 = vrot.lane.b32.xlu0 %v2228, 32
        %v2349 = vpop.permute.xlu0 %2348
        %2350 = vrot.lane.b32.xlu0 %v2202, 32
        %v2351 = vpop.permute.xlu0 %2350
        %2352 = vrot.lane.b32.xlu0 %v2231, 32
        %v2353 = vpop.permute.xlu0 %2352
        %2354 = vrot.lane.b32.xlu0 %v2204, 32
        %v2355 = vpop.permute.xlu0 %2354
        %2356 = vrot.lane.b32.xlu0 %v2233, 32
        %v2357 = vpop.permute.xlu0 %2356
        %2358 = vrot.lane.b32.xlu0 %v1973, 32
        %v2359 = vpop.permute.xlu0 %2358
        %2360 = vrot.lane.b32.xlu0 %v1992, 32
        %v2361 = vpop.permute.xlu0 %2360
        %2362 = vrot.lane.b32.xlu0 %v1975, 32
        %v2363 = vpop.permute.xlu0 %2362
        %2364 = vrot.lane.b32.xlu0 %v1994, 32
        %v2365 = vpop.permute.xlu0 %2364
        %2366 = vrot.lane.b32.xlu0 %v2207, 32
        %v2367 = vpop.permute.xlu0 %2366
        %2368 = vrot.lane.b32.xlu0 %v2236, 32
        %v2369 = vpop.permute.xlu0 %2368
        %2370 = vrot.lane.b32.xlu0 %v2209, 32
        %v2371 = vpop.permute.xlu0 %2370
        %2372 = vrot.lane.b32.xlu0 %v2238, 32
        %v2373 = vpop.permute.xlu0 %2372
        %2374 = vrot.lane.b32.xlu0 %v2212, 32
        %v2375 = vpop.permute.xlu0 %2374
        %2376 = vrot.lane.b32.xlu0 %v2241, 32
        %v2377 = vpop.permute.xlu0 %2376
        %2378 = vrot.lane.b32.xlu0 %v2214, 32
        %v2379 = vpop.permute.xlu0 %2378
        %2380 = vrot.lane.b32.xlu0 %v2243, 32
        %v2381 = vpop.permute.xlu0 %2380
        %vm2382 = vcmask 261120
        %v2383 = vsel %vm2382, %v2335, %v2337
        %v2384 = vsel %vm2382, %v2339, %v2341
        %v2385 = vsel %vm2382, %v2343, %v2345
        %v2386 = vsel %vm2382, %v2347, %v2349
        %v2387 = vsel %vm2382, %v2351, %v2353
        %v2388 = vsel %vm2382, %v2355, %v2357
        %v2389 = vsel %vm2382, %v2359, %v2361
        %v2390 = vsel %vm2382, %v2363, %v2365
        %v2391 = vsel %vm2382, %v2367, %v2369
        %v2392 = vsel %vm2382, %v2371, %v2373
        %v2393 = vsel %vm2382, %v2375, %v2377
        %v2394 = vsel %vm2382, %v2379, %v2381
        %2407 = vrot.lane.b32.xlu0 %v1987, 112
        %v2408 = vpop.permute.xlu0 %2407
        %2409 = vrot.lane.b32.xlu0 %v1989, 112
        %v2410 = vpop.permute.xlu0 %2409
        %2411 = vrot.lane.b32.xlu0 %v2226, 112
        %v2412 = vpop.permute.xlu0 %2411
        %2413 = vrot.lane.b32.xlu0 %v2228, 112
        %v2414 = vpop.permute.xlu0 %2413
        %2415 = vrot.lane.b32.xlu0 %v2231, 112
        %v2416 = vpop.permute.xlu0 %2415
        %2417 = vrot.lane.b32.xlu0 %v2233, 112
        %v2418 = vpop.permute.xlu0 %2417
        %2419 = vrot.lane.b32.xlu0 %v1992, 112
        %v2420 = vpop.permute.xlu0 %2419
        %2421 = vrot.lane.b32.xlu0 %v1994, 112
        %v2422 = vpop.permute.xlu0 %2421
        %2423 = vrot.lane.b32.xlu0 %v2236, 112
        %v2424 = vpop.permute.xlu0 %2423
        %2425 = vrot.lane.b32.xlu0 %v2238, 112
        %v2426 = vpop.permute.xlu0 %2425
        %2427 = vrot.lane.b32.xlu0 %v2241, 112
        %v2428 = vpop.permute.xlu0 %2427
        %2429 = vrot.lane.b32.xlu0 %v2243, 112
        %v2430 = vpop.permute.xlu0 %2429
        %2443 = vrot.lane.b32.xlu0 %v1987, 64
        %v2444 = vpop.permute.xlu0 %2443
        %2445 = vrot.lane.b32.xlu0 %v1989, 64
        %v2446 = vpop.permute.xlu0 %2445
        %2447 = vrot.lane.b32.xlu0 %v2226, 64
        %v2448 = vpop.permute.xlu0 %2447
        %2449 = vrot.lane.b32.xlu0 %v2228, 64
        %v2450 = vpop.permute.xlu0 %2449
        %2451 = vrot.lane.b32.xlu0 %v2231, 64
        %v2452 = vpop.permute.xlu0 %2451
        %2453 = vrot.lane.b32.xlu0 %v2233, 64
        %v2454 = vpop.permute.xlu0 %2453
        %2455 = vrot.lane.b32.xlu0 %v1992, 64
        %v2456 = vpop.permute.xlu0 %2455
        %2457 = vrot.lane.b32.xlu0 %v1994, 64
        %v2458 = vpop.permute.xlu0 %2457
        %2459 = vrot.lane.b32.xlu0 %v2236, 64
        %v2460 = vpop.permute.xlu0 %2459
        %2461 = vrot.lane.b32.xlu0 %v2238, 64
        %v2462 = vpop.permute.xlu0 %2461
        %2463 = vrot.lane.b32.xlu0 %v2241, 64
        %v2464 = vpop.permute.xlu0 %2463
        %2465 = vrot.lane.b32.xlu0 %v2243, 64
        %v2466 = vpop.permute.xlu0 %2465
        %2491 = vrot.lane.b32.xlu0 %v1987, 16
        %v2492 = vpop.permute.xlu0 %2491
        %2493 = vrot.lane.b32.xlu0 %v2006, 16
        %v2494 = vpop.permute.xlu0 %2493
        %2495 = vrot.lane.b32.xlu0 %v1989, 16
        %v2496 = vpop.permute.xlu0 %2495
        %2497 = vrot.lane.b32.xlu0 %v2008, 16
        %v2498 = vpop.permute.xlu0 %2497
        %2499 = vrot.lane.b32.xlu0 %v2226, 16
        %v2500 = vpop.permute.xlu0 %2499
        %2501 = vrot.lane.b32.xlu0 %v2255, 16
        %v2502 = vpop.permute.xlu0 %2501
        %2503 = vrot.lane.b32.xlu0 %v2228, 16
        %v2504 = vpop.permute.xlu0 %2503
        %2505 = vrot.lane.b32.xlu0 %v2257, 16
        %v2506 = vpop.permute.xlu0 %2505
        %2507 = vrot.lane.b32.xlu0 %v2231, 16
        %v2508 = vpop.permute.xlu0 %2507
        %2509 = vrot.lane.b32.xlu0 %v2260, 16
        %v2510 = vpop.permute.xlu0 %2509
        %2511 = vrot.lane.b32.xlu0 %v2233, 16
        %v2512 = vpop.permute.xlu0 %2511
        %2513 = vrot.lane.b32.xlu0 %v2262, 16
        %v2514 = vpop.permute.xlu0 %2513
        %2515 = vrot.lane.b32.xlu0 %v1992, 16
        %v2516 = vpop.permute.xlu0 %2515
        %2517 = vrot.lane.b32.xlu0 %v2011, 16
        %v2518 = vpop.permute.xlu0 %2517
        %2519 = vrot.lane.b32.xlu0 %v1994, 16
        %v2520 = vpop.permute.xlu0 %2519
        %2521 = vrot.lane.b32.xlu0 %v2013, 16
        %v2522 = vpop.permute.xlu0 %2521
        %2523 = vrot.lane.b32.xlu0 %v2236, 16
        %v2524 = vpop.permute.xlu0 %2523
        %2525 = vrot.lane.b32.xlu0 %v2265, 16
        %v2526 = vpop.permute.xlu0 %2525
        %2527 = vrot.lane.b32.xlu0 %v2238, 16
        %v2528 = vpop.permute.xlu0 %2527
        %2529 = vrot.lane.b32.xlu0 %v2267, 16
        %v2530 = vpop.permute.xlu0 %2529
        %2531 = vrot.lane.b32.xlu0 %v2241, 16
        %v2532 = vpop.permute.xlu0 %2531
        %2533 = vrot.lane.b32.xlu0 %v2270, 16
        %v2534 = vpop.permute.xlu0 %2533
        %2535 = vrot.lane.b32.xlu0 %v2243, 16
        %v2536 = vpop.permute.xlu0 %2535
        %2537 = vrot.lane.b32.xlu0 %v2272, 16
        %v2538 = vpop.permute.xlu0 %2537
        %vm2539 = vcmask 130048
        %v2540 = vsel %vm2539, %v2492, %v2494
        %v2541 = vsel %vm2539, %v2496, %v2498
        %v2542 = vsel %vm2539, %v2500, %v2502
        %v2543 = vsel %vm2539, %v2504, %v2506
        %v2544 = vsel %vm2539, %v2508, %v2510
        %v2545 = vsel %vm2539, %v2512, %v2514
        %v2546 = vsel %vm2539, %v2516, %v2518
        %v2547 = vsel %vm2539, %v2520, %v2522
        %v2548 = vsel %vm2539, %v2524, %v2526
        %v2549 = vsel %vm2539, %v2528, %v2530
        %v2550 = vsel %vm2539, %v2532, %v2534
        %v2551 = vsel %vm2539, %v2536, %v2538
        %2564 = vrot.lane.b32.xlu0 %v2006, 96
        %v2565 = vpop.permute.xlu0 %2564
        %2566 = vrot.lane.b32.xlu0 %v2008, 96
        %v2567 = vpop.permute.xlu0 %2566
        %2568 = vrot.lane.b32.xlu0 %v2255, 96
        %v2569 = vpop.permute.xlu0 %2568
        %2570 = vrot.lane.b32.xlu0 %v2257, 96
        %v2571 = vpop.permute.xlu0 %2570
        %2572 = vrot.lane.b32.xlu0 %v2260, 96
        %v2573 = vpop.permute.xlu0 %2572
        %2574 = vrot.lane.b32.xlu0 %v2262, 96
        %v2575 = vpop.permute.xlu0 %2574
        %2576 = vrot.lane.b32.xlu0 %v2011, 96
        %v2577 = vpop.permute.xlu0 %2576
        %2578 = vrot.lane.b32.xlu0 %v2013, 96
        %v2579 = vpop.permute.xlu0 %2578
        %2580 = vrot.lane.b32.xlu0 %v2265, 96
        %v2581 = vpop.permute.xlu0 %2580
        %2582 = vrot.lane.b32.xlu0 %v2267, 96
        %v2583 = vpop.permute.xlu0 %2582
        %2584 = vrot.lane.b32.xlu0 %v2270, 96
        %v2585 = vpop.permute.xlu0 %2584
        %2586 = vrot.lane.b32.xlu0 %v2272, 96
        %v2587 = vpop.permute.xlu0 %2586
        %2600 = vrot.lane.b32.xlu0 %v2006, 48
        %v2601 = vpop.permute.xlu0 %2600
        %2602 = vrot.lane.b32.xlu0 %v2008, 48
        %v2603 = vpop.permute.xlu0 %2602
        %2604 = vrot.lane.b32.xlu0 %v2255, 48
        %v2605 = vpop.permute.xlu0 %2604
        %2606 = vrot.lane.b32.xlu0 %v2257, 48
        %v2607 = vpop.permute.xlu0 %2606
        %2608 = vrot.lane.b32.xlu0 %v2260, 48
        %v2609 = vpop.permute.xlu0 %2608
        %2610 = vrot.lane.b32.xlu0 %v2262, 48
        %v2611 = vpop.permute.xlu0 %2610
        %2612 = vrot.lane.b32.xlu0 %v2011, 48
        %v2613 = vpop.permute.xlu0 %2612
        %2614 = vrot.lane.b32.xlu0 %v2013, 48
        %v2615 = vpop.permute.xlu0 %2614
        %2616 = vrot.lane.b32.xlu0 %v2265, 48
        %v2617 = vpop.permute.xlu0 %2616
        %2618 = vrot.lane.b32.xlu0 %v2267, 48
        %v2619 = vpop.permute.xlu0 %2618
        %2620 = vrot.lane.b32.xlu0 %v2270, 48
        %v2621 = vpop.permute.xlu0 %2620
        %2622 = vrot.lane.b32.xlu0 %v2272, 48
        %v2623 = vpop.permute.xlu0 %2622
        %v2636 = vpack.c.bf16 %v1968, %v1968
        %v2637 = vpack.c.bf16 %v1970, %v1970
        %v2638 = vpack.c.bf16 %v2197, %v2197
        %v2639 = vpack.c.bf16 %v2199, %v2199
        %v2640 = vpack.c.bf16 %v2202, %v2202
        %v2641 = vpack.c.bf16 %v2204, %v2204
        %v2642 = vpack.c.bf16 %v1973, %v1973
        %v2643 = vpack.c.bf16 %v1975, %v1975
        %v2644 = vpack.c.bf16 %v2207, %v2207
        %v2645 = vpack.c.bf16 %v2209, %v2209
        %v2646 = vpack.c.bf16 %v2212, %v2212
        %v2647 = vpack.c.bf16 %v2214, %v2214
        %v2648 = vpack.c.bf16 %v2287, %v2287
        %v2649 = vpack.c.bf16 %v2289, %v2289
        %v2650 = vpack.c.bf16 %v2291, %v2291
        %v2651 = vpack.c.bf16 %v2293, %v2293
        %v2652 = vpack.c.bf16 %v2295, %v2295
        %v2653 = vpack.c.bf16 %v2297, %v2297
        %v2654 = vpack.c.bf16 %v2299, %v2299
        %v2655 = vpack.c.bf16 %v2301, %v2301
        %v2656 = vpack.c.bf16 %v2303, %v2303
        %v2657 = vpack.c.bf16 %v2305, %v2305
        %v2658 = vpack.c.bf16 %v2307, %v2307
        %v2659 = vpack.c.bf16 %v2309, %v2309
        %v2660 = vpack.c.bf16 %v2383, %v2383
        %v2661 = vpack.c.bf16 %v2384, %v2384
        %v2662 = vpack.c.bf16 %v2385, %v2385
        %v2663 = vpack.c.bf16 %v2386, %v2386
        %v2664 = vpack.c.bf16 %v2387, %v2387
        %v2665 = vpack.c.bf16 %v2388, %v2388
        %v2666 = vpack.c.bf16 %v2389, %v2389
        %v2667 = vpack.c.bf16 %v2390, %v2390
        %v2668 = vpack.c.bf16 %v2391, %v2391
        %v2669 = vpack.c.bf16 %v2392, %v2392
        %v2670 = vpack.c.bf16 %v2393, %v2393
        %v2671 = vpack.c.bf16 %v2394, %v2394
        %v2672 = vpack.c.bf16 %v2408, %v2408
        %v2673 = vpack.c.bf16 %v2410, %v2410
        %v2674 = vpack.c.bf16 %v2412, %v2412
        %v2675 = vpack.c.bf16 %v2414, %v2414
        %v2676 = vpack.c.bf16 %v2416, %v2416
        %v2677 = vpack.c.bf16 %v2418, %v2418
        %v2678 = vpack.c.bf16 %v2420, %v2420
        %v2679 = vpack.c.bf16 %v2422, %v2422
        %v2680 = vpack.c.bf16 %v2424, %v2424
        %v2681 = vpack.c.bf16 %v2426, %v2426
        %v2682 = vpack.c.bf16 %v2428, %v2428
        %v2683 = vpack.c.bf16 %v2430, %v2430
        %v2684 = vpack.c.bf16 %v2444, %v2444
        %v2685 = vpack.c.bf16 %v2446, %v2446
        %v2686 = vpack.c.bf16 %v2448, %v2448
        %v2687 = vpack.c.bf16 %v2450, %v2450
        %v2688 = vpack.c.bf16 %v2452, %v2452
        %v2689 = vpack.c.bf16 %v2454, %v2454
        %v2690 = vpack.c.bf16 %v2456, %v2456
        %v2691 = vpack.c.bf16 %v2458, %v2458
        %v2692 = vpack.c.bf16 %v2460, %v2460
        %v2693 = vpack.c.bf16 %v2462, %v2462
        %v2694 = vpack.c.bf16 %v2464, %v2464
        %v2695 = vpack.c.bf16 %v2466, %v2466
        %v2696 = vpack.c.bf16 %v2540, %v2540
        %v2697 = vpack.c.bf16 %v2541, %v2541
        %v2698 = vpack.c.bf16 %v2542, %v2542
        %v2699 = vpack.c.bf16 %v2543, %v2543
        %v2700 = vpack.c.bf16 %v2544, %v2544
        %v2701 = vpack.c.bf16 %v2545, %v2545
        %v2702 = vpack.c.bf16 %v2546, %v2546
        %v2703 = vpack.c.bf16 %v2547, %v2547
        %v2704 = vpack.c.bf16 %v2548, %v2548
        %v2705 = vpack.c.bf16 %v2549, %v2549
        %v2706 = vpack.c.bf16 %v2550, %v2550
        %v2707 = vpack.c.bf16 %v2551, %v2551
        %v2708 = vpack.c.bf16 %v2565, %v2565
        %v2709 = vpack.c.bf16 %v2567, %v2567
        %v2710 = vpack.c.bf16 %v2569, %v2569
        %v2711 = vpack.c.bf16 %v2571, %v2571
        %v2712 = vpack.c.bf16 %v2573, %v2573
        %v2713 = vpack.c.bf16 %v2575, %v2575
        %v2714 = vpack.c.bf16 %v2577, %v2577
        %v2715 = vpack.c.bf16 %v2579, %v2579
        %v2716 = vpack.c.bf16 %v2581, %v2581
        %v2717 = vpack.c.bf16 %v2583, %v2583
        %v2718 = vpack.c.bf16 %v2585, %v2585
        %v2719 = vpack.c.bf16 %v2587, %v2587
        %v2720 = vpack.c.bf16 %v2601, %v2601
        %v2721 = vpack.c.bf16 %v2603, %v2603
        %v2722 = vpack.c.bf16 %v2605, %v2605
        %v2723 = vpack.c.bf16 %v2607, %v2607
        %v2724 = vpack.c.bf16 %v2609, %v2609
        %v2725 = vpack.c.bf16 %v2611, %v2611
        %v2726 = vpack.c.bf16 %v2613, %v2613
        %v2727 = vpack.c.bf16 %v2615, %v2615
        %v2728 = vpack.c.bf16 %v2617, %v2617
        %v2729 = vpack.c.bf16 %v2619, %v2619
        %v2730 = vpack.c.bf16 %v2621, %v2621
        %v2731 = vpack.c.bf16 %v2623, %v2623
        %v2738 = vunpack.c.l.b16 %v2636
        %v2739 = vunpack.c.l.b16 %v2637
        %v2740 = vunpack.c.l.b16 %v2638
        %v2741 = vunpack.c.l.b16 %v2639
        %v2742 = vunpack.c.l.b16 %v2640
        %v2743 = vunpack.c.l.b16 %v2641
        %v2744 = vpack.c.b16 %v2739, %v2738
        %v2745 = vpack.c.b16 %v2741, %v2740
        %v2746 = vpack.c.b16 %v2743, %v2742
        %2747 = vrot.lane.b32.xlu0 %v2744, 112
        %v2748 = vpop.permute.xlu0 %2747
        %2749 = vrot.lane.b32.xlu0 %v2745, 112
        %v2750 = vpop.permute.xlu0 %2749
        %2751 = vrot.lane.b32.xlu0 %v2746, 112
        %v2752 = vpop.permute.xlu0 %2751
        %v2754 = vsel %vm2539, %v2744, 0
        %v2757 = vsel %vm2539, %v2745, 0
        %v2760 = vsel %vm2539, %v2746, 0
        %v2763 = vsel %vm2539, %v2748, 0
        %v2766 = vsel %vm2539, %v2750, 0
        %v2769 = vsel %vm2539, %v2752, 0
        %2771 = vmatpush.bf16.xpose.msra.mxu0 0
        %2772 = vmatpush.bf16.xpose.msra.mxu0 0
        %2773 = vmatpush.bf16.xpose.msra.mxu0 0
        %2774 = vmatpush.bf16.xpose.msra.mxu0 0
        %2775 = vmatpush.bf16.xpose.msra.mxu0 0
        %2776 = vmatpush.bf16.xpose.msra.mxu0 %v2769
        %2777 = vmatpush.bf16.xpose.msra.mxu0 %v2766
        %2778 = vmatpush.bf16.xpose.msra.mxu0 %v2763
        %2779 = vmatmul.bf16.gmra.mxu0 %v2754
        %v2780 = vpop.f32.mrf.mxu0
        %v2781 = vadd.f32 0.0, %v2780
        %v2782 = vpop.f32.mrf.mxu0
        %v2783 = vadd.f32 0.0, %v2782
        %2784 = vmatmul.bf16.gmra.mxu0 %v2757
        %v2785 = vpop.f32.mrf.mxu0
        %v2786 = vadd.f32 0.0, %v2785
        %v2787 = vpop.f32.mrf.mxu0
        %v2788 = vadd.f32 0.0, %v2787
        %2789 = vmatmul.bf16.gmra.mxu0 %v2760
        %v2790 = vpop.f32.mrf.mxu0
        %v2791 = vadd.f32 0.0, %v2790
        %v2792 = vpop.f32.mrf.mxu0
        %v2793 = vadd.f32 0.0, %v2792
        %2794 = vdwg.mxu0
        %v2801 = vunpack.c.l.b16 %v2642
        %v2802 = vunpack.c.l.b16 %v2643
        %v2803 = vunpack.c.l.b16 %v2644
        %v2804 = vunpack.c.l.b16 %v2645
        %v2805 = vunpack.c.l.b16 %v2646
        %v2806 = vunpack.c.l.b16 %v2647
        %v2807 = vpack.c.b16 %v2802, %v2801
        %v2808 = vpack.c.b16 %v2804, %v2803
        %v2809 = vpack.c.b16 %v2806, %v2805
        %2810 = vrot.lane.b32.xlu0 %v2807, 112
        %v2811 = vpop.permute.xlu0 %2810
        %2812 = vrot.lane.b32.xlu0 %v2808, 112
        %v2813 = vpop.permute.xlu0 %2812
        %2814 = vrot.lane.b32.xlu0 %v2809, 112
        %v2815 = vpop.permute.xlu0 %2814
        %v2817 = vsel %vm2539, %v2807, 0
        %v2820 = vsel %vm2539, %v2808, 0
        %v2823 = vsel %vm2539, %v2809, 0
        %v2826 = vsel %vm2539, %v2811, 0
        %v2829 = vsel %vm2539, %v2813, 0
        %v2832 = vsel %vm2539, %v2815, 0
        %2834 = vmatpush.bf16.xpose.msra.mxu0 0
        %2835 = vmatpush.bf16.xpose.msra.mxu0 0
        %2836 = vmatpush.bf16.xpose.msra.mxu0 0
        %2837 = vmatpush.bf16.xpose.msra.mxu0 0
        %2838 = vmatpush.bf16.xpose.msra.mxu0 0
        %2839 = vmatpush.bf16.xpose.msra.mxu0 %v2832
        %2840 = vmatpush.bf16.xpose.msra.mxu0 %v2829
        %2841 = vmatpush.bf16.xpose.msra.mxu0 %v2826
        %2842 = vmatmul.bf16.gmra.mxu0 %v2817
        %v2843 = vpop.f32.mrf.mxu0
        %v2844 = vadd.f32 0.0, %v2843
        %v2845 = vpop.f32.mrf.mxu0
        %v2846 = vadd.f32 0.0, %v2845
        %2847 = vmatmul.bf16.gmra.mxu0 %v2820
        %v2848 = vpop.f32.mrf.mxu0
        %v2849 = vadd.f32 0.0, %v2848
        %v2850 = vpop.f32.mrf.mxu0
        %v2851 = vadd.f32 0.0, %v2850
        %2852 = vmatmul.bf16.gmra.mxu0 %v2823
        %v2853 = vpop.f32.mrf.mxu0
        %v2854 = vadd.f32 0.0, %v2853
        %v2855 = vpop.f32.mrf.mxu0
        %v2856 = vadd.f32 0.0, %v2855
        %2857 = vdwg.mxu0
        %v2864 = vunpack.c.l.b16 %v2648
        %v2865 = vunpack.c.l.b16 %v2649
        %v2866 = vunpack.c.l.b16 %v2650
        %v2867 = vunpack.c.l.b16 %v2651
        %v2868 = vunpack.c.l.b16 %v2652
        %v2869 = vunpack.c.l.b16 %v2653
        %v2870 = vpack.c.b16 %v2865, %v2864
        %v2871 = vpack.c.b16 %v2867, %v2866
        %v2872 = vpack.c.b16 %v2869, %v2868
        %2873 = vrot.lane.b32.xlu0 %v2870, 112
        %v2874 = vpop.permute.xlu0 %2873
        %2875 = vrot.lane.b32.xlu0 %v2871, 112
        %v2876 = vpop.permute.xlu0 %2875
        %2877 = vrot.lane.b32.xlu0 %v2872, 112
        %v2878 = vpop.permute.xlu0 %2877
        %v2880 = vsel %vm2539, %v2870, 0
        %v2883 = vsel %vm2539, %v2871, 0
        %v2886 = vsel %vm2539, %v2872, 0
        %v2889 = vsel %vm2539, %v2874, 0
        %v2892 = vsel %vm2539, %v2876, 0
        %v2895 = vsel %vm2539, %v2878, 0
        %2897 = vmatpush.bf16.xpose.msra.mxu0 0
        %2898 = vmatpush.bf16.xpose.msra.mxu0 0
        %2899 = vmatpush.bf16.xpose.msra.mxu0 0
        %2900 = vmatpush.bf16.xpose.msra.mxu0 0
        %2901 = vmatpush.bf16.xpose.msra.mxu0 0
        %2902 = vmatpush.bf16.xpose.msra.mxu0 %v2895
        %2903 = vmatpush.bf16.xpose.msra.mxu0 %v2892
        %2904 = vmatpush.bf16.xpose.msra.mxu0 %v2889
        %2905 = vmatmul.bf16.gmra.mxu0 %v2880
        %v2906 = vpop.f32.mrf.mxu0
        %v2907 = vadd.f32 0.0, %v2906
        %v2908 = vpop.f32.mrf.mxu0
        %v2909 = vadd.f32 0.0, %v2908
        %2910 = vmatmul.bf16.gmra.mxu0 %v2883
        %v2911 = vpop.f32.mrf.mxu0
        %v2912 = vadd.f32 0.0, %v2911
        %v2913 = vpop.f32.mrf.mxu0
        %v2914 = vadd.f32 0.0, %v2913
        %2915 = vmatmul.bf16.gmra.mxu0 %v2886
        %v2916 = vpop.f32.mrf.mxu0
        %v2917 = vadd.f32 0.0, %v2916
        %v2918 = vpop.f32.mrf.mxu0
        %v2919 = vadd.f32 0.0, %v2918
        %2920 = vdwg.mxu0
        %v2927 = vunpack.c.l.b16 %v2654
        %v2928 = vunpack.c.l.b16 %v2655
        %v2929 = vunpack.c.l.b16 %v2656
        %v2930 = vunpack.c.l.b16 %v2657
        %v2931 = vunpack.c.l.b16 %v2658
        %v2932 = vunpack.c.l.b16 %v2659
        %v2933 = vpack.c.b16 %v2928, %v2927
        %v2934 = vpack.c.b16 %v2930, %v2929
        %v2935 = vpack.c.b16 %v2932, %v2931
        %2936 = vrot.lane.b32.xlu0 %v2933, 112
        %v2937 = vpop.permute.xlu0 %2936
        %2938 = vrot.lane.b32.xlu0 %v2934, 112
        %v2939 = vpop.permute.xlu0 %2938
        %2940 = vrot.lane.b32.xlu0 %v2935, 112
        %v2941 = vpop.permute.xlu0 %2940
        %v2943 = vsel %vm2539, %v2933, 0
        %v2946 = vsel %vm2539, %v2934, 0
        %v2949 = vsel %vm2539, %v2935, 0
        %v2952 = vsel %vm2539, %v2937, 0
        %v2955 = vsel %vm2539, %v2939, 0
        %v2958 = vsel %vm2539, %v2941, 0
        %2960 = vmatpush.bf16.xpose.msra.mxu0 0
        %2961 = vmatpush.bf16.xpose.msra.mxu0 0
        %2962 = vmatpush.bf16.xpose.msra.mxu0 0
        %2963 = vmatpush.bf16.xpose.msra.mxu0 0
        %2964 = vmatpush.bf16.xpose.msra.mxu0 0
        %2965 = vmatpush.bf16.xpose.msra.mxu0 %v2958
        %2966 = vmatpush.bf16.xpose.msra.mxu0 %v2955
        %2967 = vmatpush.bf16.xpose.msra.mxu0 %v2952
        %2968 = vmatmul.bf16.gmra.mxu0 %v2943
        %v2969 = vpop.f32.mrf.mxu0
        %v2970 = vadd.f32 0.0, %v2969
        %v2971 = vpop.f32.mrf.mxu0
        %v2972 = vadd.f32 0.0, %v2971
        %2973 = vmatmul.bf16.gmra.mxu0 %v2946
        %v2974 = vpop.f32.mrf.mxu0
        %v2975 = vadd.f32 0.0, %v2974
        %v2976 = vpop.f32.mrf.mxu0
        %v2977 = vadd.f32 0.0, %v2976
        %2978 = vmatmul.bf16.gmra.mxu0 %v2949
        %v2979 = vpop.f32.mrf.mxu0
        %v2980 = vadd.f32 0.0, %v2979
        %v2981 = vpop.f32.mrf.mxu0
        %v2982 = vadd.f32 0.0, %v2981
        %2983 = vdwg.mxu0
        %v2990 = vunpack.c.l.b16 %v2660
        %v2991 = vunpack.c.l.b16 %v2661
        %v2992 = vunpack.c.l.b16 %v2662
        %v2993 = vunpack.c.l.b16 %v2663
        %v2994 = vunpack.c.l.b16 %v2664
        %v2995 = vunpack.c.l.b16 %v2665
        %v2996 = vpack.c.b16 %v2991, %v2990
        %v2997 = vpack.c.b16 %v2993, %v2992
        %v2998 = vpack.c.b16 %v2995, %v2994
        %2999 = vrot.lane.b32.xlu0 %v2996, 112
        %v3000 = vpop.permute.xlu0 %2999
        %3001 = vrot.lane.b32.xlu0 %v2997, 112
        %v3002 = vpop.permute.xlu0 %3001
        %3003 = vrot.lane.b32.xlu0 %v2998, 112
        %v3004 = vpop.permute.xlu0 %3003
        %v3006 = vsel %vm2539, %v2996, 0
        %v3009 = vsel %vm2539, %v2997, 0
        %v3012 = vsel %vm2539, %v2998, 0
        %v3015 = vsel %vm2539, %v3000, 0
        %v3018 = vsel %vm2539, %v3002, 0
        %v3021 = vsel %vm2539, %v3004, 0
        %3023 = vmatpush.bf16.xpose.msra.mxu0 0
        %3024 = vmatpush.bf16.xpose.msra.mxu0 0
        %3025 = vmatpush.bf16.xpose.msra.mxu0 0
        %3026 = vmatpush.bf16.xpose.msra.mxu0 0
        %3027 = vmatpush.bf16.xpose.msra.mxu0 0
        %3028 = vmatpush.bf16.xpose.msra.mxu0 %v3021
        %3029 = vmatpush.bf16.xpose.msra.mxu0 %v3018
        %3030 = vmatpush.bf16.xpose.msra.mxu0 %v3015
        %3031 = vmatmul.bf16.gmra.mxu0 %v3006
        %v3032 = vpop.f32.mrf.mxu0
        %v3033 = vadd.f32 0.0, %v3032
        %v3034 = vpop.f32.mrf.mxu0
        %v3035 = vadd.f32 0.0, %v3034
        %3036 = vmatmul.bf16.gmra.mxu0 %v3009
        %v3037 = vpop.f32.mrf.mxu0
        %v3038 = vadd.f32 0.0, %v3037
        %v3039 = vpop.f32.mrf.mxu0
        %v3040 = vadd.f32 0.0, %v3039
        %3041 = vmatmul.bf16.gmra.mxu0 %v3012
        %v3042 = vpop.f32.mrf.mxu0
        %v3043 = vadd.f32 0.0, %v3042
        %v3044 = vpop.f32.mrf.mxu0
        %v3045 = vadd.f32 0.0, %v3044
        %3046 = vdwg.mxu0
        %v3053 = vunpack.c.l.b16 %v2666
        %v3054 = vunpack.c.l.b16 %v2667
        %v3055 = vunpack.c.l.b16 %v2668
        %v3056 = vunpack.c.l.b16 %v2669
        %v3057 = vunpack.c.l.b16 %v2670
        %v3058 = vunpack.c.l.b16 %v2671
        %v3059 = vpack.c.b16 %v3054, %v3053
        %v3060 = vpack.c.b16 %v3056, %v3055
        %v3061 = vpack.c.b16 %v3058, %v3057
        %3062 = vrot.lane.b32.xlu0 %v3059, 112
        %v3063 = vpop.permute.xlu0 %3062
        %3064 = vrot.lane.b32.xlu0 %v3060, 112
        %v3065 = vpop.permute.xlu0 %3064
        %3066 = vrot.lane.b32.xlu0 %v3061, 112
        %v3067 = vpop.permute.xlu0 %3066
        %v3069 = vsel %vm2539, %v3059, 0
        %v3072 = vsel %vm2539, %v3060, 0
        %v3075 = vsel %vm2539, %v3061, 0
        %v3078 = vsel %vm2539, %v3063, 0
        %v3081 = vsel %vm2539, %v3065, 0
        %v3084 = vsel %vm2539, %v3067, 0
        %3086 = vmatpush.bf16.xpose.msra.mxu0 0
        %3087 = vmatpush.bf16.xpose.msra.mxu0 0
        %3088 = vmatpush.bf16.xpose.msra.mxu0 0
        %3089 = vmatpush.bf16.xpose.msra.mxu0 0
        %3090 = vmatpush.bf16.xpose.msra.mxu0 0
        %3091 = vmatpush.bf16.xpose.msra.mxu0 %v3084
        %3092 = vmatpush.bf16.xpose.msra.mxu0 %v3081
        %3093 = vmatpush.bf16.xpose.msra.mxu0 %v3078
        %3094 = vmatmul.bf16.gmra.mxu0 %v3069
        %v3095 = vpop.f32.mrf.mxu0
        %v3096 = vadd.f32 0.0, %v3095
        %v3097 = vpop.f32.mrf.mxu0
        %v3098 = vadd.f32 0.0, %v3097
        %3099 = vmatmul.bf16.gmra.mxu0 %v3072
        %v3100 = vpop.f32.mrf.mxu0
        %v3101 = vadd.f32 0.0, %v3100
        %v3102 = vpop.f32.mrf.mxu0
        %v3103 = vadd.f32 0.0, %v3102
        %3104 = vmatmul.bf16.gmra.mxu0 %v3075
        %v3105 = vpop.f32.mrf.mxu0
        %v3106 = vadd.f32 0.0, %v3105
        %v3107 = vpop.f32.mrf.mxu0
        %v3108 = vadd.f32 0.0, %v3107
        %3109 = vdwg.mxu0
        %v3116 = vunpack.c.l.b16 %v2672
        %v3117 = vunpack.c.l.b16 %v2673
        %v3118 = vunpack.c.l.b16 %v2674
        %v3119 = vunpack.c.l.b16 %v2675
        %v3120 = vunpack.c.l.b16 %v2676
        %v3121 = vunpack.c.l.b16 %v2677
        %v3122 = vpack.c.b16 %v3117, %v3116
        %v3123 = vpack.c.b16 %v3119, %v3118
        %v3124 = vpack.c.b16 %v3121, %v3120
        %3125 = vrot.lane.b32.xlu0 %v3122, 112
        %v3126 = vpop.permute.xlu0 %3125
        %3127 = vrot.lane.b32.xlu0 %v3123, 112
        %v3128 = vpop.permute.xlu0 %3127
        %3129 = vrot.lane.b32.xlu0 %v3124, 112
        %v3130 = vpop.permute.xlu0 %3129
        %v3132 = vsel %vm2539, %v3122, 0
        %v3135 = vsel %vm2539, %v3123, 0
        %v3138 = vsel %vm2539, %v3124, 0
        %v3141 = vsel %vm2539, %v3126, 0
        %v3144 = vsel %vm2539, %v3128, 0
        %v3147 = vsel %vm2539, %v3130, 0
        %3149 = vmatpush.bf16.xpose.msra.mxu0 0
        %3150 = vmatpush.bf16.xpose.msra.mxu0 0
        %3151 = vmatpush.bf16.xpose.msra.mxu0 0
        %3152 = vmatpush.bf16.xpose.msra.mxu0 0
        %3153 = vmatpush.bf16.xpose.msra.mxu0 0
        %3154 = vmatpush.bf16.xpose.msra.mxu0 %v3147
        %3155 = vmatpush.bf16.xpose.msra.mxu0 %v3144
        %3156 = vmatpush.bf16.xpose.msra.mxu0 %v3141
        %3157 = vmatmul.bf16.gmra.mxu0 %v3132
        %v3158 = vpop.f32.mrf.mxu0
        %v3159 = vadd.f32 0.0, %v3158
        %v3160 = vpop.f32.mrf.mxu0
        %v3161 = vadd.f32 0.0, %v3160
        %3162 = vmatmul.bf16.gmra.mxu0 %v3135
        %v3163 = vpop.f32.mrf.mxu0
        %v3164 = vadd.f32 0.0, %v3163
        %v3165 = vpop.f32.mrf.mxu0
        %v3166 = vadd.f32 0.0, %v3165
        %3167 = vmatmul.bf16.gmra.mxu0 %v3138
        %v3168 = vpop.f32.mrf.mxu0
        %v3169 = vadd.f32 0.0, %v3168
        %v3170 = vpop.f32.mrf.mxu0
        %v3171 = vadd.f32 0.0, %v3170
        %3172 = vdwg.mxu0
        %v3179 = vunpack.c.l.b16 %v2678
        %v3180 = vunpack.c.l.b16 %v2679
        %v3181 = vunpack.c.l.b16 %v2680
        %v3182 = vunpack.c.l.b16 %v2681
        %v3183 = vunpack.c.l.b16 %v2682
        %v3184 = vunpack.c.l.b16 %v2683
        %v3185 = vpack.c.b16 %v3180, %v3179
        %v3186 = vpack.c.b16 %v3182, %v3181
        %v3187 = vpack.c.b16 %v3184, %v3183
        %3188 = vrot.lane.b32.xlu0 %v3185, 112
        %v3189 = vpop.permute.xlu0 %3188
        %3190 = vrot.lane.b32.xlu0 %v3186, 112
        %v3191 = vpop.permute.xlu0 %3190
        %3192 = vrot.lane.b32.xlu0 %v3187, 112
        %v3193 = vpop.permute.xlu0 %3192
        %v3195 = vsel %vm2539, %v3185, 0
        %v3198 = vsel %vm2539, %v3186, 0
        %v3201 = vsel %vm2539, %v3187, 0
        %v3204 = vsel %vm2539, %v3189, 0
        %v3207 = vsel %vm2539, %v3191, 0
        %v3210 = vsel %vm2539, %v3193, 0
        %3212 = vmatpush.bf16.xpose.msra.mxu0 0
        %3213 = vmatpush.bf16.xpose.msra.mxu0 0
        %3214 = vmatpush.bf16.xpose.msra.mxu0 0
        %3215 = vmatpush.bf16.xpose.msra.mxu0 0
        %3216 = vmatpush.bf16.xpose.msra.mxu0 0
        %3217 = vmatpush.bf16.xpose.msra.mxu0 %v3210
        %3218 = vmatpush.bf16.xpose.msra.mxu0 %v3207
        %3219 = vmatpush.bf16.xpose.msra.mxu0 %v3204
        %3220 = vmatmul.bf16.gmra.mxu0 %v3195
        %v3221 = vpop.f32.mrf.mxu0
        %v3222 = vadd.f32 0.0, %v3221
        %v3223 = vpop.f32.mrf.mxu0
        %v3224 = vadd.f32 0.0, %v3223
        %3225 = vmatmul.bf16.gmra.mxu0 %v3198
        %v3226 = vpop.f32.mrf.mxu0
        %v3227 = vadd.f32 0.0, %v3226
        %v3228 = vpop.f32.mrf.mxu0
        %v3229 = vadd.f32 0.0, %v3228
        %3230 = vmatmul.bf16.gmra.mxu0 %v3201
        %v3231 = vpop.f32.mrf.mxu0
        %v3232 = vadd.f32 0.0, %v3231
        %v3233 = vpop.f32.mrf.mxu0
        %v3234 = vadd.f32 0.0, %v3233
        %3235 = vdwg.mxu0
        %v3242 = vunpack.c.l.b16 %v2684
        %v3243 = vunpack.c.l.b16 %v2685
        %v3244 = vunpack.c.l.b16 %v2686
        %v3245 = vunpack.c.l.b16 %v2687
        %v3246 = vunpack.c.l.b16 %v2688
        %v3247 = vunpack.c.l.b16 %v2689
        %v3248 = vpack.c.b16 %v3243, %v3242
        %v3249 = vpack.c.b16 %v3245, %v3244
        %v3250 = vpack.c.b16 %v3247, %v3246
        %3251 = vrot.lane.b32.xlu0 %v3248, 112
        %v3252 = vpop.permute.xlu0 %3251
        %3253 = vrot.lane.b32.xlu0 %v3249, 112
        %v3254 = vpop.permute.xlu0 %3253
        %3255 = vrot.lane.b32.xlu0 %v3250, 112
        %v3256 = vpop.permute.xlu0 %3255
        %v3258 = vsel %vm2539, %v3248, 0
        %v3261 = vsel %vm2539, %v3249, 0
        %v3264 = vsel %vm2539, %v3250, 0
        %v3267 = vsel %vm2539, %v3252, 0
        %v3270 = vsel %vm2539, %v3254, 0
        %v3273 = vsel %vm2539, %v3256, 0
        %3275 = vmatpush.bf16.xpose.msra.mxu0 0
        %3276 = vmatpush.bf16.xpose.msra.mxu0 0
        %3277 = vmatpush.bf16.xpose.msra.mxu0 0
        %3278 = vmatpush.bf16.xpose.msra.mxu0 0
        %3279 = vmatpush.bf16.xpose.msra.mxu0 0
        %3280 = vmatpush.bf16.xpose.msra.mxu0 %v3273
        %3281 = vmatpush.bf16.xpose.msra.mxu0 %v3270
        %3282 = vmatpush.bf16.xpose.msra.mxu0 %v3267
        %3283 = vmatmul.bf16.gmra.mxu0 %v3258
        %v3284 = vpop.f32.mrf.mxu0
        %v3285 = vadd.f32 0.0, %v3284
        %v3286 = vpop.f32.mrf.mxu0
        %v3287 = vadd.f32 0.0, %v3286
        %3288 = vmatmul.bf16.gmra.mxu0 %v3261
        %v3289 = vpop.f32.mrf.mxu0
        %v3290 = vadd.f32 0.0, %v3289
        %v3291 = vpop.f32.mrf.mxu0
        %v3292 = vadd.f32 0.0, %v3291
        %3293 = vmatmul.bf16.gmra.mxu0 %v3264
        %v3294 = vpop.f32.mrf.mxu0
        %v3295 = vadd.f32 0.0, %v3294
        %v3296 = vpop.f32.mrf.mxu0
        %v3297 = vadd.f32 0.0, %v3296
        %3298 = vdwg.mxu0
        %v3305 = vunpack.c.l.b16 %v2690
        %v3306 = vunpack.c.l.b16 %v2691
        %v3307 = vunpack.c.l.b16 %v2692
        %v3308 = vunpack.c.l.b16 %v2693
        %v3309 = vunpack.c.l.b16 %v2694
        %v3310 = vunpack.c.l.b16 %v2695
        %v3311 = vpack.c.b16 %v3306, %v3305
        %v3312 = vpack.c.b16 %v3308, %v3307
        %v3313 = vpack.c.b16 %v3310, %v3309
        %3314 = vrot.lane.b32.xlu0 %v3311, 112
        %v3315 = vpop.permute.xlu0 %3314
        %3316 = vrot.lane.b32.xlu0 %v3312, 112
        %v3317 = vpop.permute.xlu0 %3316
        %3318 = vrot.lane.b32.xlu0 %v3313, 112
        %v3319 = vpop.permute.xlu0 %3318
        %v3321 = vsel %vm2539, %v3311, 0
        %v3324 = vsel %vm2539, %v3312, 0
        %v3327 = vsel %vm2539, %v3313, 0
        %v3330 = vsel %vm2539, %v3315, 0
        %v3333 = vsel %vm2539, %v3317, 0
        %v3336 = vsel %vm2539, %v3319, 0
        %3338 = vmatpush.bf16.xpose.msra.mxu0 0
        %3339 = vmatpush.bf16.xpose.msra.mxu0 0
        %3340 = vmatpush.bf16.xpose.msra.mxu0 0
        %3341 = vmatpush.bf16.xpose.msra.mxu0 0
        %3342 = vmatpush.bf16.xpose.msra.mxu0 0
        %3343 = vmatpush.bf16.xpose.msra.mxu0 %v3336
        %3344 = vmatpush.bf16.xpose.msra.mxu0 %v3333
        %3345 = vmatpush.bf16.xpose.msra.mxu0 %v3330
        %3346 = vmatmul.bf16.gmra.mxu0 %v3321
        %v3347 = vpop.f32.mrf.mxu0
        %v3348 = vadd.f32 0.0, %v3347
        %v3349 = vpop.f32.mrf.mxu0
        %v3350 = vadd.f32 0.0, %v3349
        %3351 = vmatmul.bf16.gmra.mxu0 %v3324
        %v3352 = vpop.f32.mrf.mxu0
        %v3353 = vadd.f32 0.0, %v3352
        %v3354 = vpop.f32.mrf.mxu0
        %v3355 = vadd.f32 0.0, %v3354
        %3356 = vmatmul.bf16.gmra.mxu0 %v3327
        %v3357 = vpop.f32.mrf.mxu0
        %v3358 = vadd.f32 0.0, %v3357
        %v3359 = vpop.f32.mrf.mxu0
        %v3360 = vadd.f32 0.0, %v3359
        %3361 = vdwg.mxu0
        %v3368 = vunpack.c.l.b16 %v2696
        %v3369 = vunpack.c.l.b16 %v2697
        %v3370 = vunpack.c.l.b16 %v2698
        %v3371 = vunpack.c.l.b16 %v2699
        %v3372 = vunpack.c.l.b16 %v2700
        %v3373 = vunpack.c.l.b16 %v2701
        %v3374 = vpack.c.b16 %v3369, %v3368
        %v3375 = vpack.c.b16 %v3371, %v3370
        %v3376 = vpack.c.b16 %v3373, %v3372
        %3377 = vrot.lane.b32.xlu0 %v3374, 112
        %v3378 = vpop.permute.xlu0 %3377
        %3379 = vrot.lane.b32.xlu0 %v3375, 112
        %v3380 = vpop.permute.xlu0 %3379
        %3381 = vrot.lane.b32.xlu0 %v3376, 112
        %v3382 = vpop.permute.xlu0 %3381
        %v3384 = vsel %vm2539, %v3374, 0
        %v3387 = vsel %vm2539, %v3375, 0
        %v3390 = vsel %vm2539, %v3376, 0
        %v3393 = vsel %vm2539, %v3378, 0
        %v3396 = vsel %vm2539, %v3380, 0
        %v3399 = vsel %vm2539, %v3382, 0
        %3401 = vmatpush.bf16.xpose.msra.mxu0 0
        %3402 = vmatpush.bf16.xpose.msra.mxu0 0
        %3403 = vmatpush.bf16.xpose.msra.mxu0 0
        %3404 = vmatpush.bf16.xpose.msra.mxu0 0
        %3405 = vmatpush.bf16.xpose.msra.mxu0 0
        %3406 = vmatpush.bf16.xpose.msra.mxu0 %v3399
        %3407 = vmatpush.bf16.xpose.msra.mxu0 %v3396
        %3408 = vmatpush.bf16.xpose.msra.mxu0 %v3393
        %3409 = vmatmul.bf16.gmra.mxu0 %v3384
        %v3410 = vpop.f32.mrf.mxu0
        %v3411 = vadd.f32 0.0, %v3410
        %v3412 = vpop.f32.mrf.mxu0
        %v3413 = vadd.f32 0.0, %v3412
        %3414 = vmatmul.bf16.gmra.mxu0 %v3387
        %v3415 = vpop.f32.mrf.mxu0
        %v3416 = vadd.f32 0.0, %v3415
        %v3417 = vpop.f32.mrf.mxu0
        %v3418 = vadd.f32 0.0, %v3417
        %3419 = vmatmul.bf16.gmra.mxu0 %v3390
        %v3420 = vpop.f32.mrf.mxu0
        %v3421 = vadd.f32 0.0, %v3420
        %v3422 = vpop.f32.mrf.mxu0
        %v3423 = vadd.f32 0.0, %v3422
        %3424 = vdwg.mxu0
        %v3431 = vunpack.c.l.b16 %v2702
        %v3432 = vunpack.c.l.b16 %v2703
        %v3433 = vunpack.c.l.b16 %v2704
        %v3434 = vunpack.c.l.b16 %v2705
        %v3435 = vunpack.c.l.b16 %v2706
        %v3436 = vunpack.c.l.b16 %v2707
        %v3437 = vpack.c.b16 %v3432, %v3431
        %v3438 = vpack.c.b16 %v3434, %v3433
        %v3439 = vpack.c.b16 %v3436, %v3435
        %3440 = vrot.lane.b32.xlu0 %v3437, 112
        %v3441 = vpop.permute.xlu0 %3440
        %3442 = vrot.lane.b32.xlu0 %v3438, 112
        %v3443 = vpop.permute.xlu0 %3442
        %3444 = vrot.lane.b32.xlu0 %v3439, 112
        %v3445 = vpop.permute.xlu0 %3444
        %v3447 = vsel %vm2539, %v3437, 0
        %v3450 = vsel %vm2539, %v3438, 0
        %v3453 = vsel %vm2539, %v3439, 0
        %v3456 = vsel %vm2539, %v3441, 0
        %v3459 = vsel %vm2539, %v3443, 0
        %v3462 = vsel %vm2539, %v3445, 0
        %3464 = vmatpush.bf16.xpose.msra.mxu0 0
        %3465 = vmatpush.bf16.xpose.msra.mxu0 0
        %3466 = vmatpush.bf16.xpose.msra.mxu0 0
        %3467 = vmatpush.bf16.xpose.msra.mxu0 0
        %3468 = vmatpush.bf16.xpose.msra.mxu0 0
        %3469 = vmatpush.bf16.xpose.msra.mxu0 %v3462
        %3470 = vmatpush.bf16.xpose.msra.mxu0 %v3459
        %3471 = vmatpush.bf16.xpose.msra.mxu0 %v3456
        %3472 = vmatmul.bf16.gmra.mxu0 %v3447
        %v3473 = vpop.f32.mrf.mxu0
        %v3474 = vadd.f32 0.0, %v3473
        %v3475 = vpop.f32.mrf.mxu0
        %v3476 = vadd.f32 0.0, %v3475
        %3477 = vmatmul.bf16.gmra.mxu0 %v3450
        %v3478 = vpop.f32.mrf.mxu0
        %v3479 = vadd.f32 0.0, %v3478
        %v3480 = vpop.f32.mrf.mxu0
        %v3481 = vadd.f32 0.0, %v3480
        %3482 = vmatmul.bf16.gmra.mxu0 %v3453
        %v3483 = vpop.f32.mrf.mxu0
        %v3484 = vadd.f32 0.0, %v3483
        %v3485 = vpop.f32.mrf.mxu0
        %v3486 = vadd.f32 0.0, %v3485
        %3487 = vdwg.mxu0
        %v3494 = vunpack.c.l.b16 %v2708
        %v3495 = vunpack.c.l.b16 %v2709
        %v3496 = vunpack.c.l.b16 %v2710
        %v3497 = vunpack.c.l.b16 %v2711
        %v3498 = vunpack.c.l.b16 %v2712
        %v3499 = vunpack.c.l.b16 %v2713
        %v3500 = vpack.c.b16 %v3495, %v3494
        %v3501 = vpack.c.b16 %v3497, %v3496
        %v3502 = vpack.c.b16 %v3499, %v3498
        %3503 = vrot.lane.b32.xlu0 %v3500, 112
        %v3504 = vpop.permute.xlu0 %3503
        %3505 = vrot.lane.b32.xlu0 %v3501, 112
        %v3506 = vpop.permute.xlu0 %3505
        %3507 = vrot.lane.b32.xlu0 %v3502, 112
        %v3508 = vpop.permute.xlu0 %3507
        %v3510 = vsel %vm2539, %v3500, 0
        %v3513 = vsel %vm2539, %v3501, 0
        %v3516 = vsel %vm2539, %v3502, 0
        %v3519 = vsel %vm2539, %v3504, 0
        %v3522 = vsel %vm2539, %v3506, 0
        %v3525 = vsel %vm2539, %v3508, 0
        %3527 = vmatpush.bf16.xpose.msra.mxu0 0
        %3528 = vmatpush.bf16.xpose.msra.mxu0 0
        %3529 = vmatpush.bf16.xpose.msra.mxu0 0
        %3530 = vmatpush.bf16.xpose.msra.mxu0 0
        %3531 = vmatpush.bf16.xpose.msra.mxu0 0
        %3532 = vmatpush.bf16.xpose.msra.mxu0 %v3525
        %3533 = vmatpush.bf16.xpose.msra.mxu0 %v3522
        %3534 = vmatpush.bf16.xpose.msra.mxu0 %v3519
        %3535 = vmatmul.bf16.gmra.mxu0 %v3510
        %v3536 = vpop.f32.mrf.mxu0
        %v3537 = vadd.f32 0.0, %v3536
        %v3538 = vpop.f32.mrf.mxu0
        %v3539 = vadd.f32 0.0, %v3538
        %3540 = vmatmul.bf16.gmra.mxu0 %v3513
        %v3541 = vpop.f32.mrf.mxu0
        %v3542 = vadd.f32 0.0, %v3541
        %v3543 = vpop.f32.mrf.mxu0
        %v3544 = vadd.f32 0.0, %v3543
        %3545 = vmatmul.bf16.gmra.mxu0 %v3516
        %v3546 = vpop.f32.mrf.mxu0
        %v3547 = vadd.f32 0.0, %v3546
        %v3548 = vpop.f32.mrf.mxu0
        %v3549 = vadd.f32 0.0, %v3548
        %3550 = vdwg.mxu0
        %v3557 = vunpack.c.l.b16 %v2714
        %v3558 = vunpack.c.l.b16 %v2715
        %v3559 = vunpack.c.l.b16 %v2716
        %v3560 = vunpack.c.l.b16 %v2717
        %v3561 = vunpack.c.l.b16 %v2718
        %v3562 = vunpack.c.l.b16 %v2719
        %v3563 = vpack.c.b16 %v3558, %v3557
        %v3564 = vpack.c.b16 %v3560, %v3559
        %v3565 = vpack.c.b16 %v3562, %v3561
        %3566 = vrot.lane.b32.xlu0 %v3563, 112
        %v3567 = vpop.permute.xlu0 %3566
        %3568 = vrot.lane.b32.xlu0 %v3564, 112
        %v3569 = vpop.permute.xlu0 %3568
        %3570 = vrot.lane.b32.xlu0 %v3565, 112
        %v3571 = vpop.permute.xlu0 %3570
        %v3573 = vsel %vm2539, %v3563, 0
        %v3576 = vsel %vm2539, %v3564, 0
        %v3579 = vsel %vm2539, %v3565, 0
        %v3582 = vsel %vm2539, %v3567, 0
        %v3585 = vsel %vm2539, %v3569, 0
        %v3588 = vsel %vm2539, %v3571, 0
        %3590 = vmatpush.bf16.xpose.msra.mxu0 0
        %3591 = vmatpush.bf16.xpose.msra.mxu0 0
        %3592 = vmatpush.bf16.xpose.msra.mxu0 0
        %3593 = vmatpush.bf16.xpose.msra.mxu0 0
        %3594 = vmatpush.bf16.xpose.msra.mxu0 0
        %3595 = vmatpush.bf16.xpose.msra.mxu0 %v3588
        %3596 = vmatpush.bf16.xpose.msra.mxu0 %v3585
        %3597 = vmatpush.bf16.xpose.msra.mxu0 %v3582
        %3598 = vmatmul.bf16.gmra.mxu0 %v3573
        %v3599 = vpop.f32.mrf.mxu0
        %v3600 = vadd.f32 0.0, %v3599
        %v3601 = vpop.f32.mrf.mxu0
        %v3602 = vadd.f32 0.0, %v3601
        %3603 = vmatmul.bf16.gmra.mxu0 %v3576
        %v3604 = vpop.f32.mrf.mxu0
        %v3605 = vadd.f32 0.0, %v3604
        %v3606 = vpop.f32.mrf.mxu0
        %v3607 = vadd.f32 0.0, %v3606
        %3608 = vmatmul.bf16.gmra.mxu0 %v3579
        %v3609 = vpop.f32.mrf.mxu0
        %v3610 = vadd.f32 0.0, %v3609
        %v3611 = vpop.f32.mrf.mxu0
        %v3612 = vadd.f32 0.0, %v3611
        %3613 = vdwg.mxu0
        %v3620 = vunpack.c.l.b16 %v2720
        %v3621 = vunpack.c.l.b16 %v2721
        %v3622 = vunpack.c.l.b16 %v2722
        %v3623 = vunpack.c.l.b16 %v2723
        %v3624 = vunpack.c.l.b16 %v2724
        %v3625 = vunpack.c.l.b16 %v2725
        %v3626 = vpack.c.b16 %v3621, %v3620
        %v3627 = vpack.c.b16 %v3623, %v3622
        %v3628 = vpack.c.b16 %v3625, %v3624
        %3629 = vrot.lane.b32.xlu0 %v3626, 112
        %v3630 = vpop.permute.xlu0 %3629
        %3631 = vrot.lane.b32.xlu0 %v3627, 112
        %v3632 = vpop.permute.xlu0 %3631
        %3633 = vrot.lane.b32.xlu0 %v3628, 112
        %v3634 = vpop.permute.xlu0 %3633
        %v3636 = vsel %vm2539, %v3626, 0
        %v3639 = vsel %vm2539, %v3627, 0
        %v3642 = vsel %vm2539, %v3628, 0
        %v3645 = vsel %vm2539, %v3630, 0
        %v3648 = vsel %vm2539, %v3632, 0
        %v3651 = vsel %vm2539, %v3634, 0
        %3653 = vmatpush.bf16.xpose.msra.mxu0 0
        %3654 = vmatpush.bf16.xpose.msra.mxu0 0
        %3655 = vmatpush.bf16.xpose.msra.mxu0 0
        %3656 = vmatpush.bf16.xpose.msra.mxu0 0
        %3657 = vmatpush.bf16.xpose.msra.mxu0 0
        %3658 = vmatpush.bf16.xpose.msra.mxu0 %v3651
        %3659 = vmatpush.bf16.xpose.msra.mxu0 %v3648
        %3660 = vmatpush.bf16.xpose.msra.mxu0 %v3645
        %3661 = vmatmul.bf16.gmra.mxu0 %v3636
        %v3662 = vpop.f32.mrf.mxu0
        %v3663 = vadd.f32 0.0, %v3662
        %v3664 = vpop.f32.mrf.mxu0
        %v3665 = vadd.f32 0.0, %v3664
        %3666 = vmatmul.bf16.gmra.mxu0 %v3639
        %v3667 = vpop.f32.mrf.mxu0
        %v3668 = vadd.f32 0.0, %v3667
        %v3669 = vpop.f32.mrf.mxu0
        %v3670 = vadd.f32 0.0, %v3669
        %3671 = vmatmul.bf16.gmra.mxu0 %v3642
        %v3672 = vpop.f32.mrf.mxu0
        %v3673 = vadd.f32 0.0, %v3672
        %v3674 = vpop.f32.mrf.mxu0
        %v3675 = vadd.f32 0.0, %v3674
        %3676 = vdwg.mxu0
        %v3683 = vunpack.c.l.b16 %v2726
        %v3684 = vunpack.c.l.b16 %v2727
        %v3685 = vunpack.c.l.b16 %v2728
        %v3686 = vunpack.c.l.b16 %v2729
        %v3687 = vunpack.c.l.b16 %v2730
        %v3688 = vunpack.c.l.b16 %v2731
        %v3689 = vpack.c.b16 %v3684, %v3683
        %v3690 = vpack.c.b16 %v3686, %v3685
        %v3691 = vpack.c.b16 %v3688, %v3687
        %3692 = vrot.lane.b32.xlu0 %v3689, 112
        %v3693 = vpop.permute.xlu0 %3692
        %3694 = vrot.lane.b32.xlu0 %v3690, 112
        %v3695 = vpop.permute.xlu0 %3694
        %3696 = vrot.lane.b32.xlu0 %v3691, 112
        %v3697 = vpop.permute.xlu0 %3696
        %v3699 = vsel %vm2539, %v3689, 0
        %v3702 = vsel %vm2539, %v3690, 0
        %v3705 = vsel %vm2539, %v3691, 0
        %v3708 = vsel %vm2539, %v3693, 0
        %v3711 = vsel %vm2539, %v3695, 0
        %v3714 = vsel %vm2539, %v3697, 0
        %3716 = vmatpush.bf16.xpose.msra.mxu0 0
        %3717 = vmatpush.bf16.xpose.msra.mxu0 0
        %3718 = vmatpush.bf16.xpose.msra.mxu0 0
        %3719 = vmatpush.bf16.xpose.msra.mxu0 0
        %3720 = vmatpush.bf16.xpose.msra.mxu0 0
        %3721 = vmatpush.bf16.xpose.msra.mxu0 %v3714
        %3722 = vmatpush.bf16.xpose.msra.mxu0 %v3711
        %3723 = vmatpush.bf16.xpose.msra.mxu0 %v3708
        %3724 = vmatmul.bf16.gmra.mxu0 %v3699
        %v3725 = vpop.f32.mrf.mxu0
        %v3726 = vadd.f32 0.0, %v3725
        %v3727 = vpop.f32.mrf.mxu0
        %v3728 = vadd.f32 0.0, %v3727
        %3729 = vmatmul.bf16.gmra.mxu0 %v3702
        %v3730 = vpop.f32.mrf.mxu0
        %v3731 = vadd.f32 0.0, %v3730
        %v3732 = vpop.f32.mrf.mxu0
        %v3733 = vadd.f32 0.0, %v3732
        %3734 = vmatmul.bf16.gmra.mxu0 %v3705
        %v3735 = vpop.f32.mrf.mxu0
        %v3736 = vadd.f32 0.0, %v3735
        %v3737 = vpop.f32.mrf.mxu0
        %v3738 = vadd.f32 0.0, %v3737
        %3739 = vdwg.mxu0
        %vm3740 = vcmask 392192
        %v3741 = vsel %vm3740, %v2781, -inf
        %3742 = vmax.xlane.f32.xlu0 %v3741
        %v3743 = vpop.xlane.xlu0 %3742
        %v3744 = vsel %vm3740, %v2783, -inf
        %3745 = vmax.xlane.f32.xlu0 %v3744
        %v3746 = vpop.xlane.xlu0 %3745
        %v3747 = vsel %vm3740, %v2786, -inf
        %3748 = vmax.xlane.f32.xlu0 %v3747
        %v3749 = vpop.xlane.xlu0 %3748
        %v3750 = vsel %vm3740, %v2788, -inf
        %3751 = vmax.xlane.f32.xlu0 %v3750
        %v3752 = vpop.xlane.xlu0 %3751
        %v3753 = vsel %vm3740, %v2791, -inf
        %3754 = vmax.xlane.f32.xlu0 %v3753
        %v3755 = vpop.xlane.xlu0 %3754
        %v3756 = vsel %vm3740, %v2793, -inf
        %3757 = vmax.xlane.f32.xlu0 %v3756
        %v3758 = vpop.xlane.xlu0 %3757
        %v3759 = vsel %vm3740, %v2844, -inf
        %3760 = vmax.xlane.f32.xlu0 %v3759
        %v3761 = vpop.xlane.xlu0 %3760
        %v3762 = vsel %vm3740, %v2846, -inf
        %3763 = vmax.xlane.f32.xlu0 %v3762
        %v3764 = vpop.xlane.xlu0 %3763
        %v3765 = vsel %vm3740, %v2849, -inf
        %3766 = vmax.xlane.f32.xlu0 %v3765
        %v3767 = vpop.xlane.xlu0 %3766
        %v3768 = vsel %vm3740, %v2851, -inf
        %3769 = vmax.xlane.f32.xlu0 %v3768
        %v3770 = vpop.xlane.xlu0 %3769
        %v3771 = vsel %vm3740, %v2854, -inf
        %3772 = vmax.xlane.f32.xlu0 %v3771
        %v3773 = vpop.xlane.xlu0 %3772
        %v3774 = vsel %vm3740, %v2856, -inf
        %3775 = vmax.xlane.f32.xlu0 %v3774
        %v3776 = vpop.xlane.xlu0 %3775
        %v3777 = vsel %vm3740, %v2907, -inf
        %3778 = vmax.xlane.f32.xlu0 %v3777
        %v3779 = vpop.xlane.xlu0 %3778
        %v3780 = vsel %vm3740, %v2909, -inf
        %3781 = vmax.xlane.f32.xlu0 %v3780
        %v3782 = vpop.xlane.xlu0 %3781
        %v3783 = vsel %vm3740, %v2912, -inf
        %3784 = vmax.xlane.f32.xlu0 %v3783
        %v3785 = vpop.xlane.xlu0 %3784
        %v3786 = vsel %vm3740, %v2914, -inf
        %3787 = vmax.xlane.f32.xlu0 %v3786
        %v3788 = vpop.xlane.xlu0 %3787
        %v3789 = vsel %vm3740, %v2917, -inf
        %3790 = vmax.xlane.f32.xlu0 %v3789
        %v3791 = vpop.xlane.xlu0 %3790
        %v3792 = vsel %vm3740, %v2919, -inf
        %3793 = vmax.xlane.f32.xlu0 %v3792
        %v3794 = vpop.xlane.xlu0 %3793
        %v3795 = vsel %vm3740, %v2970, -inf
        %3796 = vmax.xlane.f32.xlu0 %v3795
        %v3797 = vpop.xlane.xlu0 %3796
        %v3798 = vsel %vm3740, %v2972, -inf
        %3799 = vmax.xlane.f32.xlu0 %v3798
        %v3800 = vpop.xlane.xlu0 %3799
        %v3801 = vsel %vm3740, %v2975, -inf
        %3802 = vmax.xlane.f32.xlu0 %v3801
        %v3803 = vpop.xlane.xlu0 %3802
        %v3804 = vsel %vm3740, %v2977, -inf
        %3805 = vmax.xlane.f32.xlu0 %v3804
        %v3806 = vpop.xlane.xlu0 %3805
        %v3807 = vsel %vm3740, %v2980, -inf
        %3808 = vmax.xlane.f32.xlu0 %v3807
        %v3809 = vpop.xlane.xlu0 %3808
        %v3810 = vsel %vm3740, %v2982, -inf
        %3811 = vmax.xlane.f32.xlu0 %v3810
        %v3812 = vpop.xlane.xlu0 %3811
        %v3813 = vsel %vm3740, %v3033, -inf
        %3814 = vmax.xlane.f32.xlu0 %v3813
        %v3815 = vpop.xlane.xlu0 %3814
        %v3816 = vsel %vm3740, %v3035, -inf
        %3817 = vmax.xlane.f32.xlu0 %v3816
        %v3818 = vpop.xlane.xlu0 %3817
        %v3819 = vsel %vm3740, %v3038, -inf
        %3820 = vmax.xlane.f32.xlu0 %v3819
        %v3821 = vpop.xlane.xlu0 %3820
        %v3822 = vsel %vm3740, %v3040, -inf
        %3823 = vmax.xlane.f32.xlu0 %v3822
        %v3824 = vpop.xlane.xlu0 %3823
        %v3825 = vsel %vm3740, %v3043, -inf
        %3826 = vmax.xlane.f32.xlu0 %v3825
        %v3827 = vpop.xlane.xlu0 %3826
        %v3828 = vsel %vm3740, %v3045, -inf
        %3829 = vmax.xlane.f32.xlu0 %v3828
        %v3830 = vpop.xlane.xlu0 %3829
        %v3831 = vsel %vm3740, %v3096, -inf
        %3832 = vmax.xlane.f32.xlu0 %v3831
        %v3833 = vpop.xlane.xlu0 %3832
        %v3834 = vsel %vm3740, %v3098, -inf
        %3835 = vmax.xlane.f32.xlu0 %v3834
        %v3836 = vpop.xlane.xlu0 %3835
        %v3837 = vsel %vm3740, %v3101, -inf
        %3838 = vmax.xlane.f32.xlu0 %v3837
        %v3839 = vpop.xlane.xlu0 %3838
        %v3840 = vsel %vm3740, %v3103, -inf
        %3841 = vmax.xlane.f32.xlu0 %v3840
        %v3842 = vpop.xlane.xlu0 %3841
        %v3843 = vsel %vm3740, %v3106, -inf
        %3844 = vmax.xlane.f32.xlu0 %v3843
        %v3845 = vpop.xlane.xlu0 %3844
        %v3846 = vsel %vm3740, %v3108, -inf
        %3847 = vmax.xlane.f32.xlu0 %v3846
        %v3848 = vpop.xlane.xlu0 %3847
        %v3849 = vsel %vm3740, %v3159, -inf
        %3850 = vmax.xlane.f32.xlu0 %v3849
        %v3851 = vpop.xlane.xlu0 %3850
        %v3852 = vsel %vm3740, %v3161, -inf
        %3853 = vmax.xlane.f32.xlu0 %v3852
        %v3854 = vpop.xlane.xlu0 %3853
        %v3855 = vsel %vm3740, %v3164, -inf
        %3856 = vmax.xlane.f32.xlu0 %v3855
        %v3857 = vpop.xlane.xlu0 %3856
        %v3858 = vsel %vm3740, %v3166, -inf
        %3859 = vmax.xlane.f32.xlu0 %v3858
        %v3860 = vpop.xlane.xlu0 %3859
        %v3861 = vsel %vm3740, %v3169, -inf
        %3862 = vmax.xlane.f32.xlu0 %v3861
        %v3863 = vpop.xlane.xlu0 %3862
        %v3864 = vsel %vm3740, %v3171, -inf
        %3865 = vmax.xlane.f32.xlu0 %v3864
        %v3866 = vpop.xlane.xlu0 %3865
        %v3867 = vsel %vm3740, %v3222, -inf
        %3868 = vmax.xlane.f32.xlu0 %v3867
        %v3869 = vpop.xlane.xlu0 %3868
        %v3870 = vsel %vm3740, %v3224, -inf
        %3871 = vmax.xlane.f32.xlu0 %v3870
        %v3872 = vpop.xlane.xlu0 %3871
        %v3873 = vsel %vm3740, %v3227, -inf
        %3874 = vmax.xlane.f32.xlu0 %v3873
        %v3875 = vpop.xlane.xlu0 %3874
        %v3876 = vsel %vm3740, %v3229, -inf
        %3877 = vmax.xlane.f32.xlu0 %v3876
        %v3878 = vpop.xlane.xlu0 %3877
        %v3879 = vsel %vm3740, %v3232, -inf
        %3880 = vmax.xlane.f32.xlu0 %v3879
        %v3881 = vpop.xlane.xlu0 %3880
        %v3882 = vsel %vm3740, %v3234, -inf
        %3883 = vmax.xlane.f32.xlu0 %v3882
        %v3884 = vpop.xlane.xlu0 %3883
        %v3885 = vsel %vm3740, %v3285, -inf
        %3886 = vmax.xlane.f32.xlu0 %v3885
        %v3887 = vpop.xlane.xlu0 %3886
        %v3888 = vsel %vm3740, %v3287, -inf
        %3889 = vmax.xlane.f32.xlu0 %v3888
        %v3890 = vpop.xlane.xlu0 %3889
        %v3891 = vsel %vm3740, %v3290, -inf
        %3892 = vmax.xlane.f32.xlu0 %v3891
        %v3893 = vpop.xlane.xlu0 %3892
        %v3894 = vsel %vm3740, %v3292, -inf
        %3895 = vmax.xlane.f32.xlu0 %v3894
        %v3896 = vpop.xlane.xlu0 %3895
        %v3897 = vsel %vm3740, %v3295, -inf
        %3898 = vmax.xlane.f32.xlu0 %v3897
        %v3899 = vpop.xlane.xlu0 %3898
        %v3900 = vsel %vm3740, %v3297, -inf
        %3901 = vmax.xlane.f32.xlu0 %v3900
        %v3902 = vpop.xlane.xlu0 %3901
        %v3903 = vsel %vm3740, %v3348, -inf
        %3904 = vmax.xlane.f32.xlu0 %v3903
        %v3905 = vpop.xlane.xlu0 %3904
        %v3906 = vsel %vm3740, %v3350, -inf
        %3907 = vmax.xlane.f32.xlu0 %v3906
        %v3908 = vpop.xlane.xlu0 %3907
        %v3909 = vsel %vm3740, %v3353, -inf
        %3910 = vmax.xlane.f32.xlu0 %v3909
        %v3911 = vpop.xlane.xlu0 %3910
        %v3912 = vsel %vm3740, %v3355, -inf
        %3913 = vmax.xlane.f32.xlu0 %v3912
        %v3914 = vpop.xlane.xlu0 %3913
        %v3915 = vsel %vm3740, %v3358, -inf
        %3916 = vmax.xlane.f32.xlu0 %v3915
        %v3917 = vpop.xlane.xlu0 %3916
        %v3918 = vsel %vm3740, %v3360, -inf
        %3919 = vmax.xlane.f32.xlu0 %v3918
        %v3920 = vpop.xlane.xlu0 %3919
        %v3921 = vsel %vm3740, %v3411, -inf
        %3922 = vmax.xlane.f32.xlu0 %v3921
        %v3923 = vpop.xlane.xlu0 %3922
        %v3924 = vsel %vm3740, %v3413, -inf
        %3925 = vmax.xlane.f32.xlu0 %v3924
        %v3926 = vpop.xlane.xlu0 %3925
        %v3927 = vsel %vm3740, %v3416, -inf
        %3928 = vmax.xlane.f32.xlu0 %v3927
        %v3929 = vpop.xlane.xlu0 %3928
        %v3930 = vsel %vm3740, %v3418, -inf
        %3931 = vmax.xlane.f32.xlu0 %v3930
        %v3932 = vpop.xlane.xlu0 %3931
        %v3933 = vsel %vm3740, %v3421, -inf
        %3934 = vmax.xlane.f32.xlu0 %v3933
        %v3935 = vpop.xlane.xlu0 %3934
        %v3936 = vsel %vm3740, %v3423, -inf
        %3937 = vmax.xlane.f32.xlu0 %v3936
        %v3938 = vpop.xlane.xlu0 %3937
        %v3939 = vsel %vm3740, %v3474, -inf
        %3940 = vmax.xlane.f32.xlu0 %v3939
        %v3941 = vpop.xlane.xlu0 %3940
        %v3942 = vsel %vm3740, %v3476, -inf
        %3943 = vmax.xlane.f32.xlu0 %v3942
        %v3944 = vpop.xlane.xlu0 %3943
        %v3945 = vsel %vm3740, %v3479, -inf
        %3946 = vmax.xlane.f32.xlu0 %v3945
        %v3947 = vpop.xlane.xlu0 %3946
        %v3948 = vsel %vm3740, %v3481, -inf
        %3949 = vmax.xlane.f32.xlu0 %v3948
        %v3950 = vpop.xlane.xlu0 %3949
        %v3951 = vsel %vm3740, %v3484, -inf
        %3952 = vmax.xlane.f32.xlu0 %v3951
        %v3953 = vpop.xlane.xlu0 %3952
        %v3954 = vsel %vm3740, %v3486, -inf
        %3955 = vmax.xlane.f32.xlu0 %v3954
        %v3956 = vpop.xlane.xlu0 %3955
        %v3957 = vsel %vm3740, %v3537, -inf
        %3958 = vmax.xlane.f32.xlu0 %v3957
        %v3959 = vpop.xlane.xlu0 %3958
        %v3960 = vsel %vm3740, %v3539, -inf
        %3961 = vmax.xlane.f32.xlu0 %v3960
        %v3962 = vpop.xlane.xlu0 %3961
        %v3963 = vsel %vm3740, %v3542, -inf
        %3964 = vmax.xlane.f32.xlu0 %v3963
        %v3965 = vpop.xlane.xlu0 %3964
        %v3966 = vsel %vm3740, %v3544, -inf
        %3967 = vmax.xlane.f32.xlu0 %v3966
        %v3968 = vpop.xlane.xlu0 %3967
        %v3969 = vsel %vm3740, %v3547, -inf
        %3970 = vmax.xlane.f32.xlu0 %v3969
        %v3971 = vpop.xlane.xlu0 %3970
        %v3972 = vsel %vm3740, %v3549, -inf
        %3973 = vmax.xlane.f32.xlu0 %v3972
        %v3974 = vpop.xlane.xlu0 %3973
        %v3975 = vsel %vm3740, %v3600, -inf
        %3976 = vmax.xlane.f32.xlu0 %v3975
        %v3977 = vpop.xlane.xlu0 %3976
        %v3978 = vsel %vm3740, %v3602, -inf
        %3979 = vmax.xlane.f32.xlu0 %v3978
        %v3980 = vpop.xlane.xlu0 %3979
        %v3981 = vsel %vm3740, %v3605, -inf
        %3982 = vmax.xlane.f32.xlu0 %v3981
        %v3983 = vpop.xlane.xlu0 %3982
        %v3984 = vsel %vm3740, %v3607, -inf
        %3985 = vmax.xlane.f32.xlu0 %v3984
        %v3986 = vpop.xlane.xlu0 %3985
        %v3987 = vsel %vm3740, %v3610, -inf
        %3988 = vmax.xlane.f32.xlu0 %v3987
        %v3989 = vpop.xlane.xlu0 %3988
        %v3990 = vsel %vm3740, %v3612, -inf
        %3991 = vmax.xlane.f32.xlu0 %v3990
        %v3992 = vpop.xlane.xlu0 %3991
        %v3993 = vsel %vm3740, %v3663, -inf
        %3994 = vmax.xlane.f32.xlu0 %v3993
        %v3995 = vpop.xlane.xlu0 %3994
        %v3996 = vsel %vm3740, %v3665, -inf
        %3997 = vmax.xlane.f32.xlu0 %v3996
        %v3998 = vpop.xlane.xlu0 %3997
        %v3999 = vsel %vm3740, %v3668, -inf
        %4000 = vmax.xlane.f32.xlu0 %v3999
        %v4001 = vpop.xlane.xlu0 %4000
        %v4002 = vsel %vm3740, %v3670, -inf
        %4003 = vmax.xlane.f32.xlu0 %v4002
        %v4004 = vpop.xlane.xlu0 %4003
        %v4005 = vsel %vm3740, %v3673, -inf
        %4006 = vmax.xlane.f32.xlu0 %v4005
        %v4007 = vpop.xlane.xlu0 %4006
        %v4008 = vsel %vm3740, %v3675, -inf
        %4009 = vmax.xlane.f32.xlu0 %v4008
        %v4010 = vpop.xlane.xlu0 %4009
        %v4011 = vsel %vm3740, %v3726, -inf
        %4012 = vmax.xlane.f32.xlu0 %v4011
        %v4013 = vpop.xlane.xlu0 %4012
        %v4014 = vsel %vm3740, %v3728, -inf
        %4015 = vmax.xlane.f32.xlu0 %v4014
        %v4016 = vpop.xlane.xlu0 %4015
        %v4017 = vsel %vm3740, %v3731, -inf
        %4018 = vmax.xlane.f32.xlu0 %v4017
        %v4019 = vpop.xlane.xlu0 %4018
        %v4020 = vsel %vm3740, %v3733, -inf
        %4021 = vmax.xlane.f32.xlu0 %v4020
        %v4022 = vpop.xlane.xlu0 %4021
        %v4023 = vsel %vm3740, %v3736, -inf
        %4024 = vmax.xlane.f32.xlu0 %v4023
        %v4025 = vpop.xlane.xlu0 %4024
        %v4026 = vsel %vm3740, %v3738, -inf
        %4027 = vmax.xlane.f32.xlu0 %v4026
        %v4028 = vpop.xlane.xlu0 %4027
        %v4029 = vsub.f32 %v2781, %v3743
        %v4030 = vsub.f32 %v2783, %v3746
        %v4031 = vsub.f32 %v2786, %v3749
        %v4032 = vsub.f32 %v2788, %v3752
        %v4033 = vsub.f32 %v2791, %v3755
        %v4034 = vsub.f32 %v2793, %v3758
        %v4035 = vsub.f32 %v2844, %v3761
        %v4036 = vsub.f32 %v2846, %v3764
        %v4037 = vsub.f32 %v2849, %v3767
        %v4038 = vsub.f32 %v2851, %v3770
        %v4039 = vsub.f32 %v2854, %v3773
        %v4040 = vsub.f32 %v2856, %v3776
        %v4041 = vsub.f32 %v2907, %v3779
        %v4042 = vsub.f32 %v2909, %v3782
        %v4043 = vsub.f32 %v2912, %v3785
        %v4044 = vsub.f32 %v2914, %v3788
        %v4045 = vsub.f32 %v2917, %v3791
        %v4046 = vsub.f32 %v2919, %v3794
        %v4047 = vsub.f32 %v2970, %v3797
        %v4048 = vsub.f32 %v2972, %v3800
        %v4049 = vsub.f32 %v2975, %v3803
        %v4050 = vsub.f32 %v2977, %v3806
        %v4051 = vsub.f32 %v2980, %v3809
        %v4052 = vsub.f32 %v2982, %v3812
        %v4053 = vsub.f32 %v3033, %v3815
        %v4054 = vsub.f32 %v3035, %v3818
        %v4055 = vsub.f32 %v3038, %v3821
        %v4056 = vsub.f32 %v3040, %v3824
        %v4057 = vsub.f32 %v3043, %v3827
        %v4058 = vsub.f32 %v3045, %v3830
        %v4059 = vsub.f32 %v3096, %v3833
        %v4060 = vsub.f32 %v3098, %v3836
        %v4061 = vsub.f32 %v3101, %v3839
        %v4062 = vsub.f32 %v3103, %v3842
        %v4063 = vsub.f32 %v3106, %v3845
        %v4064 = vsub.f32 %v3108, %v3848
        %v4065 = vsub.f32 %v3159, %v3851
        %v4066 = vsub.f32 %v3161, %v3854
        %v4067 = vsub.f32 %v3164, %v3857
        %v4068 = vsub.f32 %v3166, %v3860
        %v4069 = vsub.f32 %v3169, %v3863
        %v4070 = vsub.f32 %v3171, %v3866
        %v4071 = vsub.f32 %v3222, %v3869
        %v4072 = vsub.f32 %v3224, %v3872
        %v4073 = vsub.f32 %v3227, %v3875
        %v4074 = vsub.f32 %v3229, %v3878
        %v4075 = vsub.f32 %v3232, %v3881
        %v4076 = vsub.f32 %v3234, %v3884
        %v4077 = vsub.f32 %v3285, %v3887
        %v4078 = vsub.f32 %v3287, %v3890
        %v4079 = vsub.f32 %v3290, %v3893
        %v4080 = vsub.f32 %v3292, %v3896
        %v4081 = vsub.f32 %v3295, %v3899
        %v4082 = vsub.f32 %v3297, %v3902
        %v4083 = vsub.f32 %v3348, %v3905
        %v4084 = vsub.f32 %v3350, %v3908
        %v4085 = vsub.f32 %v3353, %v3911
        %v4086 = vsub.f32 %v3355, %v3914
        %v4087 = vsub.f32 %v3358, %v3917
        %v4088 = vsub.f32 %v3360, %v3920
        %v4089 = vsub.f32 %v3411, %v3923
        %v4090 = vsub.f32 %v3413, %v3926
        %v4091 = vsub.f32 %v3416, %v3929
        %v4092 = vsub.f32 %v3418, %v3932
        %v4093 = vsub.f32 %v3421, %v3935
        %v4094 = vsub.f32 %v3423, %v3938
        %v4095 = vsub.f32 %v3474, %v3941
        %v4096 = vsub.f32 %v3476, %v3944
        %v4097 = vsub.f32 %v3479, %v3947
        %v4098 = vsub.f32 %v3481, %v3950
        %v4099 = vsub.f32 %v3484, %v3953
        %v4100 = vsub.f32 %v3486, %v3956
        %v4101 = vsub.f32 %v3537, %v3959
        %v4102 = vsub.f32 %v3539, %v3962
        %v4103 = vsub.f32 %v3542, %v3965
        %v4104 = vsub.f32 %v3544, %v3968
        %v4105 = vsub.f32 %v3547, %v3971
        %v4106 = vsub.f32 %v3549, %v3974
        %v4107 = vsub.f32 %v3600, %v3977
        %v4108 = vsub.f32 %v3602, %v3980
        %v4109 = vsub.f32 %v3605, %v3983
        %v4110 = vsub.f32 %v3607, %v3986
        %v4111 = vsub.f32 %v3610, %v3989
        %v4112 = vsub.f32 %v3612, %v3992
        %v4113 = vsub.f32 %v3663, %v3995
        %v4114 = vsub.f32 %v3665, %v3998
        %v4115 = vsub.f32 %v3668, %v4001
        %v4116 = vsub.f32 %v3670, %v4004
        %v4117 = vsub.f32 %v3673, %v4007
        %v4118 = vsub.f32 %v3675, %v4010
        %v4119 = vsub.f32 %v3726, %v4013
        %v4120 = vsub.f32 %v3728, %v4016
        %v4121 = vsub.f32 %v3731, %v4019
        %v4122 = vsub.f32 %v3733, %v4022
        %v4123 = vsub.f32 %v3736, %v4025
        %v4124 = vsub.f32 %v3738, %v4028
        %v4125 = vmul.f32 %v4029, 1.442695
        %v4126 = vpow.pop %v4125
        %v4127 = vmul.f32 %v4030, 1.442695
        %v4128 = vpow.pop %v4127
        %v4129 = vmul.f32 %v4031, 1.442695
        %v4130 = vpow.pop %v4129
        %v4131 = vmul.f32 %v4032, 1.442695
        %v4132 = vpow.pop %v4131
        %v4133 = vmul.f32 %v4033, 1.442695
        %v4134 = vpow.pop %v4133
        %v4135 = vmul.f32 %v4034, 1.442695
        %v4136 = vpow.pop %v4135
        %v4137 = vmul.f32 %v4035, 1.442695
        %v4138 = vpow.pop %v4137
        %v4139 = vmul.f32 %v4036, 1.442695
        %v4140 = vpow.pop %v4139
        %v4141 = vmul.f32 %v4037, 1.442695
        %v4142 = vpow.pop %v4141
        %v4143 = vmul.f32 %v4038, 1.442695
        %v4144 = vpow.pop %v4143
        %v4145 = vmul.f32 %v4039, 1.442695
        %v4146 = vpow.pop %v4145
        %v4147 = vmul.f32 %v4040, 1.442695
        %v4148 = vpow.pop %v4147
        %v4149 = vmul.f32 %v4041, 1.442695
        %v4150 = vpow.pop %v4149
        %v4151 = vmul.f32 %v4042, 1.442695
        %v4152 = vpow.pop %v4151
        %v4153 = vmul.f32 %v4043, 1.442695
        %v4154 = vpow.pop %v4153
        %v4155 = vmul.f32 %v4044, 1.442695
        %v4156 = vpow.pop %v4155
        %v4157 = vmul.f32 %v4045, 1.442695
        %v4158 = vpow.pop %v4157
        %v4159 = vmul.f32 %v4046, 1.442695
        %v4160 = vpow.pop %v4159
        %v4161 = vmul.f32 %v4047, 1.442695
        %v4162 = vpow.pop %v4161
        %v4163 = vmul.f32 %v4048, 1.442695
        %v4164 = vpow.pop %v4163
        %v4165 = vmul.f32 %v4049, 1.442695
        %v4166 = vpow.pop %v4165
        %v4167 = vmul.f32 %v4050, 1.442695
        %v4168 = vpow.pop %v4167
        %v4169 = vmul.f32 %v4051, 1.442695
        %v4170 = vpow.pop %v4169
        %v4171 = vmul.f32 %v4052, 1.442695
        %v4172 = vpow.pop %v4171
        %v4173 = vmul.f32 %v4053, 1.442695
        %v4174 = vpow.pop %v4173
        %v4175 = vmul.f32 %v4054, 1.442695
        %v4176 = vpow.pop %v4175
        %v4177 = vmul.f32 %v4055, 1.442695
        %v4178 = vpow.pop %v4177
        %v4179 = vmul.f32 %v4056, 1.442695
        %v4180 = vpow.pop %v4179
        %v4181 = vmul.f32 %v4057, 1.442695
        %v4182 = vpow.pop %v4181
        %v4183 = vmul.f32 %v4058, 1.442695
        %v4184 = vpow.pop %v4183
        %v4185 = vmul.f32 %v4059, 1.442695
        %v4186 = vpow.pop %v4185
        %v4187 = vmul.f32 %v4060, 1.442695
        %v4188 = vpow.pop %v4187
        %v4189 = vmul.f32 %v4061, 1.442695
        %v4190 = vpow.pop %v4189
        %v4191 = vmul.f32 %v4062, 1.442695
        %v4192 = vpow.pop %v4191
        %v4193 = vmul.f32 %v4063, 1.442695
        %v4194 = vpow.pop %v4193
        %v4195 = vmul.f32 %v4064, 1.442695
        %v4196 = vpow.pop %v4195
        %v4197 = vmul.f32 %v4065, 1.442695
        %v4198 = vpow.pop %v4197
        %v4199 = vmul.f32 %v4066, 1.442695
        %v4200 = vpow.pop %v4199
        %v4201 = vmul.f32 %v4067, 1.442695
        %v4202 = vpow.pop %v4201
        %v4203 = vmul.f32 %v4068, 1.442695
        %v4204 = vpow.pop %v4203
        %v4205 = vmul.f32 %v4069, 1.442695
        %v4206 = vpow.pop %v4205
        %v4207 = vmul.f32 %v4070, 1.442695
        %v4208 = vpow.pop %v4207
        %v4209 = vmul.f32 %v4071, 1.442695
        %v4210 = vpow.pop %v4209
        %v4211 = vmul.f32 %v4072, 1.442695
        %v4212 = vpow.pop %v4211
        %v4213 = vmul.f32 %v4073, 1.442695
        %v4214 = vpow.pop %v4213
        %v4215 = vmul.f32 %v4074, 1.442695
        %v4216 = vpow.pop %v4215
        %v4217 = vmul.f32 %v4075, 1.442695
        %v4218 = vpow.pop %v4217
        %v4219 = vmul.f32 %v4076, 1.442695
        %v4220 = vpow.pop %v4219
        %v4221 = vmul.f32 %v4077, 1.442695
        %v4222 = vpow.pop %v4221
        %v4223 = vmul.f32 %v4078, 1.442695
        %v4224 = vpow.pop %v4223
        %v4225 = vmul.f32 %v4079, 1.442695
        %v4226 = vpow.pop %v4225
        %v4227 = vmul.f32 %v4080, 1.442695
        %v4228 = vpow.pop %v4227
        %v4229 = vmul.f32 %v4081, 1.442695
        %v4230 = vpow.pop %v4229
        %v4231 = vmul.f32 %v4082, 1.442695
        %v4232 = vpow.pop %v4231
        %v4233 = vmul.f32 %v4083, 1.442695
        %v4234 = vpow.pop %v4233
        %v4235 = vmul.f32 %v4084, 1.442695
        %v4236 = vpow.pop %v4235
        %v4237 = vmul.f32 %v4085, 1.442695
        %v4238 = vpow.pop %v4237
        %v4239 = vmul.f32 %v4086, 1.442695
        %v4240 = vpow.pop %v4239
        %v4241 = vmul.f32 %v4087, 1.442695
        %v4242 = vpow.pop %v4241
        %v4243 = vmul.f32 %v4088, 1.442695
        %v4244 = vpow.pop %v4243
        %v4245 = vmul.f32 %v4089, 1.442695
        %v4246 = vpow.pop %v4245
        %v4247 = vmul.f32 %v4090, 1.442695
        %v4248 = vpow.pop %v4247
        %v4249 = vmul.f32 %v4091, 1.442695
        %v4250 = vpow.pop %v4249
        %v4251 = vmul.f32 %v4092, 1.442695
        %v4252 = vpow.pop %v4251
        %v4253 = vmul.f32 %v4093, 1.442695
        %v4254 = vpow.pop %v4253
        %v4255 = vmul.f32 %v4094, 1.442695
        %v4256 = vpow.pop %v4255
        %v4257 = vmul.f32 %v4095, 1.442695
        %v4258 = vpow.pop %v4257
        %v4259 = vmul.f32 %v4096, 1.442695
        %v4260 = vpow.pop %v4259
        %v4261 = vmul.f32 %v4097, 1.442695
        %v4262 = vpow.pop %v4261
        %v4263 = vmul.f32 %v4098, 1.442695
        %v4264 = vpow.pop %v4263
        %v4265 = vmul.f32 %v4099, 1.442695
        %v4266 = vpow.pop %v4265
        %v4267 = vmul.f32 %v4100, 1.442695
        %v4268 = vpow.pop %v4267
        %v4269 = vmul.f32 %v4101, 1.442695
        %v4270 = vpow.pop %v4269
        %v4271 = vmul.f32 %v4102, 1.442695
        %v4272 = vpow.pop %v4271
        %v4273 = vmul.f32 %v4103, 1.442695
        %v4274 = vpow.pop %v4273
        %v4275 = vmul.f32 %v4104, 1.442695
        %v4276 = vpow.pop %v4275
        %v4277 = vmul.f32 %v4105, 1.442695
        %v4278 = vpow.pop %v4277
        %v4279 = vmul.f32 %v4106, 1.442695
        %v4280 = vpow.pop %v4279
        %v4281 = vmul.f32 %v4107, 1.442695
        %v4282 = vpow.pop %v4281
        %v4283 = vmul.f32 %v4108, 1.442695
        %v4284 = vpow.pop %v4283
        %v4285 = vmul.f32 %v4109, 1.442695
        %v4286 = vpow.pop %v4285
        %v4287 = vmul.f32 %v4110, 1.442695
        %v4288 = vpow.pop %v4287
        %v4289 = vmul.f32 %v4111, 1.442695
        %v4290 = vpow.pop %v4289
        %v4291 = vmul.f32 %v4112, 1.442695
        %v4292 = vpow.pop %v4291
        %v4293 = vmul.f32 %v4113, 1.442695
        %v4294 = vpow.pop %v4293
        %v4295 = vmul.f32 %v4114, 1.442695
        %v4296 = vpow.pop %v4295
        %v4297 = vmul.f32 %v4115, 1.442695
        %v4298 = vpow.pop %v4297
        %v4299 = vmul.f32 %v4116, 1.442695
        %v4300 = vpow.pop %v4299
        %v4301 = vmul.f32 %v4117, 1.442695
        %v4302 = vpow.pop %v4301
        %v4303 = vmul.f32 %v4118, 1.442695
        %v4304 = vpow.pop %v4303
        %v4305 = vmul.f32 %v4119, 1.442695
        %v4306 = vpow.pop %v4305
        %v4307 = vmul.f32 %v4120, 1.442695
        %v4308 = vpow.pop %v4307
        %v4309 = vmul.f32 %v4121, 1.442695
        %v4310 = vpow.pop %v4309
        %v4311 = vmul.f32 %v4122, 1.442695
        %v4312 = vpow.pop %v4311
        %v4313 = vmul.f32 %v4123, 1.442695
        %v4314 = vpow.pop %v4313
        %v4315 = vmul.f32 %v4124, 1.442695
        %v4316 = vpow.pop %v4315
        %v4317 = vsel %vm3740, %v4126, 0.0
        %4318 = vadd.xlane.f32.xlu0 %v4317
        %v4319 = vpop.xlane.xlu0 %4318
        %v4320 = vsel %vm3740, %v4128, 0.0
        %4321 = vadd.xlane.f32.xlu0 %v4320
        %v4322 = vpop.xlane.xlu0 %4321
        %v4323 = vsel %vm3740, %v4130, 0.0
        %4324 = vadd.xlane.f32.xlu0 %v4323
        %v4325 = vpop.xlane.xlu0 %4324
        %v4326 = vsel %vm3740, %v4132, 0.0
        %4327 = vadd.xlane.f32.xlu0 %v4326
        %v4328 = vpop.xlane.xlu0 %4327
        %v4329 = vsel %vm3740, %v4134, 0.0
        %4330 = vadd.xlane.f32.xlu0 %v4329
        %v4331 = vpop.xlane.xlu0 %4330
        %v4332 = vsel %vm3740, %v4136, 0.0
        %4333 = vadd.xlane.f32.xlu0 %v4332
        %v4334 = vpop.xlane.xlu0 %4333
        %v4335 = vsel %vm3740, %v4138, 0.0
        %4336 = vadd.xlane.f32.xlu0 %v4335
        %v4337 = vpop.xlane.xlu0 %4336
        %v4338 = vsel %vm3740, %v4140, 0.0
        %4339 = vadd.xlane.f32.xlu0 %v4338
        %v4340 = vpop.xlane.xlu0 %4339
        %v4341 = vsel %vm3740, %v4142, 0.0
        %4342 = vadd.xlane.f32.xlu0 %v4341
        %v4343 = vpop.xlane.xlu0 %4342
        %v4344 = vsel %vm3740, %v4144, 0.0
        %4345 = vadd.xlane.f32.xlu0 %v4344
        %v4346 = vpop.xlane.xlu0 %4345
        %v4347 = vsel %vm3740, %v4146, 0.0
        %4348 = vadd.xlane.f32.xlu0 %v4347
        %v4349 = vpop.xlane.xlu0 %4348
        %v4350 = vsel %vm3740, %v4148, 0.0
        %4351 = vadd.xlane.f32.xlu0 %v4350
        %v4352 = vpop.xlane.xlu0 %4351
        %v4353 = vsel %vm3740, %v4150, 0.0
        %4354 = vadd.xlane.f32.xlu0 %v4353
        %v4355 = vpop.xlane.xlu0 %4354
        %v4356 = vsel %vm3740, %v4152, 0.0
        %4357 = vadd.xlane.f32.xlu0 %v4356
        %v4358 = vpop.xlane.xlu0 %4357
        %v4359 = vsel %vm3740, %v4154, 0.0
        %4360 = vadd.xlane.f32.xlu0 %v4359
        %v4361 = vpop.xlane.xlu0 %4360
        %v4362 = vsel %vm3740, %v4156, 0.0
        %4363 = vadd.xlane.f32.xlu0 %v4362
        %v4364 = vpop.xlane.xlu0 %4363
        %v4365 = vsel %vm3740, %v4158, 0.0
        %4366 = vadd.xlane.f32.xlu0 %v4365
        %v4367 = vpop.xlane.xlu0 %4366
        %v4368 = vsel %vm3740, %v4160, 0.0
        %4369 = vadd.xlane.f32.xlu0 %v4368
        %v4370 = vpop.xlane.xlu0 %4369
        %v4371 = vsel %vm3740, %v4162, 0.0
        %4372 = vadd.xlane.f32.xlu0 %v4371
        %v4373 = vpop.xlane.xlu0 %4372
        %v4374 = vsel %vm3740, %v4164, 0.0
        %4375 = vadd.xlane.f32.xlu0 %v4374
        %v4376 = vpop.xlane.xlu0 %4375
        %v4377 = vsel %vm3740, %v4166, 0.0
        %4378 = vadd.xlane.f32.xlu0 %v4377
        %v4379 = vpop.xlane.xlu0 %4378
        %v4380 = vsel %vm3740, %v4168, 0.0
        %4381 = vadd.xlane.f32.xlu0 %v4380
        %v4382 = vpop.xlane.xlu0 %4381
        %v4383 = vsel %vm3740, %v4170, 0.0
        %4384 = vadd.xlane.f32.xlu0 %v4383
        %v4385 = vpop.xlane.xlu0 %4384
        %v4386 = vsel %vm3740, %v4172, 0.0
        %4387 = vadd.xlane.f32.xlu0 %v4386
        %v4388 = vpop.xlane.xlu0 %4387
        %v4389 = vsel %vm3740, %v4174, 0.0
        %4390 = vadd.xlane.f32.xlu0 %v4389
        %v4391 = vpop.xlane.xlu0 %4390
        %v4392 = vsel %vm3740, %v4176, 0.0
        %4393 = vadd.xlane.f32.xlu0 %v4392
        %v4394 = vpop.xlane.xlu0 %4393
        %v4395 = vsel %vm3740, %v4178, 0.0
        %4396 = vadd.xlane.f32.xlu0 %v4395
        %v4397 = vpop.xlane.xlu0 %4396
        %v4398 = vsel %vm3740, %v4180, 0.0
        %4399 = vadd.xlane.f32.xlu0 %v4398
        %v4400 = vpop.xlane.xlu0 %4399
        %v4401 = vsel %vm3740, %v4182, 0.0
        %4402 = vadd.xlane.f32.xlu0 %v4401
        %v4403 = vpop.xlane.xlu0 %4402
        %v4404 = vsel %vm3740, %v4184, 0.0
        %4405 = vadd.xlane.f32.xlu0 %v4404
        %v4406 = vpop.xlane.xlu0 %4405
        %v4407 = vsel %vm3740, %v4186, 0.0
        %4408 = vadd.xlane.f32.xlu0 %v4407
        %v4409 = vpop.xlane.xlu0 %4408
        %v4410 = vsel %vm3740, %v4188, 0.0
        %4411 = vadd.xlane.f32.xlu0 %v4410
        %v4412 = vpop.xlane.xlu0 %4411
        %v4413 = vsel %vm3740, %v4190, 0.0
        %4414 = vadd.xlane.f32.xlu0 %v4413
        %v4415 = vpop.xlane.xlu0 %4414
        %v4416 = vsel %vm3740, %v4192, 0.0
        %4417 = vadd.xlane.f32.xlu0 %v4416
        %v4418 = vpop.xlane.xlu0 %4417
        %v4419 = vsel %vm3740, %v4194, 0.0
        %4420 = vadd.xlane.f32.xlu0 %v4419
        %v4421 = vpop.xlane.xlu0 %4420
        %v4422 = vsel %vm3740, %v4196, 0.0
        %4423 = vadd.xlane.f32.xlu0 %v4422
        %v4424 = vpop.xlane.xlu0 %4423
        %v4425 = vsel %vm3740, %v4198, 0.0
        %4426 = vadd.xlane.f32.xlu0 %v4425
        %v4427 = vpop.xlane.xlu0 %4426
        %v4428 = vsel %vm3740, %v4200, 0.0
        %4429 = vadd.xlane.f32.xlu0 %v4428
        %v4430 = vpop.xlane.xlu0 %4429
        %v4431 = vsel %vm3740, %v4202, 0.0
        %4432 = vadd.xlane.f32.xlu0 %v4431
        %v4433 = vpop.xlane.xlu0 %4432
        %v4434 = vsel %vm3740, %v4204, 0.0
        %4435 = vadd.xlane.f32.xlu0 %v4434
        %v4436 = vpop.xlane.xlu0 %4435
        %v4437 = vsel %vm3740, %v4206, 0.0
        %4438 = vadd.xlane.f32.xlu0 %v4437
        %v4439 = vpop.xlane.xlu0 %4438
        %v4440 = vsel %vm3740, %v4208, 0.0
        %4441 = vadd.xlane.f32.xlu0 %v4440
        %v4442 = vpop.xlane.xlu0 %4441
        %v4443 = vsel %vm3740, %v4210, 0.0
        %4444 = vadd.xlane.f32.xlu0 %v4443
        %v4445 = vpop.xlane.xlu0 %4444
        %v4446 = vsel %vm3740, %v4212, 0.0
        %4447 = vadd.xlane.f32.xlu0 %v4446
        %v4448 = vpop.xlane.xlu0 %4447
        %v4449 = vsel %vm3740, %v4214, 0.0
        %4450 = vadd.xlane.f32.xlu0 %v4449
        %v4451 = vpop.xlane.xlu0 %4450
        %v4452 = vsel %vm3740, %v4216, 0.0
        %4453 = vadd.xlane.f32.xlu0 %v4452
        %v4454 = vpop.xlane.xlu0 %4453
        %v4455 = vsel %vm3740, %v4218, 0.0
        %4456 = vadd.xlane.f32.xlu0 %v4455
        %v4457 = vpop.xlane.xlu0 %4456
        %v4458 = vsel %vm3740, %v4220, 0.0
        %4459 = vadd.xlane.f32.xlu0 %v4458
        %v4460 = vpop.xlane.xlu0 %4459
        %v4461 = vsel %vm3740, %v4222, 0.0
        %4462 = vadd.xlane.f32.xlu0 %v4461
        %v4463 = vpop.xlane.xlu0 %4462
        %v4464 = vsel %vm3740, %v4224, 0.0
        %4465 = vadd.xlane.f32.xlu0 %v4464
        %v4466 = vpop.xlane.xlu0 %4465
        %v4467 = vsel %vm3740, %v4226, 0.0
        %4468 = vadd.xlane.f32.xlu0 %v4467
        %v4469 = vpop.xlane.xlu0 %4468
        %v4470 = vsel %vm3740, %v4228, 0.0
        %4471 = vadd.xlane.f32.xlu0 %v4470
        %v4472 = vpop.xlane.xlu0 %4471
        %v4473 = vsel %vm3740, %v4230, 0.0
        %4474 = vadd.xlane.f32.xlu0 %v4473
        %v4475 = vpop.xlane.xlu0 %4474
        %v4476 = vsel %vm3740, %v4232, 0.0
        %4477 = vadd.xlane.f32.xlu0 %v4476
        %v4478 = vpop.xlane.xlu0 %4477
        %v4479 = vsel %vm3740, %v4234, 0.0
        %4480 = vadd.xlane.f32.xlu0 %v4479
        %v4481 = vpop.xlane.xlu0 %4480
        %v4482 = vsel %vm3740, %v4236, 0.0
        %4483 = vadd.xlane.f32.xlu0 %v4482
        %v4484 = vpop.xlane.xlu0 %4483
        %v4485 = vsel %vm3740, %v4238, 0.0
        %4486 = vadd.xlane.f32.xlu0 %v4485
        %v4487 = vpop.xlane.xlu0 %4486
        %v4488 = vsel %vm3740, %v4240, 0.0
        %4489 = vadd.xlane.f32.xlu0 %v4488
        %v4490 = vpop.xlane.xlu0 %4489
        %v4491 = vsel %vm3740, %v4242, 0.0
        %4492 = vadd.xlane.f32.xlu0 %v4491
        %v4493 = vpop.xlane.xlu0 %4492
        %v4494 = vsel %vm3740, %v4244, 0.0
        %4495 = vadd.xlane.f32.xlu0 %v4494
        %v4496 = vpop.xlane.xlu0 %4495
        %v4497 = vsel %vm3740, %v4246, 0.0
        %4498 = vadd.xlane.f32.xlu0 %v4497
        %v4499 = vpop.xlane.xlu0 %4498
        %v4500 = vsel %vm3740, %v4248, 0.0
        %4501 = vadd.xlane.f32.xlu0 %v4500
        %v4502 = vpop.xlane.xlu0 %4501
        %v4503 = vsel %vm3740, %v4250, 0.0
        %4504 = vadd.xlane.f32.xlu0 %v4503
        %v4505 = vpop.xlane.xlu0 %4504
        %v4506 = vsel %vm3740, %v4252, 0.0
        %4507 = vadd.xlane.f32.xlu0 %v4506
        %v4508 = vpop.xlane.xlu0 %4507
        %v4509 = vsel %vm3740, %v4254, 0.0
        %4510 = vadd.xlane.f32.xlu0 %v4509
        %v4511 = vpop.xlane.xlu0 %4510
        %v4512 = vsel %vm3740, %v4256, 0.0
        %4513 = vadd.xlane.f32.xlu0 %v4512
        %v4514 = vpop.xlane.xlu0 %4513
        %v4515 = vsel %vm3740, %v4258, 0.0
        %4516 = vadd.xlane.f32.xlu0 %v4515
        %v4517 = vpop.xlane.xlu0 %4516
        %v4518 = vsel %vm3740, %v4260, 0.0
        %4519 = vadd.xlane.f32.xlu0 %v4518
        %v4520 = vpop.xlane.xlu0 %4519
        %v4521 = vsel %vm3740, %v4262, 0.0
        %4522 = vadd.xlane.f32.xlu0 %v4521
        %v4523 = vpop.xlane.xlu0 %4522
        %v4524 = vsel %vm3740, %v4264, 0.0
        %4525 = vadd.xlane.f32.xlu0 %v4524
        %v4526 = vpop.xlane.xlu0 %4525
        %v4527 = vsel %vm3740, %v4266, 0.0
        %4528 = vadd.xlane.f32.xlu0 %v4527
        %v4529 = vpop.xlane.xlu0 %4528
        %v4530 = vsel %vm3740, %v4268, 0.0
        %4531 = vadd.xlane.f32.xlu0 %v4530
        %v4532 = vpop.xlane.xlu0 %4531
        %v4533 = vsel %vm3740, %v4270, 0.0
        %4534 = vadd.xlane.f32.xlu0 %v4533
        %v4535 = vpop.xlane.xlu0 %4534
        %v4536 = vsel %vm3740, %v4272, 0.0
        %4537 = vadd.xlane.f32.xlu0 %v4536
        %v4538 = vpop.xlane.xlu0 %4537
        %v4539 = vsel %vm3740, %v4274, 0.0
        %4540 = vadd.xlane.f32.xlu0 %v4539
        %v4541 = vpop.xlane.xlu0 %4540
        %v4542 = vsel %vm3740, %v4276, 0.0
        %4543 = vadd.xlane.f32.xlu0 %v4542
        %v4544 = vpop.xlane.xlu0 %4543
        %v4545 = vsel %vm3740, %v4278, 0.0
        %4546 = vadd.xlane.f32.xlu0 %v4545
        %v4547 = vpop.xlane.xlu0 %4546
        %v4548 = vsel %vm3740, %v4280, 0.0
        %4549 = vadd.xlane.f32.xlu0 %v4548
        %v4550 = vpop.xlane.xlu0 %4549
        %v4551 = vsel %vm3740, %v4282, 0.0
        %4552 = vadd.xlane.f32.xlu0 %v4551
        %v4553 = vpop.xlane.xlu0 %4552
        %v4554 = vsel %vm3740, %v4284, 0.0
        %4555 = vadd.xlane.f32.xlu0 %v4554
        %v4556 = vpop.xlane.xlu0 %4555
        %v4557 = vsel %vm3740, %v4286, 0.0
        %4558 = vadd.xlane.f32.xlu0 %v4557
        %v4559 = vpop.xlane.xlu0 %4558
        %v4560 = vsel %vm3740, %v4288, 0.0
        %4561 = vadd.xlane.f32.xlu0 %v4560
        %v4562 = vpop.xlane.xlu0 %4561
        %v4563 = vsel %vm3740, %v4290, 0.0
        %4564 = vadd.xlane.f32.xlu0 %v4563
        %v4565 = vpop.xlane.xlu0 %4564
        %v4566 = vsel %vm3740, %v4292, 0.0
        %4567 = vadd.xlane.f32.xlu0 %v4566
        %v4568 = vpop.xlane.xlu0 %4567
        %v4569 = vsel %vm3740, %v4294, 0.0
        %4570 = vadd.xlane.f32.xlu0 %v4569
        %v4571 = vpop.xlane.xlu0 %4570
        %v4572 = vsel %vm3740, %v4296, 0.0
        %4573 = vadd.xlane.f32.xlu0 %v4572
        %v4574 = vpop.xlane.xlu0 %4573
        %v4575 = vsel %vm3740, %v4298, 0.0
        %4576 = vadd.xlane.f32.xlu0 %v4575
        %v4577 = vpop.xlane.xlu0 %4576
        %v4578 = vsel %vm3740, %v4300, 0.0
        %4579 = vadd.xlane.f32.xlu0 %v4578
        %v4580 = vpop.xlane.xlu0 %4579
        %v4581 = vsel %vm3740, %v4302, 0.0
        %4582 = vadd.xlane.f32.xlu0 %v4581
        %v4583 = vpop.xlane.xlu0 %4582
        %v4584 = vsel %vm3740, %v4304, 0.0
        %4585 = vadd.xlane.f32.xlu0 %v4584
        %v4586 = vpop.xlane.xlu0 %4585
        %v4587 = vsel %vm3740, %v4306, 0.0
        %4588 = vadd.xlane.f32.xlu0 %v4587
        %v4589 = vpop.xlane.xlu0 %4588
        %v4590 = vsel %vm3740, %v4308, 0.0
        %4591 = vadd.xlane.f32.xlu0 %v4590
        %v4592 = vpop.xlane.xlu0 %4591
        %v4593 = vsel %vm3740, %v4310, 0.0
        %4594 = vadd.xlane.f32.xlu0 %v4593
        %v4595 = vpop.xlane.xlu0 %4594
        %v4596 = vsel %vm3740, %v4312, 0.0
        %4597 = vadd.xlane.f32.xlu0 %v4596
        %v4598 = vpop.xlane.xlu0 %4597
        %v4599 = vsel %vm3740, %v4314, 0.0
        %4600 = vadd.xlane.f32.xlu0 %v4599
        %v4601 = vpop.xlane.xlu0 %4600
        %v4602 = vsel %vm3740, %v4316, 0.0
        %4603 = vadd.xlane.f32.xlu0 %v4602
        %v4604 = vpop.xlane.xlu0 %4603
        %v4605 = vpack.c.bf16 %v4126, %v4126
        %v4606 = vpack.c.bf16 %v4128, %v4128
        %v4607 = vpack.c.bf16 %v4130, %v4130
        %v4608 = vpack.c.bf16 %v4132, %v4132
        %v4609 = vpack.c.bf16 %v4134, %v4134
        %v4610 = vpack.c.bf16 %v4136, %v4136
        %v4611 = vpack.c.bf16 %v4138, %v4138
        %v4612 = vpack.c.bf16 %v4140, %v4140
        %v4613 = vpack.c.bf16 %v4142, %v4142
        %v4614 = vpack.c.bf16 %v4144, %v4144
        %v4615 = vpack.c.bf16 %v4146, %v4146
        %v4616 = vpack.c.bf16 %v4148, %v4148
        %v4617 = vpack.c.bf16 %v4150, %v4150
        %v4618 = vpack.c.bf16 %v4152, %v4152
        %v4619 = vpack.c.bf16 %v4154, %v4154
        %v4620 = vpack.c.bf16 %v4156, %v4156
        %v4621 = vpack.c.bf16 %v4158, %v4158
        %v4622 = vpack.c.bf16 %v4160, %v4160
        %v4623 = vpack.c.bf16 %v4162, %v4162
        %v4624 = vpack.c.bf16 %v4164, %v4164
        %v4625 = vpack.c.bf16 %v4166, %v4166
        %v4626 = vpack.c.bf16 %v4168, %v4168
        %v4627 = vpack.c.bf16 %v4170, %v4170
        %v4628 = vpack.c.bf16 %v4172, %v4172
        %v4629 = vpack.c.bf16 %v4174, %v4174
        %v4630 = vpack.c.bf16 %v4176, %v4176
        %v4631 = vpack.c.bf16 %v4178, %v4178
        %v4632 = vpack.c.bf16 %v4180, %v4180
        %v4633 = vpack.c.bf16 %v4182, %v4182
        %v4634 = vpack.c.bf16 %v4184, %v4184
        %v4635 = vpack.c.bf16 %v4186, %v4186
        %v4636 = vpack.c.bf16 %v4188, %v4188
        %v4637 = vpack.c.bf16 %v4190, %v4190
        %v4638 = vpack.c.bf16 %v4192, %v4192
        %v4639 = vpack.c.bf16 %v4194, %v4194
        %v4640 = vpack.c.bf16 %v4196, %v4196
        %v4641 = vpack.c.bf16 %v4198, %v4198
        %v4642 = vpack.c.bf16 %v4200, %v4200
        %v4643 = vpack.c.bf16 %v4202, %v4202
        %v4644 = vpack.c.bf16 %v4204, %v4204
        %v4645 = vpack.c.bf16 %v4206, %v4206
        %v4646 = vpack.c.bf16 %v4208, %v4208
        %v4647 = vpack.c.bf16 %v4210, %v4210
        %v4648 = vpack.c.bf16 %v4212, %v4212
        %v4649 = vpack.c.bf16 %v4214, %v4214
        %v4650 = vpack.c.bf16 %v4216, %v4216
        %v4651 = vpack.c.bf16 %v4218, %v4218
        %v4652 = vpack.c.bf16 %v4220, %v4220
        %v4653 = vpack.c.bf16 %v4222, %v4222
        %v4654 = vpack.c.bf16 %v4224, %v4224
        %v4655 = vpack.c.bf16 %v4226, %v4226
        %v4656 = vpack.c.bf16 %v4228, %v4228
        %v4657 = vpack.c.bf16 %v4230, %v4230
        %v4658 = vpack.c.bf16 %v4232, %v4232
        %v4659 = vpack.c.bf16 %v4234, %v4234
        %v4660 = vpack.c.bf16 %v4236, %v4236
        %v4661 = vpack.c.bf16 %v4238, %v4238
        %v4662 = vpack.c.bf16 %v4240, %v4240
        %v4663 = vpack.c.bf16 %v4242, %v4242
        %v4664 = vpack.c.bf16 %v4244, %v4244
        %v4665 = vpack.c.bf16 %v4246, %v4246
        %v4666 = vpack.c.bf16 %v4248, %v4248
        %v4667 = vpack.c.bf16 %v4250, %v4250
        %v4668 = vpack.c.bf16 %v4252, %v4252
        %v4669 = vpack.c.bf16 %v4254, %v4254
        %v4670 = vpack.c.bf16 %v4256, %v4256
        %v4671 = vpack.c.bf16 %v4258, %v4258
        %v4672 = vpack.c.bf16 %v4260, %v4260
        %v4673 = vpack.c.bf16 %v4262, %v4262
        %v4674 = vpack.c.bf16 %v4264, %v4264
        %v4675 = vpack.c.bf16 %v4266, %v4266
        %v4676 = vpack.c.bf16 %v4268, %v4268
        %v4677 = vpack.c.bf16 %v4270, %v4270
        %v4678 = vpack.c.bf16 %v4272, %v4272
        %v4679 = vpack.c.bf16 %v4274, %v4274
        %v4680 = vpack.c.bf16 %v4276, %v4276
        %v4681 = vpack.c.bf16 %v4278, %v4278
        %v4682 = vpack.c.bf16 %v4280, %v4280
        %v4683 = vpack.c.bf16 %v4282, %v4282
        %v4684 = vpack.c.bf16 %v4284, %v4284
        %v4685 = vpack.c.bf16 %v4286, %v4286
        %v4686 = vpack.c.bf16 %v4288, %v4288
        %v4687 = vpack.c.bf16 %v4290, %v4290
        %v4688 = vpack.c.bf16 %v4292, %v4292
        %v4689 = vpack.c.bf16 %v4294, %v4294
        %v4690 = vpack.c.bf16 %v4296, %v4296
        %v4691 = vpack.c.bf16 %v4298, %v4298
        %v4692 = vpack.c.bf16 %v4300, %v4300
        %v4693 = vpack.c.bf16 %v4302, %v4302
        %v4694 = vpack.c.bf16 %v4304, %v4304
        %v4695 = vpack.c.bf16 %v4306, %v4306
        %v4696 = vpack.c.bf16 %v4308, %v4308
        %v4697 = vpack.c.bf16 %v4310, %v4310
        %v4698 = vpack.c.bf16 %v4312, %v4312
        %v4699 = vpack.c.bf16 %v4314, %v4314
        %v4700 = vpack.c.bf16 %v4316, %v4316
        %v4707 = vunpack.c.l.b16 %v4605
        %v4708 = vunpack.c.l.b16 %v4606
        %v4709 = vunpack.c.l.b16 %v4607
        %v4710 = vunpack.c.l.b16 %v4608
        %v4711 = vunpack.c.l.b16 %v4609
        %v4712 = vunpack.c.l.b16 %v4610
        %v4713 = vpack.c.b16 %v4708, %v4707
        %v4714 = vpack.c.b16 %v4710, %v4709
        %v4715 = vpack.c.b16 %v4712, %v4711
        %4716 = vrot.lane.b32.xlu0 %v2744, 96
        %v4717 = vpop.permute.xlu0 %4716
        %4718 = vrot.lane.b32.xlu0 %v2745, 96
        %v4719 = vpop.permute.xlu0 %4718
        %4720 = vrot.lane.b32.xlu0 %v2746, 96
        %v4721 = vpop.permute.xlu0 %4720
        %v4726 = vsel %vm3740, %v4713, 0
        %v4729 = vsel %vm3740, %v4714, 0
        %v4732 = vsel %vm3740, %v4715, 0
        %4734 = vmatpush.bf16.msra.mxu0 0
        %4735 = vmatpush.bf16.msra.mxu0 0
        %4736 = vmatpush.bf16.msra.mxu0 0
        %4737 = vmatpush.bf16.msra.mxu0 0
        %4738 = vmatpush.bf16.msra.mxu0 0
        %4739 = vmatpush.bf16.msra.mxu0 %v4721
        %4740 = vmatpush.bf16.msra.mxu0 %v4719
        %4741 = vmatpush.bf16.msra.mxu0 %v4717
        %4742 = vmatmul.bf16.gmra.mxu0 %v4726
        %v4743 = vpop.f32.mrf.mxu0
        %v4744 = vadd.f32 0.0, %v4743
        %v4745 = vpop.f32.mrf.mxu0
        %v4746 = vadd.f32 0.0, %v4745
        %4747 = vmatmul.bf16.gmra.mxu0 %v4729
        %v4748 = vpop.f32.mrf.mxu0
        %v4749 = vadd.f32 0.0, %v4748
        %v4750 = vpop.f32.mrf.mxu0
        %v4751 = vadd.f32 0.0, %v4750
        %4752 = vmatmul.bf16.gmra.mxu0 %v4732
        %v4753 = vpop.f32.mrf.mxu0
        %v4754 = vadd.f32 0.0, %v4753
        %v4755 = vpop.f32.mrf.mxu0
        %v4756 = vadd.f32 0.0, %v4755
        %4757 = vdwg.mxu0
        %v4764 = vunpack.c.l.b16 %v4611
        %v4765 = vunpack.c.l.b16 %v4612
        %v4766 = vunpack.c.l.b16 %v4613
        %v4767 = vunpack.c.l.b16 %v4614
        %v4768 = vunpack.c.l.b16 %v4615
        %v4769 = vunpack.c.l.b16 %v4616
        %v4770 = vpack.c.b16 %v4765, %v4764
        %v4771 = vpack.c.b16 %v4767, %v4766
        %v4772 = vpack.c.b16 %v4769, %v4768
        %4773 = vrot.lane.b32.xlu0 %v2807, 96
        %v4774 = vpop.permute.xlu0 %4773
        %4775 = vrot.lane.b32.xlu0 %v2808, 96
        %v4776 = vpop.permute.xlu0 %4775
        %4777 = vrot.lane.b32.xlu0 %v2809, 96
        %v4778 = vpop.permute.xlu0 %4777
        %v4783 = vsel %vm3740, %v4770, 0
        %v4786 = vsel %vm3740, %v4771, 0
        %v4789 = vsel %vm3740, %v4772, 0
        %4791 = vmatpush.bf16.msra.mxu0 0
        %4792 = vmatpush.bf16.msra.mxu0 0
        %4793 = vmatpush.bf16.msra.mxu0 0
        %4794 = vmatpush.bf16.msra.mxu0 0
        %4795 = vmatpush.bf16.msra.mxu0 0
        %4796 = vmatpush.bf16.msra.mxu0 %v4778
        %4797 = vmatpush.bf16.msra.mxu0 %v4776
        %4798 = vmatpush.bf16.msra.mxu0 %v4774
        %4799 = vmatmul.bf16.gmra.mxu0 %v4783
        %v4800 = vpop.f32.mrf.mxu0
        %v4801 = vadd.f32 0.0, %v4800
        %v4802 = vpop.f32.mrf.mxu0
        %v4803 = vadd.f32 0.0, %v4802
        %4804 = vmatmul.bf16.gmra.mxu0 %v4786
        %v4805 = vpop.f32.mrf.mxu0
        %v4806 = vadd.f32 0.0, %v4805
        %v4807 = vpop.f32.mrf.mxu0
        %v4808 = vadd.f32 0.0, %v4807
        %4809 = vmatmul.bf16.gmra.mxu0 %v4789
        %v4810 = vpop.f32.mrf.mxu0
        %v4811 = vadd.f32 0.0, %v4810
        %v4812 = vpop.f32.mrf.mxu0
        %v4813 = vadd.f32 0.0, %v4812
        %4814 = vdwg.mxu0
        %v4821 = vunpack.c.l.b16 %v4617
        %v4822 = vunpack.c.l.b16 %v4618
        %v4823 = vunpack.c.l.b16 %v4619
        %v4824 = vunpack.c.l.b16 %v4620
        %v4825 = vunpack.c.l.b16 %v4621
        %v4826 = vunpack.c.l.b16 %v4622
        %v4827 = vpack.c.b16 %v4822, %v4821
        %v4828 = vpack.c.b16 %v4824, %v4823
        %v4829 = vpack.c.b16 %v4826, %v4825
        %4830 = vrot.lane.b32.xlu0 %v2870, 96
        %v4831 = vpop.permute.xlu0 %4830
        %4832 = vrot.lane.b32.xlu0 %v2871, 96
        %v4833 = vpop.permute.xlu0 %4832
        %4834 = vrot.lane.b32.xlu0 %v2872, 96
        %v4835 = vpop.permute.xlu0 %4834
        %v4840 = vsel %vm3740, %v4827, 0
        %v4843 = vsel %vm3740, %v4828, 0
        %v4846 = vsel %vm3740, %v4829, 0
        %4848 = vmatpush.bf16.msra.mxu0 0
        %4849 = vmatpush.bf16.msra.mxu0 0
        %4850 = vmatpush.bf16.msra.mxu0 0
        %4851 = vmatpush.bf16.msra.mxu0 0
        %4852 = vmatpush.bf16.msra.mxu0 0
        %4853 = vmatpush.bf16.msra.mxu0 %v4835
        %4854 = vmatpush.bf16.msra.mxu0 %v4833
        %4855 = vmatpush.bf16.msra.mxu0 %v4831
        %4856 = vmatmul.bf16.gmra.mxu0 %v4840
        %v4857 = vpop.f32.mrf.mxu0
        %v4858 = vadd.f32 0.0, %v4857
        %v4859 = vpop.f32.mrf.mxu0
        %v4860 = vadd.f32 0.0, %v4859
        %4861 = vmatmul.bf16.gmra.mxu0 %v4843
        %v4862 = vpop.f32.mrf.mxu0
        %v4863 = vadd.f32 0.0, %v4862
        %v4864 = vpop.f32.mrf.mxu0
        %v4865 = vadd.f32 0.0, %v4864
        %4866 = vmatmul.bf16.gmra.mxu0 %v4846
        %v4867 = vpop.f32.mrf.mxu0
        %v4868 = vadd.f32 0.0, %v4867
        %v4869 = vpop.f32.mrf.mxu0
        %v4870 = vadd.f32 0.0, %v4869
        %4871 = vdwg.mxu0
        %v4878 = vunpack.c.l.b16 %v4623
        %v4879 = vunpack.c.l.b16 %v4624
        %v4880 = vunpack.c.l.b16 %v4625
        %v4881 = vunpack.c.l.b16 %v4626
        %v4882 = vunpack.c.l.b16 %v4627
        %v4883 = vunpack.c.l.b16 %v4628
        %v4884 = vpack.c.b16 %v4879, %v4878
        %v4885 = vpack.c.b16 %v4881, %v4880
        %v4886 = vpack.c.b16 %v4883, %v4882
        %4887 = vrot.lane.b32.xlu0 %v2933, 96
        %v4888 = vpop.permute.xlu0 %4887
        %4889 = vrot.lane.b32.xlu0 %v2934, 96
        %v4890 = vpop.permute.xlu0 %4889
        %4891 = vrot.lane.b32.xlu0 %v2935, 96
        %v4892 = vpop.permute.xlu0 %4891
        %v4897 = vsel %vm3740, %v4884, 0
        %v4900 = vsel %vm3740, %v4885, 0
        %v4903 = vsel %vm3740, %v4886, 0
        %4905 = vmatpush.bf16.msra.mxu0 0
        %4906 = vmatpush.bf16.msra.mxu0 0
        %4907 = vmatpush.bf16.msra.mxu0 0
        %4908 = vmatpush.bf16.msra.mxu0 0
        %4909 = vmatpush.bf16.msra.mxu0 0
        %4910 = vmatpush.bf16.msra.mxu0 %v4892
        %4911 = vmatpush.bf16.msra.mxu0 %v4890
        %4912 = vmatpush.bf16.msra.mxu0 %v4888
        %4913 = vmatmul.bf16.gmra.mxu0 %v4897
        %v4914 = vpop.f32.mrf.mxu0
        %v4915 = vadd.f32 0.0, %v4914
        %v4916 = vpop.f32.mrf.mxu0
        %v4917 = vadd.f32 0.0, %v4916
        %4918 = vmatmul.bf16.gmra.mxu0 %v4900
        %v4919 = vpop.f32.mrf.mxu0
        %v4920 = vadd.f32 0.0, %v4919
        %v4921 = vpop.f32.mrf.mxu0
        %v4922 = vadd.f32 0.0, %v4921
        %4923 = vmatmul.bf16.gmra.mxu0 %v4903
        %v4924 = vpop.f32.mrf.mxu0
        %v4925 = vadd.f32 0.0, %v4924
        %v4926 = vpop.f32.mrf.mxu0
        %v4927 = vadd.f32 0.0, %v4926
        %4928 = vdwg.mxu0
        %v4935 = vunpack.c.l.b16 %v4629
        %v4936 = vunpack.c.l.b16 %v4630
        %v4937 = vunpack.c.l.b16 %v4631
        %v4938 = vunpack.c.l.b16 %v4632
        %v4939 = vunpack.c.l.b16 %v4633
        %v4940 = vunpack.c.l.b16 %v4634
        %v4941 = vpack.c.b16 %v4936, %v4935
        %v4942 = vpack.c.b16 %v4938, %v4937
        %v4943 = vpack.c.b16 %v4940, %v4939
        %4944 = vrot.lane.b32.xlu0 %v2996, 96
        %v4945 = vpop.permute.xlu0 %4944
        %4946 = vrot.lane.b32.xlu0 %v2997, 96
        %v4947 = vpop.permute.xlu0 %4946
        %4948 = vrot.lane.b32.xlu0 %v2998, 96
        %v4949 = vpop.permute.xlu0 %4948
        %v4954 = vsel %vm3740, %v4941, 0
        %v4957 = vsel %vm3740, %v4942, 0
        %v4960 = vsel %vm3740, %v4943, 0
        %4962 = vmatpush.bf16.msra.mxu0 0
        %4963 = vmatpush.bf16.msra.mxu0 0
        %4964 = vmatpush.bf16.msra.mxu0 0
        %4965 = vmatpush.bf16.msra.mxu0 0
        %4966 = vmatpush.bf16.msra.mxu0 0
        %4967 = vmatpush.bf16.msra.mxu0 %v4949
        %4968 = vmatpush.bf16.msra.mxu0 %v4947
        %4969 = vmatpush.bf16.msra.mxu0 %v4945
        %4970 = vmatmul.bf16.gmra.mxu0 %v4954
        %v4971 = vpop.f32.mrf.mxu0
        %v4972 = vadd.f32 0.0, %v4971
        %v4973 = vpop.f32.mrf.mxu0
        %v4974 = vadd.f32 0.0, %v4973
        %4975 = vmatmul.bf16.gmra.mxu0 %v4957
        %v4976 = vpop.f32.mrf.mxu0
        %v4977 = vadd.f32 0.0, %v4976
        %v4978 = vpop.f32.mrf.mxu0
        %v4979 = vadd.f32 0.0, %v4978
        %4980 = vmatmul.bf16.gmra.mxu0 %v4960
        %v4981 = vpop.f32.mrf.mxu0
        %v4982 = vadd.f32 0.0, %v4981
        %v4983 = vpop.f32.mrf.mxu0
        %v4984 = vadd.f32 0.0, %v4983
        %4985 = vdwg.mxu0
        %v4992 = vunpack.c.l.b16 %v4635
        %v4993 = vunpack.c.l.b16 %v4636
        %v4994 = vunpack.c.l.b16 %v4637
        %v4995 = vunpack.c.l.b16 %v4638
        %v4996 = vunpack.c.l.b16 %v4639
        %v4997 = vunpack.c.l.b16 %v4640
        %v4998 = vpack.c.b16 %v4993, %v4992
        %v4999 = vpack.c.b16 %v4995, %v4994
        %v5000 = vpack.c.b16 %v4997, %v4996
        %5001 = vrot.lane.b32.xlu0 %v3059, 96
        %v5002 = vpop.permute.xlu0 %5001
        %5003 = vrot.lane.b32.xlu0 %v3060, 96
        %v5004 = vpop.permute.xlu0 %5003
        %5005 = vrot.lane.b32.xlu0 %v3061, 96
        %v5006 = vpop.permute.xlu0 %5005
        %v5011 = vsel %vm3740, %v4998, 0
        %v5014 = vsel %vm3740, %v4999, 0
        %v5017 = vsel %vm3740, %v5000, 0
        %5019 = vmatpush.bf16.msra.mxu0 0
        %5020 = vmatpush.bf16.msra.mxu0 0
        %5021 = vmatpush.bf16.msra.mxu0 0
        %5022 = vmatpush.bf16.msra.mxu0 0
        %5023 = vmatpush.bf16.msra.mxu0 0
        %5024 = vmatpush.bf16.msra.mxu0 %v5006
        %5025 = vmatpush.bf16.msra.mxu0 %v5004
        %5026 = vmatpush.bf16.msra.mxu0 %v5002
        %5027 = vmatmul.bf16.gmra.mxu0 %v5011
        %v5028 = vpop.f32.mrf.mxu0
        %v5029 = vadd.f32 0.0, %v5028
        %v5030 = vpop.f32.mrf.mxu0
        %v5031 = vadd.f32 0.0, %v5030
        %5032 = vmatmul.bf16.gmra.mxu0 %v5014
        %v5033 = vpop.f32.mrf.mxu0
        %v5034 = vadd.f32 0.0, %v5033
        %v5035 = vpop.f32.mrf.mxu0
        %v5036 = vadd.f32 0.0, %v5035
        %5037 = vmatmul.bf16.gmra.mxu0 %v5017
        %v5038 = vpop.f32.mrf.mxu0
        %v5039 = vadd.f32 0.0, %v5038
        %v5040 = vpop.f32.mrf.mxu0
        %v5041 = vadd.f32 0.0, %v5040
        %5042 = vdwg.mxu0
        %v5049 = vunpack.c.l.b16 %v4641
        %v5050 = vunpack.c.l.b16 %v4642
        %v5051 = vunpack.c.l.b16 %v4643
        %v5052 = vunpack.c.l.b16 %v4644
        %v5053 = vunpack.c.l.b16 %v4645
        %v5054 = vunpack.c.l.b16 %v4646
        %v5055 = vpack.c.b16 %v5050, %v5049
        %v5056 = vpack.c.b16 %v5052, %v5051
        %v5057 = vpack.c.b16 %v5054, %v5053
        %5058 = vrot.lane.b32.xlu0 %v3122, 96
        %v5059 = vpop.permute.xlu0 %5058
        %5060 = vrot.lane.b32.xlu0 %v3123, 96
        %v5061 = vpop.permute.xlu0 %5060
        %5062 = vrot.lane.b32.xlu0 %v3124, 96
        %v5063 = vpop.permute.xlu0 %5062
        %v5068 = vsel %vm3740, %v5055, 0
        %v5071 = vsel %vm3740, %v5056, 0
        %v5074 = vsel %vm3740, %v5057, 0
        %5076 = vmatpush.bf16.msra.mxu0 0
        %5077 = vmatpush.bf16.msra.mxu0 0
        %5078 = vmatpush.bf16.msra.mxu0 0
        %5079 = vmatpush.bf16.msra.mxu0 0
        %5080 = vmatpush.bf16.msra.mxu0 0
        %5081 = vmatpush.bf16.msra.mxu0 %v5063
        %5082 = vmatpush.bf16.msra.mxu0 %v5061
        %5083 = vmatpush.bf16.msra.mxu0 %v5059
        %5084 = vmatmul.bf16.gmra.mxu0 %v5068
        %v5085 = vpop.f32.mrf.mxu0
        %v5086 = vadd.f32 0.0, %v5085
        %v5087 = vpop.f32.mrf.mxu0
        %v5088 = vadd.f32 0.0, %v5087
        %5089 = vmatmul.bf16.gmra.mxu0 %v5071
        %v5090 = vpop.f32.mrf.mxu0
        %v5091 = vadd.f32 0.0, %v5090
        %v5092 = vpop.f32.mrf.mxu0
        %v5093 = vadd.f32 0.0, %v5092
        %5094 = vmatmul.bf16.gmra.mxu0 %v5074
        %v5095 = vpop.f32.mrf.mxu0
        %v5096 = vadd.f32 0.0, %v5095
        %v5097 = vpop.f32.mrf.mxu0
        %v5098 = vadd.f32 0.0, %v5097
        %5099 = vdwg.mxu0
        %v5106 = vunpack.c.l.b16 %v4647
        %v5107 = vunpack.c.l.b16 %v4648
        %v5108 = vunpack.c.l.b16 %v4649
        %v5109 = vunpack.c.l.b16 %v4650
        %v5110 = vunpack.c.l.b16 %v4651
        %v5111 = vunpack.c.l.b16 %v4652
        %v5112 = vpack.c.b16 %v5107, %v5106
        %v5113 = vpack.c.b16 %v5109, %v5108
        %v5114 = vpack.c.b16 %v5111, %v5110
        %5115 = vrot.lane.b32.xlu0 %v3185, 96
        %v5116 = vpop.permute.xlu0 %5115
        %5117 = vrot.lane.b32.xlu0 %v3186, 96
        %v5118 = vpop.permute.xlu0 %5117
        %5119 = vrot.lane.b32.xlu0 %v3187, 96
        %v5120 = vpop.permute.xlu0 %5119
        %v5125 = vsel %vm3740, %v5112, 0
        %v5128 = vsel %vm3740, %v5113, 0
        %v5131 = vsel %vm3740, %v5114, 0
        %5133 = vmatpush.bf16.msra.mxu0 0
        %5134 = vmatpush.bf16.msra.mxu0 0
        %5135 = vmatpush.bf16.msra.mxu0 0
        %5136 = vmatpush.bf16.msra.mxu0 0
        %5137 = vmatpush.bf16.msra.mxu0 0
        %5138 = vmatpush.bf16.msra.mxu0 %v5120
        %5139 = vmatpush.bf16.msra.mxu0 %v5118
        %5140 = vmatpush.bf16.msra.mxu0 %v5116
        %5141 = vmatmul.bf16.gmra.mxu0 %v5125
        %v5142 = vpop.f32.mrf.mxu0
        %v5143 = vadd.f32 0.0, %v5142
        %v5144 = vpop.f32.mrf.mxu0
        %v5145 = vadd.f32 0.0, %v5144
        %5146 = vmatmul.bf16.gmra.mxu0 %v5128
        %v5147 = vpop.f32.mrf.mxu0
        %v5148 = vadd.f32 0.0, %v5147
        %v5149 = vpop.f32.mrf.mxu0
        %v5150 = vadd.f32 0.0, %v5149
        %5151 = vmatmul.bf16.gmra.mxu0 %v5131
        %v5152 = vpop.f32.mrf.mxu0
        %v5153 = vadd.f32 0.0, %v5152
        %v5154 = vpop.f32.mrf.mxu0
        %v5155 = vadd.f32 0.0, %v5154
        %5156 = vdwg.mxu0
        %v5163 = vunpack.c.l.b16 %v4653
        %v5164 = vunpack.c.l.b16 %v4654
        %v5165 = vunpack.c.l.b16 %v4655
        %v5166 = vunpack.c.l.b16 %v4656
        %v5167 = vunpack.c.l.b16 %v4657
        %v5168 = vunpack.c.l.b16 %v4658
        %v5169 = vpack.c.b16 %v5164, %v5163
        %v5170 = vpack.c.b16 %v5166, %v5165
        %v5171 = vpack.c.b16 %v5168, %v5167
        %5172 = vrot.lane.b32.xlu0 %v3248, 96
        %v5173 = vpop.permute.xlu0 %5172
        %5174 = vrot.lane.b32.xlu0 %v3249, 96
        %v5175 = vpop.permute.xlu0 %5174
        %5176 = vrot.lane.b32.xlu0 %v3250, 96
        %v5177 = vpop.permute.xlu0 %5176
        %v5182 = vsel %vm3740, %v5169, 0
        %v5185 = vsel %vm3740, %v5170, 0
        %v5188 = vsel %vm3740, %v5171, 0
        %5190 = vmatpush.bf16.msra.mxu0 0
        %5191 = vmatpush.bf16.msra.mxu0 0
        %5192 = vmatpush.bf16.msra.mxu0 0
        %5193 = vmatpush.bf16.msra.mxu0 0
        %5194 = vmatpush.bf16.msra.mxu0 0
        %5195 = vmatpush.bf16.msra.mxu0 %v5177
        %5196 = vmatpush.bf16.msra.mxu0 %v5175
        %5197 = vmatpush.bf16.msra.mxu0 %v5173
        %5198 = vmatmul.bf16.gmra.mxu0 %v5182
        %v5199 = vpop.f32.mrf.mxu0
        %v5200 = vadd.f32 0.0, %v5199
        %v5201 = vpop.f32.mrf.mxu0
        %v5202 = vadd.f32 0.0, %v5201
        %5203 = vmatmul.bf16.gmra.mxu0 %v5185
        %v5204 = vpop.f32.mrf.mxu0
        %v5205 = vadd.f32 0.0, %v5204
        %v5206 = vpop.f32.mrf.mxu0
        %v5207 = vadd.f32 0.0, %v5206
        %5208 = vmatmul.bf16.gmra.mxu0 %v5188
        %v5209 = vpop.f32.mrf.mxu0
        %v5210 = vadd.f32 0.0, %v5209
        %v5211 = vpop.f32.mrf.mxu0
        %v5212 = vadd.f32 0.0, %v5211
        %5213 = vdwg.mxu0
        %v5220 = vunpack.c.l.b16 %v4659
        %v5221 = vunpack.c.l.b16 %v4660
        %v5222 = vunpack.c.l.b16 %v4661
        %v5223 = vunpack.c.l.b16 %v4662
        %v5224 = vunpack.c.l.b16 %v4663
        %v5225 = vunpack.c.l.b16 %v4664
        %v5226 = vpack.c.b16 %v5221, %v5220
        %v5227 = vpack.c.b16 %v5223, %v5222
        %v5228 = vpack.c.b16 %v5225, %v5224
        %5229 = vrot.lane.b32.xlu0 %v3311, 96
        %v5230 = vpop.permute.xlu0 %5229
        %5231 = vrot.lane.b32.xlu0 %v3312, 96
        %v5232 = vpop.permute.xlu0 %5231
        %5233 = vrot.lane.b32.xlu0 %v3313, 96
        %v5234 = vpop.permute.xlu0 %5233
        %v5239 = vsel %vm3740, %v5226, 0
        %v5242 = vsel %vm3740, %v5227, 0
        %v5245 = vsel %vm3740, %v5228, 0
        %5247 = vmatpush.bf16.msra.mxu0 0
        %5248 = vmatpush.bf16.msra.mxu0 0
        %5249 = vmatpush.bf16.msra.mxu0 0
        %5250 = vmatpush.bf16.msra.mxu0 0
        %5251 = vmatpush.bf16.msra.mxu0 0
        %5252 = vmatpush.bf16.msra.mxu0 %v5234
        %5253 = vmatpush.bf16.msra.mxu0 %v5232
        %5254 = vmatpush.bf16.msra.mxu0 %v5230
        %5255 = vmatmul.bf16.gmra.mxu0 %v5239
        %v5256 = vpop.f32.mrf.mxu0
        %v5257 = vadd.f32 0.0, %v5256
        %v5258 = vpop.f32.mrf.mxu0
        %v5259 = vadd.f32 0.0, %v5258
        %5260 = vmatmul.bf16.gmra.mxu0 %v5242
        %v5261 = vpop.f32.mrf.mxu0
        %v5262 = vadd.f32 0.0, %v5261
        %v5263 = vpop.f32.mrf.mxu0
        %v5264 = vadd.f32 0.0, %v5263
        %5265 = vmatmul.bf16.gmra.mxu0 %v5245
        %v5266 = vpop.f32.mrf.mxu0
        %v5267 = vadd.f32 0.0, %v5266
        %v5268 = vpop.f32.mrf.mxu0
        %v5269 = vadd.f32 0.0, %v5268
        %5270 = vdwg.mxu0
        %v5277 = vunpack.c.l.b16 %v4665
        %v5278 = vunpack.c.l.b16 %v4666
        %v5279 = vunpack.c.l.b16 %v4667
        %v5280 = vunpack.c.l.b16 %v4668
        %v5281 = vunpack.c.l.b16 %v4669
        %v5282 = vunpack.c.l.b16 %v4670
        %v5283 = vpack.c.b16 %v5278, %v5277
        %v5284 = vpack.c.b16 %v5280, %v5279
        %v5285 = vpack.c.b16 %v5282, %v5281
        %5286 = vrot.lane.b32.xlu0 %v3374, 96
        %v5287 = vpop.permute.xlu0 %5286
        %5288 = vrot.lane.b32.xlu0 %v3375, 96
        %v5289 = vpop.permute.xlu0 %5288
        %5290 = vrot.lane.b32.xlu0 %v3376, 96
        %v5291 = vpop.permute.xlu0 %5290
        %v5296 = vsel %vm3740, %v5283, 0
        %v5299 = vsel %vm3740, %v5284, 0
        %v5302 = vsel %vm3740, %v5285, 0
        %5304 = vmatpush.bf16.msra.mxu0 0
        %5305 = vmatpush.bf16.msra.mxu0 0
        %5306 = vmatpush.bf16.msra.mxu0 0
        %5307 = vmatpush.bf16.msra.mxu0 0
        %5308 = vmatpush.bf16.msra.mxu0 0
        %5309 = vmatpush.bf16.msra.mxu0 %v5291
        %5310 = vmatpush.bf16.msra.mxu0 %v5289
        %5311 = vmatpush.bf16.msra.mxu0 %v5287
        %5312 = vmatmul.bf16.gmra.mxu0 %v5296
        %v5313 = vpop.f32.mrf.mxu0
        %v5314 = vadd.f32 0.0, %v5313
        %v5315 = vpop.f32.mrf.mxu0
        %v5316 = vadd.f32 0.0, %v5315
        %5317 = vmatmul.bf16.gmra.mxu0 %v5299
        %v5318 = vpop.f32.mrf.mxu0
        %v5319 = vadd.f32 0.0, %v5318
        %v5320 = vpop.f32.mrf.mxu0
        %v5321 = vadd.f32 0.0, %v5320
        %5322 = vmatmul.bf16.gmra.mxu0 %v5302
        %v5323 = vpop.f32.mrf.mxu0
        %v5324 = vadd.f32 0.0, %v5323
        %v5325 = vpop.f32.mrf.mxu0
        %v5326 = vadd.f32 0.0, %v5325
        %5327 = vdwg.mxu0
        %v5334 = vunpack.c.l.b16 %v4671
        %v5335 = vunpack.c.l.b16 %v4672
        %v5336 = vunpack.c.l.b16 %v4673
        %v5337 = vunpack.c.l.b16 %v4674
        %v5338 = vunpack.c.l.b16 %v4675
        %v5339 = vunpack.c.l.b16 %v4676
        %v5340 = vpack.c.b16 %v5335, %v5334
        %v5341 = vpack.c.b16 %v5337, %v5336
        %v5342 = vpack.c.b16 %v5339, %v5338
        %5343 = vrot.lane.b32.xlu0 %v3437, 96
        %v5344 = vpop.permute.xlu0 %5343
        %5345 = vrot.lane.b32.xlu0 %v3438, 96
        %v5346 = vpop.permute.xlu0 %5345
        %5347 = vrot.lane.b32.xlu0 %v3439, 96
        %v5348 = vpop.permute.xlu0 %5347
        %v5353 = vsel %vm3740, %v5340, 0
        %v5356 = vsel %vm3740, %v5341, 0
        %v5359 = vsel %vm3740, %v5342, 0
        %5361 = vmatpush.bf16.msra.mxu0 0
        %5362 = vmatpush.bf16.msra.mxu0 0
        %5363 = vmatpush.bf16.msra.mxu0 0
        %5364 = vmatpush.bf16.msra.mxu0 0
        %5365 = vmatpush.bf16.msra.mxu0 0
        %5366 = vmatpush.bf16.msra.mxu0 %v5348
        %5367 = vmatpush.bf16.msra.mxu0 %v5346
        %5368 = vmatpush.bf16.msra.mxu0 %v5344
        %5369 = vmatmul.bf16.gmra.mxu0 %v5353
        %v5370 = vpop.f32.mrf.mxu0
        %v5371 = vadd.f32 0.0, %v5370
        %v5372 = vpop.f32.mrf.mxu0
        %v5373 = vadd.f32 0.0, %v5372
        %5374 = vmatmul.bf16.gmra.mxu0 %v5356
        %v5375 = vpop.f32.mrf.mxu0
        %v5376 = vadd.f32 0.0, %v5375
        %v5377 = vpop.f32.mrf.mxu0
        %v5378 = vadd.f32 0.0, %v5377
        %5379 = vmatmul.bf16.gmra.mxu0 %v5359
        %v5380 = vpop.f32.mrf.mxu0
        %v5381 = vadd.f32 0.0, %v5380
        %v5382 = vpop.f32.mrf.mxu0
        %v5383 = vadd.f32 0.0, %v5382
        %5384 = vdwg.mxu0
        %v5391 = vunpack.c.l.b16 %v4677
        %v5392 = vunpack.c.l.b16 %v4678
        %v5393 = vunpack.c.l.b16 %v4679
        %v5394 = vunpack.c.l.b16 %v4680
        %v5395 = vunpack.c.l.b16 %v4681
        %v5396 = vunpack.c.l.b16 %v4682
        %v5397 = vpack.c.b16 %v5392, %v5391
        %v5398 = vpack.c.b16 %v5394, %v5393
        %v5399 = vpack.c.b16 %v5396, %v5395
        %5400 = vrot.lane.b32.xlu0 %v3500, 96
        %v5401 = vpop.permute.xlu0 %5400
        %5402 = vrot.lane.b32.xlu0 %v3501, 96
        %v5403 = vpop.permute.xlu0 %5402
        %5404 = vrot.lane.b32.xlu0 %v3502, 96
        %v5405 = vpop.permute.xlu0 %5404
        %v5410 = vsel %vm3740, %v5397, 0
        %v5413 = vsel %vm3740, %v5398, 0
        %v5416 = vsel %vm3740, %v5399, 0
        %5418 = vmatpush.bf16.msra.mxu0 0
        %5419 = vmatpush.bf16.msra.mxu0 0
        %5420 = vmatpush.bf16.msra.mxu0 0
        %5421 = vmatpush.bf16.msra.mxu0 0
        %5422 = vmatpush.bf16.msra.mxu0 0
        %5423 = vmatpush.bf16.msra.mxu0 %v5405
        %5424 = vmatpush.bf16.msra.mxu0 %v5403
        %5425 = vmatpush.bf16.msra.mxu0 %v5401
        %5426 = vmatmul.bf16.gmra.mxu0 %v5410
        %v5427 = vpop.f32.mrf.mxu0
        %v5428 = vadd.f32 0.0, %v5427
        %v5429 = vpop.f32.mrf.mxu0
        %v5430 = vadd.f32 0.0, %v5429
        %5431 = vmatmul.bf16.gmra.mxu0 %v5413
        %v5432 = vpop.f32.mrf.mxu0
        %v5433 = vadd.f32 0.0, %v5432
        %v5434 = vpop.f32.mrf.mxu0
        %v5435 = vadd.f32 0.0, %v5434
        %5436 = vmatmul.bf16.gmra.mxu0 %v5416
        %v5437 = vpop.f32.mrf.mxu0
        %v5438 = vadd.f32 0.0, %v5437
        %v5439 = vpop.f32.mrf.mxu0
        %v5440 = vadd.f32 0.0, %v5439
        %5441 = vdwg.mxu0
        %v5448 = vunpack.c.l.b16 %v4683
        %v5449 = vunpack.c.l.b16 %v4684
        %v5450 = vunpack.c.l.b16 %v4685
        %v5451 = vunpack.c.l.b16 %v4686
        %v5452 = vunpack.c.l.b16 %v4687
        %v5453 = vunpack.c.l.b16 %v4688
        %v5454 = vpack.c.b16 %v5449, %v5448
        %v5455 = vpack.c.b16 %v5451, %v5450
        %v5456 = vpack.c.b16 %v5453, %v5452
        %5457 = vrot.lane.b32.xlu0 %v3563, 96
        %v5458 = vpop.permute.xlu0 %5457
        %5459 = vrot.lane.b32.xlu0 %v3564, 96
        %v5460 = vpop.permute.xlu0 %5459
        %5461 = vrot.lane.b32.xlu0 %v3565, 96
        %v5462 = vpop.permute.xlu0 %5461
        %v5467 = vsel %vm3740, %v5454, 0
        %v5470 = vsel %vm3740, %v5455, 0
        %v5473 = vsel %vm3740, %v5456, 0
        %5475 = vmatpush.bf16.msra.mxu0 0
        %5476 = vmatpush.bf16.msra.mxu0 0
        %5477 = vmatpush.bf16.msra.mxu0 0
        %5478 = vmatpush.bf16.msra.mxu0 0
        %5479 = vmatpush.bf16.msra.mxu0 0
        %5480 = vmatpush.bf16.msra.mxu0 %v5462
        %5481 = vmatpush.bf16.msra.mxu0 %v5460
        %5482 = vmatpush.bf16.msra.mxu0 %v5458
        %5483 = vmatmul.bf16.gmra.mxu0 %v5467
        %v5484 = vpop.f32.mrf.mxu0
        %v5485 = vadd.f32 0.0, %v5484
        %v5486 = vpop.f32.mrf.mxu0
        %v5487 = vadd.f32 0.0, %v5486
        %5488 = vmatmul.bf16.gmra.mxu0 %v5470
        %v5489 = vpop.f32.mrf.mxu0
        %v5490 = vadd.f32 0.0, %v5489
        %v5491 = vpop.f32.mrf.mxu0
        %v5492 = vadd.f32 0.0, %v5491
        %5493 = vmatmul.bf16.gmra.mxu0 %v5473
        %v5494 = vpop.f32.mrf.mxu0
        %v5495 = vadd.f32 0.0, %v5494
        %v5496 = vpop.f32.mrf.mxu0
        %v5497 = vadd.f32 0.0, %v5496
        %5498 = vdwg.mxu0
        %v5505 = vunpack.c.l.b16 %v4689
        %v5506 = vunpack.c.l.b16 %v4690
        %v5507 = vunpack.c.l.b16 %v4691
        %v5508 = vunpack.c.l.b16 %v4692
        %v5509 = vunpack.c.l.b16 %v4693
        %v5510 = vunpack.c.l.b16 %v4694
        %v5511 = vpack.c.b16 %v5506, %v5505
        %v5512 = vpack.c.b16 %v5508, %v5507
        %v5513 = vpack.c.b16 %v5510, %v5509
        %5514 = vrot.lane.b32.xlu0 %v3626, 96
        %v5515 = vpop.permute.xlu0 %5514
        %5516 = vrot.lane.b32.xlu0 %v3627, 96
        %v5517 = vpop.permute.xlu0 %5516
        %5518 = vrot.lane.b32.xlu0 %v3628, 96
        %v5519 = vpop.permute.xlu0 %5518
        %v5524 = vsel %vm3740, %v5511, 0
        %v5527 = vsel %vm3740, %v5512, 0
        %v5530 = vsel %vm3740, %v5513, 0
        %5532 = vmatpush.bf16.msra.mxu0 0
        %5533 = vmatpush.bf16.msra.mxu0 0
        %5534 = vmatpush.bf16.msra.mxu0 0
        %5535 = vmatpush.bf16.msra.mxu0 0
        %5536 = vmatpush.bf16.msra.mxu0 0
        %5537 = vmatpush.bf16.msra.mxu0 %v5519
        %5538 = vmatpush.bf16.msra.mxu0 %v5517
        %5539 = vmatpush.bf16.msra.mxu0 %v5515
        %5540 = vmatmul.bf16.gmra.mxu0 %v5524
        %v5541 = vpop.f32.mrf.mxu0
        %v5542 = vadd.f32 0.0, %v5541
        %v5543 = vpop.f32.mrf.mxu0
        %v5544 = vadd.f32 0.0, %v5543
        %5545 = vmatmul.bf16.gmra.mxu0 %v5527
        %v5546 = vpop.f32.mrf.mxu0
        %v5547 = vadd.f32 0.0, %v5546
        %v5548 = vpop.f32.mrf.mxu0
        %v5549 = vadd.f32 0.0, %v5548
        %5550 = vmatmul.bf16.gmra.mxu0 %v5530
        %v5551 = vpop.f32.mrf.mxu0
        %v5552 = vadd.f32 0.0, %v5551
        %v5553 = vpop.f32.mrf.mxu0
        %v5554 = vadd.f32 0.0, %v5553
        %5555 = vdwg.mxu0
        %v5562 = vunpack.c.l.b16 %v4695
        %v5563 = vunpack.c.l.b16 %v4696
        %v5564 = vunpack.c.l.b16 %v4697
        %v5565 = vunpack.c.l.b16 %v4698
        %v5566 = vunpack.c.l.b16 %v4699
        %v5567 = vunpack.c.l.b16 %v4700
        %v5568 = vpack.c.b16 %v5563, %v5562
        %v5569 = vpack.c.b16 %v5565, %v5564
        %v5570 = vpack.c.b16 %v5567, %v5566
        %5571 = vrot.lane.b32.xlu0 %v3689, 96
        %v5572 = vpop.permute.xlu0 %5571
        %5573 = vrot.lane.b32.xlu0 %v3690, 96
        %v5574 = vpop.permute.xlu0 %5573
        %5575 = vrot.lane.b32.xlu0 %v3691, 96
        %v5576 = vpop.permute.xlu0 %5575
        %v5581 = vsel %vm3740, %v5568, 0
        %v5584 = vsel %vm3740, %v5569, 0
        %v5587 = vsel %vm3740, %v5570, 0
        %5589 = vmatpush.bf16.msra.mxu0 0
        %5590 = vmatpush.bf16.msra.mxu0 0
        %5591 = vmatpush.bf16.msra.mxu0 0
        %5592 = vmatpush.bf16.msra.mxu0 0
        %5593 = vmatpush.bf16.msra.mxu0 0
        %5594 = vmatpush.bf16.msra.mxu0 %v5576
        %5595 = vmatpush.bf16.msra.mxu0 %v5574
        %5596 = vmatpush.bf16.msra.mxu0 %v5572
        %5597 = vmatmul.bf16.gmra.mxu0 %v5581
        %v5598 = vpop.f32.mrf.mxu0
        %v5599 = vadd.f32 0.0, %v5598
        %v5600 = vpop.f32.mrf.mxu0
        %v5601 = vadd.f32 0.0, %v5600
        %5602 = vmatmul.bf16.gmra.mxu0 %v5584
        %v5603 = vpop.f32.mrf.mxu0
        %v5604 = vadd.f32 0.0, %v5603
        %v5605 = vpop.f32.mrf.mxu0
        %v5606 = vadd.f32 0.0, %v5605
        %5607 = vmatmul.bf16.gmra.mxu0 %v5587
        %v5608 = vpop.f32.mrf.mxu0
        %v5609 = vadd.f32 0.0, %v5608
        %v5610 = vpop.f32.mrf.mxu0
        %v5611 = vadd.f32 0.0, %v5610
        %5612 = vdwg.mxu0
        %v5613 = vrcp.pop %v4319
        %v5614 = vrcp.pop %v4322
        %v5615 = vrcp.pop %v4325
        %v5616 = vrcp.pop %v4328
        %v5617 = vrcp.pop %v4331
        %v5618 = vrcp.pop %v4334
        %v5619 = vrcp.pop %v4337
        %v5620 = vrcp.pop %v4340
        %v5621 = vrcp.pop %v4343
        %v5622 = vrcp.pop %v4346
        %v5623 = vrcp.pop %v4349
        %v5624 = vrcp.pop %v4352
        %v5625 = vrcp.pop %v4355
        %v5626 = vrcp.pop %v4358
        %v5627 = vrcp.pop %v4361
        %v5628 = vrcp.pop %v4364
        %v5629 = vrcp.pop %v4367
        %v5630 = vrcp.pop %v4370
        %v5631 = vrcp.pop %v4373
        %v5632 = vrcp.pop %v4376
        %v5633 = vrcp.pop %v4379
        %v5634 = vrcp.pop %v4382
        %v5635 = vrcp.pop %v4385
        %v5636 = vrcp.pop %v4388
        %v5637 = vrcp.pop %v4391
        %v5638 = vrcp.pop %v4394
        %v5639 = vrcp.pop %v4397
        %v5640 = vrcp.pop %v4400
        %v5641 = vrcp.pop %v4403
        %v5642 = vrcp.pop %v4406
        %v5643 = vrcp.pop %v4409
        %v5644 = vrcp.pop %v4412
        %v5645 = vrcp.pop %v4415
        %v5646 = vrcp.pop %v4418
        %v5647 = vrcp.pop %v4421
        %v5648 = vrcp.pop %v4424
        %v5649 = vrcp.pop %v4427
        %v5650 = vrcp.pop %v4430
        %v5651 = vrcp.pop %v4433
        %v5652 = vrcp.pop %v4436
        %v5653 = vrcp.pop %v4439
        %v5654 = vrcp.pop %v4442
        %v5655 = vrcp.pop %v4445
        %v5656 = vrcp.pop %v4448
        %v5657 = vrcp.pop %v4451
        %v5658 = vrcp.pop %v4454
        %v5659 = vrcp.pop %v4457
        %v5660 = vrcp.pop %v4460
        %v5661 = vrcp.pop %v4463
        %v5662 = vrcp.pop %v4466
        %v5663 = vrcp.pop %v4469
        %v5664 = vrcp.pop %v4472
        %v5665 = vrcp.pop %v4475
        %v5666 = vrcp.pop %v4478
        %v5667 = vrcp.pop %v4481
        %v5668 = vrcp.pop %v4484
        %v5669 = vrcp.pop %v4487
        %v5670 = vrcp.pop %v4490
        %v5671 = vrcp.pop %v4493
        %v5672 = vrcp.pop %v4496
        %v5673 = vrcp.pop %v4499
        %v5674 = vrcp.pop %v4502
        %v5675 = vrcp.pop %v4505
        %v5676 = vrcp.pop %v4508
        %v5677 = vrcp.pop %v4511
        %v5678 = vrcp.pop %v4514
        %v5679 = vrcp.pop %v4517
        %v5680 = vrcp.pop %v4520
        %v5681 = vrcp.pop %v4523
        %v5682 = vrcp.pop %v4526
        %v5683 = vrcp.pop %v4529
        %v5684 = vrcp.pop %v4532
        %v5685 = vrcp.pop %v4535
        %v5686 = vrcp.pop %v4538
        %v5687 = vrcp.pop %v4541
        %v5688 = vrcp.pop %v4544
        %v5689 = vrcp.pop %v4547
        %v5690 = vrcp.pop %v4550
        %v5691 = vrcp.pop %v4553
        %v5692 = vrcp.pop %v4556
        %v5693 = vrcp.pop %v4559
        %v5694 = vrcp.pop %v4562
        %v5695 = vrcp.pop %v4565
        %v5696 = vrcp.pop %v4568
        %v5697 = vrcp.pop %v4571
        %v5698 = vrcp.pop %v4574
        %v5699 = vrcp.pop %v4577
        %v5700 = vrcp.pop %v4580
        %v5701 = vrcp.pop %v4583
        %v5702 = vrcp.pop %v4586
        %v5703 = vrcp.pop %v4589
        %v5704 = vrcp.pop %v4592
        %v5705 = vrcp.pop %v4595
        %v5706 = vrcp.pop %v4598
        %v5707 = vrcp.pop %v4601
        %v5708 = vrcp.pop %v4604
        %v5709 = vmul.f32 %v4744, %v5613
        %v5710 = vmul.f32 %v4746, %v5614
        %v5711 = vmul.f32 %v4749, %v5615
        %v5712 = vmul.f32 %v4751, %v5616
        %v5713 = vmul.f32 %v4754, %v5617
        %v5714 = vmul.f32 %v4756, %v5618
        %v5715 = vmul.f32 %v4801, %v5619
        %v5716 = vmul.f32 %v4803, %v5620
        %v5717 = vmul.f32 %v4806, %v5621
        %v5718 = vmul.f32 %v4808, %v5622
        %v5719 = vmul.f32 %v4811, %v5623
        %v5720 = vmul.f32 %v4813, %v5624
        %v5721 = vmul.f32 %v4858, %v5625
        %v5722 = vmul.f32 %v4860, %v5626
        %v5723 = vmul.f32 %v4863, %v5627
        %v5724 = vmul.f32 %v4865, %v5628
        %v5725 = vmul.f32 %v4868, %v5629
        %v5726 = vmul.f32 %v4870, %v5630
        %v5727 = vmul.f32 %v4915, %v5631
        %v5728 = vmul.f32 %v4917, %v5632
        %v5729 = vmul.f32 %v4920, %v5633
        %v5730 = vmul.f32 %v4922, %v5634
        %v5731 = vmul.f32 %v4925, %v5635
        %v5732 = vmul.f32 %v4927, %v5636
        %v5733 = vmul.f32 %v4972, %v5637
        %v5734 = vmul.f32 %v4974, %v5638
        %v5735 = vmul.f32 %v4977, %v5639
        %v5736 = vmul.f32 %v4979, %v5640
        %v5737 = vmul.f32 %v4982, %v5641
        %v5738 = vmul.f32 %v4984, %v5642
        %v5739 = vmul.f32 %v5029, %v5643
        %v5740 = vmul.f32 %v5031, %v5644
        %v5741 = vmul.f32 %v5034, %v5645
        %v5742 = vmul.f32 %v5036, %v5646
        %v5743 = vmul.f32 %v5039, %v5647
        %v5744 = vmul.f32 %v5041, %v5648
        %v5745 = vmul.f32 %v5086, %v5649
        %v5746 = vmul.f32 %v5088, %v5650
        %v5747 = vmul.f32 %v5091, %v5651
        %v5748 = vmul.f32 %v5093, %v5652
        %v5749 = vmul.f32 %v5096, %v5653
        %v5750 = vmul.f32 %v5098, %v5654
        %v5751 = vmul.f32 %v5143, %v5655
        %v5752 = vmul.f32 %v5145, %v5656
        %v5753 = vmul.f32 %v5148, %v5657
        %v5754 = vmul.f32 %v5150, %v5658
        %v5755 = vmul.f32 %v5153, %v5659
        %v5756 = vmul.f32 %v5155, %v5660
        %v5757 = vmul.f32 %v5200, %v5661
        %v5758 = vmul.f32 %v5202, %v5662
        %v5759 = vmul.f32 %v5205, %v5663
        %v5760 = vmul.f32 %v5207, %v5664
        %v5761 = vmul.f32 %v5210, %v5665
        %v5762 = vmul.f32 %v5212, %v5666
        %v5763 = vmul.f32 %v5257, %v5667
        %v5764 = vmul.f32 %v5259, %v5668
        %v5765 = vmul.f32 %v5262, %v5669
        %v5766 = vmul.f32 %v5264, %v5670
        %v5767 = vmul.f32 %v5267, %v5671
        %v5768 = vmul.f32 %v5269, %v5672
        %v5769 = vmul.f32 %v5314, %v5673
        %v5770 = vmul.f32 %v5316, %v5674
        %v5771 = vmul.f32 %v5319, %v5675
        %v5772 = vmul.f32 %v5321, %v5676
        %v5773 = vmul.f32 %v5324, %v5677
        %v5774 = vmul.f32 %v5326, %v5678
        %v5775 = vmul.f32 %v5371, %v5679
        %v5776 = vmul.f32 %v5373, %v5680
        %v5777 = vmul.f32 %v5376, %v5681
        %v5778 = vmul.f32 %v5378, %v5682
        %v5779 = vmul.f32 %v5381, %v5683
        %v5780 = vmul.f32 %v5383, %v5684
        %v5781 = vmul.f32 %v5428, %v5685
        %v5782 = vmul.f32 %v5430, %v5686
        %v5783 = vmul.f32 %v5433, %v5687
        %v5784 = vmul.f32 %v5435, %v5688
        %v5785 = vmul.f32 %v5438, %v5689
        %v5786 = vmul.f32 %v5440, %v5690
        %v5787 = vmul.f32 %v5485, %v5691
        %v5788 = vmul.f32 %v5487, %v5692
        %v5789 = vmul.f32 %v5490, %v5693
        %v5790 = vmul.f32 %v5492, %v5694
        %v5791 = vmul.f32 %v5495, %v5695
        %v5792 = vmul.f32 %v5497, %v5696
        %v5793 = vmul.f32 %v5542, %v5697
        %v5794 = vmul.f32 %v5544, %v5698
        %v5795 = vmul.f32 %v5547, %v5699
        %v5796 = vmul.f32 %v5549, %v5700
        %v5797 = vmul.f32 %v5552, %v5701
        %v5798 = vmul.f32 %v5554, %v5702
        %v5799 = vmul.f32 %v5599, %v5703
        %v5800 = vmul.f32 %v5601, %v5704
        %v5801 = vmul.f32 %v5604, %v5705
        %v5802 = vmul.f32 %v5606, %v5706
        %v5803 = vmul.f32 %v5609, %v5707
        %v5804 = vmul.f32 %v5611, %v5708
        %5817 = vrot.lane.b32.xlu0 %v5721, 16
        %v5818 = vpop.permute.xlu0 %5817
        %5819 = vrot.lane.b32.xlu0 %v5722, 16
        %v5820 = vpop.permute.xlu0 %5819
        %5821 = vrot.lane.b32.xlu0 %v5723, 16
        %v5822 = vpop.permute.xlu0 %5821
        %5823 = vrot.lane.b32.xlu0 %v5724, 16
        %v5824 = vpop.permute.xlu0 %5823
        %5825 = vrot.lane.b32.xlu0 %v5725, 16
        %v5826 = vpop.permute.xlu0 %5825
        %5827 = vrot.lane.b32.xlu0 %v5726, 16
        %v5828 = vpop.permute.xlu0 %5827
        %5829 = vrot.lane.b32.xlu0 %v5727, 16
        %v5830 = vpop.permute.xlu0 %5829
        %5831 = vrot.lane.b32.xlu0 %v5728, 16
        %v5832 = vpop.permute.xlu0 %5831
        %5833 = vrot.lane.b32.xlu0 %v5729, 16
        %v5834 = vpop.permute.xlu0 %5833
        %5835 = vrot.lane.b32.xlu0 %v5730, 16
        %v5836 = vpop.permute.xlu0 %5835
        %5837 = vrot.lane.b32.xlu0 %v5731, 16
        %v5838 = vpop.permute.xlu0 %5837
        %5839 = vrot.lane.b32.xlu0 %v5732, 16
        %v5840 = vpop.permute.xlu0 %5839
        %5865 = vrot.lane.b32.xlu0 %v5733, 32
        %v5866 = vpop.permute.xlu0 %5865
        %5867 = vrot.lane.b32.xlu0 %v5734, 32
        %v5868 = vpop.permute.xlu0 %5867
        %5869 = vrot.lane.b32.xlu0 %v5735, 32
        %v5870 = vpop.permute.xlu0 %5869
        %5871 = vrot.lane.b32.xlu0 %v5736, 32
        %v5872 = vpop.permute.xlu0 %5871
        %5873 = vrot.lane.b32.xlu0 %v5737, 32
        %v5874 = vpop.permute.xlu0 %5873
        %5875 = vrot.lane.b32.xlu0 %v5738, 32
        %v5876 = vpop.permute.xlu0 %5875
        %5877 = vrot.lane.b32.xlu0 %v5739, 32
        %v5878 = vpop.permute.xlu0 %5877
        %5879 = vrot.lane.b32.xlu0 %v5740, 32
        %v5880 = vpop.permute.xlu0 %5879
        %5881 = vrot.lane.b32.xlu0 %v5741, 32
        %v5882 = vpop.permute.xlu0 %5881
        %5883 = vrot.lane.b32.xlu0 %v5742, 32
        %v5884 = vpop.permute.xlu0 %5883
        %5885 = vrot.lane.b32.xlu0 %v5743, 32
        %v5886 = vpop.permute.xlu0 %5885
        %5887 = vrot.lane.b32.xlu0 %v5744, 32
        %v5888 = vpop.permute.xlu0 %5887
        %5913 = vrot.lane.b32.xlu0 %v5745, 48
        %v5914 = vpop.permute.xlu0 %5913
        %5915 = vrot.lane.b32.xlu0 %v5746, 48
        %v5916 = vpop.permute.xlu0 %5915
        %5917 = vrot.lane.b32.xlu0 %v5747, 48
        %v5918 = vpop.permute.xlu0 %5917
        %5919 = vrot.lane.b32.xlu0 %v5748, 48
        %v5920 = vpop.permute.xlu0 %5919
        %5921 = vrot.lane.b32.xlu0 %v5749, 48
        %v5922 = vpop.permute.xlu0 %5921
        %5923 = vrot.lane.b32.xlu0 %v5750, 48
        %v5924 = vpop.permute.xlu0 %5923
        %5925 = vrot.lane.b32.xlu0 %v5751, 48
        %v5926 = vpop.permute.xlu0 %5925
        %5927 = vrot.lane.b32.xlu0 %v5752, 48
        %v5928 = vpop.permute.xlu0 %5927
        %5929 = vrot.lane.b32.xlu0 %v5753, 48
        %v5930 = vpop.permute.xlu0 %5929
        %5931 = vrot.lane.b32.xlu0 %v5754, 48
        %v5932 = vpop.permute.xlu0 %5931
        %5933 = vrot.lane.b32.xlu0 %v5755, 48
        %v5934 = vpop.permute.xlu0 %5933
        %5935 = vrot.lane.b32.xlu0 %v5756, 48
        %v5936 = vpop.permute.xlu0 %5935
        %5961 = vrot.lane.b32.xlu0 %v5757, 64
        %v5962 = vpop.permute.xlu0 %5961
        %5963 = vrot.lane.b32.xlu0 %v5758, 64
        %v5964 = vpop.permute.xlu0 %5963
        %5965 = vrot.lane.b32.xlu0 %v5759, 64
        %v5966 = vpop.permute.xlu0 %5965
        %5967 = vrot.lane.b32.xlu0 %v5760, 64
        %v5968 = vpop.permute.xlu0 %5967
        %5969 = vrot.lane.b32.xlu0 %v5761, 64
        %v5970 = vpop.permute.xlu0 %5969
        %5971 = vrot.lane.b32.xlu0 %v5762, 64
        %v5972 = vpop.permute.xlu0 %5971
        %5973 = vrot.lane.b32.xlu0 %v5763, 64
        %v5974 = vpop.permute.xlu0 %5973
        %5975 = vrot.lane.b32.xlu0 %v5764, 64
        %v5976 = vpop.permute.xlu0 %5975
        %5977 = vrot.lane.b32.xlu0 %v5765, 64
        %v5978 = vpop.permute.xlu0 %5977
        %5979 = vrot.lane.b32.xlu0 %v5766, 64
        %v5980 = vpop.permute.xlu0 %5979
        %5981 = vrot.lane.b32.xlu0 %v5767, 64
        %v5982 = vpop.permute.xlu0 %5981
        %5983 = vrot.lane.b32.xlu0 %v5768, 64
        %v5984 = vpop.permute.xlu0 %5983
        %6009 = vrot.lane.b32.xlu0 %v5769, 80
        %v6010 = vpop.permute.xlu0 %6009
        %6011 = vrot.lane.b32.xlu0 %v5770, 80
        %v6012 = vpop.permute.xlu0 %6011
        %6013 = vrot.lane.b32.xlu0 %v5771, 80
        %v6014 = vpop.permute.xlu0 %6013
        %6015 = vrot.lane.b32.xlu0 %v5772, 80
        %v6016 = vpop.permute.xlu0 %6015
        %6017 = vrot.lane.b32.xlu0 %v5773, 80
        %v6018 = vpop.permute.xlu0 %6017
        %6019 = vrot.lane.b32.xlu0 %v5774, 80
        %v6020 = vpop.permute.xlu0 %6019
        %6021 = vrot.lane.b32.xlu0 %v5775, 80
        %v6022 = vpop.permute.xlu0 %6021
        %6023 = vrot.lane.b32.xlu0 %v5776, 80
        %v6024 = vpop.permute.xlu0 %6023
        %6025 = vrot.lane.b32.xlu0 %v5777, 80
        %v6026 = vpop.permute.xlu0 %6025
        %6027 = vrot.lane.b32.xlu0 %v5778, 80
        %v6028 = vpop.permute.xlu0 %6027
        %6029 = vrot.lane.b32.xlu0 %v5779, 80
        %v6030 = vpop.permute.xlu0 %6029
        %6031 = vrot.lane.b32.xlu0 %v5780, 80
        %v6032 = vpop.permute.xlu0 %6031
        %6057 = vrot.lane.b32.xlu0 %v5781, 96
        %v6058 = vpop.permute.xlu0 %6057
        %6059 = vrot.lane.b32.xlu0 %v5782, 96
        %v6060 = vpop.permute.xlu0 %6059
        %6061 = vrot.lane.b32.xlu0 %v5783, 96
        %v6062 = vpop.permute.xlu0 %6061
        %6063 = vrot.lane.b32.xlu0 %v5784, 96
        %v6064 = vpop.permute.xlu0 %6063
        %6065 = vrot.lane.b32.xlu0 %v5785, 96
        %v6066 = vpop.permute.xlu0 %6065
        %6067 = vrot.lane.b32.xlu0 %v5786, 96
        %v6068 = vpop.permute.xlu0 %6067
        %6069 = vrot.lane.b32.xlu0 %v5787, 96
        %v6070 = vpop.permute.xlu0 %6069
        %6071 = vrot.lane.b32.xlu0 %v5788, 96
        %v6072 = vpop.permute.xlu0 %6071
        %6073 = vrot.lane.b32.xlu0 %v5789, 96
        %v6074 = vpop.permute.xlu0 %6073
        %6075 = vrot.lane.b32.xlu0 %v5790, 96
        %v6076 = vpop.permute.xlu0 %6075
        %6077 = vrot.lane.b32.xlu0 %v5791, 96
        %v6078 = vpop.permute.xlu0 %6077
        %6079 = vrot.lane.b32.xlu0 %v5792, 96
        %v6080 = vpop.permute.xlu0 %6079
        %6105 = vrot.lane.b32.xlu0 %v5793, 112
        %v6106 = vpop.permute.xlu0 %6105
        %6107 = vrot.lane.b32.xlu0 %v5794, 112
        %v6108 = vpop.permute.xlu0 %6107
        %6109 = vrot.lane.b32.xlu0 %v5795, 112
        %v6110 = vpop.permute.xlu0 %6109
        %6111 = vrot.lane.b32.xlu0 %v5796, 112
        %v6112 = vpop.permute.xlu0 %6111
        %6113 = vrot.lane.b32.xlu0 %v5797, 112
        %v6114 = vpop.permute.xlu0 %6113
        %6115 = vrot.lane.b32.xlu0 %v5798, 112
        %v6116 = vpop.permute.xlu0 %6115
        %6117 = vrot.lane.b32.xlu0 %v5799, 112
        %v6118 = vpop.permute.xlu0 %6117
        %6119 = vrot.lane.b32.xlu0 %v5800, 112
        %v6120 = vpop.permute.xlu0 %6119
        %6121 = vrot.lane.b32.xlu0 %v5801, 112
        %v6122 = vpop.permute.xlu0 %6121
        %6123 = vrot.lane.b32.xlu0 %v5802, 112
        %v6124 = vpop.permute.xlu0 %6123
        %6125 = vrot.lane.b32.xlu0 %v5803, 112
        %v6126 = vpop.permute.xlu0 %6125
        %6127 = vrot.lane.b32.xlu0 %v5804, 112
        %v6128 = vpop.permute.xlu0 %6127
        %v6141 = vsel %vm2539, %v5709, %v5818
        %v6142 = vsel %vm2539, %v5710, %v5820
        %v6143 = vsel %vm2539, %v5711, %v5822
        %v6144 = vsel %vm2539, %v5712, %v5824
        %v6145 = vsel %vm2539, %v5713, %v5826
        %v6146 = vsel %vm2539, %v5714, %v5828
        %v6147 = vsel %vm2539, %v5715, %v5830
        %v6148 = vsel %vm2539, %v5716, %v5832
        %v6149 = vsel %vm2539, %v5717, %v5834
        %v6150 = vsel %vm2539, %v5718, %v5836
        %v6151 = vsel %vm2539, %v5719, %v5838
        %v6152 = vsel %vm2539, %v5720, %v5840
        %v6153 = vsel %vm2382, %v6141, %v5866
        %v6154 = vsel %vm2382, %v6142, %v5868
        %v6155 = vsel %vm2382, %v6143, %v5870
        %v6156 = vsel %vm2382, %v6144, %v5872
        %v6157 = vsel %vm2382, %v6145, %v5874
        %v6158 = vsel %vm2382, %v6146, %v5876
        %v6159 = vsel %vm2382, %v6147, %v5878
        %v6160 = vsel %vm2382, %v6148, %v5880
        %v6161 = vsel %vm2382, %v6149, %v5882
        %v6162 = vsel %vm2382, %v6150, %v5884
        %v6163 = vsel %vm2382, %v6151, %v5886
        %v6164 = vsel %vm2382, %v6152, %v5888
        %v6165 = vsel %vm3740, %v6153, %v5914
        %v6166 = vsel %vm3740, %v6154, %v5916
        %v6167 = vsel %vm3740, %v6155, %v5918
        %v6168 = vsel %vm3740, %v6156, %v5920
        %v6169 = vsel %vm3740, %v6157, %v5922
        %v6170 = vsel %vm3740, %v6158, %v5924
        %v6171 = vsel %vm3740, %v6159, %v5926
        %v6172 = vsel %vm3740, %v6160, %v5928
        %v6173 = vsel %vm3740, %v6161, %v5930
        %v6174 = vsel %vm3740, %v6162, %v5932
        %v6175 = vsel %vm3740, %v6163, %v5934
        %v6176 = vsel %vm3740, %v6164, %v5936
        %vm6177 = vcmask 523264
        %v6178 = vsel %vm6177, %v6165, %v5962
        %v6179 = vsel %vm6177, %v6166, %v5964
        %v6180 = vsel %vm6177, %v6167, %v5966
        %v6181 = vsel %vm6177, %v6168, %v5968
        %v6182 = vsel %vm6177, %v6169, %v5970
        %v6183 = vsel %vm6177, %v6170, %v5972
        %v6184 = vsel %vm6177, %v6171, %v5974
        %v6185 = vsel %vm6177, %v6172, %v5976
        %v6186 = vsel %vm6177, %v6173, %v5978
        %v6187 = vsel %vm6177, %v6174, %v5980
        %v6188 = vsel %vm6177, %v6175, %v5982
        %v6189 = vsel %vm6177, %v6176, %v5984
        %vm6190 = vcmask 654336
        %v6191 = vsel %vm6190, %v6178, %v6010
        %v6192 = vsel %vm6190, %v6179, %v6012
        %v6193 = vsel %vm6190, %v6180, %v6014
        %v6194 = vsel %vm6190, %v6181, %v6016
        %v6195 = vsel %vm6190, %v6182, %v6018
        %v6196 = vsel %vm6190, %v6183, %v6020
        %v6197 = vsel %vm6190, %v6184, %v6022
        %v6198 = vsel %vm6190, %v6185, %v6024
        %v6199 = vsel %vm6190, %v6186, %v6026
        %v6200 = vsel %vm6190, %v6187, %v6028
        %v6201 = vsel %vm6190, %v6188, %v6030
        %v6202 = vsel %vm6190, %v6189, %v6032
        %vm6203 = vcmask 785408
        %v6204 = vsel %vm6203, %v6191, %v6058
        %v6205 = vsel %vm6203, %v6192, %v6060
        %v6206 = vsel %vm6203, %v6193, %v6062
        %v6207 = vsel %vm6203, %v6194, %v6064
        %v6208 = vsel %vm6203, %v6195, %v6066
        %v6209 = vsel %vm6203, %v6196, %v6068
        %v6210 = vsel %vm6203, %v6197, %v6070
        %v6211 = vsel %vm6203, %v6198, %v6072
        %v6212 = vsel %vm6203, %v6199, %v6074
        %v6213 = vsel %vm6203, %v6200, %v6076
        %v6214 = vsel %vm6203, %v6201, %v6078
        %v6215 = vsel %vm6203, %v6202, %v6080
        %vm6216 = vcmask 916480
        %v6217 = vsel %vm6216, %v6204, %v6106
        %v6218 = vsel %vm6216, %v6205, %v6108
        %v6219 = vsel %vm6216, %v6206, %v6110
        %v6220 = vsel %vm6216, %v6207, %v6112
        %v6221 = vsel %vm6216, %v6208, %v6114
        %v6222 = vsel %vm6216, %v6209, %v6116
        %v6223 = vsel %vm6216, %v6210, %v6118
        %v6224 = vsel %vm6216, %v6211, %v6120
        %v6225 = vsel %vm6216, %v6212, %v6122
        %v6226 = vsel %vm6216, %v6213, %v6124
        %v6227 = vsel %vm6216, %v6214, %v6126
        %v6228 = vsel %vm6216, %v6215, %v6128
        %v6229 = vpack.c.bf16 %v6218, %v6217
        %v6230 = vpack.c.bf16 %v6224, %v6223
        %v6231 = vld [vmem:[%s1353] sm:$0xf]
        %v6232 = vld [vmem:[%s1353 + $0x4] sm:$0xf]
        %v6233 = vld [vmem:[%s1353 + $0x8] sm:$0xf]
        %v6234 = vld [vmem:[%s1353 + $0xc] sm:$0xf]
        %v6235 = vld [vmem:[%s1353 + $0x10] sm:$0xf]
        %v6236 = vld [vmem:[%s1353 + $0x14] sm:$0xf]
        %v6237 = vld [vmem:[%s1353 + $0x18] sm:$0xf]
        %v6238 = vld [vmem:[%s1353 + $0x1c] sm:$0xf]
        %v6239 = vld [vmem:[%s1353 + $0x20] sm:$0xf]
        %v6240 = vld [vmem:[%s1353 + $0x24] sm:$0xf]
        %v6241 = vld [vmem:[%s1353 + $0x28] sm:$0xf]
        %v6242 = vld [vmem:[%s1353 + $0x2c] sm:$0xf]
        %v6243 = vld [vmem:[%s1353 + $0x30] sm:$0xf]
        %v6244 = vld [vmem:[%s1353 + $0x34] sm:$0xf]
        %v6245 = vld [vmem:[%s1353 + $0x38] sm:$0xf]
        %v6246 = vld [vmem:[%s1353 + $0x3c] sm:$0xf]
        %v6247 = vld [vmem:[%s1110] sm:$0x1]
        %v6249 = vperm.slane %v6247, 0
        %v6267 = vunpack.c.l.b16 %v6231
        %v6268 = vunpack.c.l.b16 %v6232
        %v6269 = vunpack.c.l.b16 %v6233
        %v6270 = vunpack.c.l.b16 %v6234
        %v6271 = vunpack.c.l.b16 %v6235
        %v6272 = vunpack.c.l.b16 %v6236
        %v6273 = vunpack.c.l.b16 %v6237
        %v6274 = vunpack.c.l.b16 %v6238
        %v6275 = vunpack.c.l.b16 %v6239
        %v6276 = vunpack.c.l.b16 %v6240
        %v6277 = vunpack.c.l.b16 %v6241
        %v6278 = vunpack.c.l.b16 %v6242
        %v6279 = vunpack.c.l.b16 %v6243
        %v6280 = vunpack.c.l.b16 %v6244
        %v6281 = vunpack.c.l.b16 %v6245
        %v6282 = vunpack.c.l.b16 %v6246
        %v6283 = vpack.c.b16 %v6268, %v6267
        %v6284 = vpack.c.b16 %v6270, %v6269
        %v6285 = vpack.c.b16 %v6272, %v6271
        %v6286 = vpack.c.b16 %v6274, %v6273
        %v6287 = vpack.c.b16 %v6276, %v6275
        %v6288 = vpack.c.b16 %v6278, %v6277
        %v6289 = vpack.c.b16 %v6280, %v6279
        %v6290 = vpack.c.b16 %v6282, %v6281
        %6299 = vmatpush.bf16.msra.mxu0 %v6290
        %6300 = vmatpush.bf16.msra.mxu0 %v6289
        %6301 = vmatpush.bf16.msra.mxu0 %v6288
        %6302 = vmatpush.bf16.msra.mxu0 %v6287
        %6303 = vmatpush.bf16.msra.mxu0 %v6286
        %6304 = vmatpush.bf16.msra.mxu0 %v6285
        %6305 = vmatpush.bf16.msra.mxu0 %v6284
        %6306 = vmatpush.bf16.msra.mxu0 %v6283
        %6307 = vmatmul.bf16.gmra.mxu0 %v6229
        %v6308 = vpop.f32.mrf.mxu0
        %v6309 = vadd.f32 %v6249, %v6308
        %v6310 = vpop.f32.mrf.mxu0
        %v6311 = vadd.f32 %v6249, %v6310
        %6312 = vmatmul.bf16.gmra.mxu0 %v6230
        %v6313 = vpop.f32.mrf.mxu0
        %v6314 = vadd.f32 %v6249, %v6313
        %v6315 = vpop.f32.mrf.mxu0
        %v6316 = vadd.f32 %v6249, %v6315
        %6317 = vdwg.mxu0
        %v6318 = vperm.slane %v1429, 0
        %v6319 = vperm.slane %v1430, 0
        %v6322 = vmul.f32 %v6318, %v6309
        %v6323 = vmul.f32 %v6318, %v6311
        %v6324 = vmul.f32 %v6319, %v6314
        %v6325 = vmul.f32 %v6319, %v6316
        %v6326 = vadd.f32 %v1393, %v6322
        %v6327 = vadd.f32 %v1394, %v6323
        %v6328 = vadd.f32 %v1395, %v6324
        %v6329 = vadd.f32 %v1396, %v6325
        %v6330 = vld [vmem:[%s1348] sm:$0x1]
        %6331 = vadd.xlane.f32.xlu0 %v6326
        %v6332 = vpop.xlane.xlu0 %6331
        %6333 = vadd.xlane.f32.xlu0 %v6327
        %v6334 = vpop.xlane.xlu0 %6333
        %6335 = vadd.xlane.f32.xlu0 %v6328
        %v6336 = vpop.xlane.xlu0 %6335
        %6337 = vadd.xlane.f32.xlu0 %v6329
        %v6338 = vpop.xlane.xlu0 %6337
        %v6339 = vmul.f32 %v6332, %v1488
        %v6340 = vmul.f32 %v6334, %v1488
        %v6341 = vmul.f32 %v6336, %v1488
        %v6342 = vmul.f32 %v6338, %v1488
        %v6343 = vsub.f32 %v6326, %v6339
        %v6344 = vsub.f32 %v6327, %v6340
        %v6345 = vsub.f32 %v6328, %v6341
        %v6346 = vsub.f32 %v6329, %v6342
        %v6347 = vmul.f32 %v6343, %v6343
        %v6348 = vmul.f32 %v6344, %v6344
        %v6349 = vmul.f32 %v6345, %v6345
        %v6350 = vmul.f32 %v6346, %v6346
        %6351 = vadd.xlane.f32.xlu0 %v6347
        %v6352 = vpop.xlane.xlu0 %6351
        %6353 = vadd.xlane.f32.xlu0 %v6348
        %v6354 = vpop.xlane.xlu0 %6353
        %6355 = vadd.xlane.f32.xlu0 %v6349
        %v6356 = vpop.xlane.xlu0 %6355
        %6357 = vadd.xlane.f32.xlu0 %v6350
        %v6358 = vpop.xlane.xlu0 %6357
        %v6359 = vmul.f32 %v6352, %v1488
        %v6360 = vmul.f32 %v6354, %v1488
        %v6361 = vmul.f32 %v6356, %v1488
        %v6362 = vmul.f32 %v6358, %v1488
        %v6363 = vadd.f32 %v6359, 1e-06
        %v6364 = vadd.f32 %v6360, 1e-06
        %v6365 = vadd.f32 %v6361, 1e-06
        %v6366 = vadd.f32 %v6362, 1e-06
        %v6367 = vrsqrt.pop %v6363
        %v6368 = vmul.f32 %v6367, %v6363
        %v6369 = vmul.f32 %v6368, %v6367
        %v6370 = vmul.f32 0.5, %v6369
        %v6371 = vsub.f32 1.5, %v6370
        %v6372 = vmul.f32 %v6367, %v6371
        %vm6373 = vweird.f32 %v6363
        %vm6374 = vweird.f32 %v6367
        %vm6375 = vmor %vm6373, %vm6374
        %v6376 = vsel %vm6375, %v6367, %v6372
        %v6377 = vrsqrt.pop %v6364
        %v6378 = vmul.f32 %v6377, %v6364
        %v6379 = vmul.f32 %v6378, %v6377
        %v6380 = vmul.f32 0.5, %v6379
        %v6381 = vsub.f32 1.5, %v6380
        %v6382 = vmul.f32 %v6377, %v6381
        %vm6383 = vweird.f32 %v6364
        %vm6384 = vweird.f32 %v6377
        %vm6385 = vmor %vm6383, %vm6384
        %v6386 = vsel %vm6385, %v6377, %v6382
        %v6387 = vrsqrt.pop %v6365
        %v6388 = vmul.f32 %v6387, %v6365
        %v6389 = vmul.f32 %v6388, %v6387
        %v6390 = vmul.f32 0.5, %v6389
        %v6391 = vsub.f32 1.5, %v6390
        %v6392 = vmul.f32 %v6387, %v6391
        %vm6393 = vweird.f32 %v6365
        %vm6394 = vweird.f32 %v6387
        %vm6395 = vmor %vm6393, %vm6394
        %v6396 = vsel %vm6395, %v6387, %v6392
        %v6397 = vrsqrt.pop %v6366
        %v6398 = vmul.f32 %v6397, %v6366
        %v6399 = vmul.f32 %v6398, %v6397
        %v6400 = vmul.f32 0.5, %v6399
        %v6401 = vsub.f32 1.5, %v6400
        %v6402 = vmul.f32 %v6397, %v6401
        %vm6403 = vweird.f32 %v6366
        %vm6404 = vweird.f32 %v6397
        %vm6405 = vmor %vm6403, %vm6404
        %v6406 = vsel %vm6405, %v6397, %v6402
        %v6407 = vmul.f32 %v6343, %v6376
        %v6408 = vmul.f32 %v6344, %v6386
        %v6409 = vmul.f32 %v6345, %v6396
        %v6410 = vmul.f32 %v6346, %v6406
        %v6412 = vperm.slane %v6330, 0
        %v6414 = vmul.f32 %v6407, %v6412
        %v6415 = vmul.f32 %v6408, %v6412
        %v6416 = vmul.f32 %v6409, %v6412
        %v6417 = vmul.f32 %v6410, %v6412
        %v6418 = vadd.f32 %v1439, 1.0
        %v6419 = vadd.f32 %v1443, 1.0
        %v6422 = vperm.slane %v6418, 0
        %v6423 = vperm.slane %v6419, 0
        %v6426 = vmul.f32 %v6414, %v6422
        %v6427 = vmul.f32 %v6415, %v6422
        %v6428 = vmul.f32 %v6416, %v6423
        %v6429 = vmul.f32 %v6417, %v6423
        %v6430 = vperm.slane %v1431, 0
        %v6431 = vperm.slane %v1432, 0
        %v6434 = vadd.f32 %v6426, %v6430
        %v6435 = vadd.f32 %v6427, %v6430
        %v6436 = vadd.f32 %v6428, %v6431
        %v6437 = vadd.f32 %v6429, %v6431
        %v6438 = vpack.c.bf16 %v6435, %v6434
        %v6439 = vpack.c.bf16 %v6437, %v6436
        %v6440 = vld [vmem:[%s1358] sm:$0xff]
        %v6441 = vld [vmem:[%s1358 + $0x8] sm:$0xff]
        %v6442 = vld [vmem:[%s1358 + $0x10] sm:$0xff]
        %v6443 = vld [vmem:[%s1358 + $0x18] sm:$0xff]
        %v6444 = vld [vmem:[%s1358 + $0x20] sm:$0xff]
        %v6445 = vld [vmem:[%s1358 + $0x28] sm:$0xff]
        %v6446 = vld [vmem:[%s1358 + $0x30] sm:$0xff]
        %v6447 = vld [vmem:[%s1358 + $0x38] sm:$0xff]
        %v6448 = vld [vmem:[%s1358 + $0x40] sm:$0xff]
        %v6449 = vld [vmem:[%s1358 + $0x48] sm:$0xff]
        %v6450 = vld [vmem:[%s1358 + $0x50] sm:$0xff]
        %v6451 = vld [vmem:[%s1358 + $0x58] sm:$0xff]
        %v6452 = vld [vmem:[%s1358 + $0x60] sm:$0xff]
        %v6453 = vld [vmem:[%s1358 + $0x68] sm:$0xff]
        %v6454 = vld [vmem:[%s1358 + $0x70] sm:$0xff]
        %v6455 = vld [vmem:[%s1358 + $0x78] sm:$0xff]
        %v6456 = vld [vmem:[%s1358 + $0x80] sm:$0xff]
        %v6457 = vld [vmem:[%s1358 + $0x88] sm:$0xff]
        %v6458 = vld [vmem:[%s1358 + $0x90] sm:$0xff]
        %v6459 = vld [vmem:[%s1358 + $0x98] sm:$0xff]
        %v6460 = vld [vmem:[%s1358 + $0xa0] sm:$0xff]
        %v6461 = vld [vmem:[%s1358 + $0xa8] sm:$0xff]
        %v6462 = vld [vmem:[%s1358 + $0xb0] sm:$0xff]
        %v6463 = vld [vmem:[%s1358 + $0xb8] sm:$0xff]
        %v6464 = vld [vmem:[%s1358 + $0xc0] sm:$0xff]
        %v6465 = vld [vmem:[%s1358 + $0xc8] sm:$0xff]
        %v6466 = vld [vmem:[%s1358 + $0xd0] sm:$0xff]
        %v6467 = vld [vmem:[%s1358 + $0xd8] sm:$0xff]
        %v6468 = vld [vmem:[%s1358 + $0xe0] sm:$0xff]
        %v6469 = vld [vmem:[%s1358 + $0xe8] sm:$0xff]
        %v6470 = vld [vmem:[%s1358 + $0xf0] sm:$0xff]
        %v6471 = vld [vmem:[%s1358 + $0xf8] sm:$0xff]
        %v6472 = vld [vmem:[%s1139] sm:$0xf]
        %v6474 = vperm.slane %v6472, 0
        %v6475 = vperm.slane %v6472, 1
        %v6476 = vperm.slane %v6472, 2
        %v6477 = vperm.slane %v6472, 3
        %v6514 = vunpack.c.l.b16 %v6440
        %v6515 = vunpack.c.h.b16 %v6440
        %v6516 = vunpack.c.l.b16 %v6441
        %v6517 = vunpack.c.h.b16 %v6441
        %v6518 = vunpack.c.l.b16 %v6442
        %v6519 = vunpack.c.h.b16 %v6442
        %v6520 = vunpack.c.l.b16 %v6443
        %v6521 = vunpack.c.h.b16 %v6443
        %v6522 = vunpack.c.l.b16 %v6444
        %v6523 = vunpack.c.h.b16 %v6444
        %v6524 = vunpack.c.l.b16 %v6445
        %v6525 = vunpack.c.h.b16 %v6445
        %v6526 = vunpack.c.l.b16 %v6446
        %v6527 = vunpack.c.h.b16 %v6446
        %v6528 = vunpack.c.l.b16 %v6447
        %v6529 = vunpack.c.h.b16 %v6447
        %v6530 = vunpack.c.l.b16 %v6448
        %v6531 = vunpack.c.h.b16 %v6448
        %v6532 = vunpack.c.l.b16 %v6449
        %v6533 = vunpack.c.h.b16 %v6449
        %v6534 = vunpack.c.l.b16 %v6450
        %v6535 = vunpack.c.h.b16 %v6450
        %v6536 = vunpack.c.l.b16 %v6451
        %v6537 = vunpack.c.h.b16 %v6451
        %v6538 = vunpack.c.l.b16 %v6452
        %v6539 = vunpack.c.h.b16 %v6452
        %v6540 = vunpack.c.l.b16 %v6453
        %v6541 = vunpack.c.h.b16 %v6453
        %v6542 = vunpack.c.l.b16 %v6454
        %v6543 = vunpack.c.h.b16 %v6454
        %v6544 = vunpack.c.l.b16 %v6455
        %v6545 = vunpack.c.h.b16 %v6455
        %v6546 = vunpack.c.l.b16 %v6456
        %v6547 = vunpack.c.h.b16 %v6456
        %v6548 = vunpack.c.l.b16 %v6457
        %v6549 = vunpack.c.h.b16 %v6457
        %v6550 = vunpack.c.l.b16 %v6458
        %v6551 = vunpack.c.h.b16 %v6458
        %v6552 = vunpack.c.l.b16 %v6459
        %v6553 = vunpack.c.h.b16 %v6459
        %v6554 = vunpack.c.l.b16 %v6460
        %v6555 = vunpack.c.h.b16 %v6460
        %v6556 = vunpack.c.l.b16 %v6461
        %v6557 = vunpack.c.h.b16 %v6461
        %v6558 = vunpack.c.l.b16 %v6462
        %v6559 = vunpack.c.h.b16 %v6462
        %v6560 = vunpack.c.l.b16 %v6463
        %v6561 = vunpack.c.h.b16 %v6463
        %v6562 = vunpack.c.l.b16 %v6464
        %v6563 = vunpack.c.h.b16 %v6464
        %v6564 = vunpack.c.l.b16 %v6465
        %v6565 = vunpack.c.h.b16 %v6465
        %v6566 = vunpack.c.l.b16 %v6466
        %v6567 = vunpack.c.h.b16 %v6466
        %v6568 = vunpack.c.l.b16 %v6467
        %v6569 = vunpack.c.h.b16 %v6467
        %v6570 = vunpack.c.l.b16 %v6468
        %v6571 = vunpack.c.h.b16 %v6468
        %v6572 = vunpack.c.l.b16 %v6469
        %v6573 = vunpack.c.h.b16 %v6469
        %v6574 = vunpack.c.l.b16 %v6470
        %v6575 = vunpack.c.h.b16 %v6470
        %v6576 = vunpack.c.l.b16 %v6471
        %v6577 = vunpack.c.h.b16 %v6471
        %v6578 = vpack.c.b16 %v6518, %v6514
        %v6579 = vpack.c.b16 %v6519, %v6515
        %v6580 = vpack.c.b16 %v6520, %v6516
        %v6581 = vpack.c.b16 %v6521, %v6517
        %v6582 = vpack.c.b16 %v6526, %v6522
        %v6583 = vpack.c.b16 %v6527, %v6523
        %v6584 = vpack.c.b16 %v6528, %v6524
        %v6585 = vpack.c.b16 %v6529, %v6525
        %v6586 = vpack.c.b16 %v6534, %v6530
        %v6587 = vpack.c.b16 %v6535, %v6531
        %v6588 = vpack.c.b16 %v6536, %v6532
        %v6589 = vpack.c.b16 %v6537, %v6533
        %v6590 = vpack.c.b16 %v6542, %v6538
        %v6591 = vpack.c.b16 %v6543, %v6539
        %v6592 = vpack.c.b16 %v6544, %v6540
        %v6593 = vpack.c.b16 %v6545, %v6541
        %v6594 = vpack.c.b16 %v6550, %v6546
        %v6595 = vpack.c.b16 %v6551, %v6547
        %v6596 = vpack.c.b16 %v6552, %v6548
        %v6597 = vpack.c.b16 %v6553, %v6549
        %v6598 = vpack.c.b16 %v6558, %v6554
        %v6599 = vpack.c.b16 %v6559, %v6555
        %v6600 = vpack.c.b16 %v6560, %v6556
        %v6601 = vpack.c.b16 %v6561, %v6557
        %v6602 = vpack.c.b16 %v6566, %v6562
        %v6603 = vpack.c.b16 %v6567, %v6563
        %v6604 = vpack.c.b16 %v6568, %v6564
        %v6605 = vpack.c.b16 %v6569, %v6565
        %v6606 = vpack.c.b16 %v6574, %v6570
        %v6607 = vpack.c.b16 %v6575, %v6571
        %v6608 = vpack.c.b16 %v6576, %v6572
        %v6609 = vpack.c.b16 %v6577, %v6573
        %6642 = vmatpush.bf16.msra.mxu0 %v6606
        %6643 = vmatpush.bf16.msra.mxu0 %v6602
        %6644 = vmatpush.bf16.msra.mxu0 %v6598
        %6645 = vmatpush.bf16.msra.mxu0 %v6594
        %6646 = vmatpush.bf16.msra.mxu0 %v6590
        %6647 = vmatpush.bf16.msra.mxu0 %v6586
        %6648 = vmatpush.bf16.msra.mxu0 %v6582
        %6649 = vmatpush.bf16.msra.mxu0 %v6578
        %6650 = vmatmul.bf16.gmra.mxu0 %v6438
        %v6651 = vpop.f32.mrf.mxu0
        %v6652 = vadd.f32 %v6474, %v6651
        %v6653 = vpop.f32.mrf.mxu0
        %v6654 = vadd.f32 %v6474, %v6653
        %6655 = vmatmul.bf16.gmra.mxu0 %v6439
        %v6656 = vpop.f32.mrf.mxu0
        %v6657 = vadd.f32 %v6474, %v6656
        %v6658 = vpop.f32.mrf.mxu0
        %v6659 = vadd.f32 %v6474, %v6658
        %6660 = vdwg.mxu0
        %6661 = vmatpush.bf16.msra.mxu0 %v6607
        %6662 = vmatpush.bf16.msra.mxu0 %v6603
        %6663 = vmatpush.bf16.msra.mxu0 %v6599
        %6664 = vmatpush.bf16.msra.mxu0 %v6595
        %6665 = vmatpush.bf16.msra.mxu0 %v6591
        %6666 = vmatpush.bf16.msra.mxu0 %v6587
        %6667 = vmatpush.bf16.msra.mxu0 %v6583
        %6668 = vmatpush.bf16.msra.mxu0 %v6579
        %6669 = vmatmul.bf16.gmra.mxu0 %v6438
        %v6670 = vpop.f32.mrf.mxu0
        %v6671 = vadd.f32 %v6475, %v6670
        %v6672 = vpop.f32.mrf.mxu0
        %v6673 = vadd.f32 %v6475, %v6672
        %6674 = vmatmul.bf16.gmra.mxu0 %v6439
        %v6675 = vpop.f32.mrf.mxu0
        %v6676 = vadd.f32 %v6475, %v6675
        %v6677 = vpop.f32.mrf.mxu0
        %v6678 = vadd.f32 %v6475, %v6677
        %6679 = vdwg.mxu0
        %6680 = vmatpush.bf16.msra.mxu0 %v6608
        %6681 = vmatpush.bf16.msra.mxu0 %v6604
        %6682 = vmatpush.bf16.msra.mxu0 %v6600
        %6683 = vmatpush.bf16.msra.mxu0 %v6596
        %6684 = vmatpush.bf16.msra.mxu0 %v6592
        %6685 = vmatpush.bf16.msra.mxu0 %v6588
        %6686 = vmatpush.bf16.msra.mxu0 %v6584
        %6687 = vmatpush.bf16.msra.mxu0 %v6580
        %6688 = vmatmul.bf16.gmra.mxu0 %v6438
        %v6689 = vpop.f32.mrf.mxu0
        %v6690 = vadd.f32 %v6476, %v6689
        %v6691 = vpop.f32.mrf.mxu0
        %v6692 = vadd.f32 %v6476, %v6691
        %6693 = vmatmul.bf16.gmra.mxu0 %v6439
        %v6694 = vpop.f32.mrf.mxu0
        %v6695 = vadd.f32 %v6476, %v6694
        %v6696 = vpop.f32.mrf.mxu0
        %v6697 = vadd.f32 %v6476, %v6696
        %6698 = vdwg.mxu0
        %6699 = vmatpush.bf16.msra.mxu0 %v6609
        %6700 = vmatpush.bf16.msra.mxu0 %v6605
        %6701 = vmatpush.bf16.msra.mxu0 %v6601
        %6702 = vmatpush.bf16.msra.mxu0 %v6597
        %6703 = vmatpush.bf16.msra.mxu0 %v6593
        %6704 = vmatpush.bf16.msra.mxu0 %v6589
        %6705 = vmatpush.bf16.msra.mxu0 %v6585
        %6706 = vmatpush.bf16.msra.mxu0 %v6581
        %6707 = vmatmul.bf16.gmra.mxu0 %v6438
        %v6708 = vpop.f32.mrf.mxu0
        %v6709 = vadd.f32 %v6477, %v6708
        %v6710 = vpop.f32.mrf.mxu0
        %v6711 = vadd.f32 %v6477, %v6710
        %6712 = vmatmul.bf16.gmra.mxu0 %v6439
        %v6713 = vpop.f32.mrf.mxu0
        %v6714 = vadd.f32 %v6477, %v6713
        %v6715 = vpop.f32.mrf.mxu0
        %v6716 = vadd.f32 %v6477, %v6715
        %6717 = vdwg.mxu0
        %v6718 = vpack.c.bf16 %v6654, %v6652
        %v6719 = vpack.c.bf16 %v6673, %v6671
        %v6720 = vpack.c.bf16 %v6692, %v6690
        %v6721 = vpack.c.bf16 %v6711, %v6709
        %v6722 = vpack.c.bf16 %v6659, %v6657
        %v6723 = vpack.c.bf16 %v6678, %v6676
        %v6724 = vpack.c.bf16 %v6697, %v6695
        %v6725 = vpack.c.bf16 %v6716, %v6714
        %v6726 = vld [vmem:[%s1363] sm:$0xf]
        %v6727 = vld [vmem:[%s1363 + $0x4] sm:$0xf]
        %v6728 = vld [vmem:[%s1363 + $0x8] sm:$0xf]
        %v6729 = vld [vmem:[%s1363 + $0xc] sm:$0xf]
        %v6730 = vld [vmem:[%s1363 + $0x10] sm:$0xf]
        %v6731 = vld [vmem:[%s1363 + $0x14] sm:$0xf]
        %v6732 = vld [vmem:[%s1363 + $0x18] sm:$0xf]
        %v6733 = vld [vmem:[%s1363 + $0x1c] sm:$0xf]
        %v6734 = vld [vmem:[%s1363 + $0x20] sm:$0xf]
        %v6735 = vld [vmem:[%s1363 + $0x24] sm:$0xf]
        %v6736 = vld [vmem:[%s1363 + $0x28] sm:$0xf]
        %v6737 = vld [vmem:[%s1363 + $0x2c] sm:$0xf]
        %v6738 = vld [vmem:[%s1363 + $0x30] sm:$0xf]
        %v6739 = vld [vmem:[%s1363 + $0x34] sm:$0xf]
        %v6740 = vld [vmem:[%s1363 + $0x38] sm:$0xf]
        %v6741 = vld [vmem:[%s1363 + $0x3c] sm:$0xf]
        %v6742 = vld [vmem:[%s1363 + $0x40] sm:$0xf]
        %v6743 = vld [vmem:[%s1363 + $0x44] sm:$0xf]
        %v6744 = vld [vmem:[%s1363 + $0x48] sm:$0xf]
        %v6745 = vld [vmem:[%s1363 + $0x4c] sm:$0xf]
        %v6746 = vld [vmem:[%s1363 + $0x50] sm:$0xf]
        %v6747 = vld [vmem:[%s1363 + $0x54] sm:$0xf]
        %v6748 = vld [vmem:[%s1363 + $0x58] sm:$0xf]
        %v6749 = vld [vmem:[%s1363 + $0x5c] sm:$0xf]
        %v6750 = vld [vmem:[%s1363 + $0x60] sm:$0xf]
        %v6751 = vld [vmem:[%s1363 + $0x64] sm:$0xf]
        %v6752 = vld [vmem:[%s1363 + $0x68] sm:$0xf]
        %v6753 = vld [vmem:[%s1363 + $0x6c] sm:$0xf]
        %v6754 = vld [vmem:[%s1363 + $0x70] sm:$0xf]
        %v6755 = vld [vmem:[%s1363 + $0x74] sm:$0xf]
        %v6756 = vld [vmem:[%s1363 + $0x78] sm:$0xf]
        %v6757 = vld [vmem:[%s1363 + $0x7c] sm:$0xf]
        %v6758 = vld [vmem:[%s1363 + $0x80] sm:$0xf]
        %v6759 = vld [vmem:[%s1363 + $0x84] sm:$0xf]
        %v6760 = vld [vmem:[%s1363 + $0x88] sm:$0xf]
        %v6761 = vld [vmem:[%s1363 + $0x8c] sm:$0xf]
        %v6762 = vld [vmem:[%s1363 + $0x90] sm:$0xf]
        %v6763 = vld [vmem:[%s1363 + $0x94] sm:$0xf]
        %v6764 = vld [vmem:[%s1363 + $0x98] sm:$0xf]
        %v6765 = vld [vmem:[%s1363 + $0x9c] sm:$0xf]
        %v6766 = vld [vmem:[%s1363 + $0xa0] sm:$0xf]
        %v6767 = vld [vmem:[%s1363 + $0xa4] sm:$0xf]
        %v6768 = vld [vmem:[%s1363 + $0xa8] sm:$0xf]
        %v6769 = vld [vmem:[%s1363 + $0xac] sm:$0xf]
        %v6770 = vld [vmem:[%s1363 + $0xb0] sm:$0xf]
        %v6771 = vld [vmem:[%s1363 + $0xb4] sm:$0xf]
        %v6772 = vld [vmem:[%s1363 + $0xb8] sm:$0xf]
        %v6773 = vld [vmem:[%s1363 + $0xbc] sm:$0xf]
        %v6774 = vld [vmem:[%s1363 + $0xc0] sm:$0xf]
        %v6775 = vld [vmem:[%s1363 + $0xc4] sm:$0xf]
        %v6776 = vld [vmem:[%s1363 + $0xc8] sm:$0xf]
        %v6777 = vld [vmem:[%s1363 + $0xcc] sm:$0xf]
        %v6778 = vld [vmem:[%s1363 + $0xd0] sm:$0xf]
        %v6779 = vld [vmem:[%s1363 + $0xd4] sm:$0xf]
        %v6780 = vld [vmem:[%s1363 + $0xd8] sm:$0xf]
        %v6781 = vld [vmem:[%s1363 + $0xdc] sm:$0xf]
        %v6782 = vld [vmem:[%s1363 + $0xe0] sm:$0xf]
        %v6783 = vld [vmem:[%s1363 + $0xe4] sm:$0xf]
        %v6784 = vld [vmem:[%s1363 + $0xe8] sm:$0xf]
        %v6785 = vld [vmem:[%s1363 + $0xec] sm:$0xf]
        %v6786 = vld [vmem:[%s1363 + $0xf0] sm:$0xf]
        %v6787 = vld [vmem:[%s1363 + $0xf4] sm:$0xf]
        %v6788 = vld [vmem:[%s1363 + $0xf8] sm:$0xf]
        %v6789 = vld [vmem:[%s1363 + $0xfc] sm:$0xf]
        %v6790 = vld [vmem:[%s1148] sm:$0x1]
        %v6792 = vperm.slane %v6790, 0
        %v6858 = vunpack.c.l.b16 %v6726
        %v6859 = vunpack.c.l.b16 %v6727
        %v6860 = vunpack.c.l.b16 %v6728
        %v6861 = vunpack.c.l.b16 %v6729
        %v6862 = vunpack.c.l.b16 %v6730
        %v6863 = vunpack.c.l.b16 %v6731
        %v6864 = vunpack.c.l.b16 %v6732
        %v6865 = vunpack.c.l.b16 %v6733
        %v6866 = vunpack.c.l.b16 %v6734
        %v6867 = vunpack.c.l.b16 %v6735
        %v6868 = vunpack.c.l.b16 %v6736
        %v6869 = vunpack.c.l.b16 %v6737
        %v6870 = vunpack.c.l.b16 %v6738
        %v6871 = vunpack.c.l.b16 %v6739
        %v6872 = vunpack.c.l.b16 %v6740
        %v6873 = vunpack.c.l.b16 %v6741
        %v6874 = vunpack.c.l.b16 %v6742
        %v6875 = vunpack.c.l.b16 %v6743
        %v6876 = vunpack.c.l.b16 %v6744
        %v6877 = vunpack.c.l.b16 %v6745
        %v6878 = vunpack.c.l.b16 %v6746
        %v6879 = vunpack.c.l.b16 %v6747
        %v6880 = vunpack.c.l.b16 %v6748
        %v6881 = vunpack.c.l.b16 %v6749
        %v6882 = vunpack.c.l.b16 %v6750
        %v6883 = vunpack.c.l.b16 %v6751
        %v6884 = vunpack.c.l.b16 %v6752
        %v6885 = vunpack.c.l.b16 %v6753
        %v6886 = vunpack.c.l.b16 %v6754
        %v6887 = vunpack.c.l.b16 %v6755
        %v6888 = vunpack.c.l.b16 %v6756
        %v6889 = vunpack.c.l.b16 %v6757
        %v6890 = vunpack.c.l.b16 %v6758
        %v6891 = vunpack.c.l.b16 %v6759
        %v6892 = vunpack.c.l.b16 %v6760
        %v6893 = vunpack.c.l.b16 %v6761
        %v6894 = vunpack.c.l.b16 %v6762
        %v6895 = vunpack.c.l.b16 %v6763
        %v6896 = vunpack.c.l.b16 %v6764
        %v6897 = vunpack.c.l.b16 %v6765
        %v6898 = vunpack.c.l.b16 %v6766
        %v6899 = vunpack.c.l.b16 %v6767
        %v6900 = vunpack.c.l.b16 %v6768
        %v6901 = vunpack.c.l.b16 %v6769
        %v6902 = vunpack.c.l.b16 %v6770
        %v6903 = vunpack.c.l.b16 %v6771
        %v6904 = vunpack.c.l.b16 %v6772
        %v6905 = vunpack.c.l.b16 %v6773
        %v6906 = vunpack.c.l.b16 %v6774
        %v6907 = vunpack.c.l.b16 %v6775
        %v6908 = vunpack.c.l.b16 %v6776
        %v6909 = vunpack.c.l.b16 %v6777
        %v6910 = vunpack.c.l.b16 %v6778
        %v6911 = vunpack.c.l.b16 %v6779
        %v6912 = vunpack.c.l.b16 %v6780
        %v6913 = vunpack.c.l.b16 %v6781
        %v6914 = vunpack.c.l.b16 %v6782
        %v6915 = vunpack.c.l.b16 %v6783
        %v6916 = vunpack.c.l.b16 %v6784
        %v6917 = vunpack.c.l.b16 %v6785
        %v6918 = vunpack.c.l.b16 %v6786
        %v6919 = vunpack.c.l.b16 %v6787
        %v6920 = vunpack.c.l.b16 %v6788
        %v6921 = vunpack.c.l.b16 %v6789
        %v6922 = vpack.c.b16 %v6859, %v6858
        %v6923 = vpack.c.b16 %v6861, %v6860
        %v6924 = vpack.c.b16 %v6863, %v6862
        %v6925 = vpack.c.b16 %v6865, %v6864
        %v6926 = vpack.c.b16 %v6867, %v6866
        %v6927 = vpack.c.b16 %v6869, %v6868
        %v6928 = vpack.c.b16 %v6871, %v6870
        %v6929 = vpack.c.b16 %v6873, %v6872
        %v6930 = vpack.c.b16 %v6875, %v6874
        %v6931 = vpack.c.b16 %v6877, %v6876
        %v6932 = vpack.c.b16 %v6879, %v6878
        %v6933 = vpack.c.b16 %v6881, %v6880
        %v6934 = vpack.c.b16 %v6883, %v6882
        %v6935 = vpack.c.b16 %v6885, %v6884
        %v6936 = vpack.c.b16 %v6887, %v6886
        %v6937 = vpack.c.b16 %v6889, %v6888
        %v6938 = vpack.c.b16 %v6891, %v6890
        %v6939 = vpack.c.b16 %v6893, %v6892
        %v6940 = vpack.c.b16 %v6895, %v6894
        %v6941 = vpack.c.b16 %v6897, %v6896
        %v6942 = vpack.c.b16 %v6899, %v6898
        %v6943 = vpack.c.b16 %v6901, %v6900
        %v6944 = vpack.c.b16 %v6903, %v6902
        %v6945 = vpack.c.b16 %v6905, %v6904
        %v6946 = vpack.c.b16 %v6907, %v6906
        %v6947 = vpack.c.b16 %v6909, %v6908
        %v6948 = vpack.c.b16 %v6911, %v6910
        %v6949 = vpack.c.b16 %v6913, %v6912
        %v6950 = vpack.c.b16 %v6915, %v6914
        %v6951 = vpack.c.b16 %v6917, %v6916
        %v6952 = vpack.c.b16 %v6919, %v6918
        %v6953 = vpack.c.b16 %v6921, %v6920
        %6986 = vmatpush.bf16.msra.mxu0 %v6929
        %6987 = vmatpush.bf16.msra.mxu0 %v6928
        %6988 = vmatpush.bf16.msra.mxu0 %v6927
        %6989 = vmatpush.bf16.msra.mxu0 %v6926
        %6990 = vmatpush.bf16.msra.mxu0 %v6925
        %6991 = vmatpush.bf16.msra.mxu0 %v6924
        %6992 = vmatpush.bf16.msra.mxu0 %v6923
        %6993 = vmatpush.bf16.msra.mxu0 %v6922
        %6994 = vmatmul.bf16.gmra.mxu0 %v6718
        %v6995 = vpop.f32.mrf.mxu0
        %v6996 = vadd.f32 %v6792, %v6995
        %v6997 = vpop.f32.mrf.mxu0
        %v6998 = vadd.f32 %v6792, %v6997
        %6999 = vmatmul.bf16.gmra.mxu0 %v6722
        %v7000 = vpop.f32.mrf.mxu0
        %v7001 = vadd.f32 %v6792, %v7000
        %v7002 = vpop.f32.mrf.mxu0
        %v7003 = vadd.f32 %v6792, %v7002
        %7004 = vdwg.mxu0
        %7005 = vmatpush.bf16.msra.mxu0 %v6937
        %7006 = vmatpush.bf16.msra.mxu0 %v6936
        %7007 = vmatpush.bf16.msra.mxu0 %v6935
        %7008 = vmatpush.bf16.msra.mxu0 %v6934
        %7009 = vmatpush.bf16.msra.mxu0 %v6933
        %7010 = vmatpush.bf16.msra.mxu0 %v6932
        %7011 = vmatpush.bf16.msra.mxu0 %v6931
        %7012 = vmatpush.bf16.msra.mxu0 %v6930
        %7013 = vmatmul.bf16.gmra.mxu0 %v6719
        %v7014 = vpop.f32.mrf.mxu0
        %v7015 = vadd.f32 %v6996, %v7014
        %v7016 = vpop.f32.mrf.mxu0
        %v7017 = vadd.f32 %v6998, %v7016
        %7018 = vmatmul.bf16.gmra.mxu0 %v6723
        %v7019 = vpop.f32.mrf.mxu0
        %v7020 = vadd.f32 %v7001, %v7019
        %v7021 = vpop.f32.mrf.mxu0
        %v7022 = vadd.f32 %v7003, %v7021
        %7023 = vdwg.mxu0
        %7024 = vmatpush.bf16.msra.mxu0 %v6945
        %7025 = vmatpush.bf16.msra.mxu0 %v6944
        %7026 = vmatpush.bf16.msra.mxu0 %v6943
        %7027 = vmatpush.bf16.msra.mxu0 %v6942
        %7028 = vmatpush.bf16.msra.mxu0 %v6941
        %7029 = vmatpush.bf16.msra.mxu0 %v6940
        %7030 = vmatpush.bf16.msra.mxu0 %v6939
        %7031 = vmatpush.bf16.msra.mxu0 %v6938
        %7032 = vmatmul.bf16.gmra.mxu0 %v6720
        %v7033 = vpop.f32.mrf.mxu0
        %v7034 = vadd.f32 %v7015, %v7033
        %v7035 = vpop.f32.mrf.mxu0
        %v7036 = vadd.f32 %v7017, %v7035
        %7037 = vmatmul.bf16.gmra.mxu0 %v6724
        %v7038 = vpop.f32.mrf.mxu0
        %v7039 = vadd.f32 %v7020, %v7038
        %v7040 = vpop.f32.mrf.mxu0
        %v7041 = vadd.f32 %v7022, %v7040
        %7042 = vdwg.mxu0
        %7043 = vmatpush.bf16.msra.mxu0 %v6953
        %7044 = vmatpush.bf16.msra.mxu0 %v6952
        %7045 = vmatpush.bf16.msra.mxu0 %v6951
        %7046 = vmatpush.bf16.msra.mxu0 %v6950
        %7047 = vmatpush.bf16.msra.mxu0 %v6949
        %7048 = vmatpush.bf16.msra.mxu0 %v6948
        %7049 = vmatpush.bf16.msra.mxu0 %v6947
        %7050 = vmatpush.bf16.msra.mxu0 %v6946
        %7051 = vmatmul.bf16.gmra.mxu0 %v6721
        %v7052 = vpop.f32.mrf.mxu0
        %v7053 = vadd.f32 %v7034, %v7052
        %v7054 = vpop.f32.mrf.mxu0
        %v7055 = vadd.f32 %v7036, %v7054
        %7056 = vmatmul.bf16.gmra.mxu0 %v6725
        %v7057 = vpop.f32.mrf.mxu0
        %v7058 = vadd.f32 %v7039, %v7057
        %v7059 = vpop.f32.mrf.mxu0
        %v7060 = vadd.f32 %v7041, %v7059
        %7061 = vdwg.mxu0
        %v7062 = vperm.slane %v1446, 0
        %v7063 = vperm.slane %v1447, 0
        %v7066 = vmul.f32 %v7062, %v7053
        %v7067 = vmul.f32 %v7062, %v7055
        %v7068 = vmul.f32 %v7063, %v7058
        %v7069 = vmul.f32 %v7063, %v7060
        %v7070 = vadd.f32 %v6326, %v7066
        %v7071 = vadd.f32 %v6327, %v7067
        %v7072 = vadd.f32 %v6328, %v7068
        %v7073 = vadd.f32 %v6329, %v7069
        %v7074 = vpack.c.bf16 %v6220, %v6219
        %v7075 = vpack.c.bf16 %v6222, %v6221
        %v7076 = vpack.c.bf16 %v6226, %v6225
        %v7077 = vpack.c.bf16 %v6228, %v6227
        %v7078 = vld [vmem:[%s1120] sm:$0xf]
        %v7079 = vld [vmem:[%s1120 + $0x4] sm:$0xf]
        %v7080 = vld [vmem:[%s1120 + $0x8] sm:$0xf]
        %v7081 = vld [vmem:[%s1120 + $0xc] sm:$0xf]
        %v7082 = vld [vmem:[%s1120 + $0x10] sm:$0xf]
        %v7083 = vld [vmem:[%s1120 + $0x14] sm:$0xf]
        %v7084 = vld [vmem:[%s1120 + $0x18] sm:$0xf]
        %v7085 = vld [vmem:[%s1120 + $0x1c] sm:$0xf]
        %v7086 = vld [vmem:[%s1120 + $0x20] sm:$0xf]
        %v7087 = vld [vmem:[%s1120 + $0x24] sm:$0xf]
        %v7088 = vld [vmem:[%s1120 + $0x28] sm:$0xf]
        %v7089 = vld [vmem:[%s1120 + $0x2c] sm:$0xf]
        %v7090 = vld [vmem:[%s1120 + $0x30] sm:$0xf]
        %v7091 = vld [vmem:[%s1120 + $0x34] sm:$0xf]
        %v7092 = vld [vmem:[%s1120 + $0x38] sm:$0xf]
        %v7093 = vld [vmem:[%s1120 + $0x3c] sm:$0xf]
        %v7094 = vld [vmem:[%s1129] sm:$0x1]
        %v7096 = vperm.slane %v7094, 0
        %v7114 = vunpack.c.l.b16 %v7078
        %v7115 = vunpack.c.l.b16 %v7079
        %v7116 = vunpack.c.l.b16 %v7080
        %v7117 = vunpack.c.l.b16 %v7081
        %v7118 = vunpack.c.l.b16 %v7082
        %v7119 = vunpack.c.l.b16 %v7083
        %v7120 = vunpack.c.l.b16 %v7084
        %v7121 = vunpack.c.l.b16 %v7085
        %v7122 = vunpack.c.l.b16 %v7086
        %v7123 = vunpack.c.l.b16 %v7087
        %v7124 = vunpack.c.l.b16 %v7088
        %v7125 = vunpack.c.l.b16 %v7089
        %v7126 = vunpack.c.l.b16 %v7090
        %v7127 = vunpack.c.l.b16 %v7091
        %v7128 = vunpack.c.l.b16 %v7092
        %v7129 = vunpack.c.l.b16 %v7093
        %v7130 = vpack.c.b16 %v7115, %v7114
        %v7131 = vpack.c.b16 %v7117, %v7116
        %v7132 = vpack.c.b16 %v7119, %v7118
        %v7133 = vpack.c.b16 %v7121, %v7120
        %v7134 = vpack.c.b16 %v7123, %v7122
        %v7135 = vpack.c.b16 %v7125, %v7124
        %v7136 = vpack.c.b16 %v7127, %v7126
        %v7137 = vpack.c.b16 %v7129, %v7128
        %7146 = vmatpush.bf16.msra.mxu0 %v7137
        %7147 = vmatpush.bf16.msra.mxu0 %v7136
        %7148 = vmatpush.bf16.msra.mxu0 %v7135
        %7149 = vmatpush.bf16.msra.mxu0 %v7134
        %7150 = vmatpush.bf16.msra.mxu0 %v7133
        %7151 = vmatpush.bf16.msra.mxu0 %v7132
        %7152 = vmatpush.bf16.msra.mxu0 %v7131
        %7153 = vmatpush.bf16.msra.mxu0 %v7130
        %7154 = vmatmul.bf16.gmra.mxu0 %v7074
        %v7155 = vpop.f32.mrf.mxu0
        %v7156 = vadd.f32 %v7096, %v7155
        %v7157 = vpop.f32.mrf.mxu0
        %v7158 = vadd.f32 %v7096, %v7157
        %7159 = vmatmul.bf16.gmra.mxu0 %v7075
        %v7160 = vpop.f32.mrf.mxu0
        %v7161 = vadd.f32 %v7096, %v7160
        %v7162 = vpop.f32.mrf.mxu0
        %v7163 = vadd.f32 %v7096, %v7162
        %7164 = vmatmul.bf16.gmra.mxu0 %v7076
        %v7165 = vpop.f32.mrf.mxu0
        %v7166 = vadd.f32 %v7096, %v7165
        %v7167 = vpop.f32.mrf.mxu0
        %v7168 = vadd.f32 %v7096, %v7167
        %7169 = vmatmul.bf16.gmra.mxu0 %v7077
        %v7170 = vpop.f32.mrf.mxu0
        %v7171 = vadd.f32 %v7096, %v7170
        %v7172 = vpop.f32.mrf.mxu0
        %v7173 = vadd.f32 %v7096, %v7172
        %7174 = vdwg.mxu0
        %v7175 = vperm.slane %v1460, 0
        %v7176 = vperm.slane %v1464, 0
        %v7179 = vmul.f32 %v7175, %v7156
        %v7180 = vmul.f32 %v7175, %v7158
        %v7181 = vmul.f32 %v7175, %v7161
        %v7182 = vmul.f32 %v7175, %v7163
        %v7183 = vmul.f32 %v7176, %v7166
        %v7184 = vmul.f32 %v7176, %v7168
        %v7185 = vmul.f32 %v7176, %v7171
        %v7186 = vmul.f32 %v7176, %v7173
        %v7187 = vadd.f32 %v1397, %v7179
        %v7188 = vadd.f32 %v1398, %v7180
        %v7189 = vadd.f32 %v1399, %v7181
        %v7190 = vadd.f32 %v1400, %v7182
        %v7191 = vadd.f32 %v1401, %v7183
        %v7192 = vadd.f32 %v1402, %v7184
        %v7193 = vadd.f32 %v1403, %v7185
        %v7194 = vadd.f32 %v1404, %v7186
        %v7195 = vld [vmem:[%s1061] sm:$0x1]
        %7196 = vadd.xlane.f32.xlu0 %v7187
        %v7197 = vpop.xlane.xlu0 %7196
        %7198 = vadd.xlane.f32.xlu0 %v7188
        %v7199 = vpop.xlane.xlu0 %7198
        %7200 = vadd.xlane.f32.xlu0 %v7189
        %v7201 = vpop.xlane.xlu0 %7200
        %7202 = vadd.xlane.f32.xlu0 %v7190
        %v7203 = vpop.xlane.xlu0 %7202
        %7204 = vadd.xlane.f32.xlu0 %v7191
        %v7205 = vpop.xlane.xlu0 %7204
        %7206 = vadd.xlane.f32.xlu0 %v7192
        %v7207 = vpop.xlane.xlu0 %7206
        %7208 = vadd.xlane.f32.xlu0 %v7193
        %v7209 = vpop.xlane.xlu0 %7208
        %7210 = vadd.xlane.f32.xlu0 %v7194
        %v7211 = vpop.xlane.xlu0 %7210
        %v7212 = vmul.f32 %v7197, %v1488
        %v7213 = vmul.f32 %v7199, %v1488
        %v7214 = vmul.f32 %v7201, %v1488
        %v7215 = vmul.f32 %v7203, %v1488
        %v7216 = vmul.f32 %v7205, %v1488
        %v7217 = vmul.f32 %v7207, %v1488
        %v7218 = vmul.f32 %v7209, %v1488
        %v7219 = vmul.f32 %v7211, %v1488
        %v7220 = vsub.f32 %v7187, %v7212
        %v7221 = vsub.f32 %v7188, %v7213
        %v7222 = vsub.f32 %v7189, %v7214
        %v7223 = vsub.f32 %v7190, %v7215
        %v7224 = vsub.f32 %v7191, %v7216
        %v7225 = vsub.f32 %v7192, %v7217
        %v7226 = vsub.f32 %v7193, %v7218
        %v7227 = vsub.f32 %v7194, %v7219
        %v7228 = vmul.f32 %v7220, %v7220
        %v7229 = vmul.f32 %v7221, %v7221
        %v7230 = vmul.f32 %v7222, %v7222
        %v7231 = vmul.f32 %v7223, %v7223
        %v7232 = vmul.f32 %v7224, %v7224
        %v7233 = vmul.f32 %v7225, %v7225
        %v7234 = vmul.f32 %v7226, %v7226
        %v7235 = vmul.f32 %v7227, %v7227
        %7236 = vadd.xlane.f32.xlu0 %v7228
        %v7237 = vpop.xlane.xlu0 %7236
        %7238 = vadd.xlane.f32.xlu0 %v7229
        %v7239 = vpop.xlane.xlu0 %7238
        %7240 = vadd.xlane.f32.xlu0 %v7230
        %v7241 = vpop.xlane.xlu0 %7240
        %7242 = vadd.xlane.f32.xlu0 %v7231
        %v7243 = vpop.xlane.xlu0 %7242
        %7244 = vadd.xlane.f32.xlu0 %v7232
        %v7245 = vpop.xlane.xlu0 %7244
        %7246 = vadd.xlane.f32.xlu0 %v7233
        %v7247 = vpop.xlane.xlu0 %7246
        %7248 = vadd.xlane.f32.xlu0 %v7234
        %v7249 = vpop.xlane.xlu0 %7248
        %7250 = vadd.xlane.f32.xlu0 %v7235
        %v7251 = vpop.xlane.xlu0 %7250
        %v7252 = vmul.f32 %v7237, %v1488
        %v7253 = vmul.f32 %v7239, %v1488
        %v7254 = vmul.f32 %v7241, %v1488
        %v7255 = vmul.f32 %v7243, %v1488
        %v7256 = vmul.f32 %v7245, %v1488
        %v7257 = vmul.f32 %v7247, %v1488
        %v7258 = vmul.f32 %v7249, %v1488
        %v7259 = vmul.f32 %v7251, %v1488
        %v7260 = vadd.f32 %v7252, 1e-06
        %v7261 = vadd.f32 %v7253, 1e-06
        %v7262 = vadd.f32 %v7254, 1e-06
        %v7263 = vadd.f32 %v7255, 1e-06
        %v7264 = vadd.f32 %v7256, 1e-06
        %v7265 = vadd.f32 %v7257, 1e-06
        %v7266 = vadd.f32 %v7258, 1e-06
        %v7267 = vadd.f32 %v7259, 1e-06
        %v7268 = vrsqrt.pop %v7260
        %v7269 = vmul.f32 %v7268, %v7260
        %v7270 = vmul.f32 %v7269, %v7268
        %v7271 = vmul.f32 0.5, %v7270
        %v7272 = vsub.f32 1.5, %v7271
        %v7273 = vmul.f32 %v7268, %v7272
        %vm7274 = vweird.f32 %v7260
        %vm7275 = vweird.f32 %v7268
        %vm7276 = vmor %vm7274, %vm7275
        %v7277 = vsel %vm7276, %v7268, %v7273
        %v7278 = vrsqrt.pop %v7261
        %v7279 = vmul.f32 %v7278, %v7261
        %v7280 = vmul.f32 %v7279, %v7278
        %v7281 = vmul.f32 0.5, %v7280
        %v7282 = vsub.f32 1.5, %v7281
        %v7283 = vmul.f32 %v7278, %v7282
        %vm7284 = vweird.f32 %v7261
        %vm7285 = vweird.f32 %v7278
        %vm7286 = vmor %vm7284, %vm7285
        %v7287 = vsel %vm7286, %v7278, %v7283
        %v7288 = vrsqrt.pop %v7262
        %v7289 = vmul.f32 %v7288, %v7262
        %v7290 = vmul.f32 %v7289, %v7288
        %v7291 = vmul.f32 0.5, %v7290
        %v7292 = vsub.f32 1.5, %v7291
        %v7293 = vmul.f32 %v7288, %v7292
        %vm7294 = vweird.f32 %v7262
        %vm7295 = vweird.f32 %v7288
        %vm7296 = vmor %vm7294, %vm7295
        %v7297 = vsel %vm7296, %v7288, %v7293
        %v7298 = vrsqrt.pop %v7263
        %v7299 = vmul.f32 %v7298, %v7263
        %v7300 = vmul.f32 %v7299, %v7298
        %v7301 = vmul.f32 0.5, %v7300
        %v7302 = vsub.f32 1.5, %v7301
        %v7303 = vmul.f32 %v7298, %v7302
        %vm7304 = vweird.f32 %v7263
        %vm7305 = vweird.f32 %v7298
        %vm7306 = vmor %vm7304, %vm7305
        %v7307 = vsel %vm7306, %v7298, %v7303
        %v7308 = vrsqrt.pop %v7264
        %v7309 = vmul.f32 %v7308, %v7264
        %v7310 = vmul.f32 %v7309, %v7308
        %v7311 = vmul.f32 0.5, %v7310
        %v7312 = vsub.f32 1.5, %v7311
        %v7313 = vmul.f32 %v7308, %v7312
        %vm7314 = vweird.f32 %v7264
        %vm7315 = vweird.f32 %v7308
        %vm7316 = vmor %vm7314, %vm7315
        %v7317 = vsel %vm7316, %v7308, %v7313
        %v7318 = vrsqrt.pop %v7265
        %v7319 = vmul.f32 %v7318, %v7265
        %v7320 = vmul.f32 %v7319, %v7318
        %v7321 = vmul.f32 0.5, %v7320
        %v7322 = vsub.f32 1.5, %v7321
        %v7323 = vmul.f32 %v7318, %v7322
        %vm7324 = vweird.f32 %v7265
        %vm7325 = vweird.f32 %v7318
        %vm7326 = vmor %vm7324, %vm7325
        %v7327 = vsel %vm7326, %v7318, %v7323
        %v7328 = vrsqrt.pop %v7266
        %v7329 = vmul.f32 %v7328, %v7266
        %v7330 = vmul.f32 %v7329, %v7328
        %v7331 = vmul.f32 0.5, %v7330
        %v7332 = vsub.f32 1.5, %v7331
        %v7333 = vmul.f32 %v7328, %v7332
        %vm7334 = vweird.f32 %v7266
        %vm7335 = vweird.f32 %v7328
        %vm7336 = vmor %vm7334, %vm7335
        %v7337 = vsel %vm7336, %v7328, %v7333
        %v7338 = vrsqrt.pop %v7267
        %v7339 = vmul.f32 %v7338, %v7267
        %v7340 = vmul.f32 %v7339, %v7338
        %v7341 = vmul.f32 0.5, %v7340
        %v7342 = vsub.f32 1.5, %v7341
        %v7343 = vmul.f32 %v7338, %v7342
        %vm7344 = vweird.f32 %v7267
        %vm7345 = vweird.f32 %v7338
        %vm7346 = vmor %vm7344, %vm7345
        %v7347 = vsel %vm7346, %v7338, %v7343
        %v7348 = vmul.f32 %v7220, %v7277
        %v7349 = vmul.f32 %v7221, %v7287
        %v7350 = vmul.f32 %v7222, %v7297
        %v7351 = vmul.f32 %v7223, %v7307
        %v7352 = vmul.f32 %v7224, %v7317
        %v7353 = vmul.f32 %v7225, %v7327
        %v7354 = vmul.f32 %v7226, %v7337
        %v7355 = vmul.f32 %v7227, %v7347
        %v7357 = vperm.slane %v7195, 0
        %v7359 = vmul.f32 %v7348, %v7357
        %v7360 = vmul.f32 %v7349, %v7357
        %v7361 = vmul.f32 %v7350, %v7357
        %v7362 = vmul.f32 %v7351, %v7357
        %v7363 = vmul.f32 %v7352, %v7357
        %v7364 = vmul.f32 %v7353, %v7357
        %v7365 = vmul.f32 %v7354, %v7357
        %v7366 = vmul.f32 %v7355, %v7357
        %v7367 = vadd.f32 %v1467, 1.0
        %v7368 = vadd.f32 %v1468, 1.0
        %v7371 = vperm.slane %v7367, 0
        %v7372 = vperm.slane %v7368, 0
        %v7375 = vmul.f32 %v7359, %v7371
        %v7376 = vmul.f32 %v7360, %v7371
        %v7377 = vmul.f32 %v7361, %v7371
        %v7378 = vmul.f32 %v7362, %v7371
        %v7379 = vmul.f32 %v7363, %v7372
        %v7380 = vmul.f32 %v7364, %v7372
        %v7381 = vmul.f32 %v7365, %v7372
        %v7382 = vmul.f32 %v7366, %v7372
        %v7383 = vperm.slane %v1465, 0
        %v7384 = vperm.slane %v1466, 0
        %v7387 = vadd.f32 %v7375, %v7383
        %v7388 = vadd.f32 %v7376, %v7383
        %v7389 = vadd.f32 %v7377, %v7383
        %v7390 = vadd.f32 %v7378, %v7383
        %v7391 = vadd.f32 %v7379, %v7384
        %v7392 = vadd.f32 %v7380, %v7384
        %v7393 = vadd.f32 %v7381, %v7384
        %v7394 = vadd.f32 %v7382, %v7384
        %v7395 = vpack.c.bf16 %v7388, %v7387
        %v7396 = vpack.c.bf16 %v7390, %v7389
        %v7397 = vpack.c.bf16 %v7392, %v7391
        %v7398 = vpack.c.bf16 %v7394, %v7393
        %v7399 = vld [vmem:[%s1158] sm:$0xff]
        %v7400 = vld [vmem:[%s1158 + $0x8] sm:$0xff]
        %v7401 = vld [vmem:[%s1158 + $0x10] sm:$0xff]
        %v7402 = vld [vmem:[%s1158 + $0x18] sm:$0xff]
        %v7403 = vld [vmem:[%s1158 + $0x20] sm:$0xff]
        %v7404 = vld [vmem:[%s1158 + $0x28] sm:$0xff]
        %v7405 = vld [vmem:[%s1158 + $0x30] sm:$0xff]
        %v7406 = vld [vmem:[%s1158 + $0x38] sm:$0xff]
        %v7407 = vld [vmem:[%s1158 + $0x40] sm:$0xff]
        %v7408 = vld [vmem:[%s1158 + $0x48] sm:$0xff]
        %v7409 = vld [vmem:[%s1158 + $0x50] sm:$0xff]
        %v7410 = vld [vmem:[%s1158 + $0x58] sm:$0xff]
        %v7411 = vld [vmem:[%s1158 + $0x60] sm:$0xff]
        %v7412 = vld [vmem:[%s1158 + $0x68] sm:$0xff]
        %v7413 = vld [vmem:[%s1158 + $0x70] sm:$0xff]
        %v7414 = vld [vmem:[%s1158 + $0x78] sm:$0xff]
        %v7415 = vld [vmem:[%s1158 + $0x80] sm:$0xff]
        %v7416 = vld [vmem:[%s1158 + $0x88] sm:$0xff]
        %v7417 = vld [vmem:[%s1158 + $0x90] sm:$0xff]
        %v7418 = vld [vmem:[%s1158 + $0x98] sm:$0xff]
        %v7419 = vld [vmem:[%s1158 + $0xa0] sm:$0xff]
        %v7420 = vld [vmem:[%s1158 + $0xa8] sm:$0xff]
        %v7421 = vld [vmem:[%s1158 + $0xb0] sm:$0xff]
        %v7422 = vld [vmem:[%s1158 + $0xb8] sm:$0xff]
        %v7423 = vld [vmem:[%s1158 + $0xc0] sm:$0xff]
        %v7424 = vld [vmem:[%s1158 + $0xc8] sm:$0xff]
        %v7425 = vld [vmem:[%s1158 + $0xd0] sm:$0xff]
        %v7426 = vld [vmem:[%s1158 + $0xd8] sm:$0xff]
        %v7427 = vld [vmem:[%s1158 + $0xe0] sm:$0xff]
        %v7428 = vld [vmem:[%s1158 + $0xe8] sm:$0xff]
        %v7429 = vld [vmem:[%s1158 + $0xf0] sm:$0xff]
        %v7430 = vld [vmem:[%s1158 + $0xf8] sm:$0xff]
        %v7431 = vld [vmem:[%s1168] sm:$0xf]
        %v7433 = vperm.slane %v7431, 0
        %v7434 = vperm.slane %v7431, 1
        %v7435 = vperm.slane %v7431, 2
        %v7436 = vperm.slane %v7431, 3
        %v7473 = vunpack.c.l.b16 %v7399
        %v7474 = vunpack.c.h.b16 %v7399
        %v7475 = vunpack.c.l.b16 %v7400
        %v7476 = vunpack.c.h.b16 %v7400
        %v7477 = vunpack.c.l.b16 %v7401
        %v7478 = vunpack.c.h.b16 %v7401
        %v7479 = vunpack.c.l.b16 %v7402
        %v7480 = vunpack.c.h.b16 %v7402
        %v7481 = vunpack.c.l.b16 %v7403
        %v7482 = vunpack.c.h.b16 %v7403
        %v7483 = vunpack.c.l.b16 %v7404
        %v7484 = vunpack.c.h.b16 %v7404
        %v7485 = vunpack.c.l.b16 %v7405
        %v7486 = vunpack.c.h.b16 %v7405
        %v7487 = vunpack.c.l.b16 %v7406
        %v7488 = vunpack.c.h.b16 %v7406
        %v7489 = vunpack.c.l.b16 %v7407
        %v7490 = vunpack.c.h.b16 %v7407
        %v7491 = vunpack.c.l.b16 %v7408
        %v7492 = vunpack.c.h.b16 %v7408
        %v7493 = vunpack.c.l.b16 %v7409
        %v7494 = vunpack.c.h.b16 %v7409
        %v7495 = vunpack.c.l.b16 %v7410
        %v7496 = vunpack.c.h.b16 %v7410
        %v7497 = vunpack.c.l.b16 %v7411
        %v7498 = vunpack.c.h.b16 %v7411
        %v7499 = vunpack.c.l.b16 %v7412
        %v7500 = vunpack.c.h.b16 %v7412
        %v7501 = vunpack.c.l.b16 %v7413
        %v7502 = vunpack.c.h.b16 %v7413
        %v7503 = vunpack.c.l.b16 %v7414
        %v7504 = vunpack.c.h.b16 %v7414
        %v7505 = vunpack.c.l.b16 %v7415
        %v7506 = vunpack.c.h.b16 %v7415
        %v7507 = vunpack.c.l.b16 %v7416
        %v7508 = vunpack.c.h.b16 %v7416
        %v7509 = vunpack.c.l.b16 %v7417
        %v7510 = vunpack.c.h.b16 %v7417
        %v7511 = vunpack.c.l.b16 %v7418
        %v7512 = vunpack.c.h.b16 %v7418
        %v7513 = vunpack.c.l.b16 %v7419
        %v7514 = vunpack.c.h.b16 %v7419
        %v7515 = vunpack.c.l.b16 %v7420
        %v7516 = vunpack.c.h.b16 %v7420
        %v7517 = vunpack.c.l.b16 %v7421
        %v7518 = vunpack.c.h.b16 %v7421
        %v7519 = vunpack.c.l.b16 %v7422
        %v7520 = vunpack.c.h.b16 %v7422
        %v7521 = vunpack.c.l.b16 %v7423
        %v7522 = vunpack.c.h.b16 %v7423
        %v7523 = vunpack.c.l.b16 %v7424
        %v7524 = vunpack.c.h.b16 %v7424
        %v7525 = vunpack.c.l.b16 %v7425
        %v7526 = vunpack.c.h.b16 %v7425
        %v7527 = vunpack.c.l.b16 %v7426
        %v7528 = vunpack.c.h.b16 %v7426
        %v7529 = vunpack.c.l.b16 %v7427
        %v7530 = vunpack.c.h.b16 %v7427
        %v7531 = vunpack.c.l.b16 %v7428
        %v7532 = vunpack.c.h.b16 %v7428
        %v7533 = vunpack.c.l.b16 %v7429
        %v7534 = vunpack.c.h.b16 %v7429
        %v7535 = vunpack.c.l.b16 %v7430
        %v7536 = vunpack.c.h.b16 %v7430
        %v7537 = vpack.c.b16 %v7477, %v7473
        %v7538 = vpack.c.b16 %v7478, %v7474
        %v7539 = vpack.c.b16 %v7479, %v7475
        %v7540 = vpack.c.b16 %v7480, %v7476
        %v7541 = vpack.c.b16 %v7485, %v7481
        %v7542 = vpack.c.b16 %v7486, %v7482
        %v7543 = vpack.c.b16 %v7487, %v7483
        %v7544 = vpack.c.b16 %v7488, %v7484
        %v7545 = vpack.c.b16 %v7493, %v7489
        %v7546 = vpack.c.b16 %v7494, %v7490
        %v7547 = vpack.c.b16 %v7495, %v7491
        %v7548 = vpack.c.b16 %v7496, %v7492
        %v7549 = vpack.c.b16 %v7501, %v7497
        %v7550 = vpack.c.b16 %v7502, %v7498
        %v7551 = vpack.c.b16 %v7503, %v7499
        %v7552 = vpack.c.b16 %v7504, %v7500
        %v7553 = vpack.c.b16 %v7509, %v7505
        %v7554 = vpack.c.b16 %v7510, %v7506
        %v7555 = vpack.c.b16 %v7511, %v7507
        %v7556 = vpack.c.b16 %v7512, %v7508
        %v7557 = vpack.c.b16 %v7517, %v7513
        %v7558 = vpack.c.b16 %v7518, %v7514
        %v7559 = vpack.c.b16 %v7519, %v7515
        %v7560 = vpack.c.b16 %v7520, %v7516
        %v7561 = vpack.c.b16 %v7525, %v7521
        %v7562 = vpack.c.b16 %v7526, %v7522
        %v7563 = vpack.c.b16 %v7527, %v7523
        %v7564 = vpack.c.b16 %v7528, %v7524
        %v7565 = vpack.c.b16 %v7533, %v7529
        %v7566 = vpack.c.b16 %v7534, %v7530
        %v7567 = vpack.c.b16 %v7535, %v7531
        %v7568 = vpack.c.b16 %v7536, %v7532
        %7601 = vmatpush.bf16.msra.mxu0 %v7565
        %7602 = vmatpush.bf16.msra.mxu0 %v7561
        %7603 = vmatpush.bf16.msra.mxu0 %v7557
        %7604 = vmatpush.bf16.msra.mxu0 %v7553
        %7605 = vmatpush.bf16.msra.mxu0 %v7549
        %7606 = vmatpush.bf16.msra.mxu0 %v7545
        %7607 = vmatpush.bf16.msra.mxu0 %v7541
        %7608 = vmatpush.bf16.msra.mxu0 %v7537
        %7609 = vmatmul.bf16.gmra.mxu0 %v7395
        %v7610 = vpop.f32.mrf.mxu0
        %v7611 = vadd.f32 %v7433, %v7610
        %v7612 = vpop.f32.mrf.mxu0
        %v7613 = vadd.f32 %v7433, %v7612
        %7614 = vmatmul.bf16.gmra.mxu0 %v7396
        %v7615 = vpop.f32.mrf.mxu0
        %v7616 = vadd.f32 %v7433, %v7615
        %v7617 = vpop.f32.mrf.mxu0
        %v7618 = vadd.f32 %v7433, %v7617
        %7619 = vmatmul.bf16.gmra.mxu0 %v7397
        %v7620 = vpop.f32.mrf.mxu0
        %v7621 = vadd.f32 %v7433, %v7620
        %v7622 = vpop.f32.mrf.mxu0
        %v7623 = vadd.f32 %v7433, %v7622
        %7624 = vmatmul.bf16.gmra.mxu0 %v7398
        %v7625 = vpop.f32.mrf.mxu0
        %v7626 = vadd.f32 %v7433, %v7625
        %v7627 = vpop.f32.mrf.mxu0
        %v7628 = vadd.f32 %v7433, %v7627
        %7629 = vdwg.mxu0
        %7630 = vmatpush.bf16.msra.mxu0 %v7566
        %7631 = vmatpush.bf16.msra.mxu0 %v7562
        %7632 = vmatpush.bf16.msra.mxu0 %v7558
        %7633 = vmatpush.bf16.msra.mxu0 %v7554
        %7634 = vmatpush.bf16.msra.mxu0 %v7550
        %7635 = vmatpush.bf16.msra.mxu0 %v7546
        %7636 = vmatpush.bf16.msra.mxu0 %v7542
        %7637 = vmatpush.bf16.msra.mxu0 %v7538
        %7638 = vmatmul.bf16.gmra.mxu0 %v7395
        %v7639 = vpop.f32.mrf.mxu0
        %v7640 = vadd.f32 %v7434, %v7639
        %v7641 = vpop.f32.mrf.mxu0
        %v7642 = vadd.f32 %v7434, %v7641
        %7643 = vmatmul.bf16.gmra.mxu0 %v7396
        %v7644 = vpop.f32.mrf.mxu0
        %v7645 = vadd.f32 %v7434, %v7644
        %v7646 = vpop.f32.mrf.mxu0
        %v7647 = vadd.f32 %v7434, %v7646
        %7648 = vmatmul.bf16.gmra.mxu0 %v7397
        %v7649 = vpop.f32.mrf.mxu0
        %v7650 = vadd.f32 %v7434, %v7649
        %v7651 = vpop.f32.mrf.mxu0
        %v7652 = vadd.f32 %v7434, %v7651
        %7653 = vmatmul.bf16.gmra.mxu0 %v7398
        %v7654 = vpop.f32.mrf.mxu0
        %v7655 = vadd.f32 %v7434, %v7654
        %v7656 = vpop.f32.mrf.mxu0
        %v7657 = vadd.f32 %v7434, %v7656
        %7658 = vdwg.mxu0
        %7659 = vmatpush.bf16.msra.mxu0 %v7567
        %7660 = vmatpush.bf16.msra.mxu0 %v7563
        %7661 = vmatpush.bf16.msra.mxu0 %v7559
        %7662 = vmatpush.bf16.msra.mxu0 %v7555
        %7663 = vmatpush.bf16.msra.mxu0 %v7551
        %7664 = vmatpush.bf16.msra.mxu0 %v7547
        %7665 = vmatpush.bf16.msra.mxu0 %v7543
        %7666 = vmatpush.bf16.msra.mxu0 %v7539
        %7667 = vmatmul.bf16.gmra.mxu0 %v7395
        %v7668 = vpop.f32.mrf.mxu0
        %v7669 = vadd.f32 %v7435, %v7668
        %v7670 = vpop.f32.mrf.mxu0
        %v7671 = vadd.f32 %v7435, %v7670
        %7672 = vmatmul.bf16.gmra.mxu0 %v7396
        %v7673 = vpop.f32.mrf.mxu0
        %v7674 = vadd.f32 %v7435, %v7673
        %v7675 = vpop.f32.mrf.mxu0
        %v7676 = vadd.f32 %v7435, %v7675
        %7677 = vmatmul.bf16.gmra.mxu0 %v7397
        %v7678 = vpop.f32.mrf.mxu0
        %v7679 = vadd.f32 %v7435, %v7678
        %v7680 = vpop.f32.mrf.mxu0
        %v7681 = vadd.f32 %v7435, %v7680
        %7682 = vmatmul.bf16.gmra.mxu0 %v7398
        %v7683 = vpop.f32.mrf.mxu0
        %v7684 = vadd.f32 %v7435, %v7683
        %v7685 = vpop.f32.mrf.mxu0
        %v7686 = vadd.f32 %v7435, %v7685
        %7687 = vdwg.mxu0
        %7688 = vmatpush.bf16.msra.mxu0 %v7568
        %7689 = vmatpush.bf16.msra.mxu0 %v7564
        %7690 = vmatpush.bf16.msra.mxu0 %v7560
        %7691 = vmatpush.bf16.msra.mxu0 %v7556
        %7692 = vmatpush.bf16.msra.mxu0 %v7552
        %7693 = vmatpush.bf16.msra.mxu0 %v7548
        %7694 = vmatpush.bf16.msra.mxu0 %v7544
        %7695 = vmatpush.bf16.msra.mxu0 %v7540
        %7696 = vmatmul.bf16.gmra.mxu0 %v7395
        %v7697 = vpop.f32.mrf.mxu0
        %v7698 = vadd.f32 %v7436, %v7697
        %v7699 = vpop.f32.mrf.mxu0
        %v7700 = vadd.f32 %v7436, %v7699
        %7701 = vmatmul.bf16.gmra.mxu0 %v7396
        %v7702 = vpop.f32.mrf.mxu0
        %v7703 = vadd.f32 %v7436, %v7702
        %v7704 = vpop.f32.mrf.mxu0
        %v7705 = vadd.f32 %v7436, %v7704
        %7706 = vmatmul.bf16.gmra.mxu0 %v7397
        %v7707 = vpop.f32.mrf.mxu0
        %v7708 = vadd.f32 %v7436, %v7707
        %v7709 = vpop.f32.mrf.mxu0
        %v7710 = vadd.f32 %v7436, %v7709
        %7711 = vmatmul.bf16.gmra.mxu0 %v7398
        %v7712 = vpop.f32.mrf.mxu0
        %v7713 = vadd.f32 %v7436, %v7712
        %v7714 = vpop.f32.mrf.mxu0
        %v7715 = vadd.f32 %v7436, %v7714
        %7716 = vdwg.mxu0
        %v7717 = vpack.c.bf16 %v7613, %v7611
        %v7718 = vpack.c.bf16 %v7642, %v7640
        %v7719 = vpack.c.bf16 %v7671, %v7669
        %v7720 = vpack.c.bf16 %v7700, %v7698
        %v7721 = vpack.c.bf16 %v7618, %v7616
        %v7722 = vpack.c.bf16 %v7647, %v7645
        %v7723 = vpack.c.bf16 %v7676, %v7674
        %v7724 = vpack.c.bf16 %v7705, %v7703
        %v7725 = vpack.c.bf16 %v7623, %v7621
        %v7726 = vpack.c.bf16 %v7652, %v7650
        %v7727 = vpack.c.bf16 %v7681, %v7679
        %v7728 = vpack.c.bf16 %v7710, %v7708
        %v7729 = vpack.c.bf16 %v7628, %v7626
        %v7730 = vpack.c.bf16 %v7657, %v7655
        %v7731 = vpack.c.bf16 %v7686, %v7684
        %v7732 = vpack.c.bf16 %v7715, %v7713
        %v7733 = vld [vmem:[%s1178] sm:$0xf]
        %v7734 = vld [vmem:[%s1178 + $0x4] sm:$0xf]
        %v7735 = vld [vmem:[%s1178 + $0x8] sm:$0xf]
        %v7736 = vld [vmem:[%s1178 + $0xc] sm:$0xf]
        %v7737 = vld [vmem:[%s1178 + $0x10] sm:$0xf]
        %v7738 = vld [vmem:[%s1178 + $0x14] sm:$0xf]
        %v7739 = vld [vmem:[%s1178 + $0x18] sm:$0xf]
        %v7740 = vld [vmem:[%s1178 + $0x1c] sm:$0xf]
        %v7741 = vld [vmem:[%s1178 + $0x20] sm:$0xf]
        %v7742 = vld [vmem:[%s1178 + $0x24] sm:$0xf]
        %v7743 = vld [vmem:[%s1178 + $0x28] sm:$0xf]
        %v7744 = vld [vmem:[%s1178 + $0x2c] sm:$0xf]
        %v7745 = vld [vmem:[%s1178 + $0x30] sm:$0xf]
        %v7746 = vld [vmem:[%s1178 + $0x34] sm:$0xf]
        %v7747 = vld [vmem:[%s1178 + $0x38] sm:$0xf]
        %v7748 = vld [vmem:[%s1178 + $0x3c] sm:$0xf]
        %v7749 = vld [vmem:[%s1178 + $0x40] sm:$0xf]
        %v7750 = vld [vmem:[%s1178 + $0x44] sm:$0xf]
        %v7751 = vld [vmem:[%s1178 + $0x48] sm:$0xf]
        %v7752 = vld [vmem:[%s1178 + $0x4c] sm:$0xf]
        %v7753 = vld [vmem:[%s1178 + $0x50] sm:$0xf]
        %v7754 = vld [vmem:[%s1178 + $0x54] sm:$0xf]
        %v7755 = vld [vmem:[%s1178 + $0x58] sm:$0xf]
        %v7756 = vld [vmem:[%s1178 + $0x5c] sm:$0xf]
        %v7757 = vld [vmem:[%s1178 + $0x60] sm:$0xf]
        %v7758 = vld [vmem:[%s1178 + $0x64] sm:$0xf]
        %v7759 = vld [vmem:[%s1178 + $0x68] sm:$0xf]
        %v7760 = vld [vmem:[%s1178 + $0x6c] sm:$0xf]
        %v7761 = vld [vmem:[%s1178 + $0x70] sm:$0xf]
        %v7762 = vld [vmem:[%s1178 + $0x74] sm:$0xf]
        %v7763 = vld [vmem:[%s1178 + $0x78] sm:$0xf]
        %v7764 = vld [vmem:[%s1178 + $0x7c] sm:$0xf]
        %v7765 = vld [vmem:[%s1178 + $0x80] sm:$0xf]
        %v7766 = vld [vmem:[%s1178 + $0x84] sm:$0xf]
        %v7767 = vld [vmem:[%s1178 + $0x88] sm:$0xf]
        %v7768 = vld [vmem:[%s1178 + $0x8c] sm:$0xf]
        %v7769 = vld [vmem:[%s1178 + $0x90] sm:$0xf]
        %v7770 = vld [vmem:[%s1178 + $0x94] sm:$0xf]
        %v7771 = vld [vmem:[%s1178 + $0x98] sm:$0xf]
        %v7772 = vld [vmem:[%s1178 + $0x9c] sm:$0xf]
        %v7773 = vld [vmem:[%s1178 + $0xa0] sm:$0xf]
        %v7774 = vld [vmem:[%s1178 + $0xa4] sm:$0xf]
        %v7775 = vld [vmem:[%s1178 + $0xa8] sm:$0xf]
        %v7776 = vld [vmem:[%s1178 + $0xac] sm:$0xf]
        %v7777 = vld [vmem:[%s1178 + $0xb0] sm:$0xf]
        %v7778 = vld [vmem:[%s1178 + $0xb4] sm:$0xf]
        %v7779 = vld [vmem:[%s1178 + $0xb8] sm:$0xf]
        %v7780 = vld [vmem:[%s1178 + $0xbc] sm:$0xf]
        %v7781 = vld [vmem:[%s1178 + $0xc0] sm:$0xf]
        %v7782 = vld [vmem:[%s1178 + $0xc4] sm:$0xf]
        %v7783 = vld [vmem:[%s1178 + $0xc8] sm:$0xf]
        %v7784 = vld [vmem:[%s1178 + $0xcc] sm:$0xf]
        %v7785 = vld [vmem:[%s1178 + $0xd0] sm:$0xf]
        %v7786 = vld [vmem:[%s1178 + $0xd4] sm:$0xf]
        %v7787 = vld [vmem:[%s1178 + $0xd8] sm:$0xf]
        %v7788 = vld [vmem:[%s1178 + $0xdc] sm:$0xf]
        %v7789 = vld [vmem:[%s1178 + $0xe0] sm:$0xf]
        %v7790 = vld [vmem:[%s1178 + $0xe4] sm:$0xf]
        %v7791 = vld [vmem:[%s1178 + $0xe8] sm:$0xf]
        %v7792 = vld [vmem:[%s1178 + $0xec] sm:$0xf]
        %v7793 = vld [vmem:[%s1178 + $0xf0] sm:$0xf]
        %v7794 = vld [vmem:[%s1178 + $0xf4] sm:$0xf]
        %v7795 = vld [vmem:[%s1178 + $0xf8] sm:$0xf]
        %v7796 = vld [vmem:[%s1178 + $0xfc] sm:$0xf]
        %v7797 = vld [vmem:[%s1187] sm:$0x1]
        %v7799 = vperm.slane %v7797, 0
        %v7865 = vunpack.c.l.b16 %v7733
        %v7866 = vunpack.c.l.b16 %v7734
        %v7867 = vunpack.c.l.b16 %v7735
        %v7868 = vunpack.c.l.b16 %v7736
        %v7869 = vunpack.c.l.b16 %v7737
        %v7870 = vunpack.c.l.b16 %v7738
        %v7871 = vunpack.c.l.b16 %v7739
        %v7872 = vunpack.c.l.b16 %v7740
        %v7873 = vunpack.c.l.b16 %v7741
        %v7874 = vunpack.c.l.b16 %v7742
        %v7875 = vunpack.c.l.b16 %v7743
        %v7876 = vunpack.c.l.b16 %v7744
        %v7877 = vunpack.c.l.b16 %v7745
        %v7878 = vunpack.c.l.b16 %v7746
        %v7879 = vunpack.c.l.b16 %v7747
        %v7880 = vunpack.c.l.b16 %v7748
        %v7881 = vunpack.c.l.b16 %v7749
        %v7882 = vunpack.c.l.b16 %v7750
        %v7883 = vunpack.c.l.b16 %v7751
        %v7884 = vunpack.c.l.b16 %v7752
        %v7885 = vunpack.c.l.b16 %v7753
        %v7886 = vunpack.c.l.b16 %v7754
        %v7887 = vunpack.c.l.b16 %v7755
        %v7888 = vunpack.c.l.b16 %v7756
        %v7889 = vunpack.c.l.b16 %v7757
        %v7890 = vunpack.c.l.b16 %v7758
        %v7891 = vunpack.c.l.b16 %v7759
        %v7892 = vunpack.c.l.b16 %v7760
        %v7893 = vunpack.c.l.b16 %v7761
        %v7894 = vunpack.c.l.b16 %v7762
        %v7895 = vunpack.c.l.b16 %v7763
        %v7896 = vunpack.c.l.b16 %v7764
        %v7897 = vunpack.c.l.b16 %v7765
        %v7898 = vunpack.c.l.b16 %v7766
        %v7899 = vunpack.c.l.b16 %v7767
        %v7900 = vunpack.c.l.b16 %v7768
        %v7901 = vunpack.c.l.b16 %v7769
        %v7902 = vunpack.c.l.b16 %v7770
        %v7903 = vunpack.c.l.b16 %v7771
        %v7904 = vunpack.c.l.b16 %v7772
        %v7905 = vunpack.c.l.b16 %v7773
        %v7906 = vunpack.c.l.b16 %v7774
        %v7907 = vunpack.c.l.b16 %v7775
        %v7908 = vunpack.c.l.b16 %v7776
        %v7909 = vunpack.c.l.b16 %v7777
        %v7910 = vunpack.c.l.b16 %v7778
        %v7911 = vunpack.c.l.b16 %v7779
        %v7912 = vunpack.c.l.b16 %v7780
        %v7913 = vunpack.c.l.b16 %v7781
        %v7914 = vunpack.c.l.b16 %v7782
        %v7915 = vunpack.c.l.b16 %v7783
        %v7916 = vunpack.c.l.b16 %v7784
        %v7917 = vunpack.c.l.b16 %v7785
        %v7918 = vunpack.c.l.b16 %v7786
        %v7919 = vunpack.c.l.b16 %v7787
        %v7920 = vunpack.c.l.b16 %v7788
        %v7921 = vunpack.c.l.b16 %v7789
        %v7922 = vunpack.c.l.b16 %v7790
        %v7923 = vunpack.c.l.b16 %v7791
        %v7924 = vunpack.c.l.b16 %v7792
        %v7925 = vunpack.c.l.b16 %v7793
        %v7926 = vunpack.c.l.b16 %v7794
        %v7927 = vunpack.c.l.b16 %v7795
        %v7928 = vunpack.c.l.b16 %v7796
        %v7929 = vpack.c.b16 %v7866, %v7865
        %v7930 = vpack.c.b16 %v7868, %v7867
        %v7931 = vpack.c.b16 %v7870, %v7869
        %v7932 = vpack.c.b16 %v7872, %v7871
        %v7933 = vpack.c.b16 %v7874, %v7873
        %v7934 = vpack.c.b16 %v7876, %v7875
        %v7935 = vpack.c.b16 %v7878, %v7877
        %v7936 = vpack.c.b16 %v7880, %v7879
        %v7937 = vpack.c.b16 %v7882, %v7881
        %v7938 = vpack.c.b16 %v7884, %v7883
        %v7939 = vpack.c.b16 %v7886, %v7885
        %v7940 = vpack.c.b16 %v7888, %v7887
        %v7941 = vpack.c.b16 %v7890, %v7889
        %v7942 = vpack.c.b16 %v7892, %v7891
        %v7943 = vpack.c.b16 %v7894, %v7893
        %v7944 = vpack.c.b16 %v7896, %v7895
        %v7945 = vpack.c.b16 %v7898, %v7897
        %v7946 = vpack.c.b16 %v7900, %v7899
        %v7947 = vpack.c.b16 %v7902, %v7901
        %v7948 = vpack.c.b16 %v7904, %v7903
        %v7949 = vpack.c.b16 %v7906, %v7905
        %v7950 = vpack.c.b16 %v7908, %v7907
        %v7951 = vpack.c.b16 %v7910, %v7909
        %v7952 = vpack.c.b16 %v7912, %v7911
        %v7953 = vpack.c.b16 %v7914, %v7913
        %v7954 = vpack.c.b16 %v7916, %v7915
        %v7955 = vpack.c.b16 %v7918, %v7917
        %v7956 = vpack.c.b16 %v7920, %v7919
        %v7957 = vpack.c.b16 %v7922, %v7921
        %v7958 = vpack.c.b16 %v7924, %v7923
        %v7959 = vpack.c.b16 %v7926, %v7925
        %v7960 = vpack.c.b16 %v7928, %v7927
        %7993 = vmatpush.bf16.msra.mxu0 %v7936
        %7994 = vmatpush.bf16.msra.mxu0 %v7935
        %7995 = vmatpush.bf16.msra.mxu0 %v7934
        %7996 = vmatpush.bf16.msra.mxu0 %v7933
        %7997 = vmatpush.bf16.msra.mxu0 %v7932
        %7998 = vmatpush.bf16.msra.mxu0 %v7931
        %7999 = vmatpush.bf16.msra.mxu0 %v7930
        %8000 = vmatpush.bf16.msra.mxu0 %v7929
        %8001 = vmatmul.bf16.gmra.mxu0 %v7717
        %v8002 = vpop.f32.mrf.mxu0
        %v8003 = vadd.f32 %v7799, %v8002
        %v8004 = vpop.f32.mrf.mxu0
        %v8005 = vadd.f32 %v7799, %v8004
        %8006 = vmatmul.bf16.gmra.mxu0 %v7721
        %v8007 = vpop.f32.mrf.mxu0
        %v8008 = vadd.f32 %v7799, %v8007
        %v8009 = vpop.f32.mrf.mxu0
        %v8010 = vadd.f32 %v7799, %v8009
        %8011 = vmatmul.bf16.gmra.mxu0 %v7725
        %v8012 = vpop.f32.mrf.mxu0
        %v8013 = vadd.f32 %v7799, %v8012
        %v8014 = vpop.f32.mrf.mxu0
        %v8015 = vadd.f32 %v7799, %v8014
        %8016 = vmatmul.bf16.gmra.mxu0 %v7729
        %v8017 = vpop.f32.mrf.mxu0
        %v8018 = vadd.f32 %v7799, %v8017
        %v8019 = vpop.f32.mrf.mxu0
        %v8020 = vadd.f32 %v7799, %v8019
        %8021 = vdwg.mxu0
        %8022 = vmatpush.bf16.msra.mxu0 %v7944
        %8023 = vmatpush.bf16.msra.mxu0 %v7943
        %8024 = vmatpush.bf16.msra.mxu0 %v7942
        %8025 = vmatpush.bf16.msra.mxu0 %v7941
        %8026 = vmatpush.bf16.msra.mxu0 %v7940
        %8027 = vmatpush.bf16.msra.mxu0 %v7939
        %8028 = vmatpush.bf16.msra.mxu0 %v7938
        %8029 = vmatpush.bf16.msra.mxu0 %v7937
        %8030 = vmatmul.bf16.gmra.mxu0 %v7718
        %v8031 = vpop.f32.mrf.mxu0
        %v8032 = vadd.f32 %v8003, %v8031
        %v8033 = vpop.f32.mrf.mxu0
        %v8034 = vadd.f32 %v8005, %v8033
        %8035 = vmatmul.bf16.gmra.mxu0 %v7722
        %v8036 = vpop.f32.mrf.mxu0
        %v8037 = vadd.f32 %v8008, %v8036
        %v8038 = vpop.f32.mrf.mxu0
        %v8039 = vadd.f32 %v8010, %v8038
        %8040 = vmatmul.bf16.gmra.mxu0 %v7726
        %v8041 = vpop.f32.mrf.mxu0
        %v8042 = vadd.f32 %v8013, %v8041
        %v8043 = vpop.f32.mrf.mxu0
        %v8044 = vadd.f32 %v8015, %v8043
        %8045 = vmatmul.bf16.gmra.mxu0 %v7730
        %v8046 = vpop.f32.mrf.mxu0
        %v8047 = vadd.f32 %v8018, %v8046
        %v8048 = vpop.f32.mrf.mxu0
        %v8049 = vadd.f32 %v8020, %v8048
        %8050 = vdwg.mxu0
        %8051 = vmatpush.bf16.msra.mxu0 %v7952
        %8052 = vmatpush.bf16.msra.mxu0 %v7951
        %8053 = vmatpush.bf16.msra.mxu0 %v7950
        %8054 = vmatpush.bf16.msra.mxu0 %v7949
        %8055 = vmatpush.bf16.msra.mxu0 %v7948
        %8056 = vmatpush.bf16.msra.mxu0 %v7947
        %8057 = vmatpush.bf16.msra.mxu0 %v7946
        %8058 = vmatpush.bf16.msra.mxu0 %v7945
        %8059 = vmatmul.bf16.gmra.mxu0 %v7719
        %v8060 = vpop.f32.mrf.mxu0
        %v8061 = vadd.f32 %v8032, %v8060
        %v8062 = vpop.f32.mrf.mxu0
        %v8063 = vadd.f32 %v8034, %v8062
        %8064 = vmatmul.bf16.gmra.mxu0 %v7723
        %v8065 = vpop.f32.mrf.mxu0
        %v8066 = vadd.f32 %v8037, %v8065
        %v8067 = vpop.f32.mrf.mxu0
        %v8068 = vadd.f32 %v8039, %v8067
        %8069 = vmatmul.bf16.gmra.mxu0 %v7727
        %v8070 = vpop.f32.mrf.mxu0
        %v8071 = vadd.f32 %v8042, %v8070
        %v8072 = vpop.f32.mrf.mxu0
        %v8073 = vadd.f32 %v8044, %v8072
        %8074 = vmatmul.bf16.gmra.mxu0 %v7731
        %v8075 = vpop.f32.mrf.mxu0
        %v8076 = vadd.f32 %v8047, %v8075
        %v8077 = vpop.f32.mrf.mxu0
        %v8078 = vadd.f32 %v8049, %v8077
        %8079 = vdwg.mxu0
        %8080 = vmatpush.bf16.msra.mxu0 %v7960
        %8081 = vmatpush.bf16.msra.mxu0 %v7959
        %8082 = vmatpush.bf16.msra.mxu0 %v7958
        %8083 = vmatpush.bf16.msra.mxu0 %v7957
        %8084 = vmatpush.bf16.msra.mxu0 %v7956
        %8085 = vmatpush.bf16.msra.mxu0 %v7955
        %8086 = vmatpush.bf16.msra.mxu0 %v7954
        %8087 = vmatpush.bf16.msra.mxu0 %v7953
        %8088 = vmatmul.bf16.gmra.mxu0 %v7720
        %v8089 = vpop.f32.mrf.mxu0
        %v8090 = vadd.f32 %v8061, %v8089
        %v8091 = vpop.f32.mrf.mxu0
        %v8092 = vadd.f32 %v8063, %v8091
        %8093 = vmatmul.bf16.gmra.mxu0 %v7724
        %v8094 = vpop.f32.mrf.mxu0
        %v8095 = vadd.f32 %v8066, %v8094
        %v8096 = vpop.f32.mrf.mxu0
        %v8097 = vadd.f32 %v8068, %v8096
        %8098 = vmatmul.bf16.gmra.mxu0 %v7728
        %v8099 = vpop.f32.mrf.mxu0
        %v8100 = vadd.f32 %v8071, %v8099
        %v8101 = vpop.f32.mrf.mxu0
        %v8102 = vadd.f32 %v8073, %v8101
        %8103 = vmatmul.bf16.gmra.mxu0 %v7732
        %v8104 = vpop.f32.mrf.mxu0
        %v8105 = vadd.f32 %v8076, %v8104
        %v8106 = vpop.f32.mrf.mxu0
        %v8107 = vadd.f32 %v8078, %v8106
        %8108 = vdwg.mxu0
        %v8109 = vperm.slane %v1471, 0
        %v8110 = vperm.slane %v1472, 0
        %v8113 = vmul.f32 %v8109, %v8090
        %v8114 = vmul.f32 %v8109, %v8092
        %v8115 = vmul.f32 %v8109, %v8095
        %v8116 = vmul.f32 %v8109, %v8097
        %v8117 = vmul.f32 %v8110, %v8100
        %v8118 = vmul.f32 %v8110, %v8102
        %v8119 = vmul.f32 %v8110, %v8105
        %v8120 = vmul.f32 %v8110, %v8107
        %v8121 = vadd.f32 %v7187, %v8113
        %v8122 = vadd.f32 %v7188, %v8114
        %v8123 = vadd.f32 %v7189, %v8115
        %v8124 = vadd.f32 %v7190, %v8116
        %v8125 = vadd.f32 %v7191, %v8117
        %v8126 = vadd.f32 %v7192, %v8118
        %v8127 = vadd.f32 %v7193, %v8119
        %v8128 = vadd.f32 %v7194, %v8120
        %8129 = vst [vmem:[%s23] sm:$0xff] %v7070
        %8130 = vst [vmem:[%s23 + $0x8] sm:$0xff] %v7071
        %8131 = vst [vmem:[%s23 + $0x10] sm:$0xff] %v7072
        %8132 = vst [vmem:[%s23 + $0x18] sm:$0xff] %v7073
        %8133 = vst [vmem:[%s24] sm:$0xff] %v8121
        %8134 = vst [vmem:[%s24 + $0x8] sm:$0xff] %v8122
        %8135 = vst [vmem:[%s24 + $0x10] sm:$0xff] %v8123
        %8136 = vst [vmem:[%s24 + $0x18] sm:$0xff] %v8124
        %8137 = vst [vmem:[%s24 + $0x20] sm:$0xff] %v8125
        %8138 = vst [vmem:[%s24 + $0x28] sm:$0xff] %v8126
        %8139 = vst [vmem:[%s24 + $0x30] sm:$0xff] %v8127
        %8140 = vst [vmem:[%s24 + $0x38] sm:$0xff] %v8128
        // Predicated region
        $region177: #{_dit_forward.4} parent=111 // pred_check
          %p8141 = pneg %p661
        $region178: #{_dit_forward.4} parent=111 // pred_check_branch
          %8143 = sbr.rel (%p8141) target = $region180
        $region179: #{_dit_forward.4} parent=111 // pred_region
          _
        $region180: #{_dit_forward.4} parent=111 // pred_fallthru
          _
        // Predicated region
        $region181: #{_dit_forward.4} parent=111 // pred_check
          %p8144 = pneg %p682
        $region182: #{_dit_forward.4} parent=111 // pred_check_branch
          %8146 = sbr.rel (%p8144) target = $region184
        $region183: #{_dit_forward.4} parent=111 // pred_region
          _
        $region184: #{_dit_forward.4} parent=111 // pred_fallthru
          _
        // Predicated region
        $region185: #{_dit_forward.4} parent=111 // pred_check
          %p8147 = pneg %p661
        $region186: #{_dit_forward.4} parent=111 // pred_check_branch
          %8149 = sbr.rel (%p8147) target = $region188
        $region187: #{_dit_forward.4} parent=111 // pred_region
          _
        $region188: #{_dit_forward.4} parent=111 // pred_fallthru
          _
        // Predicated region
        $region189: #{_dit_forward.4} parent=111 // pred_check
          %p8150 = pneg %p682
        $region190: #{_dit_forward.4} parent=111 // pred_check_branch
          %8152 = sbr.rel (%p8150) target = $region192
        $region191: #{_dit_forward.4} parent=111 // pred_region
          _
        $region192: #{_dit_forward.4} parent=111 // pred_fallthru
          _
      $region112: #{_dit_forward.4} parent=5 // pred_fallthru
        _
      %p8153 = scmp.le.s32.totalorder 2, %s55
      // Predicated region
      $region193: #{_dit_forward.4} parent=5 // pred_check
        %p8154 = pneg %p8153
      $region194: #{_dit_forward.4} parent=5 // pred_check_branch
        %8156 = sbr.rel (%p8154) target = $region196
      $region195: #{_dit_forward.4} parent=5 // pred_region
        %s8157 = ssub.s32 %s55, 2
      $region196: #{_dit_forward.4} parent=5 // pred_fallthru
        _
    $region6: #{_dit_forward.4} parent=1 // loop_footer
      %s59 = sadd.s32 1, %s55
    $region7: #{_dit_forward.4} parent=1 // loop_footer_branch
      %54 = sbr.rel target = $region3
    $region8: #{_dit_forward.4} parent=1 // loop_exit
      _
    %8158 = vsyncpa [#allocation3], 1
    %s8159 = scalar_lea.sflag [#allocation3], 1
    %8160 = vsyncpa %s8159, 1
    %8161 = vsyncpa [#allocation5], 1
    %s8162 = scalar_lea.sflag [#allocation5], 1
    %8163 = vsyncpa %s8162, 1
    %8164 = vsyncpa [#allocation8], 1
    %s8165 = scalar_lea.sflag [#allocation8], 1
    %8166 = vsyncpa %s8165, 1
    %8167 = vsyncpa [#allocation11], 1
    %s8168 = scalar_lea.sflag [#allocation11], 1
    %8169 = vsyncpa %s8168, 1
    %8170 = vsyncpa [#allocation14], 1
    %s8171 = scalar_lea.sflag [#allocation14], 1
    %8172 = vsyncpa %s8171, 1
    %8173 = vsyncpa [#allocation17], 1
    %s8174 = scalar_lea.sflag [#allocation17], 1
    %8175 = vsyncpa %s8174, 1
    %8176 = vsyncpa [#allocation20], 1
    %s8177 = scalar_lea.sflag [#allocation20], 1
    %8178 = vsyncpa %s8177, 1
    %8179 = vsyncpa [#allocation23], 1
    %s8180 = scalar_lea.sflag [#allocation23], 1
    %8181 = vsyncpa %s8180, 1

</llo_original>
